<compile_context>
chip_gen: v6e
topology: v6e:2x2x1
jax: 0.10.0
libtpu: 0.0.40
codegen_flags: <defaults>
</compile_context>

<pallas_src>
import math
from functools import partial

import jax
import jax.numpy as jnp
from jax.experimental import pallas as pl
from jax.experimental.pallas import tpu as pltpu  # noqa: F401

HIDDEN = 32
NHEAD = 4
DIM_FF = 2 * HIDDEN
NUM_LAYERS = 3
EPS_LN = 1e-5  # nn.LayerNorm default inside TransformerEncoderLayer

# rows of the packed per-layer parameter slab (see init_params)
ROW_BQ, ROW_BK, ROW_BV, ROW_BO = 0, 1, 2, 3
ROW_LN1W, ROW_LN1B = 4, 5
ROW_B1, ROW_B2 = 6, 7
ROW_LN2W, ROW_LN2B = 8, 9


# ----------------------------------------------------------------------------- kernel
def fused_kernel(x_ref, pu_ref, wqkv_ref, wo_ref, w1_ref, w2_ref, vec_ref,
                 fcw_ref, fcb_ref, o_ref, *, nhead, num_layers, seq_len):
    """3 post-norm TransformerEncoderLayers + final fc, fully fused (no grid).

    x_ref   : (N*S, E)     f32   activations (user-major, flattened)
    pu_ref  : (N, E)       f32   user embeddings
    wqkv_ref: (L, 3, E, E) bf16  q/k/v projections, (in,out) layout
    wo_ref  : (L, H, dh, E)bf16  output projection split per head
    w1_ref  : (L, E, FF)   bf16
    w2_ref  : (L, FF, E)   bf16
    vec_ref : (L, 16, 128) f32   packed 1-row params (biases + LN scales)
    fcw_ref : (2, E, Vp)   bf16  [fc W_top ; fc W_bot], lane-padded to Vp
    fcb_ref : (1, Vp)      f32
    o_ref   : (N, S, Vp)   f32   Vp % 128 == 0 -> full-lane (unmasked) stores
    """
    x = x_ref[...].astype(jnp.float32)          # (M, E)
    M, E = x.shape
    S = seq_len
    N = M // S
    H = nhead
    dh = E // H
    FF = w1_ref.shape[-1]
    scale = 1.0 / math.sqrt(dh)

    act = x
    for l in range(num_layers):                 # static layer loop, weights stay in VMEM
        vec = vec_ref[l]                        # (16, 128) f32
        bq = vec[ROW_BQ:ROW_BQ + 1, :E]
        bk = vec[ROW_BK:ROW_BK + 1, :E]
        bv = vec[ROW_BV:ROW_BV + 1, :E]
        bo = vec[ROW_BO:ROW_BO + 1, :E]
        ln1w, ln1b = vec[ROW_LN1W:ROW_LN1W + 1, :E], vec[ROW_LN1B:ROW_LN1B + 1, :E]
        b1 = vec[ROW_B1:ROW_B1 + 1, :FF]
        b2 = vec[ROW_B2:ROW_B2 + 1, :E]
        ln2w, ln2b = vec[ROW_LN2W:ROW_LN2W + 1, :E], vec[ROW_LN2B:ROW_LN2B + 1, :E]

        wqkv_l = wqkv_ref[l]                    # (3, E, E) bf16
        wo_l = wo_ref[l]                        # (H, dh, E) bf16

        # ---- q / k / v projections (three small dots, no lane-offset slicing) ----
        a16 = act.astype(jnp.bfloat16)
        q = jnp.dot(a16, wqkv_l[0], preferred_element_type=jnp.float32) + bq   # (M,E)
        k = jnp.dot(a16, wqkv_l[1], preferred_element_type=jnp.float32) + bk
        v = jnp.dot(a16, wqkv_l[2], preferred_element_type=jnp.float32) + bv

        q3 = (q * scale).reshape(N, S, E).astype(jnp.bfloat16)
        k3 = k.reshape(N, S, E).astype(jnp.bfloat16)
        v3 = v.reshape(N, S, E).astype(jnp.bfloat16)

        # ---- attention scores for all heads, stacked on a MAJOR axis --------------
        sc_heads = []
        for hd in range(H):
            sl = slice(hd * dh, (hd + 1) * dh)
            sc_heads.append(jnp.einsum('nsd,ntd->nst', q3[:, :, sl], k3[:, :, sl],
                                       preferred_element_type=jnp.float32))
        sc = jnp.stack(sc_heads, axis=1)                        # (N, H, S, S) f32

        # ONE softmax over all heads; reciprocal goes to the (otherwise idle) EUP
        sc = sc - jnp.max(sc, axis=-1, keepdims=True)
        p = jnp.exp(sc)
        p = p * pl.reciprocal(jnp.sum(p, axis=-1, keepdims=True), approx=True)
        p16 = p.astype(jnp.bfloat16)

        # ---- context + output projection accumulated per head (no lane concat) ----
        attn = bo                                               # (1, E) -> broadcasts
        for hd in range(H):
            ctx = jnp.einsum('nst,ntd->nsd', p16[:, hd],
                             v3[:, :, hd * dh:(hd + 1) * dh],
                             preferred_element_type=jnp.float32)          # (N, S, dh)
            attn = attn + jnp.dot(ctx.reshape(M, dh).astype(jnp.bfloat16), wo_l[hd],
                                  preferred_element_type=jnp.float32)

        # ---- residual + LayerNorm 1 (biased variance, eps=1e-5) --------------------
        h1 = act + attn
        mu = jnp.mean(h1, axis=-1, keepdims=True)
        var = jnp.mean((h1 - mu) ** 2, axis=-1, keepdims=True)
        y = (h1 - mu) * jax.lax.rsqrt(var + EPS_LN) * ln1w + ln1b

        # ---- feed-forward (ReLU) ----------------------------------------------------
        f = jnp.dot(y.astype(jnp.bfloat16), w1_ref[l],
                    preferred_element_type=jnp.float32) + b1
        f = jnp.maximum(f, 0.0)
        f = jnp.dot(f.astype(jnp.bfloat16), w2_ref[l],
                    preferred_element_type=jnp.float32) + b2

        # ---- residual + LayerNorm 2 -------------------------------------------------
        h2 = y + f
        mu2 = jnp.mean(h2, axis=-1, keepdims=True)
        var2 = jnp.mean((h2 - mu2) ** 2, axis=-1, keepdims=True)
        act = (h2 - mu2) * jax.lax.rsqrt(var2 + EPS_LN) * ln2w + ln2b

    # ---- final fc: cat([out, p_u]) @ W + b  ==  out @ W_top + (p_u @ W_bot + b) -----
    y_top = jnp.dot(act.astype(jnp.bfloat16), fcw_ref[0],
                    preferred_element_type=jnp.float32)                    # (M, Vp)
    pu_term = (jnp.dot(pu_ref[...].astype(jnp.bfloat16), fcw_ref[1],
                       preferred_element_type=jnp.float32) + fcb_ref[...])  # (N, Vp)
    Vp = y_top.shape[-1]
    y_out = y_top.reshape(N, S, Vp) + pu_term[:, None, :]
    o_ref[...] = y_out.astype(o_ref.dtype)      # full-lane stores (Vp % 128 == 0)


# ----------------------------------------------------------------------------- wrapper
def transformer_fc_fused(x_flat, p_u, params):
    """x_flat: (N*S, E) f32; p_u: (N, E) f32. Returns (N, S, Vp) f32."""
    M, _ = x_flat.shape
    N = p_u.shape[0]
    S = M // N
    L = params["wqkv"].shape[0]
    Vp = params["fcw"].shape[-1]
    # Single no-grid invocation: weights + activations are << VMEM on v5e/v6e/v7x,
    # so every operand stays VMEM-resident for the whole call.
    # TODO(synk): for a non-toy batch (N >= a few hundred) add a grid over N with
    #             dimension_semantics=("parallel",) to use v7x's second TensorCore.
    return pl.pallas_call(
        partial(fused_kernel, nhead=NHEAD, num_layers=L, seq_len=S),
        out_shape=jax.ShapeDtypeStruct((N, S, Vp), jnp.float32),
    )(x_flat, p_u, params["wqkv"], params["wo"], params["w1"], params["w2"],
      params["vec"], params["fcw"], params["fcb"])


# ----------------------------------------------------------------------------- params
def make_positional_encoding(max_len, d_model):
    position = jnp.arange(max_len, dtype=jnp.float32)[:, None]
    div_term = jnp.exp(jnp.arange(0, d_model, 2, dtype=jnp.float32)
                       * (-math.log(10000.0) / d_model))
    pe = jnp.zeros((max_len, d_model), dtype=jnp.float32)
    pe = pe.at[:, 0::2].set(jnp.sin(position * div_term))
    pe = pe.at[:, 1::2].set(jnp.cos(position * div_term))
    return pe


def init_params(key, input_size, user_count, hidden, num_layers=NUM_LAYERS, max_len=64):
    E, FF, H = hidden, DIM_FF, NHEAD
    dh = E // H
    Vp = ((input_size + 127) // 128) * 128          # lane-pad fc output to 128

    keys = iter(jax.random.split(key, 3 + 6 * num_layers))

    def nrm(k, shape, scl=0.02):
        return scl * jax.random.normal(k, shape, dtype=jnp.float32)

    embed = nrm(next(keys), (input_size, E), 1.0)
    user_embed = nrm(next(keys), (user_count, E), 1.0)
    fc_w = nrm(next(keys), (2 * E, input_size))     # (2E, V), (in, out) layout

    wqkv, wo, w1, w2, vec = [], [], [], [], []
    for _ in range(num_layers):
        wqkv.append(jnp.stack([nrm(next(keys), (E, E)) for _ in range(3)]))  # (3,E,E)
        wo.append(nrm(next(keys), (E, E)).reshape(H, dh, E))                 # (H,dh,E)
        w1.append(nrm(next(keys), (E, FF)))
        w2.append(nrm(next(keys), (FF, E)))
        slab = jnp.zeros((16, 128), jnp.float32)     # packed 1-row params
        slab = slab.at[ROW_LN1W, :E].set(1.0)        # LayerNorm weights = ones
        slab = slab.at[ROW_LN2W, :E].set(1.0)
        # all Linear / LayerNorm biases left at zero for the demo init
        vec.append(slab)

    fcw = jnp.zeros((2, E, Vp), jnp.float32)
    fcw = fcw.at[0, :, :input_size].set(fc_w[:E])    # multiplies the encoder output
    fcw = fcw.at[1, :, :input_size].set(fc_w[E:])    # multiplies the user embedding

    return {
        "embed": embed,
        "user_embed": user_embed,
        "pe": make_positional_encoding(max_len, E),
        "wqkv": jnp.stack(wqkv).astype(jnp.bfloat16),   # (L, 3, E, E)
        "wo":   jnp.stack(wo).astype(jnp.bfloat16),     # (L, H, dh, E)
        "w1":   jnp.stack(w1).astype(jnp.bfloat16),     # (L, E, FF)
        "w2":   jnp.stack(w2).astype(jnp.bfloat16),     # (L, FF, E)
        "vec":  jnp.stack(vec),                         # (L, 16, 128) f32
        "fcw":  fcw.astype(jnp.bfloat16),               # (2, E, Vp)
        "fcb":  jnp.zeros((1, Vp), jnp.float32),
    }


# ----------------------------------------------------------------------------- forward
def forward(params, x, t, s, y_t, y_s, h, active_user):
    """Mirrors LocationPrediction_Transformer.forward (eval mode, dropout = identity)."""
    S, N = x.shape
    E = params["embed"].shape[1]
    V = params["embed"].shape[0]        # location vocabulary == fc output width

    # embedding gathered directly in user-major (N, S, E) layout + positional encoding
    x_emb = params["embed"][x.T] + params["pe"][None, :S, :]       # (N, S, E)
    p_u = params["user_embed"][active_user.reshape(-1)]            # (N, E)

    out = transformer_fc_fused(x_emb.reshape(N * S, E), p_u, params)   # (N, S, Vp)
    y_linear = jnp.transpose(out[:, :, :V], (1, 0, 2))             # (S, N, V) PyTorch layout
    return y_linear, h


# ----------------------------------------------------------------------------- main
if __name__ == "__main__":
    input_size = 64   # location vocabulary
    user_count = 16
    hidden = HIDDEN
    S, N = 8, 4       # seq_len, user_len

    root = jax.random.PRNGKey(0)
    pkey, xkey, ukey = jax.random.split(root, 3)

    params = init_params(pkey, input_size, user_count, hidden)

    x = jax.random.randint(xkey, (S, N), 0, input_size)            # location ids
    active_user = jax.random.randint(ukey, (1, N), 0, user_count)  # user ids
    # unused-by-forward auxiliary inputs (kept for signature fidelity)
    t = jnp.zeros((S, N), jnp.float32)
    s = jnp.zeros((S, N, 2), jnp.float32)
    y_t = jnp.zeros((S, N), jnp.float32)
    y_s = jnp.zeros((S, N, 2), jnp.float32)
    h = jnp.zeros((1, N, hidden), jnp.float32)

    fwd = jax.jit(forward)
    y_linear, h_out = fwd(params, x, t, s, y_t, y_s, h, active_user)
    y_linear = jax.block_until_ready(y_linear)

    assert y_linear.shape == (S, N, input_size)
    assert h_out.shape == h.shape
    assert bool(jnp.all(jnp.isfinite(y_linear)))
    print("KERNEL_OK")
</pallas_src>

<mosaic_0001>
module attributes {stable_mosaic.version = 11 : i64} {
  func.func @fused_kernel(%arg0: memref<32x32xf32, #tpu.memory_space<vmem>>, %arg1: memref<4x32xf32, #tpu.memory_space<vmem>>, %arg2: memref<3x3x32x32xbf16, #tpu.memory_space<vmem>>, %arg3: memref<3x4x8x32xbf16, #tpu.memory_space<vmem>>, %arg4: memref<3x32x64xbf16, #tpu.memory_space<vmem>>, %arg5: memref<3x64x32xbf16, #tpu.memory_space<vmem>>, %arg6: memref<3x16x128xf32, #tpu.memory_space<vmem>>, %arg7: memref<2x32x128xbf16, #tpu.memory_space<vmem>>, %arg8: memref<1x128xf32, #tpu.memory_space<vmem>>, %arg9: memref<4x8x128xf32, #tpu.memory_space<vmem>>) attributes {dimension_semantics = [], scalar_prefetch = 0 : i64, scratch_operands = 0 : i64, tpu.core_type = #tpu.core_type<tc>} {
    %c0 = arith.constant 0 : index
    %c0_0 = arith.constant 0 : index
    %0 = vector.load %arg0[%c0, %c0_0] : memref<32x32xf32, #tpu.memory_space<vmem>>, vector<32x32xf32>
    %c0_1 = arith.constant 0 : index
    %c0_2 = arith.constant 0 : index
    %c0_3 = arith.constant 0 : index
    %1 = vector.load %arg6[%c0_1, %c0_2, %c0_3] : memref<3x16x128xf32, #tpu.memory_space<vmem>>, vector<1x16x128xf32>
    %2 = vector.shape_cast %1 : vector<1x16x128xf32> to vector<16x128xf32>
    %3 = vector.extract_strided_slice %2 {offsets = [0, 0], sizes = [1, 32], strides = [1, 1]} : vector<16x128xf32> to vector<1x32xf32>
    %4 = vector.extract_strided_slice %2 {offsets = [1, 0], sizes = [1, 32], strides = [1, 1]} : vector<16x128xf32> to vector<1x32xf32>
    %5 = vector.extract_strided_slice %2 {offsets = [2, 0], sizes = [1, 32], strides = [1, 1]} : vector<16x128xf32> to vector<1x32xf32>
    %6 = vector.extract_strided_slice %2 {offsets = [3, 0], sizes = [1, 32], strides = [1, 1]} : vector<16x128xf32> to vector<1x32xf32>
    %7 = vector.extract_strided_slice %2 {offsets = [4, 0], sizes = [1, 32], strides = [1, 1]} : vector<16x128xf32> to vector<1x32xf32>
    %8 = vector.extract_strided_slice %2 {offsets = [5, 0], sizes = [1, 32], strides = [1, 1]} : vector<16x128xf32> to vector<1x32xf32>
    %9 = vector.extract_strided_slice %2 {offsets = [6, 0], sizes = [1, 64], strides = [1, 1]} : vector<16x128xf32> to vector<1x64xf32>
    %10 = vector.extract_strided_slice %2 {offsets = [7, 0], sizes = [1, 32], strides = [1, 1]} : vector<16x128xf32> to vector<1x32xf32>
    %11 = vector.extract_strided_slice %2 {offsets = [8, 0], sizes = [1, 32], strides = [1, 1]} : vector<16x128xf32> to vector<1x32xf32>
    %12 = vector.extract_strided_slice %2 {offsets = [9, 0], sizes = [1, 32], strides = [1, 1]} : vector<16x128xf32> to vector<1x32xf32>
    %c0_4 = arith.constant 0 : index
    %c0_5 = arith.constant 0 : index
    %c0_6 = arith.constant 0 : index
    %c0_7 = arith.constant 0 : index
    %13 = vector.load %arg2[%c0_4, %c0_5, %c0_6, %c0_7] : memref<3x3x32x32xbf16, #tpu.memory_space<vmem>>, vector<1x3x32x32xbf16>
    %14 = vector.shape_cast %13 : vector<1x3x32x32xbf16> to vector<3x32x32xbf16>
    %c0_8 = arith.constant 0 : index
    %c0_9 = arith.constant 0 : index
    %c0_10 = arith.constant 0 : index
    %c0_11 = arith.constant 0 : index
    %15 = vector.load %arg3[%c0_8, %c0_9, %c0_10, %c0_11] : memref<3x4x8x32xbf16, #tpu.memory_space<vmem>>, vector<1x4x8x32xbf16>
    %16 = vector.shape_cast %15 : vector<1x4x8x32xbf16> to vector<4x8x32xbf16>
    %17 = arith.truncf %0 : vector<32x32xf32> to vector<32x32xbf16>
    %18 = vector.extract_strided_slice %14 {offsets = [0, 0, 0], sizes = [1, 32, 32], strides = [1, 1, 1]} : vector<3x32x32xbf16> to vector<1x32x32xbf16>
    %19 = vector.shape_cast %18 : vector<1x32x32xbf16> to vector<32x32xbf16>
    %cst = arith.constant dense<0.000000e+00> : vector<32x32xf32>
    %20 = tpu.matmul %17, %19, %cst {dimension_numbers = #tpu.dot_dimension_numbers<[1], [0], [0], [1], [0, 0, 1, 1], [], []>} : vector<32x32xbf16>, vector<32x32xbf16>, vector<32x32xf32> -> vector<32x32xf32>
    %21 = vector.broadcast %3 : vector<1x32xf32> to vector<32x32xf32>
    %22 = arith.addf %20, %21 : vector<32x32xf32>
    %23 = vector.extract_strided_slice %14 {offsets = [1, 0, 0], sizes = [1, 32, 32], strides = [1, 1, 1]} : vector<3x32x32xbf16> to vector<1x32x32xbf16>
    %24 = vector.shape_cast %23 : vector<1x32x32xbf16> to vector<32x32xbf16>
    %cst_12 = arith.constant dense<0.000000e+00> : vector<32x32xf32>
    %25 = tpu.matmul %17, %24, %cst_12 {dimension_numbers = #tpu.dot_dimension_numbers<[1], [0], [0], [1], [0, 0, 1, 1], [], []>} : vector<32x32xbf16>, vector<32x32xbf16>, vector<32x32xf32> -> vector<32x32xf32>
    %26 = vector.broadcast %4 : vector<1x32xf32> to vector<32x32xf32>
    %27 = arith.addf %25, %26 : vector<32x32xf32>
    %28 = vector.extract_strided_slice %14 {offsets = [2, 0, 0], sizes = [1, 32, 32], strides = [1, 1, 1]} : vector<3x32x32xbf16> to vector<1x32x32xbf16>
    %29 = vector.shape_cast %28 : vector<1x32x32xbf16> to vector<32x32xbf16>
    %cst_13 = arith.constant dense<0.000000e+00> : vector<32x32xf32>
    %30 = tpu.matmul %17, %29, %cst_13 {dimension_numbers = #tpu.dot_dimension_numbers<[1], [0], [0], [1], [0, 0, 1, 1], [], []>} : vector<32x32xbf16>, vector<32x32xbf16>, vector<32x32xf32> -> vector<32x32xf32>
    %31 = vector.broadcast %5 : vector<1x32xf32> to vector<32x32xf32>
    %32 = arith.addf %30, %31 : vector<32x32xf32>
    %cst_14 = arith.constant 0.353553385 : f32
    %33 = vector.broadcast %cst_14 : f32 to vector<32x32xf32>
    %34 = arith.mulf %22, %33 : vector<32x32xf32>
    %35 = vector.shape_cast %34 : vector<32x32xf32> to vector<4x8x32xf32>
    %36 = arith.truncf %35 : vector<4x8x32xf32> to vector<4x8x32xbf16>
    %37 = vector.shape_cast %27 : vector<32x32xf32> to vector<4x8x32xf32>
    %38 = arith.truncf %37 : vector<4x8x32xf32> to vector<4x8x32xbf16>
    %39 = vector.shape_cast %32 : vector<32x32xf32> to vector<4x8x32xf32>
    %40 = arith.truncf %39 : vector<4x8x32xf32> to vector<4x8x32xbf16>
    %41 = vector.extract_strided_slice %36 {offsets = [0, 0, 0], sizes = [4, 8, 8], strides = [1, 1, 1]} : vector<4x8x32xbf16> to vector<4x8x8xbf16>
    %42 = vector.extract_strided_slice %38 {offsets = [0, 0, 0], sizes = [4, 8, 8], strides = [1, 1, 1]} : vector<4x8x32xbf16> to vector<4x8x8xbf16>
    "tpu.trace_start"() <{level = 10 : i32, message = "nsd,ntd->nst"}> : () -> ()
    %cst_15 = arith.constant dense<0.000000e+00> : vector<4x8x8xf32>
    %43 = tpu.matmul %41, %42, %cst_15 {dimension_numbers = #tpu.dot_dimension_numbers<[2], [2], [1], [1], [0, 0, 0, 1, 1, 1], [0], [0]>} : vector<4x8x8xbf16>, vector<4x8x8xbf16>, vector<4x8x8xf32> -> vector<4x8x8xf32>
    "tpu.trace_stop"() : () -> ()
    %44 = vector.extract_strided_slice %36 {offsets = [0, 0, 8], sizes = [4, 8, 8], strides = [1, 1, 1]} : vector<4x8x32xbf16> to vector<4x8x8xbf16>
    %45 = vector.extract_strided_slice %38 {offsets = [0, 0, 8], sizes = [4, 8, 8], strides = [1, 1, 1]} : vector<4x8x32xbf16> to vector<4x8x8xbf16>
    "tpu.trace_start"() <{level = 10 : i32, message = "nsd,ntd->nst"}> : () -> ()
    %cst_16 = arith.constant dense<0.000000e+00> : vector<4x8x8xf32>
    %46 = tpu.matmul %44, %45, %cst_16 {dimension_numbers = #tpu.dot_dimension_numbers<[2], [2], [1], [1], [0, 0, 0, 1, 1, 1], [0], [0]>} : vector<4x8x8xbf16>, vector<4x8x8xbf16>, vector<4x8x8xf32> -> vector<4x8x8xf32>
    "tpu.trace_stop"() : () -> ()
    %47 = vector.extract_strided_slice %36 {offsets = [0, 0, 16], sizes = [4, 8, 8], strides = [1, 1, 1]} : vector<4x8x32xbf16> to vector<4x8x8xbf16>
    %48 = vector.extract_strided_slice %38 {offsets = [0, 0, 16], sizes = [4, 8, 8], strides = [1, 1, 1]} : vector<4x8x32xbf16> to vector<4x8x8xbf16>
    "tpu.trace_start"() <{level = 10 : i32, message = "nsd,ntd->nst"}> : () -> ()
    %cst_17 = arith.constant dense<0.000000e+00> : vector<4x8x8xf32>
    %49 = tpu.matmul %47, %48, %cst_17 {dimension_numbers = #tpu.dot_dimension_numbers<[2], [2], [1], [1], [0, 0, 0, 1, 1, 1], [0], [0]>} : vector<4x8x8xbf16>, vector<4x8x8xbf16>, vector<4x8x8xf32> -> vector<4x8x8xf32>
    "tpu.trace_stop"() : () -> ()
    %50 = vector.extract_strided_slice %36 {offsets = [0, 0, 24], sizes = [4, 8, 8], strides = [1, 1, 1]} : vector<4x8x32xbf16> to vector<4x8x8xbf16>
    %51 = vector.extract_strided_slice %38 {offsets = [0, 0, 24], sizes = [4, 8, 8], strides = [1, 1, 1]} : vector<4x8x32xbf16> to vector<4x8x8xbf16>
    "tpu.trace_start"() <{level = 10 : i32, message = "nsd,ntd->nst"}> : () -> ()
    %cst_18 = arith.constant dense<0.000000e+00> : vector<4x8x8xf32>
    %52 = tpu.matmul %50, %51, %cst_18 {dimension_numbers = #tpu.dot_dimension_numbers<[2], [2], [1], [1], [0, 0, 0, 1, 1, 1], [0], [0]>} : vector<4x8x8xbf16>, vector<4x8x8xbf16>, vector<4x8x8xf32> -> vector<4x8x8xf32>
    "tpu.trace_stop"() : () -> ()
    %53 = vector.shape_cast %43 : vector<4x8x8xf32> to vector<4x1x8x8xf32>
    %54 = vector.shape_cast %46 : vector<4x8x8xf32> to vector<4x1x8x8xf32>
    %55 = vector.shape_cast %49 : vector<4x8x8xf32> to vector<4x1x8x8xf32>
    %56 = vector.shape_cast %52 : vector<4x8x8xf32> to vector<4x1x8x8xf32>
    %57 = tpu.concatenate %53, %54, %55, %56 in 1 : vector<4x1x8x8xf32>, vector<4x1x8x8xf32>, vector<4x1x8x8xf32>, vector<4x1x8x8xf32> -> vector<4x4x8x8xf32>
    %cst_19 = arith.constant dense<0xFF800000> : vector<4x4x8xf32>
    %58 = vector.multi_reduction <maximumf>, %57, %cst_19 [3] : vector<4x4x8x8xf32> to vector<4x4x8xf32>
    %59 = vector.shape_cast %58 : vector<4x4x8xf32> to vector<4x4x8x1xf32>
    %60 = vector.broadcast %59 : vector<4x4x8x1xf32> to vector<4x4x8x8xf32>
    %61 = arith.subf %57, %60 : vector<4x4x8x8xf32>
    %62 = math.exp %61 : vector<4x4x8x8xf32>
    %cst_20 = arith.constant dense<0.000000e+00> : vector<4x4x8xf32>
    %63 = vector.multi_reduction <add>, %62, %cst_20 [3] : vector<4x4x8x8xf32> to vector<4x4x8xf32>
    %64 = vector.shape_cast %63 : vector<4x4x8xf32> to vector<4x4x8x1xf32>
    %65 = tpu.reciprocal %64 {approx = true} : vector<4x4x8x1xf32> -> vector<4x4x8x1xf32>
    %66 = vector.broadcast %65 : vector<4x4x8x1xf32> to vector<4x4x8x8xf32>
    %67 = arith.mulf %62, %66 : vector<4x4x8x8xf32>
    %68 = arith.truncf %67 : vector<4x4x8x8xf32> to vector<4x4x8x8xbf16>
    %69 = vector.extract_strided_slice %68 {offsets = [0, 0, 0, 0], sizes = [4, 1, 8, 8], strides = [1, 1, 1, 1]} : vector<4x4x8x8xbf16> to vector<4x1x8x8xbf16>
    %70 = vector.shape_cast %69 : vector<4x1x8x8xbf16> to vector<4x8x8xbf16>
    %71 = vector.extract_strided_slice %40 {offsets = [0, 0, 0], sizes = [4, 8, 8], strides = [1, 1, 1]} : vector<4x8x32xbf16> to vector<4x8x8xbf16>
    "tpu.trace_start"() <{level = 10 : i32, message = "nst,ntd->nsd"}> : () -> ()
    %cst_21 = arith.constant dense<0.000000e+00> : vector<4x8x8xf32>
    %72 = tpu.matmul %70, %71, %cst_21 {dimension_numbers = #tpu.dot_dimension_numbers<[2], [1], [1], [2], [0, 0, 0, 1, 1, 2], [0], [0]>} : vector<4x8x8xbf16>, vector<4x8x8xbf16>, vector<4x8x8xf32> -> vector<4x8x8xf32>
    "tpu.trace_stop"() : () -> ()
    %73 = vector.shape_cast %72 : vector<4x8x8xf32> to vector<32x8xf32>
    %74 = arith.truncf %73 : vector<32x8xf32> to vector<32x8xbf16>
    %75 = vector.extract_strided_slice %16 {offsets = [0, 0, 0], sizes = [1, 8, 32], strides = [1, 1, 1]} : vector<4x8x32xbf16> to vector<1x8x32xbf16>
    %76 = vector.shape_cast %75 : vector<1x8x32xbf16> to vector<8x32xbf16>
    %cst_22 = arith.constant dense<0.000000e+00> : vector<32x32xf32>
    %77 = tpu.matmul %74, %76, %cst_22 {dimension_numbers = #tpu.dot_dimension_numbers<[1], [0], [0], [1], [0, 0, 1, 1], [], []>} : vector<32x8xbf16>, vector<8x32xbf16>, vector<32x32xf32> -> vector<32x32xf32>
    %78 = vector.broadcast %6 : vector<1x32xf32> to vector<32x32xf32>
    %79 = arith.addf %78, %77 : vector<32x32xf32>
    %80 = vector.extract_strided_slice %68 {offsets = [0, 1, 0, 0], sizes = [4, 1, 8, 8], strides = [1, 1, 1, 1]} : vector<4x4x8x8xbf16> to vector<4x1x8x8xbf16>
    %81 = vector.shape_cast %80 : vector<4x1x8x8xbf16> to vector<4x8x8xbf16>
    %82 = vector.extract_strided_slice %40 {offsets = [0, 0, 8], sizes = [4, 8, 8], strides = [1, 1, 1]} : vector<4x8x32xbf16> to vector<4x8x8xbf16>
    "tpu.trace_start"() <{level = 10 : i32, message = "nst,ntd->nsd"}> : () -> ()
    %cst_23 = arith.constant dense<0.000000e+00> : vector<4x8x8xf32>
    %83 = tpu.matmul %81, %82, %cst_23 {dimension_numbers = #tpu.dot_dimension_numbers<[2], [1], [1], [2], [0, 0, 0, 1, 1, 2], [0], [0]>} : vector<4x8x8xbf16>, vector<4x8x8xbf16>, vector<4x8x8xf32> -> vector<4x8x8xf32>
    "tpu.trace_stop"() : () -> ()
    %84 = vector.shape_cast %83 : vector<4x8x8xf32> to vector<32x8xf32>
    %85 = arith.truncf %84 : vector<32x8xf32> to vector<32x8xbf16>
    %86 = vector.extract_strided_slice %16 {offsets = [1, 0, 0], sizes = [1, 8, 32], strides = [1, 1, 1]} : vector<4x8x32xbf16> to vector<1x8x32xbf16>
    %87 = vector.shape_cast %86 : vector<1x8x32xbf16> to vector<8x32xbf16>
    %cst_24 = arith.constant dense<0.000000e+00> : vector<32x32xf32>
    %88 = tpu.matmul %85, %87, %cst_24 {dimension_numbers = #tpu.dot_dimension_numbers<[1], [0], [0], [1], [0, 0, 1, 1], [], []>} : vector<32x8xbf16>, vector<8x32xbf16>, vector<32x32xf32> -> vector<32x32xf32>
    %89 = arith.addf %79, %88 : vector<32x32xf32>
    %90 = vector.extract_strided_slice %68 {offsets = [0, 2, 0, 0], sizes = [4, 1, 8, 8], strides = [1, 1, 1, 1]} : vector<4x4x8x8xbf16> to vector<4x1x8x8xbf16>
    %91 = vector.shape_cast %90 : vector<4x1x8x8xbf16> to vector<4x8x8xbf16>
    %92 = vector.extract_strided_slice %40 {offsets = [0, 0, 16], sizes = [4, 8, 8], strides = [1, 1, 1]} : vector<4x8x32xbf16> to vector<4x8x8xbf16>
    "tpu.trace_start"() <{level = 10 : i32, message = "nst,ntd->nsd"}> : () -> ()
    %cst_25 = arith.constant dense<0.000000e+00> : vector<4x8x8xf32>
    %93 = tpu.matmul %91, %92, %cst_25 {dimension_numbers = #tpu.dot_dimension_numbers<[2], [1], [1], [2], [0, 0, 0, 1, 1, 2], [0], [0]>} : vector<4x8x8xbf16>, vector<4x8x8xbf16>, vector<4x8x8xf32> -> vector<4x8x8xf32>
    "tpu.trace_stop"() : () -> ()
    %94 = vector.shape_cast %93 : vector<4x8x8xf32> to vector<32x8xf32>
    %95 = arith.truncf %94 : vector<32x8xf32> to vector<32x8xbf16>
    %96 = vector.extract_strided_slice %16 {offsets = [2, 0, 0], sizes = [1, 8, 32], strides = [1, 1, 1]} : vector<4x8x32xbf16> to vector<1x8x32xbf16>
    %97 = vector.shape_cast %96 : vector<1x8x32xbf16> to vector<8x32xbf16>
    %cst_26 = arith.constant dense<0.000000e+00> : vector<32x32xf32>
    %98 = tpu.matmul %95, %97, %cst_26 {dimension_numbers = #tpu.dot_dimension_numbers<[1], [0], [0], [1], [0, 0, 1, 1], [], []>} : vector<32x8xbf16>, vector<8x32xbf16>, vector<32x32xf32> -> vector<32x32xf32>
    %99 = arith.addf %89, %98 : vector<32x32xf32>
    %100 = vector.extract_strided_slice %68 {offsets = [0, 3, 0, 0], sizes = [4, 1, 8, 8], strides = [1, 1, 1, 1]} : vector<4x4x8x8xbf16> to vector<4x1x8x8xbf16>
    %101 = vector.shape_cast %100 : vector<4x1x8x8xbf16> to vector<4x8x8xbf16>
    %102 = vector.extract_strided_slice %40 {offsets = [0, 0, 24], sizes = [4, 8, 8], strides = [1, 1, 1]} : vector<4x8x32xbf16> to vector<4x8x8xbf16>
    "tpu.trace_start"() <{level = 10 : i32, message = "nst,ntd->nsd"}> : () -> ()
    %cst_27 = arith.constant dense<0.000000e+00> : vector<4x8x8xf32>
    %103 = tpu.matmul %101, %102, %cst_27 {dimension_numbers = #tpu.dot_dimension_numbers<[2], [1], [1], [2], [0, 0, 0, 1, 1, 2], [0], [0]>} : vector<4x8x8xbf16>, vector<4x8x8xbf16>, vector<4x8x8xf32> -> vector<4x8x8xf32>
    "tpu.trace_stop"() : () -> ()
    %104 = vector.shape_cast %103 : vector<4x8x8xf32> to vector<32x8xf32>
    %105 = arith.truncf %104 : vector<32x8xf32> to vector<32x8xbf16>
    %106 = vector.extract_strided_slice %16 {offsets = [3, 0, 0], sizes = [1, 8, 32], strides = [1, 1, 1]} : vector<4x8x32xbf16> to vector<1x8x32xbf16>
    %107 = vector.shape_cast %106 : vector<1x8x32xbf16> to vector<8x32xbf16>
    %cst_28 = arith.constant dense<0.000000e+00> : vector<32x32xf32>
    %108 = tpu.matmul %105, %107, %cst_28 {dimension_numbers = #tpu.dot_dimension_numbers<[1], [0], [0], [1], [0, 0, 1, 1], [], []>} : vector<32x8xbf16>, vector<8x32xbf16>, vector<32x32xf32> -> vector<32x32xf32>
    %109 = arith.addf %99, %108 : vector<32x32xf32>
    %110 = arith.addf %0, %109 : vector<32x32xf32>
    %cst_29 = arith.constant dense<0.000000e+00> : vector<32xf32>
    %111 = vector.multi_reduction <add>, %110, %cst_29 [1] : vector<32x32xf32> to vector<32xf32>
    %112 = vector.shape_cast %111 : vector<32xf32> to vector<32x1xf32>
    %cst_30 = arith.constant 3.200000e+01 : f32
    %113 = vector.broadcast %cst_30 : f32 to vector<32x1xf32>
    %114 = arith.divf %112, %113 : vector<32x1xf32>
    %115 = vector.broadcast %114 : vector<32x1xf32> to vector<32x32xf32>
    %116 = arith.subf %110, %115 : vector<32x32xf32>
    %117 = arith.mulf %116, %116 : vector<32x32xf32>
    %cst_31 = arith.constant dense<0.000000e+00> : vector<32xf32>
    %118 = vector.multi_reduction <add>, %117, %cst_31 [1] : vector<32x32xf32> to vector<32xf32>
    %119 = vector.shape_cast %118 : vector<32xf32> to vector<32x1xf32>
    %cst_32 = arith.constant 3.200000e+01 : f32
    %120 = vector.broadcast %cst_32 : f32 to vector<32x1xf32>
    %121 = arith.divf %119, %120 : vector<32x1xf32>
    %122 = vector.broadcast %114 : vector<32x1xf32> to vector<32x32xf32>
    %123 = arith.subf %110, %122 : vector<32x32xf32>
    %cst_33 = arith.constant 9.99999974E-6 : f32
    %124 = vector.broadcast %cst_33 : f32 to vector<32x1xf32>
    %125 = arith.addf %121, %124 : vector<32x1xf32>
    %126 = math.rsqrt %125 : vector<32x1xf32>
    %127 = vector.broadcast %126 : vector<32x1xf32> to vector<32x32xf32>
    %128 = arith.mulf %123, %127 : vector<32x32xf32>
    %129 = vector.broadcast %7 : vector<1x32xf32> to vector<32x32xf32>
    %130 = arith.mulf %128, %129 : vector<32x32xf32>
    %131 = vector.broadcast %8 : vector<1x32xf32> to vector<32x32xf32>
    %132 = arith.addf %130, %131 : vector<32x32xf32>
    %133 = arith.truncf %132 : vector<32x32xf32> to vector<32x32xbf16>
    %c0_34 = arith.constant 0 : index
    %c0_35 = arith.constant 0 : index
    %c0_36 = arith.constant 0 : index
    %134 = vector.load %arg4[%c0_34, %c0_35, %c0_36] : memref<3x32x64xbf16, #tpu.memory_space<vmem>>, vector<1x32x64xbf16>
    %135 = vector.shape_cast %134 : vector<1x32x64xbf16> to vector<32x64xbf16>
    %cst_37 = arith.constant dense<0.000000e+00> : vector<32x64xf32>
    %136 = tpu.matmul %133, %135, %cst_37 {dimension_numbers = #tpu.dot_dimension_numbers<[1], [0], [0], [1], [0, 0, 1, 1], [], []>} : vector<32x32xbf16>, vector<32x64xbf16>, vector<32x64xf32> -> vector<32x64xf32>
    %137 = vector.broadcast %9 : vector<1x64xf32> to vector<32x64xf32>
    %138 = arith.addf %136, %137 : vector<32x64xf32>
    %cst_38 = arith.constant 0.000000e+00 : f32
    %139 = vector.broadcast %cst_38 : f32 to vector<32x64xf32>
    %140 = arith.maximumf %138, %139 : vector<32x64xf32>
    %141 = arith.truncf %140 : vector<32x64xf32> to vector<32x64xbf16>
    %c0_39 = arith.constant 0 : index
    %c0_40 = arith.constant 0 : index
    %c0_41 = arith.constant 0 : index
    %142 = vector.load %arg5[%c0_39, %c0_40, %c0_41] : memref<3x64x32xbf16, #tpu.memory_space<vmem>>, vector<1x64x32xbf16>
    %143 = vector.shape_cast %142 : vector<1x64x32xbf16> to vector<64x32xbf16>
    %cst_42 = arith.constant dense<0.000000e+00> : vector<32x32xf32>
    %144 = tpu.matmul %141, %143, %cst_42 {dimension_numbers = #tpu.dot_dimension_numbers<[1], [0], [0], [1], [0, 0, 1, 1], [], []>} : vector<32x64xbf16>, vector<64x32xbf16>, vector<32x32xf32> -> vector<32x32xf32>
    %145 = vector.broadcast %10 : vector<1x32xf32> to vector<32x32xf32>
    %146 = arith.addf %144, %145 : vector<32x32xf32>
    %147 = arith.addf %132, %146 : vector<32x32xf32>
    %cst_43 = arith.constant dense<0.000000e+00> : vector<32xf32>
    %148 = vector.multi_reduction <add>, %147, %cst_43 [1] : vector<32x32xf32> to vector<32xf32>
    %149 = vector.shape_cast %148 : vector<32xf32> to vector<32x1xf32>
    %cst_44 = arith.constant 3.200000e+01 : f32
    %150 = vector.broadcast %cst_44 : f32 to vector<32x1xf32>
    %151 = arith.divf %149, %150 : vector<32x1xf32>
    %152 = vector.broadcast %151 : vector<32x1xf32> to vector<32x32xf32>
    %153 = arith.subf %147, %152 : vector<32x32xf32>
    %154 = arith.mulf %153, %153 : vector<32x32xf32>
    %cst_45 = arith.constant dense<0.000000e+00> : vector<32xf32>
    %155 = vector.multi_reduction <add>, %154, %cst_45 [1] : vector<32x32xf32> to vector<32xf32>
    %156 = vector.shape_cast %155 : vector<32xf32> to vector<32x1xf32>
    %cst_46 = arith.constant 3.200000e+01 : f32
    %157 = vector.broadcast %cst_46 : f32 to vector<32x1xf32>
    %158 = arith.divf %156, %157 : vector<32x1xf32>
    %159 = vector.broadcast %151 : vector<32x1xf32> to vector<32x32xf32>
    %160 = arith.subf %147, %159 : vector<32x32xf32>
    %cst_47 = arith.constant 9.99999974E-6 : f32
    %161 = vector.broadcast %cst_47 : f32 to vector<32x1xf32>
    %162 = arith.addf %158, %161 : vector<32x1xf32>
    %163 = math.rsqrt %162 : vector<32x1xf32>
    %164 = vector.broadcast %163 : vector<32x1xf32> to vector<32x32xf32>
    %165 = arith.mulf %160, %164 : vector<32x32xf32>
    %166 = vector.broadcast %11 : vector<1x32xf32> to vector<32x32xf32>
    %167 = arith.mulf %165, %166 : vector<32x32xf32>
    %168 = vector.broadcast %12 : vector<1x32xf32> to vector<32x32xf32>
    %169 = arith.addf %167, %168 : vector<32x32xf32>
    %c1 = arith.constant 1 : index
    %c0_48 = arith.constant 0 : index
    %c0_49 = arith.constant 0 : index
    %170 = vector.load %arg6[%c1, %c0_48, %c0_49] : memref<3x16x128xf32, #tpu.memory_space<vmem>>, vector<1x16x128xf32>
    %171 = vector.shape_cast %170 : vector<1x16x128xf32> to vector<16x128xf32>
    %172 = vector.extract_strided_slice %171 {offsets = [0, 0], sizes = [1, 32], strides = [1, 1]} : vector<16x128xf32> to vector<1x32xf32>
    %173 = vector.extract_strided_slice %171 {offsets = [1, 0], sizes = [1, 32], strides = [1, 1]} : vector<16x128xf32> to vector<1x32xf32>
    %174 = vector.extract_strided_slice %171 {offsets = [2, 0], sizes = [1, 32], strides = [1, 1]} : vector<16x128xf32> to vector<1x32xf32>
    %175 = vector.extract_strided_slice %171 {offsets = [3, 0], sizes = [1, 32], strides = [1, 1]} : vector<16x128xf32> to vector<1x32xf32>
    %176 = vector.extract_strided_slice %171 {offsets = [4, 0], sizes = [1, 32], strides = [1, 1]} : vector<16x128xf32> to vector<1x32xf32>
    %177 = vector.extract_strided_slice %171 {offsets = [5, 0], sizes = [1, 32], strides = [1, 1]} : vector<16x128xf32> to vector<1x32xf32>
    %178 = vector.extract_strided_slice %171 {offsets = [6, 0], sizes = [1, 64], strides = [1, 1]} : vector<16x128xf32> to vector<1x64xf32>
    %179 = vector.extract_strided_slice %171 {offsets = [7, 0], sizes = [1, 32], strides = [1, 1]} : vector<16x128xf32> to vector<1x32xf32>
    %180 = vector.extract_strided_slice %171 {offsets = [8, 0], sizes = [1, 32], strides = [1, 1]} : vector<16x128xf32> to vector<1x32xf32>
    %181 = vector.extract_strided_slice %171 {offsets = [9, 0], sizes = [1, 32], strides = [1, 1]} : vector<16x128xf32> to vector<1x32xf32>
    %c1_50 = arith.constant 1 : index
    %c0_51 = arith.constant 0 : index
    %c0_52 = arith.constant 0 : index
    %c0_53 = arith.constant 0 : index
    %182 = vector.load %arg2[%c1_50, %c0_51, %c0_52, %c0_53] : memref<3x3x32x32xbf16, #tpu.memory_space<vmem>>, vector<1x3x32x32xbf16>
    %183 = vector.shape_cast %182 : vector<1x3x32x32xbf16> to vector<3x32x32xbf16>
    %c1_54 = arith.constant 1 : index
    %c0_55 = arith.constant 0 : index
    %c0_56 = arith.constant 0 : index
    %c0_57 = arith.constant 0 : index
    %184 = vector.load %arg3[%c1_54, %c0_55, %c0_56, %c0_57] : memref<3x4x8x32xbf16, #tpu.memory_space<vmem>>, vector<1x4x8x32xbf16>
    %185 = vector.shape_cast %184 : vector<1x4x8x32xbf16> to vector<4x8x32xbf16>
    %186 = arith.truncf %169 : vector<32x32xf32> to vector<32x32xbf16>
    %187 = vector.extract_strided_slice %183 {offsets = [0, 0, 0], sizes = [1, 32, 32], strides = [1, 1, 1]} : vector<3x32x32xbf16> to vector<1x32x32xbf16>
    %188 = vector.shape_cast %187 : vector<1x32x32xbf16> to vector<32x32xbf16>
    %cst_58 = arith.constant dense<0.000000e+00> : vector<32x32xf32>
    %189 = tpu.matmul %186, %188, %cst_58 {dimension_numbers = #tpu.dot_dimension_numbers<[1], [0], [0], [1], [0, 0, 1, 1], [], []>} : vector<32x32xbf16>, vector<32x32xbf16>, vector<32x32xf32> -> vector<32x32xf32>
    %190 = vector.broadcast %172 : vector<1x32xf32> to vector<32x32xf32>
    %191 = arith.addf %189, %190 : vector<32x32xf32>
    %192 = vector.extract_strided_slice %183 {offsets = [1, 0, 0], sizes = [1, 32, 32], strides = [1, 1, 1]} : vector<3x32x32xbf16> to vector<1x32x32xbf16>
    %193 = vector.shape_cast %192 : vector<1x32x32xbf16> to vector<32x32xbf16>
    %cst_59 = arith.constant dense<0.000000e+00> : vector<32x32xf32>
    %194 = tpu.matmul %186, %193, %cst_59 {dimension_numbers = #tpu.dot_dimension_numbers<[1], [0], [0], [1], [0, 0, 1, 1], [], []>} : vector<32x32xbf16>, vector<32x32xbf16>, vector<32x32xf32> -> vector<32x32xf32>
    %195 = vector.broadcast %173 : vector<1x32xf32> to vector<32x32xf32>
    %196 = arith.addf %194, %195 : vector<32x32xf32>
    %197 = vector.extract_strided_slice %183 {offsets = [2, 0, 0], sizes = [1, 32, 32], strides = [1, 1, 1]} : vector<3x32x32xbf16> to vector<1x32x32xbf16>
    %198 = vector.shape_cast %197 : vector<1x32x32xbf16> to vector<32x32xbf16>
    %cst_60 = arith.constant dense<0.000000e+00> : vector<32x32xf32>
    %199 = tpu.matmul %186, %198, %cst_60 {dimension_numbers = #tpu.dot_dimension_numbers<[1], [0], [0], [1], [0, 0, 1, 1], [], []>} : vector<32x32xbf16>, vector<32x32xbf16>, vector<32x32xf32> -> vector<32x32xf32>
    %200 = vector.broadcast %174 : vector<1x32xf32> to vector<32x32xf32>
    %201 = arith.addf %199, %200 : vector<32x32xf32>
    %cst_61 = arith.constant 0.353553385 : f32
    %202 = vector.broadcast %cst_61 : f32 to vector<32x32xf32>
    %203 = arith.mulf %191, %202 : vector<32x32xf32>
    %204 = vector.shape_cast %203 : vector<32x32xf32> to vector<4x8x32xf32>
    %205 = arith.truncf %204 : vector<4x8x32xf32> to vector<4x8x32xbf16>
    %206 = vector.shape_cast %196 : vector<32x32xf32> to vector<4x8x32xf32>
    %207 = arith.truncf %206 : vector<4x8x32xf32> to vector<4x8x32xbf16>
    %208 = vector.shape_cast %201 : vector<32x32xf32> to vector<4x8x32xf32>
    %209 = arith.truncf %208 : vector<4x8x32xf32> to vector<4x8x32xbf16>
    %210 = vector.extract_strided_slice %205 {offsets = [0, 0, 0], sizes = [4, 8, 8], strides = [1, 1, 1]} : vector<4x8x32xbf16> to vector<4x8x8xbf16>
    %211 = vector.extract_strided_slice %207 {offsets = [0, 0, 0], sizes = [4, 8, 8], strides = [1, 1, 1]} : vector<4x8x32xbf16> to vector<4x8x8xbf16>
    "tpu.trace_start"() <{level = 10 : i32, message = "nsd,ntd->nst"}> : () -> ()
    %cst_62 = arith.constant dense<0.000000e+00> : vector<4x8x8xf32>
    %212 = tpu.matmul %210, %211, %cst_62 {dimension_numbers = #tpu.dot_dimension_numbers<[2], [2], [1], [1], [0, 0, 0, 1, 1, 1], [0], [0]>} : vector<4x8x8xbf16>, vector<4x8x8xbf16>, vector<4x8x8xf32> -> vector<4x8x8xf32>
    "tpu.trace_stop"() : () -> ()
    %213 = vector.extract_strided_slice %205 {offsets = [0, 0, 8], sizes = [4, 8, 8], strides = [1, 1, 1]} : vector<4x8x32xbf16> to vector<4x8x8xbf16>
    %214 = vector.extract_strided_slice %207 {offsets = [0, 0, 8], sizes = [4, 8, 8], strides = [1, 1, 1]} : vector<4x8x32xbf16> to vector<4x8x8xbf16>
    "tpu.trace_start"() <{level = 10 : i32, message = "nsd,ntd->nst"}> : () -> ()
    %cst_63 = arith.constant dense<0.000000e+00> : vector<4x8x8xf32>
    %215 = tpu.matmul %213, %214, %cst_63 {dimension_numbers = #tpu.dot_dimension_numbers<[2], [2], [1], [1], [0, 0, 0, 1, 1, 1], [0], [0]>} : vector<4x8x8xbf16>, vector<4x8x8xbf16>, vector<4x8x8xf32> -> vector<4x8x8xf32>
    "tpu.trace_stop"() : () -> ()
    %216 = vector.extract_strided_slice %205 {offsets = [0, 0, 16], sizes = [4, 8, 8], strides = [1, 1, 1]} : vector<4x8x32xbf16> to vector<4x8x8xbf16>
    %217 = vector.extract_strided_slice %207 {offsets = [0, 0, 16], sizes = [4, 8, 8], strides = [1, 1, 1]} : vector<4x8x32xbf16> to vector<4x8x8xbf16>
    "tpu.trace_start"() <{level = 10 : i32, message = "nsd,ntd->nst"}> : () -> ()
    %cst_64 = arith.constant dense<0.000000e+00> : vector<4x8x8xf32>
    %218 = tpu.matmul %216, %217, %cst_64 {dimension_numbers = #tpu.dot_dimension_numbers<[2], [2], [1], [1], [0, 0, 0, 1, 1, 1], [0], [0]>} : vector<4x8x8xbf16>, vector<4x8x8xbf16>, vector<4x8x8xf32> -> vector<4x8x8xf32>
    "tpu.trace_stop"() : () -> ()
    %219 = vector.extract_strided_slice %205 {offsets = [0, 0, 24], sizes = [4, 8, 8], strides = [1, 1, 1]} : vector<4x8x32xbf16> to vector<4x8x8xbf16>
    %220 = vector.extract_strided_slice %207 {offsets = [0, 0, 24], sizes = [4, 8, 8], strides = [1, 1, 1]} : vector<4x8x32xbf16> to vector<4x8x8xbf16>
    "tpu.trace_start"() <{level = 10 : i32, message = "nsd,ntd->nst"}> : () -> ()
    %cst_65 = arith.constant dense<0.000000e+00> : vector<4x8x8xf32>
    %221 = tpu.matmul %219, %220, %cst_65 {dimension_numbers = #tpu.dot_dimension_numbers<[2], [2], [1], [1], [0, 0, 0, 1, 1, 1], [0], [0]>} : vector<4x8x8xbf16>, vector<4x8x8xbf16>, vector<4x8x8xf32> -> vector<4x8x8xf32>
    "tpu.trace_stop"() : () -> ()
    %222 = vector.shape_cast %212 : vector<4x8x8xf32> to vector<4x1x8x8xf32>
    %223 = vector.shape_cast %215 : vector<4x8x8xf32> to vector<4x1x8x8xf32>
    %224 = vector.shape_cast %218 : vector<4x8x8xf32> to vector<4x1x8x8xf32>
    %225 = vector.shape_cast %221 : vector<4x8x8xf32> to vector<4x1x8x8xf32>
    %226 = tpu.concatenate %222, %223, %224, %225 in 1 : vector<4x1x8x8xf32>, vector<4x1x8x8xf32>, vector<4x1x8x8xf32>, vector<4x1x8x8xf32> -> vector<4x4x8x8xf32>
    %cst_66 = arith.constant dense<0xFF800000> : vector<4x4x8xf32>
    %227 = vector.multi_reduction <maximumf>, %226, %cst_66 [3] : vector<4x4x8x8xf32> to vector<4x4x8xf32>
    %228 = vector.shape_cast %227 : vector<4x4x8xf32> to vector<4x4x8x1xf32>
    %229 = vector.broadcast %228 : vector<4x4x8x1xf32> to vector<4x4x8x8xf32>
    %230 = arith.subf %226, %229 : vector<4x4x8x8xf32>
    %231 = math.exp %230 : vector<4x4x8x8xf32>
    %cst_67 = arith.constant dense<0.000000e+00> : vector<4x4x8xf32>
    %232 = vector.multi_reduction <add>, %231, %cst_67 [3] : vector<4x4x8x8xf32> to vector<4x4x8xf32>
    %233 = vector.shape_cast %232 : vector<4x4x8xf32> to vector<4x4x8x1xf32>
    %234 = tpu.reciprocal %233 {approx = true} : vector<4x4x8x1xf32> -> vector<4x4x8x1xf32>
    %235 = vector.broadcast %234 : vector<4x4x8x1xf32> to vector<4x4x8x8xf32>
    %236 = arith.mulf %231, %235 : vector<4x4x8x8xf32>
    %237 = arith.truncf %236 : vector<4x4x8x8xf32> to vector<4x4x8x8xbf16>
    %238 = vector.extract_strided_slice %237 {offsets = [0, 0, 0, 0], sizes = [4, 1, 8, 8], strides = [1, 1, 1, 1]} : vector<4x4x8x8xbf16> to vector<4x1x8x8xbf16>
    %239 = vector.shape_cast %238 : vector<4x1x8x8xbf16> to vector<4x8x8xbf16>
    %240 = vector.extract_strided_slice %209 {offsets = [0, 0, 0], sizes = [4, 8, 8], strides = [1, 1, 1]} : vector<4x8x32xbf16> to vector<4x8x8xbf16>
    "tpu.trace_start"() <{level = 10 : i32, message = "nst,ntd->nsd"}> : () -> ()
    %cst_68 = arith.constant dense<0.000000e+00> : vector<4x8x8xf32>
    %241 = tpu.matmul %239, %240, %cst_68 {dimension_numbers = #tpu.dot_dimension_numbers<[2], [1], [1], [2], [0, 0, 0, 1, 1, 2], [0], [0]>} : vector<4x8x8xbf16>, vector<4x8x8xbf16>, vector<4x8x8xf32> -> vector<4x8x8xf32>
    "tpu.trace_stop"() : () -> ()
    %242 = vector.shape_cast %241 : vector<4x8x8xf32> to vector<32x8xf32>
    %243 = arith.truncf %242 : vector<32x8xf32> to vector<32x8xbf16>
    %244 = vector.extract_strided_slice %185 {offsets = [0, 0, 0], sizes = [1, 8, 32], strides = [1, 1, 1]} : vector<4x8x32xbf16> to vector<1x8x32xbf16>
    %245 = vector.shape_cast %244 : vector<1x8x32xbf16> to vector<8x32xbf16>
    %cst_69 = arith.constant dense<0.000000e+00> : vector<32x32xf32>
    %246 = tpu.matmul %243, %245, %cst_69 {dimension_numbers = #tpu.dot_dimension_numbers<[1], [0], [0], [1], [0, 0, 1, 1], [], []>} : vector<32x8xbf16>, vector<8x32xbf16>, vector<32x32xf32> -> vector<32x32xf32>
    %247 = vector.broadcast %175 : vector<1x32xf32> to vector<32x32xf32>
    %248 = arith.addf %247, %246 : vector<32x32xf32>
    %249 = vector.extract_strided_slice %237 {offsets = [0, 1, 0, 0], sizes = [4, 1, 8, 8], strides = [1, 1, 1, 1]} : vector<4x4x8x8xbf16> to vector<4x1x8x8xbf16>
    %250 = vector.shape_cast %249 : vector<4x1x8x8xbf16> to vector<4x8x8xbf16>
    %251 = vector.extract_strided_slice %209 {offsets = [0, 0, 8], sizes = [4, 8, 8], strides = [1, 1, 1]} : vector<4x8x32xbf16> to vector<4x8x8xbf16>
    "tpu.trace_start"() <{level = 10 : i32, message = "nst,ntd->nsd"}> : () -> ()
    %cst_70 = arith.constant dense<0.000000e+00> : vector<4x8x8xf32>
    %252 = tpu.matmul %250, %251, %cst_70 {dimension_numbers = #tpu.dot_dimension_numbers<[2], [1], [1], [2], [0, 0, 0, 1, 1, 2], [0], [0]>} : vector<4x8x8xbf16>, vector<4x8x8xbf16>, vector<4x8x8xf32> -> vector<4x8x8xf32>
    "tpu.trace_stop"() : () -> ()
    %253 = vector.shape_cast %252 : vector<4x8x8xf32> to vector<32x8xf32>
    %254 = arith.truncf %253 : vector<32x8xf32> to vector<32x8xbf16>
    %255 = vector.extract_strided_slice %185 {offsets = [1, 0, 0], sizes = [1, 8, 32], strides = [1, 1, 1]} : vector<4x8x32xbf16> to vector<1x8x32xbf16>
    %256 = vector.shape_cast %255 : vector<1x8x32xbf16> to vector<8x32xbf16>
    %cst_71 = arith.constant dense<0.000000e+00> : vector<32x32xf32>
    %257 = tpu.matmul %254, %256, %cst_71 {dimension_numbers = #tpu.dot_dimension_numbers<[1], [0], [0], [1], [0, 0, 1, 1], [], []>} : vector<32x8xbf16>, vector<8x32xbf16>, vector<32x32xf32> -> vector<32x32xf32>
    %258 = arith.addf %248, %257 : vector<32x32xf32>
    %259 = vector.extract_strided_slice %237 {offsets = [0, 2, 0, 0], sizes = [4, 1, 8, 8], strides = [1, 1, 1, 1]} : vector<4x4x8x8xbf16> to vector<4x1x8x8xbf16>
    %260 = vector.shape_cast %259 : vector<4x1x8x8xbf16> to vector<4x8x8xbf16>
    %261 = vector.extract_strided_slice %209 {offsets = [0, 0, 16], sizes = [4, 8, 8], strides = [1, 1, 1]} : vector<4x8x32xbf16> to vector<4x8x8xbf16>
    "tpu.trace_start"() <{level = 10 : i32, message = "nst,ntd->nsd"}> : () -> ()
    %cst_72 = arith.constant dense<0.000000e+00> : vector<4x8x8xf32>
    %262 = tpu.matmul %260, %261, %cst_72 {dimension_numbers = #tpu.dot_dimension_numbers<[2], [1], [1], [2], [0, 0, 0, 1, 1, 2], [0], [0]>} : vector<4x8x8xbf16>, vector<4x8x8xbf16>, vector<4x8x8xf32> -> vector<4x8x8xf32>
    "tpu.trace_stop"() : () -> ()
    %263 = vector.shape_cast %262 : vector<4x8x8xf32> to vector<32x8xf32>
    %264 = arith.truncf %263 : vector<32x8xf32> to vector<32x8xbf16>
    %265 = vector.extract_strided_slice %185 {offsets = [2, 0, 0], sizes = [1, 8, 32], strides = [1, 1, 1]} : vector<4x8x32xbf16> to vector<1x8x32xbf16>
    %266 = vector.shape_cast %265 : vector<1x8x32xbf16> to vector<8x32xbf16>
    %cst_73 = arith.constant dense<0.000000e+00> : vector<32x32xf32>
    %267 = tpu.matmul %264, %266, %cst_73 {dimension_numbers = #tpu.dot_dimension_numbers<[1], [0], [0], [1], [0, 0, 1, 1], [], []>} : vector<32x8xbf16>, vector<8x32xbf16>, vector<32x32xf32> -> vector<32x32xf32>
    %268 = arith.addf %258, %267 : vector<32x32xf32>
    %269 = vector.extract_strided_slice %237 {offsets = [0, 3, 0, 0], sizes = [4, 1, 8, 8], strides = [1, 1, 1, 1]} : vector<4x4x8x8xbf16> to vector<4x1x8x8xbf16>
    %270 = vector.shape_cast %269 : vector<4x1x8x8xbf16> to vector<4x8x8xbf16>
    %271 = vector.extract_strided_slice %209 {offsets = [0, 0, 24], sizes = [4, 8, 8], strides = [1, 1, 1]} : vector<4x8x32xbf16> to vector<4x8x8xbf16>
    "tpu.trace_start"() <{level = 10 : i32, message = "nst,ntd->nsd"}> : () -> ()
    %cst_74 = arith.constant dense<0.000000e+00> : vector<4x8x8xf32>
    %272 = tpu.matmul %270, %271, %cst_74 {dimension_numbers = #tpu.dot_dimension_numbers<[2], [1], [1], [2], [0, 0, 0, 1, 1, 2], [0], [0]>} : vector<4x8x8xbf16>, vector<4x8x8xbf16>, vector<4x8x8xf32> -> vector<4x8x8xf32>
    "tpu.trace_stop"() : () -> ()
    %273 = vector.shape_cast %272 : vector<4x8x8xf32> to vector<32x8xf32>
    %274 = arith.truncf %273 : vector<32x8xf32> to vector<32x8xbf16>
    %275 = vector.extract_strided_slice %185 {offsets = [3, 0, 0], sizes = [1, 8, 32], strides = [1, 1, 1]} : vector<4x8x32xbf16> to vector<1x8x32xbf16>
    %276 = vector.shape_cast %275 : vector<1x8x32xbf16> to vector<8x32xbf16>
    %cst_75 = arith.constant dense<0.000000e+00> : vector<32x32xf32>
    %277 = tpu.matmul %274, %276, %cst_75 {dimension_numbers = #tpu.dot_dimension_numbers<[1], [0], [0], [1], [0, 0, 1, 1], [], []>} : vector<32x8xbf16>, vector<8x32xbf16>, vector<32x32xf32> -> vector<32x32xf32>
    %278 = arith.addf %268, %277 : vector<32x32xf32>
    %279 = arith.addf %169, %278 : vector<32x32xf32>
    %cst_76 = arith.constant dense<0.000000e+00> : vector<32xf32>
    %280 = vector.multi_reduction <add>, %279, %cst_76 [1] : vector<32x32xf32> to vector<32xf32>
    %281 = vector.shape_cast %280 : vector<32xf32> to vector<32x1xf32>
    %cst_77 = arith.constant 3.200000e+01 : f32
    %282 = vector.broadcast %cst_77 : f32 to vector<32x1xf32>
    %283 = arith.divf %281, %282 : vector<32x1xf32>
    %284 = vector.broadcast %283 : vector<32x1xf32> to vector<32x32xf32>
    %285 = arith.subf %279, %284 : vector<32x32xf32>
    %286 = arith.mulf %285, %285 : vector<32x32xf32>
    %cst_78 = arith.constant dense<0.000000e+00> : vector<32xf32>
    %287 = vector.multi_reduction <add>, %286, %cst_78 [1] : vector<32x32xf32> to vector<32xf32>
    %288 = vector.shape_cast %287 : vector<32xf32> to vector<32x1xf32>
    %cst_79 = arith.constant 3.200000e+01 : f32
    %289 = vector.broadcast %cst_79 : f32 to vector<32x1xf32>
    %290 = arith.divf %288, %289 : vector<32x1xf32>
    %291 = vector.broadcast %283 : vector<32x1xf32> to vector<32x32xf32>
    %292 = arith.subf %279, %291 : vector<32x32xf32>
    %cst_80 = arith.constant 9.99999974E-6 : f32
    %293 = vector.broadcast %cst_80 : f32 to vector<32x1xf32>
    %294 = arith.addf %290, %293 : vector<32x1xf32>
    %295 = math.rsqrt %294 : vector<32x1xf32>
    %296 = vector.broadcast %295 : vector<32x1xf32> to vector<32x32xf32>
    %297 = arith.mulf %292, %296 : vector<32x32xf32>
    %298 = vector.broadcast %176 : vector<1x32xf32> to vector<32x32xf32>
    %299 = arith.mulf %297, %298 : vector<32x32xf32>
    %300 = vector.broadcast %177 : vector<1x32xf32> to vector<32x32xf32>
    %301 = arith.addf %299, %300 : vector<32x32xf32>
    %302 = arith.truncf %301 : vector<32x32xf32> to vector<32x32xbf16>
    %c1_81 = arith.constant 1 : index
    %c0_82 = arith.constant 0 : index
    %c0_83 = arith.constant 0 : index
    %303 = vector.load %arg4[%c1_81, %c0_82, %c0_83] : memref<3x32x64xbf16, #tpu.memory_space<vmem>>, vector<1x32x64xbf16>
    %304 = vector.shape_cast %303 : vector<1x32x64xbf16> to vector<32x64xbf16>
    %cst_84 = arith.constant dense<0.000000e+00> : vector<32x64xf32>
    %305 = tpu.matmul %302, %304, %cst_84 {dimension_numbers = #tpu.dot_dimension_numbers<[1], [0], [0], [1], [0, 0, 1, 1], [], []>} : vector<32x32xbf16>, vector<32x64xbf16>, vector<32x64xf32> -> vector<32x64xf32>
    %306 = vector.broadcast %178 : vector<1x64xf32> to vector<32x64xf32>
    %307 = arith.addf %305, %306 : vector<32x64xf32>
    %cst_85 = arith.constant 0.000000e+00 : f32
    %308 = vector.broadcast %cst_85 : f32 to vector<32x64xf32>
    %309 = arith.maximumf %307, %308 : vector<32x64xf32>
    %310 = arith.truncf %309 : vector<32x64xf32> to vector<32x64xbf16>
    %c1_86 = arith.constant 1 : index
    %c0_87 = arith.constant 0 : index
    %c0_88 = arith.constant 0 : index
    %311 = vector.load %arg5[%c1_86, %c0_87, %c0_88] : memref<3x64x32xbf16, #tpu.memory_space<vmem>>, vector<1x64x32xbf16>
    %312 = vector.shape_cast %311 : vector<1x64x32xbf16> to vector<64x32xbf16>
    %cst_89 = arith.constant dense<0.000000e+00> : vector<32x32xf32>
    %313 = tpu.matmul %310, %312, %cst_89 {dimension_numbers = #tpu.dot_dimension_numbers<[1], [0], [0], [1], [0, 0, 1, 1], [], []>} : vector<32x64xbf16>, vector<64x32xbf16>, vector<32x32xf32> -> vector<32x32xf32>
    %314 = vector.broadcast %179 : vector<1x32xf32> to vector<32x32xf32>
    %315 = arith.addf %313, %314 : vector<32x32xf32>
    %316 = arith.addf %301, %315 : vector<32x32xf32>
    %cst_90 = arith.constant dense<0.000000e+00> : vector<32xf32>
    %317 = vector.multi_reduction <add>, %316, %cst_90 [1] : vector<32x32xf32> to vector<32xf32>
    %318 = vector.shape_cast %317 : vector<32xf32> to vector<32x1xf32>
    %cst_91 = arith.constant 3.200000e+01 : f32
    %319 = vector.broadcast %cst_91 : f32 to vector<32x1xf32>
    %320 = arith.divf %318, %319 : vector<32x1xf32>
    %321 = vector.broadcast %320 : vector<32x1xf32> to vector<32x32xf32>
    %322 = arith.subf %316, %321 : vector<32x32xf32>
    %323 = arith.mulf %322, %322 : vector<32x32xf32>
    %cst_92 = arith.constant dense<0.000000e+00> : vector<32xf32>
    %324 = vector.multi_reduction <add>, %323, %cst_92 [1] : vector<32x32xf32> to vector<32xf32>
    %325 = vector.shape_cast %324 : vector<32xf32> to vector<32x1xf32>
    %cst_93 = arith.constant 3.200000e+01 : f32
    %326 = vector.broadcast %cst_93 : f32 to vector<32x1xf32>
    %327 = arith.divf %325, %326 : vector<32x1xf32>
    %328 = vector.broadcast %320 : vector<32x1xf32> to vector<32x32xf32>
    %329 = arith.subf %316, %328 : vector<32x32xf32>
    %cst_94 = arith.constant 9.99999974E-6 : f32
    %330 = vector.broadcast %cst_94 : f32 to vector<32x1xf32>
    %331 = arith.addf %327, %330 : vector<32x1xf32>
    %332 = math.rsqrt %331 : vector<32x1xf32>
    %333 = vector.broadcast %332 : vector<32x1xf32> to vector<32x32xf32>
    %334 = arith.mulf %329, %333 : vector<32x32xf32>
    %335 = vector.broadcast %180 : vector<1x32xf32> to vector<32x32xf32>
    %336 = arith.mulf %334, %335 : vector<32x32xf32>
    %337 = vector.broadcast %181 : vector<1x32xf32> to vector<32x32xf32>
    %338 = arith.addf %336, %337 : vector<32x32xf32>
    %c2 = arith.constant 2 : index
    %c0_95 = arith.constant 0 : index
    %c0_96 = arith.constant 0 : index
    %339 = vector.load %arg6[%c2, %c0_95, %c0_96] : memref<3x16x128xf32, #tpu.memory_space<vmem>>, vector<1x16x128xf32>
    %340 = vector.shape_cast %339 : vector<1x16x128xf32> to vector<16x128xf32>
    %341 = vector.extract_strided_slice %340 {offsets = [0, 0], sizes = [1, 32], strides = [1, 1]} : vector<16x128xf32> to vector<1x32xf32>
    %342 = vector.extract_strided_slice %340 {offsets = [1, 0], sizes = [1, 32], strides = [1, 1]} : vector<16x128xf32> to vector<1x32xf32>
    %343 = vector.extract_strided_slice %340 {offsets = [2, 0], sizes = [1, 32], strides = [1, 1]} : vector<16x128xf32> to vector<1x32xf32>
    %344 = vector.extract_strided_slice %340 {offsets = [3, 0], sizes = [1, 32], strides = [1, 1]} : vector<16x128xf32> to vector<1x32xf32>
    %345 = vector.extract_strided_slice %340 {offsets = [4, 0], sizes = [1, 32], strides = [1, 1]} : vector<16x128xf32> to vector<1x32xf32>
    %346 = vector.extract_strided_slice %340 {offsets = [5, 0], sizes = [1, 32], strides = [1, 1]} : vector<16x128xf32> to vector<1x32xf32>
    %347 = vector.extract_strided_slice %340 {offsets = [6, 0], sizes = [1, 64], strides = [1, 1]} : vector<16x128xf32> to vector<1x64xf32>
    %348 = vector.extract_strided_slice %340 {offsets = [7, 0], sizes = [1, 32], strides = [1, 1]} : vector<16x128xf32> to vector<1x32xf32>
    %349 = vector.extract_strided_slice %340 {offsets = [8, 0], sizes = [1, 32], strides = [1, 1]} : vector<16x128xf32> to vector<1x32xf32>
    %350 = vector.extract_strided_slice %340 {offsets = [9, 0], sizes = [1, 32], strides = [1, 1]} : vector<16x128xf32> to vector<1x32xf32>
    %c2_97 = arith.constant 2 : index
    %c0_98 = arith.constant 0 : index
    %c0_99 = arith.constant 0 : index
    %c0_100 = arith.constant 0 : index
    %351 = vector.load %arg2[%c2_97, %c0_98, %c0_99, %c0_100] : memref<3x3x32x32xbf16, #tpu.memory_space<vmem>>, vector<1x3x32x32xbf16>
    %352 = vector.shape_cast %351 : vector<1x3x32x32xbf16> to vector<3x32x32xbf16>
    %c2_101 = arith.constant 2 : index
    %c0_102 = arith.constant 0 : index
    %c0_103 = arith.constant 0 : index
    %c0_104 = arith.constant 0 : index
    %353 = vector.load %arg3[%c2_101, %c0_102, %c0_103, %c0_104] : memref<3x4x8x32xbf16, #tpu.memory_space<vmem>>, vector<1x4x8x32xbf16>
    %354 = vector.shape_cast %353 : vector<1x4x8x32xbf16> to vector<4x8x32xbf16>
    %355 = arith.truncf %338 : vector<32x32xf32> to vector<32x32xbf16>
    %356 = vector.extract_strided_slice %352 {offsets = [0, 0, 0], sizes = [1, 32, 32], strides = [1, 1, 1]} : vector<3x32x32xbf16> to vector<1x32x32xbf16>
    %357 = vector.shape_cast %356 : vector<1x32x32xbf16> to vector<32x32xbf16>
    %cst_105 = arith.constant dense<0.000000e+00> : vector<32x32xf32>
    %358 = tpu.matmul %355, %357, %cst_105 {dimension_numbers = #tpu.dot_dimension_numbers<[1], [0], [0], [1], [0, 0, 1, 1], [], []>} : vector<32x32xbf16>, vector<32x32xbf16>, vector<32x32xf32> -> vector<32x32xf32>
    %359 = vector.broadcast %341 : vector<1x32xf32> to vector<32x32xf32>
    %360 = arith.addf %358, %359 : vector<32x32xf32>
    %361 = vector.extract_strided_slice %352 {offsets = [1, 0, 0], sizes = [1, 32, 32], strides = [1, 1, 1]} : vector<3x32x32xbf16> to vector<1x32x32xbf16>
    %362 = vector.shape_cast %361 : vector<1x32x32xbf16> to vector<32x32xbf16>
    %cst_106 = arith.constant dense<0.000000e+00> : vector<32x32xf32>
    %363 = tpu.matmul %355, %362, %cst_106 {dimension_numbers = #tpu.dot_dimension_numbers<[1], [0], [0], [1], [0, 0, 1, 1], [], []>} : vector<32x32xbf16>, vector<32x32xbf16>, vector<32x32xf32> -> vector<32x32xf32>
    %364 = vector.broadcast %342 : vector<1x32xf32> to vector<32x32xf32>
    %365 = arith.addf %363, %364 : vector<32x32xf32>
    %366 = vector.extract_strided_slice %352 {offsets = [2, 0, 0], sizes = [1, 32, 32], strides = [1, 1, 1]} : vector<3x32x32xbf16> to vector<1x32x32xbf16>
    %367 = vector.shape_cast %366 : vector<1x32x32xbf16> to vector<32x32xbf16>
    %cst_107 = arith.constant dense<0.000000e+00> : vector<32x32xf32>
    %368 = tpu.matmul %355, %367, %cst_107 {dimension_numbers = #tpu.dot_dimension_numbers<[1], [0], [0], [1], [0, 0, 1, 1], [], []>} : vector<32x32xbf16>, vector<32x32xbf16>, vector<32x32xf32> -> vector<32x32xf32>
    %369 = vector.broadcast %343 : vector<1x32xf32> to vector<32x32xf32>
    %370 = arith.addf %368, %369 : vector<32x32xf32>
    %cst_108 = arith.constant 0.353553385 : f32
    %371 = vector.broadcast %cst_108 : f32 to vector<32x32xf32>
    %372 = arith.mulf %360, %371 : vector<32x32xf32>
    %373 = vector.shape_cast %372 : vector<32x32xf32> to vector<4x8x32xf32>
    %374 = arith.truncf %373 : vector<4x8x32xf32> to vector<4x8x32xbf16>
    %375 = vector.shape_cast %365 : vector<32x32xf32> to vector<4x8x32xf32>
    %376 = arith.truncf %375 : vector<4x8x32xf32> to vector<4x8x32xbf16>
    %377 = vector.shape_cast %370 : vector<32x32xf32> to vector<4x8x32xf32>
    %378 = arith.truncf %377 : vector<4x8x32xf32> to vector<4x8x32xbf16>
    %379 = vector.extract_strided_slice %374 {offsets = [0, 0, 0], sizes = [4, 8, 8], strides = [1, 1, 1]} : vector<4x8x32xbf16> to vector<4x8x8xbf16>
    %380 = vector.extract_strided_slice %376 {offsets = [0, 0, 0], sizes = [4, 8, 8], strides = [1, 1, 1]} : vector<4x8x32xbf16> to vector<4x8x8xbf16>
    "tpu.trace_start"() <{level = 10 : i32, message = "nsd,ntd->nst"}> : () -> ()
    %cst_109 = arith.constant dense<0.000000e+00> : vector<4x8x8xf32>
    %381 = tpu.matmul %379, %380, %cst_109 {dimension_numbers = #tpu.dot_dimension_numbers<[2], [2], [1], [1], [0, 0, 0, 1, 1, 1], [0], [0]>} : vector<4x8x8xbf16>, vector<4x8x8xbf16>, vector<4x8x8xf32> -> vector<4x8x8xf32>
    "tpu.trace_stop"() : () -> ()
    %382 = vector.extract_strided_slice %374 {offsets = [0, 0, 8], sizes = [4, 8, 8], strides = [1, 1, 1]} : vector<4x8x32xbf16> to vector<4x8x8xbf16>
    %383 = vector.extract_strided_slice %376 {offsets = [0, 0, 8], sizes = [4, 8, 8], strides = [1, 1, 1]} : vector<4x8x32xbf16> to vector<4x8x8xbf16>
    "tpu.trace_start"() <{level = 10 : i32, message = "nsd,ntd->nst"}> : () -> ()
    %cst_110 = arith.constant dense<0.000000e+00> : vector<4x8x8xf32>
    %384 = tpu.matmul %382, %383, %cst_110 {dimension_numbers = #tpu.dot_dimension_numbers<[2], [2], [1], [1], [0, 0, 0, 1, 1, 1], [0], [0]>} : vector<4x8x8xbf16>, vector<4x8x8xbf16>, vector<4x8x8xf32> -> vector<4x8x8xf32>
    "tpu.trace_stop"() : () -> ()
    %385 = vector.extract_strided_slice %374 {offsets = [0, 0, 16], sizes = [4, 8, 8], strides = [1, 1, 1]} : vector<4x8x32xbf16> to vector<4x8x8xbf16>
    %386 = vector.extract_strided_slice %376 {offsets = [0, 0, 16], sizes = [4, 8, 8], strides = [1, 1, 1]} : vector<4x8x32xbf16> to vector<4x8x8xbf16>
    "tpu.trace_start"() <{level = 10 : i32, message = "nsd,ntd->nst"}> : () -> ()
    %cst_111 = arith.constant dense<0.000000e+00> : vector<4x8x8xf32>
    %387 = tpu.matmul %385, %386, %cst_111 {dimension_numbers = #tpu.dot_dimension_numbers<[2], [2], [1], [1], [0, 0, 0, 1, 1, 1], [0], [0]>} : vector<4x8x8xbf16>, vector<4x8x8xbf16>, vector<4x8x8xf32> -> vector<4x8x8xf32>
    "tpu.trace_stop"() : () -> ()
    %388 = vector.extract_strided_slice %374 {offsets = [0, 0, 24], sizes = [4, 8, 8], strides = [1, 1, 1]} : vector<4x8x32xbf16> to vector<4x8x8xbf16>
    %389 = vector.extract_strided_slice %376 {offsets = [0, 0, 24], sizes = [4, 8, 8], strides = [1, 1, 1]} : vector<4x8x32xbf16> to vector<4x8x8xbf16>
    "tpu.trace_start"() <{level = 10 : i32, message = "nsd,ntd->nst"}> : () -> ()
    %cst_112 = arith.constant dense<0.000000e+00> : vector<4x8x8xf32>
    %390 = tpu.matmul %388, %389, %cst_112 {dimension_numbers = #tpu.dot_dimension_numbers<[2], [2], [1], [1], [0, 0, 0, 1, 1, 1], [0], [0]>} : vector<4x8x8xbf16>, vector<4x8x8xbf16>, vector<4x8x8xf32> -> vector<4x8x8xf32>
    "tpu.trace_stop"() : () -> ()
    %391 = vector.shape_cast %381 : vector<4x8x8xf32> to vector<4x1x8x8xf32>
    %392 = vector.shape_cast %384 : vector<4x8x8xf32> to vector<4x1x8x8xf32>
    %393 = vector.shape_cast %387 : vector<4x8x8xf32> to vector<4x1x8x8xf32>
    %394 = vector.shape_cast %390 : vector<4x8x8xf32> to vector<4x1x8x8xf32>
    %395 = tpu.concatenate %391, %392, %393, %394 in 1 : vector<4x1x8x8xf32>, vector<4x1x8x8xf32>, vector<4x1x8x8xf32>, vector<4x1x8x8xf32> -> vector<4x4x8x8xf32>
    %cst_113 = arith.constant dense<0xFF800000> : vector<4x4x8xf32>
    %396 = vector.multi_reduction <maximumf>, %395, %cst_113 [3] : vector<4x4x8x8xf32> to vector<4x4x8xf32>
    %397 = vector.shape_cast %396 : vector<4x4x8xf32> to vector<4x4x8x1xf32>
    %398 = vector.broadcast %397 : vector<4x4x8x1xf32> to vector<4x4x8x8xf32>
    %399 = arith.subf %395, %398 : vector<4x4x8x8xf32>
    %400 = math.exp %399 : vector<4x4x8x8xf32>
    %cst_114 = arith.constant dense<0.000000e+00> : vector<4x4x8xf32>
    %401 = vector.multi_reduction <add>, %400, %cst_114 [3] : vector<4x4x8x8xf32> to vector<4x4x8xf32>
    %402 = vector.shape_cast %401 : vector<4x4x8xf32> to vector<4x4x8x1xf32>
    %403 = tpu.reciprocal %402 {approx = true} : vector<4x4x8x1xf32> -> vector<4x4x8x1xf32>
    %404 = vector.broadcast %403 : vector<4x4x8x1xf32> to vector<4x4x8x8xf32>
    %405 = arith.mulf %400, %404 : vector<4x4x8x8xf32>
    %406 = arith.truncf %405 : vector<4x4x8x8xf32> to vector<4x4x8x8xbf16>
    %407 = vector.extract_strided_slice %406 {offsets = [0, 0, 0, 0], sizes = [4, 1, 8, 8], strides = [1, 1, 1, 1]} : vector<4x4x8x8xbf16> to vector<4x1x8x8xbf16>
    %408 = vector.shape_cast %407 : vector<4x1x8x8xbf16> to vector<4x8x8xbf16>
    %409 = vector.extract_strided_slice %378 {offsets = [0, 0, 0], sizes = [4, 8, 8], strides = [1, 1, 1]} : vector<4x8x32xbf16> to vector<4x8x8xbf16>
    "tpu.trace_start"() <{level = 10 : i32, message = "nst,ntd->nsd"}> : () -> ()
    %cst_115 = arith.constant dense<0.000000e+00> : vector<4x8x8xf32>
    %410 = tpu.matmul %408, %409, %cst_115 {dimension_numbers = #tpu.dot_dimension_numbers<[2], [1], [1], [2], [0, 0, 0, 1, 1, 2], [0], [0]>} : vector<4x8x8xbf16>, vector<4x8x8xbf16>, vector<4x8x8xf32> -> vector<4x8x8xf32>
    "tpu.trace_stop"() : () -> ()
    %411 = vector.shape_cast %410 : vector<4x8x8xf32> to vector<32x8xf32>
    %412 = arith.truncf %411 : vector<32x8xf32> to vector<32x8xbf16>
    %413 = vector.extract_strided_slice %354 {offsets = [0, 0, 0], sizes = [1, 8, 32], strides = [1, 1, 1]} : vector<4x8x32xbf16> to vector<1x8x32xbf16>
    %414 = vector.shape_cast %413 : vector<1x8x32xbf16> to vector<8x32xbf16>
    %cst_116 = arith.constant dense<0.000000e+00> : vector<32x32xf32>
    %415 = tpu.matmul %412, %414, %cst_116 {dimension_numbers = #tpu.dot_dimension_numbers<[1], [0], [0], [1], [0, 0, 1, 1], [], []>} : vector<32x8xbf16>, vector<8x32xbf16>, vector<32x32xf32> -> vector<32x32xf32>
    %416 = vector.broadcast %344 : vector<1x32xf32> to vector<32x32xf32>
    %417 = arith.addf %416, %415 : vector<32x32xf32>
    %418 = vector.extract_strided_slice %406 {offsets = [0, 1, 0, 0], sizes = [4, 1, 8, 8], strides = [1, 1, 1, 1]} : vector<4x4x8x8xbf16> to vector<4x1x8x8xbf16>
    %419 = vector.shape_cast %418 : vector<4x1x8x8xbf16> to vector<4x8x8xbf16>
    %420 = vector.extract_strided_slice %378 {offsets = [0, 0, 8], sizes = [4, 8, 8], strides = [1, 1, 1]} : vector<4x8x32xbf16> to vector<4x8x8xbf16>
    "tpu.trace_start"() <{level = 10 : i32, message = "nst,ntd->nsd"}> : () -> ()
    %cst_117 = arith.constant dense<0.000000e+00> : vector<4x8x8xf32>
    %421 = tpu.matmul %419, %420, %cst_117 {dimension_numbers = #tpu.dot_dimension_numbers<[2], [1], [1], [2], [0, 0, 0, 1, 1, 2], [0], [0]>} : vector<4x8x8xbf16>, vector<4x8x8xbf16>, vector<4x8x8xf32> -> vector<4x8x8xf32>
    "tpu.trace_stop"() : () -> ()
    %422 = vector.shape_cast %421 : vector<4x8x8xf32> to vector<32x8xf32>
    %423 = arith.truncf %422 : vector<32x8xf32> to vector<32x8xbf16>
    %424 = vector.extract_strided_slice %354 {offsets = [1, 0, 0], sizes = [1, 8, 32], strides = [1, 1, 1]} : vector<4x8x32xbf16> to vector<1x8x32xbf16>
    %425 = vector.shape_cast %424 : vector<1x8x32xbf16> to vector<8x32xbf16>
    %cst_118 = arith.constant dense<0.000000e+00> : vector<32x32xf32>
    %426 = tpu.matmul %423, %425, %cst_118 {dimension_numbers = #tpu.dot_dimension_numbers<[1], [0], [0], [1], [0, 0, 1, 1], [], []>} : vector<32x8xbf16>, vector<8x32xbf16>, vector<32x32xf32> -> vector<32x32xf32>
    %427 = arith.addf %417, %426 : vector<32x32xf32>
    %428 = vector.extract_strided_slice %406 {offsets = [0, 2, 0, 0], sizes = [4, 1, 8, 8], strides = [1, 1, 1, 1]} : vector<4x4x8x8xbf16> to vector<4x1x8x8xbf16>
    %429 = vector.shape_cast %428 : vector<4x1x8x8xbf16> to vector<4x8x8xbf16>
    %430 = vector.extract_strided_slice %378 {offsets = [0, 0, 16], sizes = [4, 8, 8], strides = [1, 1, 1]} : vector<4x8x32xbf16> to vector<4x8x8xbf16>
    "tpu.trace_start"() <{level = 10 : i32, message = "nst,ntd->nsd"}> : () -> ()
    %cst_119 = arith.constant dense<0.000000e+00> : vector<4x8x8xf32>
    %431 = tpu.matmul %429, %430, %cst_119 {dimension_numbers = #tpu.dot_dimension_numbers<[2], [1], [1], [2], [0, 0, 0, 1, 1, 2], [0], [0]>} : vector<4x8x8xbf16>, vector<4x8x8xbf16>, vector<4x8x8xf32> -> vector<4x8x8xf32>
    "tpu.trace_stop"() : () -> ()
    %432 = vector.shape_cast %431 : vector<4x8x8xf32> to vector<32x8xf32>
    %433 = arith.truncf %432 : vector<32x8xf32> to vector<32x8xbf16>
    %434 = vector.extract_strided_slice %354 {offsets = [2, 0, 0], sizes = [1, 8, 32], strides = [1, 1, 1]} : vector<4x8x32xbf16> to vector<1x8x32xbf16>
    %435 = vector.shape_cast %434 : vector<1x8x32xbf16> to vector<8x32xbf16>
    %cst_120 = arith.constant dense<0.000000e+00> : vector<32x32xf32>
    %436 = tpu.matmul %433, %435, %cst_120 {dimension_numbers = #tpu.dot_dimension_numbers<[1], [0], [0], [1], [0, 0, 1, 1], [], []>} : vector<32x8xbf16>, vector<8x32xbf16>, vector<32x32xf32> -> vector<32x32xf32>
    %437 = arith.addf %427, %436 : vector<32x32xf32>
    %438 = vector.extract_strided_slice %406 {offsets = [0, 3, 0, 0], sizes = [4, 1, 8, 8], strides = [1, 1, 1, 1]} : vector<4x4x8x8xbf16> to vector<4x1x8x8xbf16>
    %439 = vector.shape_cast %438 : vector<4x1x8x8xbf16> to vector<4x8x8xbf16>
    %440 = vector.extract_strided_slice %378 {offsets = [0, 0, 24], sizes = [4, 8, 8], strides = [1, 1, 1]} : vector<4x8x32xbf16> to vector<4x8x8xbf16>
    "tpu.trace_start"() <{level = 10 : i32, message = "nst,ntd->nsd"}> : () -> ()
    %cst_121 = arith.constant dense<0.000000e+00> : vector<4x8x8xf32>
    %441 = tpu.matmul %439, %440, %cst_121 {dimension_numbers = #tpu.dot_dimension_numbers<[2], [1], [1], [2], [0, 0, 0, 1, 1, 2], [0], [0]>} : vector<4x8x8xbf16>, vector<4x8x8xbf16>, vector<4x8x8xf32> -> vector<4x8x8xf32>
    "tpu.trace_stop"() : () -> ()
    %442 = vector.shape_cast %441 : vector<4x8x8xf32> to vector<32x8xf32>
    %443 = arith.truncf %442 : vector<32x8xf32> to vector<32x8xbf16>
    %444 = vector.extract_strided_slice %354 {offsets = [3, 0, 0], sizes = [1, 8, 32], strides = [1, 1, 1]} : vector<4x8x32xbf16> to vector<1x8x32xbf16>
    %445 = vector.shape_cast %444 : vector<1x8x32xbf16> to vector<8x32xbf16>
    %cst_122 = arith.constant dense<0.000000e+00> : vector<32x32xf32>
    %446 = tpu.matmul %443, %445, %cst_122 {dimension_numbers = #tpu.dot_dimension_numbers<[1], [0], [0], [1], [0, 0, 1, 1], [], []>} : vector<32x8xbf16>, vector<8x32xbf16>, vector<32x32xf32> -> vector<32x32xf32>
    %447 = arith.addf %437, %446 : vector<32x32xf32>
    %448 = arith.addf %338, %447 : vector<32x32xf32>
    %cst_123 = arith.constant dense<0.000000e+00> : vector<32xf32>
    %449 = vector.multi_reduction <add>, %448, %cst_123 [1] : vector<32x32xf32> to vector<32xf32>
    %450 = vector.shape_cast %449 : vector<32xf32> to vector<32x1xf32>
    %cst_124 = arith.constant 3.200000e+01 : f32
    %451 = vector.broadcast %cst_124 : f32 to vector<32x1xf32>
    %452 = arith.divf %450, %451 : vector<32x1xf32>
    %453 = vector.broadcast %452 : vector<32x1xf32> to vector<32x32xf32>
    %454 = arith.subf %448, %453 : vector<32x32xf32>
    %455 = arith.mulf %454, %454 : vector<32x32xf32>
    %cst_125 = arith.constant dense<0.000000e+00> : vector<32xf32>
    %456 = vector.multi_reduction <add>, %455, %cst_125 [1] : vector<32x32xf32> to vector<32xf32>
    %457 = vector.shape_cast %456 : vector<32xf32> to vector<32x1xf32>
    %cst_126 = arith.constant 3.200000e+01 : f32
    %458 = vector.broadcast %cst_126 : f32 to vector<32x1xf32>
    %459 = arith.divf %457, %458 : vector<32x1xf32>
    %460 = vector.broadcast %452 : vector<32x1xf32> to vector<32x32xf32>
    %461 = arith.subf %448, %460 : vector<32x32xf32>
    %cst_127 = arith.constant 9.99999974E-6 : f32
    %462 = vector.broadcast %cst_127 : f32 to vector<32x1xf32>
    %463 = arith.addf %459, %462 : vector<32x1xf32>
    %464 = math.rsqrt %463 : vector<32x1xf32>
    %465 = vector.broadcast %464 : vector<32x1xf32> to vector<32x32xf32>
    %466 = arith.mulf %461, %465 : vector<32x32xf32>
    %467 = vector.broadcast %345 : vector<1x32xf32> to vector<32x32xf32>
    %468 = arith.mulf %466, %467 : vector<32x32xf32>
    %469 = vector.broadcast %346 : vector<1x32xf32> to vector<32x32xf32>
    %470 = arith.addf %468, %469 : vector<32x32xf32>
    %471 = arith.truncf %470 : vector<32x32xf32> to vector<32x32xbf16>
    %c2_128 = arith.constant 2 : index
    %c0_129 = arith.constant 0 : index
    %c0_130 = arith.constant 0 : index
    %472 = vector.load %arg4[%c2_128, %c0_129, %c0_130] : memref<3x32x64xbf16, #tpu.memory_space<vmem>>, vector<1x32x64xbf16>
    %473 = vector.shape_cast %472 : vector<1x32x64xbf16> to vector<32x64xbf16>
    %cst_131 = arith.constant dense<0.000000e+00> : vector<32x64xf32>
    %474 = tpu.matmul %471, %473, %cst_131 {dimension_numbers = #tpu.dot_dimension_numbers<[1], [0], [0], [1], [0, 0, 1, 1], [], []>} : vector<32x32xbf16>, vector<32x64xbf16>, vector<32x64xf32> -> vector<32x64xf32>
    %475 = vector.broadcast %347 : vector<1x64xf32> to vector<32x64xf32>
    %476 = arith.addf %474, %475 : vector<32x64xf32>
    %cst_132 = arith.constant 0.000000e+00 : f32
    %477 = vector.broadcast %cst_132 : f32 to vector<32x64xf32>
    %478 = arith.maximumf %476, %477 : vector<32x64xf32>
    %479 = arith.truncf %478 : vector<32x64xf32> to vector<32x64xbf16>
    %c2_133 = arith.constant 2 : index
    %c0_134 = arith.constant 0 : index
    %c0_135 = arith.constant 0 : index
    %480 = vector.load %arg5[%c2_133, %c0_134, %c0_135] : memref<3x64x32xbf16, #tpu.memory_space<vmem>>, vector<1x64x32xbf16>
    %481 = vector.shape_cast %480 : vector<1x64x32xbf16> to vector<64x32xbf16>
    %cst_136 = arith.constant dense<0.000000e+00> : vector<32x32xf32>
    %482 = tpu.matmul %479, %481, %cst_136 {dimension_numbers = #tpu.dot_dimension_numbers<[1], [0], [0], [1], [0, 0, 1, 1], [], []>} : vector<32x64xbf16>, vector<64x32xbf16>, vector<32x32xf32> -> vector<32x32xf32>
    %483 = vector.broadcast %348 : vector<1x32xf32> to vector<32x32xf32>
    %484 = arith.addf %482, %483 : vector<32x32xf32>
    %485 = arith.addf %470, %484 : vector<32x32xf32>
    %cst_137 = arith.constant dense<0.000000e+00> : vector<32xf32>
    %486 = vector.multi_reduction <add>, %485, %cst_137 [1] : vector<32x32xf32> to vector<32xf32>
    %487 = vector.shape_cast %486 : vector<32xf32> to vector<32x1xf32>
    %cst_138 = arith.constant 3.200000e+01 : f32
    %488 = vector.broadcast %cst_138 : f32 to vector<32x1xf32>
    %489 = arith.divf %487, %488 : vector<32x1xf32>
    %490 = vector.broadcast %489 : vector<32x1xf32> to vector<32x32xf32>
    %491 = arith.subf %485, %490 : vector<32x32xf32>
    %492 = arith.mulf %491, %491 : vector<32x32xf32>
    %cst_139 = arith.constant dense<0.000000e+00> : vector<32xf32>
    %493 = vector.multi_reduction <add>, %492, %cst_139 [1] : vector<32x32xf32> to vector<32xf32>
    %494 = vector.shape_cast %493 : vector<32xf32> to vector<32x1xf32>
    %cst_140 = arith.constant 3.200000e+01 : f32
    %495 = vector.broadcast %cst_140 : f32 to vector<32x1xf32>
    %496 = arith.divf %494, %495 : vector<32x1xf32>
    %497 = vector.broadcast %489 : vector<32x1xf32> to vector<32x32xf32>
    %498 = arith.subf %485, %497 : vector<32x32xf32>
    %cst_141 = arith.constant 9.99999974E-6 : f32
    %499 = vector.broadcast %cst_141 : f32 to vector<32x1xf32>
    %500 = arith.addf %496, %499 : vector<32x1xf32>
    %501 = math.rsqrt %500 : vector<32x1xf32>
    %502 = vector.broadcast %501 : vector<32x1xf32> to vector<32x32xf32>
    %503 = arith.mulf %498, %502 : vector<32x32xf32>
    %504 = vector.broadcast %349 : vector<1x32xf32> to vector<32x32xf32>
    %505 = arith.mulf %503, %504 : vector<32x32xf32>
    %506 = vector.broadcast %350 : vector<1x32xf32> to vector<32x32xf32>
    %507 = arith.addf %505, %506 : vector<32x32xf32>
    %508 = arith.truncf %507 : vector<32x32xf32> to vector<32x32xbf16>
    %c0_142 = arith.constant 0 : index
    %c0_143 = arith.constant 0 : index
    %c0_144 = arith.constant 0 : index
    %509 = vector.load %arg7[%c0_142, %c0_143, %c0_144] : memref<2x32x128xbf16, #tpu.memory_space<vmem>>, vector<1x32x128xbf16>
    %510 = vector.shape_cast %509 : vector<1x32x128xbf16> to vector<32x128xbf16>
    %cst_145 = arith.constant dense<0.000000e+00> : vector<32x128xf32>
    %511 = tpu.matmul %508, %510, %cst_145 {dimension_numbers = #tpu.dot_dimension_numbers<[1], [0], [0], [1], [0, 0, 1, 1], [], []>} : vector<32x32xbf16>, vector<32x128xbf16>, vector<32x128xf32> -> vector<32x128xf32>
    %c0_146 = arith.constant 0 : index
    %c0_147 = arith.constant 0 : index
    %512 = vector.load %arg1[%c0_146, %c0_147] : memref<4x32xf32, #tpu.memory_space<vmem>>, vector<4x32xf32>
    %513 = arith.truncf %512 : vector<4x32xf32> to vector<4x32xbf16>
    %c1_148 = arith.constant 1 : index
    %c0_149 = arith.constant 0 : index
    %c0_150 = arith.constant 0 : index
    %514 = vector.load %arg7[%c1_148, %c0_149, %c0_150] : memref<2x32x128xbf16, #tpu.memory_space<vmem>>, vector<1x32x128xbf16>
    %515 = vector.shape_cast %514 : vector<1x32x128xbf16> to vector<32x128xbf16>
    %cst_151 = arith.constant dense<0.000000e+00> : vector<4x128xf32>
    %516 = tpu.matmul %513, %515, %cst_151 {dimension_numbers = #tpu.dot_dimension_numbers<[1], [0], [0], [1], [0, 0, 1, 1], [], []>} : vector<4x32xbf16>, vector<32x128xbf16>, vector<4x128xf32> -> vector<4x128xf32>
    %c0_152 = arith.constant 0 : index
    %c0_153 = arith.constant 0 : index
    %517 = vector.load %arg8[%c0_152, %c0_153] : memref<1x128xf32, #tpu.memory_space<vmem>>, vector<1x128xf32>
    %518 = vector.broadcast %517 : vector<1x128xf32> to vector<4x128xf32>
    %519 = arith.addf %516, %518 : vector<4x128xf32>
    %520 = vector.shape_cast %511 : vector<32x128xf32> to vector<4x8x128xf32>
    %521 = vector.shape_cast %519 : vector<4x128xf32> to vector<4x1x128xf32>
    %522 = vector.broadcast %521 : vector<4x1x128xf32> to vector<4x8x128xf32>
    %523 = arith.addf %520, %522 : vector<4x8x128xf32>
    %c0_154 = arith.constant 0 : index
    %c0_155 = arith.constant 0 : index
    %c0_156 = arith.constant 0 : index
    %524 = vector.load %arg9[%c0_154, %c0_155, %c0_156] : memref<4x8x128xf32, #tpu.memory_space<vmem>>, vector<4x8x128xf32>
    tpu.vector_store %arg9[%c0_154, %c0_155, %c0_156], %523 {strides = array<i32>} : memref<4x8x128xf32, #tpu.memory_space<vmem>>, vector<4x8x128xf32>,
    return
  }
}

</mosaic_0001>

<llo_original>
// kernel: forward.1
$region0: #{forward.1}
  #allocation0 [shape = 'u32[]', space=smem, size = 0x4, offset = 0x4, fixed_abs, tag = 'smem constant byte address 0x4 - core index']
  #allocation1 [shape = 'u32[144,128]{1,0:T(1,128)}', space=vmem, size = 0x12000, scoped, tag = 'internal scratch']
  %s0 = inlined_call_operand.vmem [shape: f32[32,32], index: 0, kind: input, shape index: {}]
  %s1 = inlined_call_operand.vmem [shape: f32[4,32], index: 1, kind: input, shape index: {}]
  %s2 = inlined_call_operand.vmem [shape: bf16[3,3,32,32], index: 2, kind: input, shape index: {}]
  %s3 = inlined_call_operand.vmem [shape: bf16[3,4,8,32], index: 3, kind: input, shape index: {}]
  %s4 = inlined_call_operand.vmem [shape: bf16[3,32,64], index: 4, kind: input, shape index: {}]
  %s5 = inlined_call_operand.vmem [shape: bf16[3,64,32], index: 5, kind: input, shape index: {}]
  %s6 = inlined_call_operand.vmem [shape: f32[3,16,128], index: 6, kind: input, shape index: {}]
  %s7 = inlined_call_operand.vmem [shape: bf16[2,32,128], index: 7, kind: input, shape index: {}]
  %s8 = inlined_call_operand.vmem [shape: f32[1,128], index: 8, kind: input, shape index: {}]
  %s9 = inlined_call_operand.vmem [shape: f32[4,8,128], index: 9, kind: output, shape index: {}]
  %s10 = sld [smem:[#allocation0]]
  $region46: #{forward.1} parent=0
    _
  %s12 = ssub.s32 1, %s10
  %s13 = scalar_select 0, %s12, %s10
  // Predicated region
  $region2: #{forward.1} parent=0 // pred_check
    _
  $region3: #{forward.1} parent=0 // pred_check_branch
    %15 = sbr.rel (0) target = $region5
  $region4: #{forward.1} parent=0 // pred_region
    _
  $region5: #{forward.1} parent=0 // pred_fallthru
    _
  // Predicated region
  $region6: #{forward.1} parent=0 // pred_check
    _
  $region7: #{forward.1} parent=0 // pred_check_branch
    %17 = sbr.rel (0) target = $region9
  $region8: #{forward.1} parent=0 // pred_region
    _
  $region9: #{forward.1} parent=0 // pred_fallthru
    _
  // Predicated region
  $region10: #{forward.1} parent=0 // pred_check
    _
  $region11: #{forward.1} parent=0 // pred_check_branch
    %19 = sbr.rel (0) target = $region13
  $region12: #{forward.1} parent=0 // pred_region
    _
  $region13: #{forward.1} parent=0 // pred_fallthru
    _
  // Predicated region
  $region14: #{forward.1} parent=0 // pred_check
    _
  $region15: #{forward.1} parent=0 // pred_check_branch
    %21 = sbr.rel (0) target = $region17
  $region16: #{forward.1} parent=0 // pred_region
    _
  $region17: #{forward.1} parent=0 // pred_fallthru
    _
  // Predicated region
  $region18: #{forward.1} parent=0 // pred_check
    _
  $region19: #{forward.1} parent=0 // pred_check_branch
    %23 = sbr.rel (0) target = $region21
  $region20: #{forward.1} parent=0 // pred_region
    _
  $region21: #{forward.1} parent=0 // pred_fallthru
    _
  // Predicated region
  $region22: #{forward.1} parent=0 // pred_check
    _
  $region23: #{forward.1} parent=0 // pred_check_branch
    %25 = sbr.rel (0) target = $region25
  $region24: #{forward.1} parent=0 // pred_region
    _
  $region25: #{forward.1} parent=0 // pred_fallthru
    _
  // Predicated region
  $region26: #{forward.1} parent=0 // pred_check
    _
  $region27: #{forward.1} parent=0 // pred_check_branch
    %27 = sbr.rel (0) target = $region29
  $region28: #{forward.1} parent=0 // pred_region
    _
  $region29: #{forward.1} parent=0 // pred_fallthru
    _
  // Predicated region
  $region30: #{forward.1} parent=0 // pred_check
    _
  $region31: #{forward.1} parent=0 // pred_check_branch
    %29 = sbr.rel (0) target = $region33
  $region32: #{forward.1} parent=0 // pred_region
    _
  $region33: #{forward.1} parent=0 // pred_fallthru
    _
  // Predicated region
  $region34: #{forward.1} parent=0 // pred_check
    _
  $region35: #{forward.1} parent=0 // pred_check_branch
    %31 = sbr.rel (0) target = $region37
  $region36: #{forward.1} parent=0 // pred_region
    _
  $region37: #{forward.1} parent=0 // pred_fallthru
    _
  %v33 = vld [vmem:[%s0] sm:$0xff]
  %v34 = vld [vmem:[%s0 + $0x8] sm:$0xff]
  %v35 = vld [vmem:[%s0 + $0x10] sm:$0xff]
  %v36 = vld [vmem:[%s0 + $0x18] sm:$0xff]
  %v37 = vld [vmem:[%s6] sm:$0xff]
  %v38 = vld [vmem:[%s6 + $0x8] sm:$0xff]
  %v39 = vld [vmem:[%s2] sm:$0xf]
  %v40 = vld [vmem:[%s2 + $0x4] sm:$0xf]
  %v41 = vld [vmem:[%s2 + $0x8] sm:$0xf]
  %v42 = vld [vmem:[%s2 + $0xc] sm:$0xf]
  %v43 = vld [vmem:[%s2 + $0x10] sm:$0xf]
  %v44 = vld [vmem:[%s2 + $0x14] sm:$0xf]
  %v45 = vld [vmem:[%s2 + $0x18] sm:$0xf]
  %v46 = vld [vmem:[%s2 + $0x1c] sm:$0xf]
  %v47 = vld [vmem:[%s2 + $0x20] sm:$0xf]
  %v48 = vld [vmem:[%s2 + $0x24] sm:$0xf]
  %v49 = vld [vmem:[%s2 + $0x28] sm:$0xf]
  %v50 = vld [vmem:[%s2 + $0x2c] sm:$0xf]
  %v51 = vld [vmem:[%s3] sm:$0xf]
  %v52 = vld [vmem:[%s3 + $0x4] sm:$0xf]
  %v53 = vld [vmem:[%s3 + $0x8] sm:$0xf]
  %v54 = vld [vmem:[%s3 + $0xc] sm:$0xf]
  %v55 = vpack.c.bf16 %v34, %v33
  %v56 = vpack.c.bf16 %v36, %v35
  %v57 = vlaneseq
  %v58 = vshrl.u32 %v57, 7
  %v59 = vsub.s32 0, %v58
  %v60 = vrot.slane %v37, %v59
  %v65 = vunpack.c.l.b16 %v39
  %v66 = vunpack.c.l.b16 %v40
  %v67 = vunpack.c.l.b16 %v41
  %v68 = vunpack.c.l.b16 %v42
  %v69 = vpack.c.b16 %v66, %v65
  %v70 = vpack.c.b16 %v68, %v67
  %vm73 = vcmask 261120
  %v75 = vsel %vm73, %v55, 0
  %v78 = vsel %vm73, %v56, 0
  %80 = vmatprep.subr.bf16.mxu0 0
  %81 = vmatpush1.bf16.msra.mxu0 0
  %82 = vmatprep.subr.bf16.mxu0 0
  %83 = vmatpush1.bf16.msra.mxu0 0
  %84 = vmatprep.subr.bf16.mxu0 0
  %85 = vmatpush1.bf16.msra.mxu0 0
  %86 = vmatprep.subr.bf16.mxu0 0
  %87 = vmatpush1.bf16.msra.mxu0 0
  %88 = vmatprep.subr.bf16.mxu0 0
  %89 = vmatpush1.bf16.msra.mxu0 0
  %90 = vmatprep.subr.bf16.mxu0 0
  %91 = vmatpush1.bf16.msra.mxu0 0
  %92 = vmatprep.subr.bf16.mxu0 0
  %93 = vmatpush1.bf16.msra.mxu0 %v70
  %94 = vmatprep.subr.bf16.mxu0 0
  %95 = vmatpush1.bf16.msra.mxu0 %v69
  %96 = vmatprep.subr.bf16.mxu0 0
  %97 = vmatpush2.bf16.msra.mxu0 0
  %98 = vmatprep.subr.bf16.mxu0 0
  %99 = vmatpush2.bf16.msra.mxu0 0
  %100 = vmatprep.subr.bf16.mxu0 0
  %101 = vmatpush2.bf16.msra.mxu0 0
  %102 = vmatprep.subr.bf16.mxu0 0
  %103 = vmatpush2.bf16.msra.mxu0 0
  %104 = vmatprep.subr.bf16.mxu0 0
  %105 = vmatpush2.bf16.msra.mxu0 0
  %106 = vmatprep.subr.bf16.mxu0 0
  %107 = vmatpush2.bf16.msra.mxu0 0
  %108 = vmatprep.subr.bf16.mxu0 0
  %109 = vmatpush2.bf16.msra.mxu0 0
  %110 = vmatprep.subr.bf16.mxu0 0
  %111 = vmatpush2.bf16.msra.mxu0 0
  %112 = vmatprep.mubr.bf16.mxu0 0
  %113 = vmatmul.mubr.bf16.gmra.mxu0 %v75
  %v114 = vpop.f32.mrf.mxu0
  %v115 = vadd.f32 %v60, %v114
  %v116 = vpop.f32.mrf.mxu0
  %v117 = vpop.f32.mrf.mxu0
  %v118 = vadd.f32 %v60, %v117
  %v119 = vpop.f32.mrf.mxu0
  %120 = vmatprep.mubr.bf16.mxu0 0
  %121 = vmatmul.mubr.bf16.gmra.mxu0 %v78
  %v122 = vpop.f32.mrf.mxu0
  %v123 = vadd.f32 %v60, %v122
  %v124 = vpop.f32.mrf.mxu0
  %v125 = vpop.f32.mrf.mxu0
  %v126 = vadd.f32 %v60, %v125
  %v127 = vpop.f32.mrf.mxu0
  %128 = vdwg.mxu0
  %v129 = vlaneseq
  %v130 = vshrl.u32 %v129, 7
  %v131 = vsub.s32 1, %v130
  %v132 = vrot.slane %v37, %v131
  %v137 = vunpack.c.l.b16 %v43
  %v138 = vunpack.c.l.b16 %v44
  %v139 = vunpack.c.l.b16 %v45
  %v140 = vunpack.c.l.b16 %v46
  %v141 = vpack.c.b16 %v138, %v137
  %v142 = vpack.c.b16 %v140, %v139
  %145 = vmatprep.subr.bf16.mxu0 0
  %146 = vmatpush1.bf16.msra.mxu0 0
  %147 = vmatprep.subr.bf16.mxu0 0
  %148 = vmatpush1.bf16.msra.mxu0 0
  %149 = vmatprep.subr.bf16.mxu0 0
  %150 = vmatpush1.bf16.msra.mxu0 0
  %151 = vmatprep.subr.bf16.mxu0 0
  %152 = vmatpush1.bf16.msra.mxu0 0
  %153 = vmatprep.subr.bf16.mxu0 0
  %154 = vmatpush1.bf16.msra.mxu0 0
  %155 = vmatprep.subr.bf16.mxu0 0
  %156 = vmatpush1.bf16.msra.mxu0 0
  %157 = vmatprep.subr.bf16.mxu0 0
  %158 = vmatpush1.bf16.msra.mxu0 %v142
  %159 = vmatprep.subr.bf16.mxu0 0
  %160 = vmatpush1.bf16.msra.mxu0 %v141
  %161 = vmatprep.subr.bf16.mxu0 0
  %162 = vmatpush2.bf16.msra.mxu0 0
  %163 = vmatprep.subr.bf16.mxu0 0
  %164 = vmatpush2.bf16.msra.mxu0 0
  %165 = vmatprep.subr.bf16.mxu0 0
  %166 = vmatpush2.bf16.msra.mxu0 0
  %167 = vmatprep.subr.bf16.mxu0 0
  %168 = vmatpush2.bf16.msra.mxu0 0
  %169 = vmatprep.subr.bf16.mxu0 0
  %170 = vmatpush2.bf16.msra.mxu0 0
  %171 = vmatprep.subr.bf16.mxu0 0
  %172 = vmatpush2.bf16.msra.mxu0 0
  %173 = vmatprep.subr.bf16.mxu0 0
  %174 = vmatpush2.bf16.msra.mxu0 0
  %175 = vmatprep.subr.bf16.mxu0 0
  %176 = vmatpush2.bf16.msra.mxu0 0
  %177 = vmatprep.mubr.bf16.mxu0 0
  %178 = vmatmul.mubr.bf16.gmra.mxu0 %v75
  %v179 = vpop.f32.mrf.mxu0
  %v180 = vadd.f32 %v132, %v179
  %v181 = vpop.f32.mrf.mxu0
  %v182 = vpop.f32.mrf.mxu0
  %v183 = vadd.f32 %v132, %v182
  %v184 = vpop.f32.mrf.mxu0
  %185 = vmatprep.mubr.bf16.mxu0 0
  %186 = vmatmul.mubr.bf16.gmra.mxu0 %v78
  %v187 = vpop.f32.mrf.mxu0
  %v188 = vadd.f32 %v132, %v187
  %v189 = vpop.f32.mrf.mxu0
  %v190 = vpop.f32.mrf.mxu0
  %v191 = vadd.f32 %v132, %v190
  %v192 = vpop.f32.mrf.mxu0
  %193 = vdwg.mxu0
  %v194 = vlaneseq
  %v195 = vshrl.u32 %v194, 7
  %v196 = vsub.s32 2, %v195
  %v197 = vrot.slane %v37, %v196
  %v202 = vunpack.c.l.b16 %v47
  %v203 = vunpack.c.l.b16 %v48
  %v204 = vunpack.c.l.b16 %v49
  %v205 = vunpack.c.l.b16 %v50
  %v206 = vpack.c.b16 %v203, %v202
  %v207 = vpack.c.b16 %v205, %v204
  %210 = vmatprep.subr.bf16.mxu0 0
  %211 = vmatpush1.bf16.msra.mxu0 0
  %212 = vmatprep.subr.bf16.mxu0 0
  %213 = vmatpush1.bf16.msra.mxu0 0
  %214 = vmatprep.subr.bf16.mxu0 0
  %215 = vmatpush1.bf16.msra.mxu0 0
  %216 = vmatprep.subr.bf16.mxu0 0
  %217 = vmatpush1.bf16.msra.mxu0 0
  %218 = vmatprep.subr.bf16.mxu0 0
  %219 = vmatpush1.bf16.msra.mxu0 0
  %220 = vmatprep.subr.bf16.mxu0 0
  %221 = vmatpush1.bf16.msra.mxu0 0
  %222 = vmatprep.subr.bf16.mxu0 0
  %223 = vmatpush1.bf16.msra.mxu0 %v207
  %224 = vmatprep.subr.bf16.mxu0 0
  %225 = vmatpush1.bf16.msra.mxu0 %v206
  %226 = vmatprep.subr.bf16.mxu0 0
  %227 = vmatpush2.bf16.msra.mxu0 0
  %228 = vmatprep.subr.bf16.mxu0 0
  %229 = vmatpush2.bf16.msra.mxu0 0
  %230 = vmatprep.subr.bf16.mxu0 0
  %231 = vmatpush2.bf16.msra.mxu0 0
  %232 = vmatprep.subr.bf16.mxu0 0
  %233 = vmatpush2.bf16.msra.mxu0 0
  %234 = vmatprep.subr.bf16.mxu0 0
  %235 = vmatpush2.bf16.msra.mxu0 0
  %236 = vmatprep.subr.bf16.mxu0 0
  %237 = vmatpush2.bf16.msra.mxu0 0
  %238 = vmatprep.subr.bf16.mxu0 0
  %239 = vmatpush2.bf16.msra.mxu0 0
  %240 = vmatprep.subr.bf16.mxu0 0
  %241 = vmatpush2.bf16.msra.mxu0 0
  %242 = vmatprep.mubr.bf16.mxu0 0
  %243 = vmatmul.mubr.bf16.gmra.mxu0 %v75
  %v244 = vpop.f32.mrf.mxu0
  %v245 = vadd.f32 %v197, %v244
  %v246 = vpop.f32.mrf.mxu0
  %v247 = vpop.f32.mrf.mxu0
  %v248 = vadd.f32 %v197, %v247
  %v249 = vpop.f32.mrf.mxu0
  %250 = vmatprep.mubr.bf16.mxu0 0
  %251 = vmatmul.mubr.bf16.gmra.mxu0 %v78
  %v252 = vpop.f32.mrf.mxu0
  %v253 = vadd.f32 %v197, %v252
  %v254 = vpop.f32.mrf.mxu0
  %v255 = vpop.f32.mrf.mxu0
  %v256 = vadd.f32 %v197, %v255
  %v257 = vpop.f32.mrf.mxu0
  %258 = vdwg.mxu0
  %v259 = vmul.f32 %v115, 0.35355338
  %v260 = vmul.f32 %v118, 0.35355338
  %v261 = vmul.f32 %v123, 0.35355338
  %v262 = vmul.f32 %v126, 0.35355338
  %v263 = vpack.c.bf16 %v259, %v259
  %v264 = vpack.c.bf16 %v260, %v260
  %v265 = vpack.c.bf16 %v261, %v261
  %v266 = vpack.c.bf16 %v262, %v262
  %v267 = vpack.c.bf16 %v180, %v180
  %v268 = vpack.c.bf16 %v183, %v183
  %v269 = vpack.c.bf16 %v188, %v188
  %v270 = vpack.c.bf16 %v191, %v191
  %v271 = vpack.c.bf16 %v245, %v245
  %v272 = vpack.c.bf16 %v248, %v248
  %v273 = vpack.c.bf16 %v253, %v253
  %v274 = vpack.c.bf16 %v256, %v256
  %vm275 = vcmask 64512
  %v277 = vsel %vm275, %v263, 0
  %v280 = vsel %vm275, %v267, 0
  %282 = vmatprep.subr.bf16.mxu0 0
  %283 = vmatpush1.bf16.xpose.msra.mxu0 0
  %284 = vmatprep.subr.bf16.mxu0 0
  %285 = vmatpush1.bf16.xpose.msra.mxu0 0
  %286 = vmatprep.subr.bf16.mxu0 0
  %287 = vmatpush1.bf16.xpose.msra.mxu0 0
  %288 = vmatprep.subr.bf16.mxu0 0
  %289 = vmatpush1.bf16.xpose.msra.mxu0 0
  %290 = vmatprep.subr.bf16.mxu0 0
  %291 = vmatpush1.bf16.xpose.msra.mxu0 0
  %292 = vmatprep.subr.bf16.mxu0 0
  %293 = vmatpush1.bf16.xpose.msra.mxu0 0
  %294 = vmatprep.subr.bf16.mxu0 0
  %295 = vmatpush1.bf16.xpose.msra.mxu0 0
  %296 = vmatprep.subr.bf16.mxu0 0
  %297 = vmatpush1.bf16.xpose.msra.mxu0 %v280
  %298 = vmatprep.subr.bf16.mxu0 0
  %299 = vmatpush2.bf16.xpose.msra.mxu0 0
  %300 = vmatprep.subr.bf16.mxu0 0
  %301 = vmatpush2.bf16.xpose.msra.mxu0 0
  %302 = vmatprep.subr.bf16.mxu0 0
  %303 = vmatpush2.bf16.xpose.msra.mxu0 0
  %304 = vmatprep.subr.bf16.mxu0 0
  %305 = vmatpush2.bf16.xpose.msra.mxu0 0
  %306 = vmatprep.subr.bf16.mxu0 0
  %307 = vmatpush2.bf16.xpose.msra.mxu0 0
  %308 = vmatprep.subr.bf16.mxu0 0
  %309 = vmatpush2.bf16.xpose.msra.mxu0 0
  %310 = vmatprep.subr.bf16.mxu0 0
  %311 = vmatpush2.bf16.xpose.msra.mxu0 0
  %312 = vmatprep.subr.bf16.mxu0 0
  %313 = vmatpush2.bf16.xpose.msra.mxu0 0
  %314 = vmatprep.mubr.bf16.mxu0 0
  %315 = vmatmul.mubr.bf16.gmra.mxu0 %v277
  %v316 = vpop.f32.mrf.mxu0
  %v317 = vadd.f32 0.0, %v316
  %v318 = vpop.f32.mrf.mxu0
  %v319 = vpop.f32.mrf.mxu0
  %v320 = vpop.f32.mrf.mxu0
  %321 = vdwg.mxu0
  %v323 = vsel %vm275, %v264, 0
  %v326 = vsel %vm275, %v268, 0
  %328 = vmatprep.subr.bf16.mxu0 0
  %329 = vmatpush1.bf16.xpose.msra.mxu0 0
  %330 = vmatprep.subr.bf16.mxu0 0
  %331 = vmatpush1.bf16.xpose.msra.mxu0 0
  %332 = vmatprep.subr.bf16.mxu0 0
  %333 = vmatpush1.bf16.xpose.msra.mxu0 0
  %334 = vmatprep.subr.bf16.mxu0 0
  %335 = vmatpush1.bf16.xpose.msra.mxu0 0
  %336 = vmatprep.subr.bf16.mxu0 0
  %337 = vmatpush1.bf16.xpose.msra.mxu0 0
  %338 = vmatprep.subr.bf16.mxu0 0
  %339 = vmatpush1.bf16.xpose.msra.mxu0 0
  %340 = vmatprep.subr.bf16.mxu0 0
  %341 = vmatpush1.bf16.xpose.msra.mxu0 0
  %342 = vmatprep.subr.bf16.mxu0 0
  %343 = vmatpush1.bf16.xpose.msra.mxu0 %v326
  %344 = vmatprep.subr.bf16.mxu0 0
  %345 = vmatpush2.bf16.xpose.msra.mxu0 0
  %346 = vmatprep.subr.bf16.mxu0 0
  %347 = vmatpush2.bf16.xpose.msra.mxu0 0
  %348 = vmatprep.subr.bf16.mxu0 0
  %349 = vmatpush2.bf16.xpose.msra.mxu0 0
  %350 = vmatprep.subr.bf16.mxu0 0
  %351 = vmatpush2.bf16.xpose.msra.mxu0 0
  %352 = vmatprep.subr.bf16.mxu0 0
  %353 = vmatpush2.bf16.xpose.msra.mxu0 0
  %354 = vmatprep.subr.bf16.mxu0 0
  %355 = vmatpush2.bf16.xpose.msra.mxu0 0
  %356 = vmatprep.subr.bf16.mxu0 0
  %357 = vmatpush2.bf16.xpose.msra.mxu0 0
  %358 = vmatprep.subr.bf16.mxu0 0
  %359 = vmatpush2.bf16.xpose.msra.mxu0 0
  %360 = vmatprep.mubr.bf16.mxu0 0
  %361 = vmatmul.mubr.bf16.gmra.mxu0 %v323
  %v362 = vpop.f32.mrf.mxu0
  %v363 = vadd.f32 0.0, %v362
  %v364 = vpop.f32.mrf.mxu0
  %v365 = vpop.f32.mrf.mxu0
  %v366 = vpop.f32.mrf.mxu0
  %367 = vdwg.mxu0
  %v369 = vsel %vm275, %v265, 0
  %v372 = vsel %vm275, %v269, 0
  %374 = vmatprep.subr.bf16.mxu0 0
  %375 = vmatpush1.bf16.xpose.msra.mxu0 0
  %376 = vmatprep.subr.bf16.mxu0 0
  %377 = vmatpush1.bf16.xpose.msra.mxu0 0
  %378 = vmatprep.subr.bf16.mxu0 0
  %379 = vmatpush1.bf16.xpose.msra.mxu0 0
  %380 = vmatprep.subr.bf16.mxu0 0
  %381 = vmatpush1.bf16.xpose.msra.mxu0 0
  %382 = vmatprep.subr.bf16.mxu0 0
  %383 = vmatpush1.bf16.xpose.msra.mxu0 0
  %384 = vmatprep.subr.bf16.mxu0 0
  %385 = vmatpush1.bf16.xpose.msra.mxu0 0
  %386 = vmatprep.subr.bf16.mxu0 0
  %387 = vmatpush1.bf16.xpose.msra.mxu0 0
  %388 = vmatprep.subr.bf16.mxu0 0
  %389 = vmatpush1.bf16.xpose.msra.mxu0 %v372
  %390 = vmatprep.subr.bf16.mxu0 0
  %391 = vmatpush2.bf16.xpose.msra.mxu0 0
  %392 = vmatprep.subr.bf16.mxu0 0
  %393 = vmatpush2.bf16.xpose.msra.mxu0 0
  %394 = vmatprep.subr.bf16.mxu0 0
  %395 = vmatpush2.bf16.xpose.msra.mxu0 0
  %396 = vmatprep.subr.bf16.mxu0 0
  %397 = vmatpush2.bf16.xpose.msra.mxu0 0
  %398 = vmatprep.subr.bf16.mxu0 0
  %399 = vmatpush2.bf16.xpose.msra.mxu0 0
  %400 = vmatprep.subr.bf16.mxu0 0
  %401 = vmatpush2.bf16.xpose.msra.mxu0 0
  %402 = vmatprep.subr.bf16.mxu0 0
  %403 = vmatpush2.bf16.xpose.msra.mxu0 0
  %404 = vmatprep.subr.bf16.mxu0 0
  %405 = vmatpush2.bf16.xpose.msra.mxu0 0
  %406 = vmatprep.mubr.bf16.mxu0 0
  %407 = vmatmul.mubr.bf16.gmra.mxu0 %v369
  %v408 = vpop.f32.mrf.mxu0
  %v409 = vadd.f32 0.0, %v408
  %v410 = vpop.f32.mrf.mxu0
  %v411 = vpop.f32.mrf.mxu0
  %v412 = vpop.f32.mrf.mxu0
  %413 = vdwg.mxu0
  %v415 = vsel %vm275, %v266, 0
  %v418 = vsel %vm275, %v270, 0
  %420 = vmatprep.subr.bf16.mxu0 0
  %421 = vmatpush1.bf16.xpose.msra.mxu0 0
  %422 = vmatprep.subr.bf16.mxu0 0
  %423 = vmatpush1.bf16.xpose.msra.mxu0 0
  %424 = vmatprep.subr.bf16.mxu0 0
  %425 = vmatpush1.bf16.xpose.msra.mxu0 0
  %426 = vmatprep.subr.bf16.mxu0 0
  %427 = vmatpush1.bf16.xpose.msra.mxu0 0
  %428 = vmatprep.subr.bf16.mxu0 0
  %429 = vmatpush1.bf16.xpose.msra.mxu0 0
  %430 = vmatprep.subr.bf16.mxu0 0
  %431 = vmatpush1.bf16.xpose.msra.mxu0 0
  %432 = vmatprep.subr.bf16.mxu0 0
  %433 = vmatpush1.bf16.xpose.msra.mxu0 0
  %434 = vmatprep.subr.bf16.mxu0 0
  %435 = vmatpush1.bf16.xpose.msra.mxu0 %v418
  %436 = vmatprep.subr.bf16.mxu0 0
  %437 = vmatpush2.bf16.xpose.msra.mxu0 0
  %438 = vmatprep.subr.bf16.mxu0 0
  %439 = vmatpush2.bf16.xpose.msra.mxu0 0
  %440 = vmatprep.subr.bf16.mxu0 0
  %441 = vmatpush2.bf16.xpose.msra.mxu0 0
  %442 = vmatprep.subr.bf16.mxu0 0
  %443 = vmatpush2.bf16.xpose.msra.mxu0 0
  %444 = vmatprep.subr.bf16.mxu0 0
  %445 = vmatpush2.bf16.xpose.msra.mxu0 0
  %446 = vmatprep.subr.bf16.mxu0 0
  %447 = vmatpush2.bf16.xpose.msra.mxu0 0
  %448 = vmatprep.subr.bf16.mxu0 0
  %449 = vmatpush2.bf16.xpose.msra.mxu0 0
  %450 = vmatprep.subr.bf16.mxu0 0
  %451 = vmatpush2.bf16.xpose.msra.mxu0 0
  %452 = vmatprep.mubr.bf16.mxu0 0
  %453 = vmatmul.mubr.bf16.gmra.mxu0 %v415
  %v454 = vpop.f32.mrf.mxu0
  %v455 = vadd.f32 0.0, %v454
  %v456 = vpop.f32.mrf.mxu0
  %v457 = vpop.f32.mrf.mxu0
  %v458 = vpop.f32.mrf.mxu0
  %459 = vdwg.mxu0
  %461 = vrot.lane.b32.xlu0 %v263, 120
  %v462 = vpop.permute.xlu0 %461
  %464 = vrot.lane.b32.xlu0 %v267, 120
  %v465 = vpop.permute.xlu0 %464
  %v467 = vsel %vm275, %v462, 0
  %v470 = vsel %vm275, %v465, 0
  %472 = vmatprep.subr.bf16.mxu0 0
  %473 = vmatpush1.bf16.xpose.msra.mxu0 0
  %474 = vmatprep.subr.bf16.mxu0 0
  %475 = vmatpush1.bf16.xpose.msra.mxu0 0
  %476 = vmatprep.subr.bf16.mxu0 0
  %477 = vmatpush1.bf16.xpose.msra.mxu0 0
  %478 = vmatprep.subr.bf16.mxu0 0
  %479 = vmatpush1.bf16.xpose.msra.mxu0 0
  %480 = vmatprep.subr.bf16.mxu0 0
  %481 = vmatpush1.bf16.xpose.msra.mxu0 0
  %482 = vmatprep.subr.bf16.mxu0 0
  %483 = vmatpush1.bf16.xpose.msra.mxu0 0
  %484 = vmatprep.subr.bf16.mxu0 0
  %485 = vmatpush1.bf16.xpose.msra.mxu0 0
  %486 = vmatprep.subr.bf16.mxu0 0
  %487 = vmatpush1.bf16.xpose.msra.mxu0 %v470
  %488 = vmatprep.subr.bf16.mxu0 0
  %489 = vmatpush2.bf16.xpose.msra.mxu0 0
  %490 = vmatprep.subr.bf16.mxu0 0
  %491 = vmatpush2.bf16.xpose.msra.mxu0 0
  %492 = vmatprep.subr.bf16.mxu0 0
  %493 = vmatpush2.bf16.xpose.msra.mxu0 0
  %494 = vmatprep.subr.bf16.mxu0 0
  %495 = vmatpush2.bf16.xpose.msra.mxu0 0
  %496 = vmatprep.subr.bf16.mxu0 0
  %497 = vmatpush2.bf16.xpose.msra.mxu0 0
  %498 = vmatprep.subr.bf16.mxu0 0
  %499 = vmatpush2.bf16.xpose.msra.mxu0 0
  %500 = vmatprep.subr.bf16.mxu0 0
  %501 = vmatpush2.bf16.xpose.msra.mxu0 0
  %502 = vmatprep.subr.bf16.mxu0 0
  %503 = vmatpush2.bf16.xpose.msra.mxu0 0
  %504 = vmatprep.mubr.bf16.mxu0 0
  %505 = vmatmul.mubr.bf16.gmra.mxu0 %v467
  %v506 = vpop.f32.mrf.mxu0
  %v507 = vadd.f32 0.0, %v506
  %v508 = vpop.f32.mrf.mxu0
  %v509 = vpop.f32.mrf.mxu0
  %v510 = vpop.f32.mrf.mxu0
  %511 = vdwg.mxu0
  %513 = vrot.lane.b32.xlu0 %v264, 120
  %v514 = vpop.permute.xlu0 %513
  %516 = vrot.lane.b32.xlu0 %v268, 120
  %v517 = vpop.permute.xlu0 %516
  %v519 = vsel %vm275, %v514, 0
  %v522 = vsel %vm275, %v517, 0
  %524 = vmatprep.subr.bf16.mxu0 0
  %525 = vmatpush1.bf16.xpose.msra.mxu0 0
  %526 = vmatprep.subr.bf16.mxu0 0
  %527 = vmatpush1.bf16.xpose.msra.mxu0 0
  %528 = vmatprep.subr.bf16.mxu0 0
  %529 = vmatpush1.bf16.xpose.msra.mxu0 0
  %530 = vmatprep.subr.bf16.mxu0 0
  %531 = vmatpush1.bf16.xpose.msra.mxu0 0
  %532 = vmatprep.subr.bf16.mxu0 0
  %533 = vmatpush1.bf16.xpose.msra.mxu0 0
  %534 = vmatprep.subr.bf16.mxu0 0
  %535 = vmatpush1.bf16.xpose.msra.mxu0 0
  %536 = vmatprep.subr.bf16.mxu0 0
  %537 = vmatpush1.bf16.xpose.msra.mxu0 0
  %538 = vmatprep.subr.bf16.mxu0 0
  %539 = vmatpush1.bf16.xpose.msra.mxu0 %v522
  %540 = vmatprep.subr.bf16.mxu0 0
  %541 = vmatpush2.bf16.xpose.msra.mxu0 0
  %542 = vmatprep.subr.bf16.mxu0 0
  %543 = vmatpush2.bf16.xpose.msra.mxu0 0
  %544 = vmatprep.subr.bf16.mxu0 0
  %545 = vmatpush2.bf16.xpose.msra.mxu0 0
  %546 = vmatprep.subr.bf16.mxu0 0
  %547 = vmatpush2.bf16.xpose.msra.mxu0 0
  %548 = vmatprep.subr.bf16.mxu0 0
  %549 = vmatpush2.bf16.xpose.msra.mxu0 0
  %550 = vmatprep.subr.bf16.mxu0 0
  %551 = vmatpush2.bf16.xpose.msra.mxu0 0
  %552 = vmatprep.subr.bf16.mxu0 0
  %553 = vmatpush2.bf16.xpose.msra.mxu0 0
  %554 = vmatprep.subr.bf16.mxu0 0
  %555 = vmatpush2.bf16.xpose.msra.mxu0 0
  %556 = vmatprep.mubr.bf16.mxu0 0
  %557 = vmatmul.mubr.bf16.gmra.mxu0 %v519
  %v558 = vpop.f32.mrf.mxu0
  %v559 = vadd.f32 0.0, %v558
  %v560 = vpop.f32.mrf.mxu0
  %v561 = vpop.f32.mrf.mxu0
  %v562 = vpop.f32.mrf.mxu0
  %563 = vdwg.mxu0
  %565 = vrot.lane.b32.xlu0 %v265, 120
  %v566 = vpop.permute.xlu0 %565
  %568 = vrot.lane.b32.xlu0 %v269, 120
  %v569 = vpop.permute.xlu0 %568
  %v571 = vsel %vm275, %v566, 0
  %v574 = vsel %vm275, %v569, 0
  %576 = vmatprep.subr.bf16.mxu0 0
  %577 = vmatpush1.bf16.xpose.msra.mxu0 0
  %578 = vmatprep.subr.bf16.mxu0 0
  %579 = vmatpush1.bf16.xpose.msra.mxu0 0
  %580 = vmatprep.subr.bf16.mxu0 0
  %581 = vmatpush1.bf16.xpose.msra.mxu0 0
  %582 = vmatprep.subr.bf16.mxu0 0
  %583 = vmatpush1.bf16.xpose.msra.mxu0 0
  %584 = vmatprep.subr.bf16.mxu0 0
  %585 = vmatpush1.bf16.xpose.msra.mxu0 0
  %586 = vmatprep.subr.bf16.mxu0 0
  %587 = vmatpush1.bf16.xpose.msra.mxu0 0
  %588 = vmatprep.subr.bf16.mxu0 0
  %589 = vmatpush1.bf16.xpose.msra.mxu0 0
  %590 = vmatprep.subr.bf16.mxu0 0
  %591 = vmatpush1.bf16.xpose.msra.mxu0 %v574
  %592 = vmatprep.subr.bf16.mxu0 0
  %593 = vmatpush2.bf16.xpose.msra.mxu0 0
  %594 = vmatprep.subr.bf16.mxu0 0
  %595 = vmatpush2.bf16.xpose.msra.mxu0 0
  %596 = vmatprep.subr.bf16.mxu0 0
  %597 = vmatpush2.bf16.xpose.msra.mxu0 0
  %598 = vmatprep.subr.bf16.mxu0 0
  %599 = vmatpush2.bf16.xpose.msra.mxu0 0
  %600 = vmatprep.subr.bf16.mxu0 0
  %601 = vmatpush2.bf16.xpose.msra.mxu0 0
  %602 = vmatprep.subr.bf16.mxu0 0
  %603 = vmatpush2.bf16.xpose.msra.mxu0 0
  %604 = vmatprep.subr.bf16.mxu0 0
  %605 = vmatpush2.bf16.xpose.msra.mxu0 0
  %606 = vmatprep.subr.bf16.mxu0 0
  %607 = vmatpush2.bf16.xpose.msra.mxu0 0
  %608 = vmatprep.mubr.bf16.mxu0 0
  %609 = vmatmul.mubr.bf16.gmra.mxu0 %v571
  %v610 = vpop.f32.mrf.mxu0
  %v611 = vadd.f32 0.0, %v610
  %v612 = vpop.f32.mrf.mxu0
  %v613 = vpop.f32.mrf.mxu0
  %v614 = vpop.f32.mrf.mxu0
  %615 = vdwg.mxu0
  %617 = vrot.lane.b32.xlu0 %v266, 120
  %v618 = vpop.permute.xlu0 %617
  %620 = vrot.lane.b32.xlu0 %v270, 120
  %v621 = vpop.permute.xlu0 %620
  %v623 = vsel %vm275, %v618, 0
  %v626 = vsel %vm275, %v621, 0
  %628 = vmatprep.subr.bf16.mxu0 0
  %629 = vmatpush1.bf16.xpose.msra.mxu0 0
  %630 = vmatprep.subr.bf16.mxu0 0
  %631 = vmatpush1.bf16.xpose.msra.mxu0 0
  %632 = vmatprep.subr.bf16.mxu0 0
  %633 = vmatpush1.bf16.xpose.msra.mxu0 0
  %634 = vmatprep.subr.bf16.mxu0 0
  %635 = vmatpush1.bf16.xpose.msra.mxu0 0
  %636 = vmatprep.subr.bf16.mxu0 0
  %637 = vmatpush1.bf16.xpose.msra.mxu0 0
  %638 = vmatprep.subr.bf16.mxu0 0
  %639 = vmatpush1.bf16.xpose.msra.mxu0 0
  %640 = vmatprep.subr.bf16.mxu0 0
  %641 = vmatpush1.bf16.xpose.msra.mxu0 0
  %642 = vmatprep.subr.bf16.mxu0 0
  %643 = vmatpush1.bf16.xpose.msra.mxu0 %v626
  %644 = vmatprep.subr.bf16.mxu0 0
  %645 = vmatpush2.bf16.xpose.msra.mxu0 0
  %646 = vmatprep.subr.bf16.mxu0 0
  %647 = vmatpush2.bf16.xpose.msra.mxu0 0
  %648 = vmatprep.subr.bf16.mxu0 0
  %649 = vmatpush2.bf16.xpose.msra.mxu0 0
  %650 = vmatprep.subr.bf16.mxu0 0
  %651 = vmatpush2.bf16.xpose.msra.mxu0 0
  %652 = vmatprep.subr.bf16.mxu0 0
  %653 = vmatpush2.bf16.xpose.msra.mxu0 0
  %654 = vmatprep.subr.bf16.mxu0 0
  %655 = vmatpush2.bf16.xpose.msra.mxu0 0
  %656 = vmatprep.subr.bf16.mxu0 0
  %657 = vmatpush2.bf16.xpose.msra.mxu0 0
  %658 = vmatprep.subr.bf16.mxu0 0
  %659 = vmatpush2.bf16.xpose.msra.mxu0 0
  %660 = vmatprep.mubr.bf16.mxu0 0
  %661 = vmatmul.mubr.bf16.gmra.mxu0 %v623
  %v662 = vpop.f32.mrf.mxu0
  %v663 = vadd.f32 0.0, %v662
  %v664 = vpop.f32.mrf.mxu0
  %v665 = vpop.f32.mrf.mxu0
  %v666 = vpop.f32.mrf.mxu0
  %667 = vdwg.mxu0
  %668 = vrot.lane.b32.xlu0 %v263, 112
  %v669 = vpop.permute.xlu0 %668
  %670 = vrot.lane.b32.xlu0 %v267, 112
  %v671 = vpop.permute.xlu0 %670
  %v673 = vsel %vm275, %v669, 0
  %v676 = vsel %vm275, %v671, 0
  %678 = vmatprep.subr.bf16.mxu0 0
  %679 = vmatpush1.bf16.xpose.msra.mxu0 0
  %680 = vmatprep.subr.bf16.mxu0 0
  %681 = vmatpush1.bf16.xpose.msra.mxu0 0
  %682 = vmatprep.subr.bf16.mxu0 0
  %683 = vmatpush1.bf16.xpose.msra.mxu0 0
  %684 = vmatprep.subr.bf16.mxu0 0
  %685 = vmatpush1.bf16.xpose.msra.mxu0 0
  %686 = vmatprep.subr.bf16.mxu0 0
  %687 = vmatpush1.bf16.xpose.msra.mxu0 0
  %688 = vmatprep.subr.bf16.mxu0 0
  %689 = vmatpush1.bf16.xpose.msra.mxu0 0
  %690 = vmatprep.subr.bf16.mxu0 0
  %691 = vmatpush1.bf16.xpose.msra.mxu0 0
  %692 = vmatprep.subr.bf16.mxu0 0
  %693 = vmatpush1.bf16.xpose.msra.mxu0 %v676
  %694 = vmatprep.subr.bf16.mxu0 0
  %695 = vmatpush2.bf16.xpose.msra.mxu0 0
  %696 = vmatprep.subr.bf16.mxu0 0
  %697 = vmatpush2.bf16.xpose.msra.mxu0 0
  %698 = vmatprep.subr.bf16.mxu0 0
  %699 = vmatpush2.bf16.xpose.msra.mxu0 0
  %700 = vmatprep.subr.bf16.mxu0 0
  %701 = vmatpush2.bf16.xpose.msra.mxu0 0
  %702 = vmatprep.subr.bf16.mxu0 0
  %703 = vmatpush2.bf16.xpose.msra.mxu0 0
  %704 = vmatprep.subr.bf16.mxu0 0
  %705 = vmatpush2.bf16.xpose.msra.mxu0 0
  %706 = vmatprep.subr.bf16.mxu0 0
  %707 = vmatpush2.bf16.xpose.msra.mxu0 0
  %708 = vmatprep.subr.bf16.mxu0 0
  %709 = vmatpush2.bf16.xpose.msra.mxu0 0
  %710 = vmatprep.mubr.bf16.mxu0 0
  %711 = vmatmul.mubr.bf16.gmra.mxu0 %v673
  %v712 = vpop.f32.mrf.mxu0
  %v713 = vadd.f32 0.0, %v712
  %v714 = vpop.f32.mrf.mxu0
  %v715 = vpop.f32.mrf.mxu0
  %v716 = vpop.f32.mrf.mxu0
  %717 = vdwg.mxu0
  %718 = vrot.lane.b32.xlu0 %v264, 112
  %v719 = vpop.permute.xlu0 %718
  %720 = vrot.lane.b32.xlu0 %v268, 112
  %v721 = vpop.permute.xlu0 %720
  %v723 = vsel %vm275, %v719, 0
  %v726 = vsel %vm275, %v721, 0
  %728 = vmatprep.subr.bf16.mxu0 0
  %729 = vmatpush1.bf16.xpose.msra.mxu0 0
  %730 = vmatprep.subr.bf16.mxu0 0
  %731 = vmatpush1.bf16.xpose.msra.mxu0 0
  %732 = vmatprep.subr.bf16.mxu0 0
  %733 = vmatpush1.bf16.xpose.msra.mxu0 0
  %734 = vmatprep.subr.bf16.mxu0 0
  %735 = vmatpush1.bf16.xpose.msra.mxu0 0
  %736 = vmatprep.subr.bf16.mxu0 0
  %737 = vmatpush1.bf16.xpose.msra.mxu0 0
  %738 = vmatprep.subr.bf16.mxu0 0
  %739 = vmatpush1.bf16.xpose.msra.mxu0 0
  %740 = vmatprep.subr.bf16.mxu0 0
  %741 = vmatpush1.bf16.xpose.msra.mxu0 0
  %742 = vmatprep.subr.bf16.mxu0 0
  %743 = vmatpush1.bf16.xpose.msra.mxu0 %v726
  %744 = vmatprep.subr.bf16.mxu0 0
  %745 = vmatpush2.bf16.xpose.msra.mxu0 0
  %746 = vmatprep.subr.bf16.mxu0 0
  %747 = vmatpush2.bf16.xpose.msra.mxu0 0
  %748 = vmatprep.subr.bf16.mxu0 0
  %749 = vmatpush2.bf16.xpose.msra.mxu0 0
  %750 = vmatprep.subr.bf16.mxu0 0
  %751 = vmatpush2.bf16.xpose.msra.mxu0 0
  %752 = vmatprep.subr.bf16.mxu0 0
  %753 = vmatpush2.bf16.xpose.msra.mxu0 0
  %754 = vmatprep.subr.bf16.mxu0 0
  %755 = vmatpush2.bf16.xpose.msra.mxu0 0
  %756 = vmatprep.subr.bf16.mxu0 0
  %757 = vmatpush2.bf16.xpose.msra.mxu0 0
  %758 = vmatprep.subr.bf16.mxu0 0
  %759 = vmatpush2.bf16.xpose.msra.mxu0 0
  %760 = vmatprep.mubr.bf16.mxu0 0
  %761 = vmatmul.mubr.bf16.gmra.mxu0 %v723
  %v762 = vpop.f32.mrf.mxu0
  %v763 = vadd.f32 0.0, %v762
  %v764 = vpop.f32.mrf.mxu0
  %v765 = vpop.f32.mrf.mxu0
  %v766 = vpop.f32.mrf.mxu0
  %767 = vdwg.mxu0
  %768 = vrot.lane.b32.xlu0 %v265, 112
  %v769 = vpop.permute.xlu0 %768
  %770 = vrot.lane.b32.xlu0 %v269, 112
  %v771 = vpop.permute.xlu0 %770
  %v773 = vsel %vm275, %v769, 0
  %v776 = vsel %vm275, %v771, 0
  %778 = vmatprep.subr.bf16.mxu0 0
  %779 = vmatpush1.bf16.xpose.msra.mxu0 0
  %780 = vmatprep.subr.bf16.mxu0 0
  %781 = vmatpush1.bf16.xpose.msra.mxu0 0
  %782 = vmatprep.subr.bf16.mxu0 0
  %783 = vmatpush1.bf16.xpose.msra.mxu0 0
  %784 = vmatprep.subr.bf16.mxu0 0
  %785 = vmatpush1.bf16.xpose.msra.mxu0 0
  %786 = vmatprep.subr.bf16.mxu0 0
  %787 = vmatpush1.bf16.xpose.msra.mxu0 0
  %788 = vmatprep.subr.bf16.mxu0 0
  %789 = vmatpush1.bf16.xpose.msra.mxu0 0
  %790 = vmatprep.subr.bf16.mxu0 0
  %791 = vmatpush1.bf16.xpose.msra.mxu0 0
  %792 = vmatprep.subr.bf16.mxu0 0
  %793 = vmatpush1.bf16.xpose.msra.mxu0 %v776
  %794 = vmatprep.subr.bf16.mxu0 0
  %795 = vmatpush2.bf16.xpose.msra.mxu0 0
  %796 = vmatprep.subr.bf16.mxu0 0
  %797 = vmatpush2.bf16.xpose.msra.mxu0 0
  %798 = vmatprep.subr.bf16.mxu0 0
  %799 = vmatpush2.bf16.xpose.msra.mxu0 0
  %800 = vmatprep.subr.bf16.mxu0 0
  %801 = vmatpush2.bf16.xpose.msra.mxu0 0
  %802 = vmatprep.subr.bf16.mxu0 0
  %803 = vmatpush2.bf16.xpose.msra.mxu0 0
  %804 = vmatprep.subr.bf16.mxu0 0
  %805 = vmatpush2.bf16.xpose.msra.mxu0 0
  %806 = vmatprep.subr.bf16.mxu0 0
  %807 = vmatpush2.bf16.xpose.msra.mxu0 0
  %808 = vmatprep.subr.bf16.mxu0 0
  %809 = vmatpush2.bf16.xpose.msra.mxu0 0
  %810 = vmatprep.mubr.bf16.mxu0 0
  %811 = vmatmul.mubr.bf16.gmra.mxu0 %v773
  %v812 = vpop.f32.mrf.mxu0
  %v813 = vadd.f32 0.0, %v812
  %v814 = vpop.f32.mrf.mxu0
  %v815 = vpop.f32.mrf.mxu0
  %v816 = vpop.f32.mrf.mxu0
  %817 = vdwg.mxu0
  %818 = vrot.lane.b32.xlu0 %v266, 112
  %v819 = vpop.permute.xlu0 %818
  %820 = vrot.lane.b32.xlu0 %v270, 112
  %v821 = vpop.permute.xlu0 %820
  %v823 = vsel %vm275, %v819, 0
  %v826 = vsel %vm275, %v821, 0
  %828 = vmatprep.subr.bf16.mxu0 0
  %829 = vmatpush1.bf16.xpose.msra.mxu0 0
  %830 = vmatprep.subr.bf16.mxu0 0
  %831 = vmatpush1.bf16.xpose.msra.mxu0 0
  %832 = vmatprep.subr.bf16.mxu0 0
  %833 = vmatpush1.bf16.xpose.msra.mxu0 0
  %834 = vmatprep.subr.bf16.mxu0 0
  %835 = vmatpush1.bf16.xpose.msra.mxu0 0
  %836 = vmatprep.subr.bf16.mxu0 0
  %837 = vmatpush1.bf16.xpose.msra.mxu0 0
  %838 = vmatprep.subr.bf16.mxu0 0
  %839 = vmatpush1.bf16.xpose.msra.mxu0 0
  %840 = vmatprep.subr.bf16.mxu0 0
  %841 = vmatpush1.bf16.xpose.msra.mxu0 0
  %842 = vmatprep.subr.bf16.mxu0 0
  %843 = vmatpush1.bf16.xpose.msra.mxu0 %v826
  %844 = vmatprep.subr.bf16.mxu0 0
  %845 = vmatpush2.bf16.xpose.msra.mxu0 0
  %846 = vmatprep.subr.bf16.mxu0 0
  %847 = vmatpush2.bf16.xpose.msra.mxu0 0
  %848 = vmatprep.subr.bf16.mxu0 0
  %849 = vmatpush2.bf16.xpose.msra.mxu0 0
  %850 = vmatprep.subr.bf16.mxu0 0
  %851 = vmatpush2.bf16.xpose.msra.mxu0 0
  %852 = vmatprep.subr.bf16.mxu0 0
  %853 = vmatpush2.bf16.xpose.msra.mxu0 0
  %854 = vmatprep.subr.bf16.mxu0 0
  %855 = vmatpush2.bf16.xpose.msra.mxu0 0
  %856 = vmatprep.subr.bf16.mxu0 0
  %857 = vmatpush2.bf16.xpose.msra.mxu0 0
  %858 = vmatprep.subr.bf16.mxu0 0
  %859 = vmatpush2.bf16.xpose.msra.mxu0 0
  %860 = vmatprep.mubr.bf16.mxu0 0
  %861 = vmatmul.mubr.bf16.gmra.mxu0 %v823
  %v862 = vpop.f32.mrf.mxu0
  %v863 = vadd.f32 0.0, %v862
  %v864 = vpop.f32.mrf.mxu0
  %v865 = vpop.f32.mrf.mxu0
  %v866 = vpop.f32.mrf.mxu0
  %867 = vdwg.mxu0
  %868 = vrot.lane.b32.xlu0 %v263, 104
  %v869 = vpop.permute.xlu0 %868
  %870 = vrot.lane.b32.xlu0 %v267, 104
  %v871 = vpop.permute.xlu0 %870
  %v873 = vsel %vm275, %v869, 0
  %v876 = vsel %vm275, %v871, 0
  %878 = vmatprep.subr.bf16.mxu0 0
  %879 = vmatpush1.bf16.xpose.msra.mxu0 0
  %880 = vmatprep.subr.bf16.mxu0 0
  %881 = vmatpush1.bf16.xpose.msra.mxu0 0
  %882 = vmatprep.subr.bf16.mxu0 0
  %883 = vmatpush1.bf16.xpose.msra.mxu0 0
  %884 = vmatprep.subr.bf16.mxu0 0
  %885 = vmatpush1.bf16.xpose.msra.mxu0 0
  %886 = vmatprep.subr.bf16.mxu0 0
  %887 = vmatpush1.bf16.xpose.msra.mxu0 0
  %888 = vmatprep.subr.bf16.mxu0 0
  %889 = vmatpush1.bf16.xpose.msra.mxu0 0
  %890 = vmatprep.subr.bf16.mxu0 0
  %891 = vmatpush1.bf16.xpose.msra.mxu0 0
  %892 = vmatprep.subr.bf16.mxu0 0
  %893 = vmatpush1.bf16.xpose.msra.mxu0 %v876
  %894 = vmatprep.subr.bf16.mxu0 0
  %895 = vmatpush2.bf16.xpose.msra.mxu0 0
  %896 = vmatprep.subr.bf16.mxu0 0
  %897 = vmatpush2.bf16.xpose.msra.mxu0 0
  %898 = vmatprep.subr.bf16.mxu0 0
  %899 = vmatpush2.bf16.xpose.msra.mxu0 0
  %900 = vmatprep.subr.bf16.mxu0 0
  %901 = vmatpush2.bf16.xpose.msra.mxu0 0
  %902 = vmatprep.subr.bf16.mxu0 0
  %903 = vmatpush2.bf16.xpose.msra.mxu0 0
  %904 = vmatprep.subr.bf16.mxu0 0
  %905 = vmatpush2.bf16.xpose.msra.mxu0 0
  %906 = vmatprep.subr.bf16.mxu0 0
  %907 = vmatpush2.bf16.xpose.msra.mxu0 0
  %908 = vmatprep.subr.bf16.mxu0 0
  %909 = vmatpush2.bf16.xpose.msra.mxu0 0
  %910 = vmatprep.mubr.bf16.mxu0 0
  %911 = vmatmul.mubr.bf16.gmra.mxu0 %v873
  %v912 = vpop.f32.mrf.mxu0
  %v913 = vadd.f32 0.0, %v912
  %v914 = vpop.f32.mrf.mxu0
  %v915 = vpop.f32.mrf.mxu0
  %v916 = vpop.f32.mrf.mxu0
  %917 = vdwg.mxu0
  %918 = vrot.lane.b32.xlu0 %v264, 104
  %v919 = vpop.permute.xlu0 %918
  %920 = vrot.lane.b32.xlu0 %v268, 104
  %v921 = vpop.permute.xlu0 %920
  %v923 = vsel %vm275, %v919, 0
  %v926 = vsel %vm275, %v921, 0
  %928 = vmatprep.subr.bf16.mxu0 0
  %929 = vmatpush1.bf16.xpose.msra.mxu0 0
  %930 = vmatprep.subr.bf16.mxu0 0
  %931 = vmatpush1.bf16.xpose.msra.mxu0 0
  %932 = vmatprep.subr.bf16.mxu0 0
  %933 = vmatpush1.bf16.xpose.msra.mxu0 0
  %934 = vmatprep.subr.bf16.mxu0 0
  %935 = vmatpush1.bf16.xpose.msra.mxu0 0
  %936 = vmatprep.subr.bf16.mxu0 0
  %937 = vmatpush1.bf16.xpose.msra.mxu0 0
  %938 = vmatprep.subr.bf16.mxu0 0
  %939 = vmatpush1.bf16.xpose.msra.mxu0 0
  %940 = vmatprep.subr.bf16.mxu0 0
  %941 = vmatpush1.bf16.xpose.msra.mxu0 0
  %942 = vmatprep.subr.bf16.mxu0 0
  %943 = vmatpush1.bf16.xpose.msra.mxu0 %v926
  %944 = vmatprep.subr.bf16.mxu0 0
  %945 = vmatpush2.bf16.xpose.msra.mxu0 0
  %946 = vmatprep.subr.bf16.mxu0 0
  %947 = vmatpush2.bf16.xpose.msra.mxu0 0
  %948 = vmatprep.subr.bf16.mxu0 0
  %949 = vmatpush2.bf16.xpose.msra.mxu0 0
  %950 = vmatprep.subr.bf16.mxu0 0
  %951 = vmatpush2.bf16.xpose.msra.mxu0 0
  %952 = vmatprep.subr.bf16.mxu0 0
  %953 = vmatpush2.bf16.xpose.msra.mxu0 0
  %954 = vmatprep.subr.bf16.mxu0 0
  %955 = vmatpush2.bf16.xpose.msra.mxu0 0
  %956 = vmatprep.subr.bf16.mxu0 0
  %957 = vmatpush2.bf16.xpose.msra.mxu0 0
  %958 = vmatprep.subr.bf16.mxu0 0
  %959 = vmatpush2.bf16.xpose.msra.mxu0 0
  %960 = vmatprep.mubr.bf16.mxu0 0
  %961 = vmatmul.mubr.bf16.gmra.mxu0 %v923
  %v962 = vpop.f32.mrf.mxu0
  %v963 = vadd.f32 0.0, %v962
  %v964 = vpop.f32.mrf.mxu0
  %v965 = vpop.f32.mrf.mxu0
  %v966 = vpop.f32.mrf.mxu0
  %967 = vdwg.mxu0
  %968 = vrot.lane.b32.xlu0 %v265, 104
  %v969 = vpop.permute.xlu0 %968
  %970 = vrot.lane.b32.xlu0 %v269, 104
  %v971 = vpop.permute.xlu0 %970
  %v973 = vsel %vm275, %v969, 0
  %v976 = vsel %vm275, %v971, 0
  %978 = vmatprep.subr.bf16.mxu0 0
  %979 = vmatpush1.bf16.xpose.msra.mxu0 0
  %980 = vmatprep.subr.bf16.mxu0 0
  %981 = vmatpush1.bf16.xpose.msra.mxu0 0
  %982 = vmatprep.subr.bf16.mxu0 0
  %983 = vmatpush1.bf16.xpose.msra.mxu0 0
  %984 = vmatprep.subr.bf16.mxu0 0
  %985 = vmatpush1.bf16.xpose.msra.mxu0 0
  %986 = vmatprep.subr.bf16.mxu0 0
  %987 = vmatpush1.bf16.xpose.msra.mxu0 0
  %988 = vmatprep.subr.bf16.mxu0 0
  %989 = vmatpush1.bf16.xpose.msra.mxu0 0
  %990 = vmatprep.subr.bf16.mxu0 0
  %991 = vmatpush1.bf16.xpose.msra.mxu0 0
  %992 = vmatprep.subr.bf16.mxu0 0
  %993 = vmatpush1.bf16.xpose.msra.mxu0 %v976
  %994 = vmatprep.subr.bf16.mxu0 0
  %995 = vmatpush2.bf16.xpose.msra.mxu0 0
  %996 = vmatprep.subr.bf16.mxu0 0
  %997 = vmatpush2.bf16.xpose.msra.mxu0 0
  %998 = vmatprep.subr.bf16.mxu0 0
  %999 = vmatpush2.bf16.xpose.msra.mxu0 0
  %1000 = vmatprep.subr.bf16.mxu0 0
  %1001 = vmatpush2.bf16.xpose.msra.mxu0 0
  %1002 = vmatprep.subr.bf16.mxu0 0
  %1003 = vmatpush2.bf16.xpose.msra.mxu0 0
  %1004 = vmatprep.subr.bf16.mxu0 0
  %1005 = vmatpush2.bf16.xpose.msra.mxu0 0
  %1006 = vmatprep.subr.bf16.mxu0 0
  %1007 = vmatpush2.bf16.xpose.msra.mxu0 0
  %1008 = vmatprep.subr.bf16.mxu0 0
  %1009 = vmatpush2.bf16.xpose.msra.mxu0 0
  %1010 = vmatprep.mubr.bf16.mxu0 0
  %1011 = vmatmul.mubr.bf16.gmra.mxu0 %v973
  %v1012 = vpop.f32.mrf.mxu0
  %v1013 = vadd.f32 0.0, %v1012
  %v1014 = vpop.f32.mrf.mxu0
  %v1015 = vpop.f32.mrf.mxu0
  %v1016 = vpop.f32.mrf.mxu0
  %1017 = vdwg.mxu0
  %1018 = vrot.lane.b32.xlu0 %v266, 104
  %v1019 = vpop.permute.xlu0 %1018
  %1020 = vrot.lane.b32.xlu0 %v270, 104
  %v1021 = vpop.permute.xlu0 %1020
  %v1023 = vsel %vm275, %v1019, 0
  %v1026 = vsel %vm275, %v1021, 0
  %1028 = vmatprep.subr.bf16.mxu0 0
  %1029 = vmatpush1.bf16.xpose.msra.mxu0 0
  %1030 = vmatprep.subr.bf16.mxu0 0
  %1031 = vmatpush1.bf16.xpose.msra.mxu0 0
  %1032 = vmatprep.subr.bf16.mxu0 0
  %1033 = vmatpush1.bf16.xpose.msra.mxu0 0
  %1034 = vmatprep.subr.bf16.mxu0 0
  %1035 = vmatpush1.bf16.xpose.msra.mxu0 0
  %1036 = vmatprep.subr.bf16.mxu0 0
  %1037 = vmatpush1.bf16.xpose.msra.mxu0 0
  %1038 = vmatprep.subr.bf16.mxu0 0
  %1039 = vmatpush1.bf16.xpose.msra.mxu0 0
  %1040 = vmatprep.subr.bf16.mxu0 0
  %1041 = vmatpush1.bf16.xpose.msra.mxu0 0
  %1042 = vmatprep.subr.bf16.mxu0 0
  %1043 = vmatpush1.bf16.xpose.msra.mxu0 %v1026
  %1044 = vmatprep.subr.bf16.mxu0 0
  %1045 = vmatpush2.bf16.xpose.msra.mxu0 0
  %1046 = vmatprep.subr.bf16.mxu0 0
  %1047 = vmatpush2.bf16.xpose.msra.mxu0 0
  %1048 = vmatprep.subr.bf16.mxu0 0
  %1049 = vmatpush2.bf16.xpose.msra.mxu0 0
  %1050 = vmatprep.subr.bf16.mxu0 0
  %1051 = vmatpush2.bf16.xpose.msra.mxu0 0
  %1052 = vmatprep.subr.bf16.mxu0 0
  %1053 = vmatpush2.bf16.xpose.msra.mxu0 0
  %1054 = vmatprep.subr.bf16.mxu0 0
  %1055 = vmatpush2.bf16.xpose.msra.mxu0 0
  %1056 = vmatprep.subr.bf16.mxu0 0
  %1057 = vmatpush2.bf16.xpose.msra.mxu0 0
  %1058 = vmatprep.subr.bf16.mxu0 0
  %1059 = vmatpush2.bf16.xpose.msra.mxu0 0
  %1060 = vmatprep.mubr.bf16.mxu0 0
  %1061 = vmatmul.mubr.bf16.gmra.mxu0 %v1023
  %v1062 = vpop.f32.mrf.mxu0
  %v1063 = vadd.f32 0.0, %v1062
  %v1064 = vpop.f32.mrf.mxu0
  %v1065 = vpop.f32.mrf.mxu0
  %v1066 = vpop.f32.mrf.mxu0
  %1067 = vdwg.mxu0
  %v1068 = vsel %vm275, %v317, -inf
  %1069 = vmax.xlane.f32.xlu0 %v1068
  %v1070 = vpop.xlane.xlu0 %1069
  %v1071 = vsel %vm275, %v507, -inf
  %1072 = vmax.xlane.f32.xlu0 %v1071
  %v1073 = vpop.xlane.xlu0 %1072
  %v1074 = vsel %vm275, %v713, -inf
  %1075 = vmax.xlane.f32.xlu0 %v1074
  %v1076 = vpop.xlane.xlu0 %1075
  %v1077 = vsel %vm275, %v913, -inf
  %1078 = vmax.xlane.f32.xlu0 %v1077
  %v1079 = vpop.xlane.xlu0 %1078
  %v1080 = vsel %vm275, %v363, -inf
  %1081 = vmax.xlane.f32.xlu0 %v1080
  %v1082 = vpop.xlane.xlu0 %1081
  %v1083 = vsel %vm275, %v559, -inf
  %1084 = vmax.xlane.f32.xlu0 %v1083
  %v1085 = vpop.xlane.xlu0 %1084
  %v1086 = vsel %vm275, %v763, -inf
  %1087 = vmax.xlane.f32.xlu0 %v1086
  %v1088 = vpop.xlane.xlu0 %1087
  %v1089 = vsel %vm275, %v963, -inf
  %1090 = vmax.xlane.f32.xlu0 %v1089
  %v1091 = vpop.xlane.xlu0 %1090
  %v1092 = vsel %vm275, %v409, -inf
  %1093 = vmax.xlane.f32.xlu0 %v1092
  %v1094 = vpop.xlane.xlu0 %1093
  %v1095 = vsel %vm275, %v611, -inf
  %1096 = vmax.xlane.f32.xlu0 %v1095
  %v1097 = vpop.xlane.xlu0 %1096
  %v1098 = vsel %vm275, %v813, -inf
  %1099 = vmax.xlane.f32.xlu0 %v1098
  %v1100 = vpop.xlane.xlu0 %1099
  %v1101 = vsel %vm275, %v1013, -inf
  %1102 = vmax.xlane.f32.xlu0 %v1101
  %v1103 = vpop.xlane.xlu0 %1102
  %v1104 = vsel %vm275, %v455, -inf
  %1105 = vmax.xlane.f32.xlu0 %v1104
  %v1106 = vpop.xlane.xlu0 %1105
  %v1107 = vsel %vm275, %v663, -inf
  %1108 = vmax.xlane.f32.xlu0 %v1107
  %v1109 = vpop.xlane.xlu0 %1108
  %v1110 = vsel %vm275, %v863, -inf
  %1111 = vmax.xlane.f32.xlu0 %v1110
  %v1112 = vpop.xlane.xlu0 %1111
  %v1113 = vsel %vm275, %v1063, -inf
  %1114 = vmax.xlane.f32.xlu0 %v1113
  %v1115 = vpop.xlane.xlu0 %1114
  %v1116 = vsub.f32 %v317, %v1070
  %v1117 = vsub.f32 %v507, %v1073
  %v1118 = vsub.f32 %v713, %v1076
  %v1119 = vsub.f32 %v913, %v1079
  %v1120 = vsub.f32 %v363, %v1082
  %v1121 = vsub.f32 %v559, %v1085
  %v1122 = vsub.f32 %v763, %v1088
  %v1123 = vsub.f32 %v963, %v1091
  %v1124 = vsub.f32 %v409, %v1094
  %v1125 = vsub.f32 %v611, %v1097
  %v1126 = vsub.f32 %v813, %v1100
  %v1127 = vsub.f32 %v1013, %v1103
  %v1128 = vsub.f32 %v455, %v1106
  %v1129 = vsub.f32 %v663, %v1109
  %v1130 = vsub.f32 %v863, %v1112
  %v1131 = vsub.f32 %v1063, %v1115
  %v1132 = vmul.f32 %v1116, 1.442695
  %v1133 = vpow.pop %v1132
  %v1134 = vmul.f32 %v1117, 1.442695
  %v1135 = vpow.pop %v1134
  %v1136 = vmul.f32 %v1118, 1.442695
  %v1137 = vpow.pop %v1136
  %v1138 = vmul.f32 %v1119, 1.442695
  %v1139 = vpow.pop %v1138
  %v1140 = vmul.f32 %v1120, 1.442695
  %v1141 = vpow.pop %v1140
  %v1142 = vmul.f32 %v1121, 1.442695
  %v1143 = vpow.pop %v1142
  %v1144 = vmul.f32 %v1122, 1.442695
  %v1145 = vpow.pop %v1144
  %v1146 = vmul.f32 %v1123, 1.442695
  %v1147 = vpow.pop %v1146
  %v1148 = vmul.f32 %v1124, 1.442695
  %v1149 = vpow.pop %v1148
  %v1150 = vmul.f32 %v1125, 1.442695
  %v1151 = vpow.pop %v1150
  %v1152 = vmul.f32 %v1126, 1.442695
  %v1153 = vpow.pop %v1152
  %v1154 = vmul.f32 %v1127, 1.442695
  %v1155 = vpow.pop %v1154
  %v1156 = vmul.f32 %v1128, 1.442695
  %v1157 = vpow.pop %v1156
  %v1158 = vmul.f32 %v1129, 1.442695
  %v1159 = vpow.pop %v1158
  %v1160 = vmul.f32 %v1130, 1.442695
  %v1161 = vpow.pop %v1160
  %v1162 = vmul.f32 %v1131, 1.442695
  %v1163 = vpow.pop %v1162
  %v1164 = vsel %vm275, %v1133, 0.0
  %1165 = vadd.xlane.f32.xlu0 %v1164
  %v1166 = vpop.xlane.xlu0 %1165
  %v1167 = vsel %vm275, %v1135, 0.0
  %1168 = vadd.xlane.f32.xlu0 %v1167
  %v1169 = vpop.xlane.xlu0 %1168
  %v1170 = vsel %vm275, %v1137, 0.0
  %1171 = vadd.xlane.f32.xlu0 %v1170
  %v1172 = vpop.xlane.xlu0 %1171
  %v1173 = vsel %vm275, %v1139, 0.0
  %1174 = vadd.xlane.f32.xlu0 %v1173
  %v1175 = vpop.xlane.xlu0 %1174
  %v1176 = vsel %vm275, %v1141, 0.0
  %1177 = vadd.xlane.f32.xlu0 %v1176
  %v1178 = vpop.xlane.xlu0 %1177
  %v1179 = vsel %vm275, %v1143, 0.0
  %1180 = vadd.xlane.f32.xlu0 %v1179
  %v1181 = vpop.xlane.xlu0 %1180
  %v1182 = vsel %vm275, %v1145, 0.0
  %1183 = vadd.xlane.f32.xlu0 %v1182
  %v1184 = vpop.xlane.xlu0 %1183
  %v1185 = vsel %vm275, %v1147, 0.0
  %1186 = vadd.xlane.f32.xlu0 %v1185
  %v1187 = vpop.xlane.xlu0 %1186
  %v1188 = vsel %vm275, %v1149, 0.0
  %1189 = vadd.xlane.f32.xlu0 %v1188
  %v1190 = vpop.xlane.xlu0 %1189
  %v1191 = vsel %vm275, %v1151, 0.0
  %1192 = vadd.xlane.f32.xlu0 %v1191
  %v1193 = vpop.xlane.xlu0 %1192
  %v1194 = vsel %vm275, %v1153, 0.0
  %1195 = vadd.xlane.f32.xlu0 %v1194
  %v1196 = vpop.xlane.xlu0 %1195
  %v1197 = vsel %vm275, %v1155, 0.0
  %1198 = vadd.xlane.f32.xlu0 %v1197
  %v1199 = vpop.xlane.xlu0 %1198
  %v1200 = vsel %vm275, %v1157, 0.0
  %1201 = vadd.xlane.f32.xlu0 %v1200
  %v1202 = vpop.xlane.xlu0 %1201
  %v1203 = vsel %vm275, %v1159, 0.0
  %1204 = vadd.xlane.f32.xlu0 %v1203
  %v1205 = vpop.xlane.xlu0 %1204
  %v1206 = vsel %vm275, %v1161, 0.0
  %1207 = vadd.xlane.f32.xlu0 %v1206
  %v1208 = vpop.xlane.xlu0 %1207
  %v1209 = vsel %vm275, %v1163, 0.0
  %1210 = vadd.xlane.f32.xlu0 %v1209
  %v1211 = vpop.xlane.xlu0 %1210
  %v1212 = vrcp.pop %v1166
  %v1213 = vrcp.pop %v1169
  %v1214 = vrcp.pop %v1172
  %v1215 = vrcp.pop %v1175
  %v1216 = vrcp.pop %v1178
  %v1217 = vrcp.pop %v1181
  %v1218 = vrcp.pop %v1184
  %v1219 = vrcp.pop %v1187
  %v1220 = vrcp.pop %v1190
  %v1221 = vrcp.pop %v1193
  %v1222 = vrcp.pop %v1196
  %v1223 = vrcp.pop %v1199
  %v1224 = vrcp.pop %v1202
  %v1225 = vrcp.pop %v1205
  %v1226 = vrcp.pop %v1208
  %v1227 = vrcp.pop %v1211
  %v1228 = vmul.f32 %v1133, %v1212
  %v1229 = vmul.f32 %v1135, %v1213
  %v1230 = vmul.f32 %v1137, %v1214
  %v1231 = vmul.f32 %v1139, %v1215
  %v1232 = vmul.f32 %v1141, %v1216
  %v1233 = vmul.f32 %v1143, %v1217
  %v1234 = vmul.f32 %v1145, %v1218
  %v1235 = vmul.f32 %v1147, %v1219
  %v1236 = vmul.f32 %v1149, %v1220
  %v1237 = vmul.f32 %v1151, %v1221
  %v1238 = vmul.f32 %v1153, %v1222
  %v1239 = vmul.f32 %v1155, %v1223
  %v1240 = vmul.f32 %v1157, %v1224
  %v1241 = vmul.f32 %v1159, %v1225
  %v1242 = vmul.f32 %v1161, %v1226
  %v1243 = vmul.f32 %v1163, %v1227
  %v1244 = vpack.c.bf16 %v1228, %v1228
  %v1245 = vpack.c.bf16 %v1229, %v1229
  %v1246 = vpack.c.bf16 %v1230, %v1230
  %v1247 = vpack.c.bf16 %v1231, %v1231
  %v1248 = vpack.c.bf16 %v1232, %v1232
  %v1249 = vpack.c.bf16 %v1233, %v1233
  %v1250 = vpack.c.bf16 %v1234, %v1234
  %v1251 = vpack.c.bf16 %v1235, %v1235
  %v1252 = vpack.c.bf16 %v1236, %v1236
  %v1253 = vpack.c.bf16 %v1237, %v1237
  %v1254 = vpack.c.bf16 %v1238, %v1238
  %v1255 = vpack.c.bf16 %v1239, %v1239
  %v1256 = vpack.c.bf16 %v1240, %v1240
  %v1257 = vpack.c.bf16 %v1241, %v1241
  %v1258 = vpack.c.bf16 %v1242, %v1242
  %v1259 = vpack.c.bf16 %v1243, %v1243
  %v1261 = vsel %vm275, %v1244, 0
  %vm1263 = vcmask 1043456
  %v1265 = vsel %vm1263, %v271, 0
  %1267 = vmatprep.subr.bf16.mxu0 0
  %1268 = vmatpush1.bf16.msra.mxu0 0
  %1269 = vmatprep.subr.bf16.mxu0 0
  %1270 = vmatpush1.bf16.msra.mxu0 0
  %1271 = vmatprep.subr.bf16.mxu0 0
  %1272 = vmatpush1.bf16.msra.mxu0 0
  %1273 = vmatprep.subr.bf16.mxu0 0
  %1274 = vmatpush1.bf16.msra.mxu0 0
  %1275 = vmatprep.subr.bf16.mxu0 0
  %1276 = vmatpush1.bf16.msra.mxu0 0
  %1277 = vmatprep.subr.bf16.mxu0 0
  %1278 = vmatpush1.bf16.msra.mxu0 0
  %1279 = vmatprep.subr.bf16.mxu0 0
  %1280 = vmatpush1.bf16.msra.mxu0 0
  %1281 = vmatprep.subr.bf16.mxu0 0
  %1282 = vmatpush1.bf16.msra.mxu0 %v1265
  %1283 = vmatprep.subr.bf16.mxu0 0
  %1284 = vmatpush2.bf16.msra.mxu0 0
  %1285 = vmatprep.subr.bf16.mxu0 0
  %1286 = vmatpush2.bf16.msra.mxu0 0
  %1287 = vmatprep.subr.bf16.mxu0 0
  %1288 = vmatpush2.bf16.msra.mxu0 0
  %1289 = vmatprep.subr.bf16.mxu0 0
  %1290 = vmatpush2.bf16.msra.mxu0 0
  %1291 = vmatprep.subr.bf16.mxu0 0
  %1292 = vmatpush2.bf16.msra.mxu0 0
  %1293 = vmatprep.subr.bf16.mxu0 0
  %1294 = vmatpush2.bf16.msra.mxu0 0
  %1295 = vmatprep.subr.bf16.mxu0 0
  %1296 = vmatpush2.bf16.msra.mxu0 0
  %1297 = vmatprep.subr.bf16.mxu0 0
  %1298 = vmatpush2.bf16.msra.mxu0 0
  %1299 = vmatprep.mubr.bf16.mxu0 0
  %1300 = vmatmul.mubr.bf16.gmra.mxu0 %v1261
  %v1301 = vpop.f32.mrf.mxu0
  %v1302 = vadd.f32 0.0, %v1301
  %v1303 = vpop.f32.mrf.mxu0
  %v1304 = vpop.f32.mrf.mxu0
  %v1305 = vpop.f32.mrf.mxu0
  %1306 = vdwg.mxu0
  %v1308 = vsel %vm275, %v1248, 0
  %v1311 = vsel %vm1263, %v272, 0
  %1313 = vmatprep.subr.bf16.mxu0 0
  %1314 = vmatpush1.bf16.msra.mxu0 0
  %1315 = vmatprep.subr.bf16.mxu0 0
  %1316 = vmatpush1.bf16.msra.mxu0 0
  %1317 = vmatprep.subr.bf16.mxu0 0
  %1318 = vmatpush1.bf16.msra.mxu0 0
  %1319 = vmatprep.subr.bf16.mxu0 0
  %1320 = vmatpush1.bf16.msra.mxu0 0
  %1321 = vmatprep.subr.bf16.mxu0 0
  %1322 = vmatpush1.bf16.msra.mxu0 0
  %1323 = vmatprep.subr.bf16.mxu0 0
  %1324 = vmatpush1.bf16.msra.mxu0 0
  %1325 = vmatprep.subr.bf16.mxu0 0
  %1326 = vmatpush1.bf16.msra.mxu0 0
  %1327 = vmatprep.subr.bf16.mxu0 0
  %1328 = vmatpush1.bf16.msra.mxu0 %v1311
  %1329 = vmatprep.subr.bf16.mxu0 0
  %1330 = vmatpush2.bf16.msra.mxu0 0
  %1331 = vmatprep.subr.bf16.mxu0 0
  %1332 = vmatpush2.bf16.msra.mxu0 0
  %1333 = vmatprep.subr.bf16.mxu0 0
  %1334 = vmatpush2.bf16.msra.mxu0 0
  %1335 = vmatprep.subr.bf16.mxu0 0
  %1336 = vmatpush2.bf16.msra.mxu0 0
  %1337 = vmatprep.subr.bf16.mxu0 0
  %1338 = vmatpush2.bf16.msra.mxu0 0
  %1339 = vmatprep.subr.bf16.mxu0 0
  %1340 = vmatpush2.bf16.msra.mxu0 0
  %1341 = vmatprep.subr.bf16.mxu0 0
  %1342 = vmatpush2.bf16.msra.mxu0 0
  %1343 = vmatprep.subr.bf16.mxu0 0
  %1344 = vmatpush2.bf16.msra.mxu0 0
  %1345 = vmatprep.mubr.bf16.mxu0 0
  %1346 = vmatmul.mubr.bf16.gmra.mxu0 %v1308
  %v1347 = vpop.f32.mrf.mxu0
  %v1348 = vadd.f32 0.0, %v1347
  %v1349 = vpop.f32.mrf.mxu0
  %v1350 = vpop.f32.mrf.mxu0
  %v1351 = vpop.f32.mrf.mxu0
  %1352 = vdwg.mxu0
  %v1354 = vsel %vm275, %v1252, 0
  %v1357 = vsel %vm1263, %v273, 0
  %1359 = vmatprep.subr.bf16.mxu0 0
  %1360 = vmatpush1.bf16.msra.mxu0 0
  %1361 = vmatprep.subr.bf16.mxu0 0
  %1362 = vmatpush1.bf16.msra.mxu0 0
  %1363 = vmatprep.subr.bf16.mxu0 0
  %1364 = vmatpush1.bf16.msra.mxu0 0
  %1365 = vmatprep.subr.bf16.mxu0 0
  %1366 = vmatpush1.bf16.msra.mxu0 0
  %1367 = vmatprep.subr.bf16.mxu0 0
  %1368 = vmatpush1.bf16.msra.mxu0 0
  %1369 = vmatprep.subr.bf16.mxu0 0
  %1370 = vmatpush1.bf16.msra.mxu0 0
  %1371 = vmatprep.subr.bf16.mxu0 0
  %1372 = vmatpush1.bf16.msra.mxu0 0
  %1373 = vmatprep.subr.bf16.mxu0 0
  %1374 = vmatpush1.bf16.msra.mxu0 %v1357
  %1375 = vmatprep.subr.bf16.mxu0 0
  %1376 = vmatpush2.bf16.msra.mxu0 0
  %1377 = vmatprep.subr.bf16.mxu0 0
  %1378 = vmatpush2.bf16.msra.mxu0 0
  %1379 = vmatprep.subr.bf16.mxu0 0
  %1380 = vmatpush2.bf16.msra.mxu0 0
  %1381 = vmatprep.subr.bf16.mxu0 0
  %1382 = vmatpush2.bf16.msra.mxu0 0
  %1383 = vmatprep.subr.bf16.mxu0 0
  %1384 = vmatpush2.bf16.msra.mxu0 0
  %1385 = vmatprep.subr.bf16.mxu0 0
  %1386 = vmatpush2.bf16.msra.mxu0 0
  %1387 = vmatprep.subr.bf16.mxu0 0
  %1388 = vmatpush2.bf16.msra.mxu0 0
  %1389 = vmatprep.subr.bf16.mxu0 0
  %1390 = vmatpush2.bf16.msra.mxu0 0
  %1391 = vmatprep.mubr.bf16.mxu0 0
  %1392 = vmatmul.mubr.bf16.gmra.mxu0 %v1354
  %v1393 = vpop.f32.mrf.mxu0
  %v1394 = vadd.f32 0.0, %v1393
  %v1395 = vpop.f32.mrf.mxu0
  %v1396 = vpop.f32.mrf.mxu0
  %v1397 = vpop.f32.mrf.mxu0
  %1398 = vdwg.mxu0
  %v1400 = vsel %vm275, %v1256, 0
  %v1403 = vsel %vm1263, %v274, 0
  %1405 = vmatprep.subr.bf16.mxu0 0
  %1406 = vmatpush1.bf16.msra.mxu0 0
  %1407 = vmatprep.subr.bf16.mxu0 0
  %1408 = vmatpush1.bf16.msra.mxu0 0
  %1409 = vmatprep.subr.bf16.mxu0 0
  %1410 = vmatpush1.bf16.msra.mxu0 0
  %1411 = vmatprep.subr.bf16.mxu0 0
  %1412 = vmatpush1.bf16.msra.mxu0 0
  %1413 = vmatprep.subr.bf16.mxu0 0
  %1414 = vmatpush1.bf16.msra.mxu0 0
  %1415 = vmatprep.subr.bf16.mxu0 0
  %1416 = vmatpush1.bf16.msra.mxu0 0
  %1417 = vmatprep.subr.bf16.mxu0 0
  %1418 = vmatpush1.bf16.msra.mxu0 0
  %1419 = vmatprep.subr.bf16.mxu0 0
  %1420 = vmatpush1.bf16.msra.mxu0 %v1403
  %1421 = vmatprep.subr.bf16.mxu0 0
  %1422 = vmatpush2.bf16.msra.mxu0 0
  %1423 = vmatprep.subr.bf16.mxu0 0
  %1424 = vmatpush2.bf16.msra.mxu0 0
  %1425 = vmatprep.subr.bf16.mxu0 0
  %1426 = vmatpush2.bf16.msra.mxu0 0
  %1427 = vmatprep.subr.bf16.mxu0 0
  %1428 = vmatpush2.bf16.msra.mxu0 0
  %1429 = vmatprep.subr.bf16.mxu0 0
  %1430 = vmatpush2.bf16.msra.mxu0 0
  %1431 = vmatprep.subr.bf16.mxu0 0
  %1432 = vmatpush2.bf16.msra.mxu0 0
  %1433 = vmatprep.subr.bf16.mxu0 0
  %1434 = vmatpush2.bf16.msra.mxu0 0
  %1435 = vmatprep.subr.bf16.mxu0 0
  %1436 = vmatpush2.bf16.msra.mxu0 0
  %1437 = vmatprep.mubr.bf16.mxu0 0
  %1438 = vmatmul.mubr.bf16.gmra.mxu0 %v1400
  %v1439 = vpop.f32.mrf.mxu0
  %v1440 = vadd.f32 0.0, %v1439
  %v1441 = vpop.f32.mrf.mxu0
  %v1442 = vpop.f32.mrf.mxu0
  %v1443 = vpop.f32.mrf.mxu0
  %1444 = vdwg.mxu0
  %v1445 = vpack.c.bf16 %v1348, %v1302
  %v1446 = vpack.c.bf16 %v1440, %v1394
  %v1448 = vsel %vm275, %v1445, 0
  %v1451 = vsel %vm275, %v1446, 0
  %v1454 = vsel %vm1263, %v51, 0
  %1456 = vmatprep.subr.bf16.mxu0 0
  %1457 = vmatpush1.bf16.msra.mxu0 0
  %1458 = vmatprep.subr.bf16.mxu0 0
  %1459 = vmatpush1.bf16.msra.mxu0 0
  %1460 = vmatprep.subr.bf16.mxu0 0
  %1461 = vmatpush1.bf16.msra.mxu0 0
  %1462 = vmatprep.subr.bf16.mxu0 0
  %1463 = vmatpush1.bf16.msra.mxu0 0
  %1464 = vmatprep.subr.bf16.mxu0 0
  %1465 = vmatpush1.bf16.msra.mxu0 0
  %1466 = vmatprep.subr.bf16.mxu0 0
  %1467 = vmatpush1.bf16.msra.mxu0 0
  %1468 = vmatprep.subr.bf16.mxu0 0
  %1469 = vmatpush1.bf16.msra.mxu0 0
  %1470 = vmatprep.subr.bf16.mxu0 0
  %1471 = vmatpush1.bf16.msra.mxu0 %v1454
  %1472 = vmatprep.subr.bf16.mxu0 0
  %1473 = vmatpush2.bf16.msra.mxu0 0
  %1474 = vmatprep.subr.bf16.mxu0 0
  %1475 = vmatpush2.bf16.msra.mxu0 0
  %1476 = vmatprep.subr.bf16.mxu0 0
  %1477 = vmatpush2.bf16.msra.mxu0 0
  %1478 = vmatprep.subr.bf16.mxu0 0
  %1479 = vmatpush2.bf16.msra.mxu0 0
  %1480 = vmatprep.subr.bf16.mxu0 0
  %1481 = vmatpush2.bf16.msra.mxu0 0
  %1482 = vmatprep.subr.bf16.mxu0 0
  %1483 = vmatpush2.bf16.msra.mxu0 0
  %1484 = vmatprep.subr.bf16.mxu0 0
  %1485 = vmatpush2.bf16.msra.mxu0 0
  %1486 = vmatprep.subr.bf16.mxu0 0
  %1487 = vmatpush2.bf16.msra.mxu0 0
  %1488 = vmatprep.mubr.bf16.mxu0 0
  %1489 = vmatmul.mubr.bf16.gmra.mxu0 %v1448
  %v1490 = vpop.f32.mrf.mxu0
  %v1491 = vadd.f32 0.0, %v1490
  %v1492 = vpop.f32.mrf.mxu0
  %v1493 = vpop.f32.mrf.mxu0
  %v1494 = vadd.f32 0.0, %v1493
  %v1495 = vpop.f32.mrf.mxu0
  %1496 = vmatprep.mubr.bf16.mxu0 0
  %1497 = vmatmul.mubr.bf16.gmra.mxu0 %v1451
  %v1498 = vpop.f32.mrf.mxu0
  %v1499 = vadd.f32 0.0, %v1498
  %v1500 = vpop.f32.mrf.mxu0
  %v1501 = vpop.f32.mrf.mxu0
  %v1502 = vadd.f32 0.0, %v1501
  %v1503 = vpop.f32.mrf.mxu0
  %1504 = vdwg.mxu0
  %v1505 = vlaneseq
  %v1506 = vshrl.u32 %v1505, 7
  %v1507 = vsub.s32 3, %v1506
  %v1508 = vrot.slane %v37, %v1507
  %v1509 = vadd.f32 %v1508, %v1491
  %v1510 = vadd.f32 %v1508, %v1494
  %v1511 = vadd.f32 %v1508, %v1499
  %v1512 = vadd.f32 %v1508, %v1502
  %1514 = vrot.lane.b32.xlu0 %v271, 120
  %v1515 = vpop.permute.xlu0 %1514
  %v1517 = vsel %vm275, %v1245, 0
  %v1520 = vsel %vm1263, %v1515, 0
  %1522 = vmatprep.subr.bf16.mxu0 0
  %1523 = vmatpush1.bf16.msra.mxu0 0
  %1524 = vmatprep.subr.bf16.mxu0 0
  %1525 = vmatpush1.bf16.msra.mxu0 0
  %1526 = vmatprep.subr.bf16.mxu0 0
  %1527 = vmatpush1.bf16.msra.mxu0 0
  %1528 = vmatprep.subr.bf16.mxu0 0
  %1529 = vmatpush1.bf16.msra.mxu0 0
  %1530 = vmatprep.subr.bf16.mxu0 0
  %1531 = vmatpush1.bf16.msra.mxu0 0
  %1532 = vmatprep.subr.bf16.mxu0 0
  %1533 = vmatpush1.bf16.msra.mxu0 0
  %1534 = vmatprep.subr.bf16.mxu0 0
  %1535 = vmatpush1.bf16.msra.mxu0 0
  %1536 = vmatprep.subr.bf16.mxu0 0
  %1537 = vmatpush1.bf16.msra.mxu0 %v1520
  %1538 = vmatprep.subr.bf16.mxu0 0
  %1539 = vmatpush2.bf16.msra.mxu0 0
  %1540 = vmatprep.subr.bf16.mxu0 0
  %1541 = vmatpush2.bf16.msra.mxu0 0
  %1542 = vmatprep.subr.bf16.mxu0 0
  %1543 = vmatpush2.bf16.msra.mxu0 0
  %1544 = vmatprep.subr.bf16.mxu0 0
  %1545 = vmatpush2.bf16.msra.mxu0 0
  %1546 = vmatprep.subr.bf16.mxu0 0
  %1547 = vmatpush2.bf16.msra.mxu0 0
  %1548 = vmatprep.subr.bf16.mxu0 0
  %1549 = vmatpush2.bf16.msra.mxu0 0
  %1550 = vmatprep.subr.bf16.mxu0 0
  %1551 = vmatpush2.bf16.msra.mxu0 0
  %1552 = vmatprep.subr.bf16.mxu0 0
  %1553 = vmatpush2.bf16.msra.mxu0 0
  %1554 = vmatprep.mubr.bf16.mxu0 0
  %1555 = vmatmul.mubr.bf16.gmra.mxu0 %v1517
  %v1556 = vpop.f32.mrf.mxu0
  %v1557 = vadd.f32 0.0, %v1556
  %v1558 = vpop.f32.mrf.mxu0
  %v1559 = vpop.f32.mrf.mxu0
  %v1560 = vpop.f32.mrf.mxu0
  %1561 = vdwg.mxu0
  %1563 = vrot.lane.b32.xlu0 %v272, 120
  %v1564 = vpop.permute.xlu0 %1563
  %v1566 = vsel %vm275, %v1249, 0
  %v1569 = vsel %vm1263, %v1564, 0
  %1571 = vmatprep.subr.bf16.mxu0 0
  %1572 = vmatpush1.bf16.msra.mxu0 0
  %1573 = vmatprep.subr.bf16.mxu0 0
  %1574 = vmatpush1.bf16.msra.mxu0 0
  %1575 = vmatprep.subr.bf16.mxu0 0
  %1576 = vmatpush1.bf16.msra.mxu0 0
  %1577 = vmatprep.subr.bf16.mxu0 0
  %1578 = vmatpush1.bf16.msra.mxu0 0
  %1579 = vmatprep.subr.bf16.mxu0 0
  %1580 = vmatpush1.bf16.msra.mxu0 0
  %1581 = vmatprep.subr.bf16.mxu0 0
  %1582 = vmatpush1.bf16.msra.mxu0 0
  %1583 = vmatprep.subr.bf16.mxu0 0
  %1584 = vmatpush1.bf16.msra.mxu0 0
  %1585 = vmatprep.subr.bf16.mxu0 0
  %1586 = vmatpush1.bf16.msra.mxu0 %v1569
  %1587 = vmatprep.subr.bf16.mxu0 0
  %1588 = vmatpush2.bf16.msra.mxu0 0
  %1589 = vmatprep.subr.bf16.mxu0 0
  %1590 = vmatpush2.bf16.msra.mxu0 0
  %1591 = vmatprep.subr.bf16.mxu0 0
  %1592 = vmatpush2.bf16.msra.mxu0 0
  %1593 = vmatprep.subr.bf16.mxu0 0
  %1594 = vmatpush2.bf16.msra.mxu0 0
  %1595 = vmatprep.subr.bf16.mxu0 0
  %1596 = vmatpush2.bf16.msra.mxu0 0
  %1597 = vmatprep.subr.bf16.mxu0 0
  %1598 = vmatpush2.bf16.msra.mxu0 0
  %1599 = vmatprep.subr.bf16.mxu0 0
  %1600 = vmatpush2.bf16.msra.mxu0 0
  %1601 = vmatprep.subr.bf16.mxu0 0
  %1602 = vmatpush2.bf16.msra.mxu0 0
  %1603 = vmatprep.mubr.bf16.mxu0 0
  %1604 = vmatmul.mubr.bf16.gmra.mxu0 %v1566
  %v1605 = vpop.f32.mrf.mxu0
  %v1606 = vadd.f32 0.0, %v1605
  %v1607 = vpop.f32.mrf.mxu0
  %v1608 = vpop.f32.mrf.mxu0
  %v1609 = vpop.f32.mrf.mxu0
  %1610 = vdwg.mxu0
  %1612 = vrot.lane.b32.xlu0 %v273, 120
  %v1613 = vpop.permute.xlu0 %1612
  %v1615 = vsel %vm275, %v1253, 0
  %v1618 = vsel %vm1263, %v1613, 0
  %1620 = vmatprep.subr.bf16.mxu0 0
  %1621 = vmatpush1.bf16.msra.mxu0 0
  %1622 = vmatprep.subr.bf16.mxu0 0
  %1623 = vmatpush1.bf16.msra.mxu0 0
  %1624 = vmatprep.subr.bf16.mxu0 0
  %1625 = vmatpush1.bf16.msra.mxu0 0
  %1626 = vmatprep.subr.bf16.mxu0 0
  %1627 = vmatpush1.bf16.msra.mxu0 0
  %1628 = vmatprep.subr.bf16.mxu0 0
  %1629 = vmatpush1.bf16.msra.mxu0 0
  %1630 = vmatprep.subr.bf16.mxu0 0
  %1631 = vmatpush1.bf16.msra.mxu0 0
  %1632 = vmatprep.subr.bf16.mxu0 0
  %1633 = vmatpush1.bf16.msra.mxu0 0
  %1634 = vmatprep.subr.bf16.mxu0 0
  %1635 = vmatpush1.bf16.msra.mxu0 %v1618
  %1636 = vmatprep.subr.bf16.mxu0 0
  %1637 = vmatpush2.bf16.msra.mxu0 0
  %1638 = vmatprep.subr.bf16.mxu0 0
  %1639 = vmatpush2.bf16.msra.mxu0 0
  %1640 = vmatprep.subr.bf16.mxu0 0
  %1641 = vmatpush2.bf16.msra.mxu0 0
  %1642 = vmatprep.subr.bf16.mxu0 0
  %1643 = vmatpush2.bf16.msra.mxu0 0
  %1644 = vmatprep.subr.bf16.mxu0 0
  %1645 = vmatpush2.bf16.msra.mxu0 0
  %1646 = vmatprep.subr.bf16.mxu0 0
  %1647 = vmatpush2.bf16.msra.mxu0 0
  %1648 = vmatprep.subr.bf16.mxu0 0
  %1649 = vmatpush2.bf16.msra.mxu0 0
  %1650 = vmatprep.subr.bf16.mxu0 0
  %1651 = vmatpush2.bf16.msra.mxu0 0
  %1652 = vmatprep.mubr.bf16.mxu0 0
  %1653 = vmatmul.mubr.bf16.gmra.mxu0 %v1615
  %v1654 = vpop.f32.mrf.mxu0
  %v1655 = vadd.f32 0.0, %v1654
  %v1656 = vpop.f32.mrf.mxu0
  %v1657 = vpop.f32.mrf.mxu0
  %v1658 = vpop.f32.mrf.mxu0
  %1659 = vdwg.mxu0
  %1661 = vrot.lane.b32.xlu0 %v274, 120
  %v1662 = vpop.permute.xlu0 %1661
  %v1664 = vsel %vm275, %v1257, 0
  %v1667 = vsel %vm1263, %v1662, 0
  %1669 = vmatprep.subr.bf16.mxu0 0
  %1670 = vmatpush1.bf16.msra.mxu0 0
  %1671 = vmatprep.subr.bf16.mxu0 0
  %1672 = vmatpush1.bf16.msra.mxu0 0
  %1673 = vmatprep.subr.bf16.mxu0 0
  %1674 = vmatpush1.bf16.msra.mxu0 0
  %1675 = vmatprep.subr.bf16.mxu0 0
  %1676 = vmatpush1.bf16.msra.mxu0 0
  %1677 = vmatprep.subr.bf16.mxu0 0
  %1678 = vmatpush1.bf16.msra.mxu0 0
  %1679 = vmatprep.subr.bf16.mxu0 0
  %1680 = vmatpush1.bf16.msra.mxu0 0
  %1681 = vmatprep.subr.bf16.mxu0 0
  %1682 = vmatpush1.bf16.msra.mxu0 0
  %1683 = vmatprep.subr.bf16.mxu0 0
  %1684 = vmatpush1.bf16.msra.mxu0 %v1667
  %1685 = vmatprep.subr.bf16.mxu0 0
  %1686 = vmatpush2.bf16.msra.mxu0 0
  %1687 = vmatprep.subr.bf16.mxu0 0
  %1688 = vmatpush2.bf16.msra.mxu0 0
  %1689 = vmatprep.subr.bf16.mxu0 0
  %1690 = vmatpush2.bf16.msra.mxu0 0
  %1691 = vmatprep.subr.bf16.mxu0 0
  %1692 = vmatpush2.bf16.msra.mxu0 0
  %1693 = vmatprep.subr.bf16.mxu0 0
  %1694 = vmatpush2.bf16.msra.mxu0 0
  %1695 = vmatprep.subr.bf16.mxu0 0
  %1696 = vmatpush2.bf16.msra.mxu0 0
  %1697 = vmatprep.subr.bf16.mxu0 0
  %1698 = vmatpush2.bf16.msra.mxu0 0
  %1699 = vmatprep.subr.bf16.mxu0 0
  %1700 = vmatpush2.bf16.msra.mxu0 0
  %1701 = vmatprep.mubr.bf16.mxu0 0
  %1702 = vmatmul.mubr.bf16.gmra.mxu0 %v1664
  %v1703 = vpop.f32.mrf.mxu0
  %v1704 = vadd.f32 0.0, %v1703
  %v1705 = vpop.f32.mrf.mxu0
  %v1706 = vpop.f32.mrf.mxu0
  %v1707 = vpop.f32.mrf.mxu0
  %1708 = vdwg.mxu0
  %v1709 = vpack.c.bf16 %v1606, %v1557
  %v1710 = vpack.c.bf16 %v1704, %v1655
  %v1712 = vsel %vm275, %v1709, 0
  %v1715 = vsel %vm275, %v1710, 0
  %v1718 = vsel %vm1263, %v52, 0
  %1720 = vmatprep.subr.bf16.mxu0 0
  %1721 = vmatpush1.bf16.msra.mxu0 0
  %1722 = vmatprep.subr.bf16.mxu0 0
  %1723 = vmatpush1.bf16.msra.mxu0 0
  %1724 = vmatprep.subr.bf16.mxu0 0
  %1725 = vmatpush1.bf16.msra.mxu0 0
  %1726 = vmatprep.subr.bf16.mxu0 0
  %1727 = vmatpush1.bf16.msra.mxu0 0
  %1728 = vmatprep.subr.bf16.mxu0 0
  %1729 = vmatpush1.bf16.msra.mxu0 0
  %1730 = vmatprep.subr.bf16.mxu0 0
  %1731 = vmatpush1.bf16.msra.mxu0 0
  %1732 = vmatprep.subr.bf16.mxu0 0
  %1733 = vmatpush1.bf16.msra.mxu0 0
  %1734 = vmatprep.subr.bf16.mxu0 0
  %1735 = vmatpush1.bf16.msra.mxu0 %v1718
  %1736 = vmatprep.subr.bf16.mxu0 0
  %1737 = vmatpush2.bf16.msra.mxu0 0
  %1738 = vmatprep.subr.bf16.mxu0 0
  %1739 = vmatpush2.bf16.msra.mxu0 0
  %1740 = vmatprep.subr.bf16.mxu0 0
  %1741 = vmatpush2.bf16.msra.mxu0 0
  %1742 = vmatprep.subr.bf16.mxu0 0
  %1743 = vmatpush2.bf16.msra.mxu0 0
  %1744 = vmatprep.subr.bf16.mxu0 0
  %1745 = vmatpush2.bf16.msra.mxu0 0
  %1746 = vmatprep.subr.bf16.mxu0 0
  %1747 = vmatpush2.bf16.msra.mxu0 0
  %1748 = vmatprep.subr.bf16.mxu0 0
  %1749 = vmatpush2.bf16.msra.mxu0 0
  %1750 = vmatprep.subr.bf16.mxu0 0
  %1751 = vmatpush2.bf16.msra.mxu0 0
  %1752 = vmatprep.mubr.bf16.mxu0 0
  %1753 = vmatmul.mubr.bf16.gmra.mxu0 %v1712
  %v1754 = vpop.f32.mrf.mxu0
  %v1755 = vadd.f32 0.0, %v1754
  %v1756 = vpop.f32.mrf.mxu0
  %v1757 = vpop.f32.mrf.mxu0
  %v1758 = vadd.f32 0.0, %v1757
  %v1759 = vpop.f32.mrf.mxu0
  %1760 = vmatprep.mubr.bf16.mxu0 0
  %1761 = vmatmul.mubr.bf16.gmra.mxu0 %v1715
  %v1762 = vpop.f32.mrf.mxu0
  %v1763 = vadd.f32 0.0, %v1762
  %v1764 = vpop.f32.mrf.mxu0
  %v1765 = vpop.f32.mrf.mxu0
  %v1766 = vadd.f32 0.0, %v1765
  %v1767 = vpop.f32.mrf.mxu0
  %1768 = vdwg.mxu0
  %v1769 = vadd.f32 %v1509, %v1755
  %v1770 = vadd.f32 %v1510, %v1758
  %v1771 = vadd.f32 %v1511, %v1763
  %v1772 = vadd.f32 %v1512, %v1766
  %1773 = vrot.lane.b32.xlu0 %v271, 112
  %v1774 = vpop.permute.xlu0 %1773
  %v1776 = vsel %vm275, %v1246, 0
  %v1779 = vsel %vm1263, %v1774, 0
  %1781 = vmatprep.subr.bf16.mxu0 0
  %1782 = vmatpush1.bf16.msra.mxu0 0
  %1783 = vmatprep.subr.bf16.mxu0 0
  %1784 = vmatpush1.bf16.msra.mxu0 0
  %1785 = vmatprep.subr.bf16.mxu0 0
  %1786 = vmatpush1.bf16.msra.mxu0 0
  %1787 = vmatprep.subr.bf16.mxu0 0
  %1788 = vmatpush1.bf16.msra.mxu0 0
  %1789 = vmatprep.subr.bf16.mxu0 0
  %1790 = vmatpush1.bf16.msra.mxu0 0
  %1791 = vmatprep.subr.bf16.mxu0 0
  %1792 = vmatpush1.bf16.msra.mxu0 0
  %1793 = vmatprep.subr.bf16.mxu0 0
  %1794 = vmatpush1.bf16.msra.mxu0 0
  %1795 = vmatprep.subr.bf16.mxu0 0
  %1796 = vmatpush1.bf16.msra.mxu0 %v1779
  %1797 = vmatprep.subr.bf16.mxu0 0
  %1798 = vmatpush2.bf16.msra.mxu0 0
  %1799 = vmatprep.subr.bf16.mxu0 0
  %1800 = vmatpush2.bf16.msra.mxu0 0
  %1801 = vmatprep.subr.bf16.mxu0 0
  %1802 = vmatpush2.bf16.msra.mxu0 0
  %1803 = vmatprep.subr.bf16.mxu0 0
  %1804 = vmatpush2.bf16.msra.mxu0 0
  %1805 = vmatprep.subr.bf16.mxu0 0
  %1806 = vmatpush2.bf16.msra.mxu0 0
  %1807 = vmatprep.subr.bf16.mxu0 0
  %1808 = vmatpush2.bf16.msra.mxu0 0
  %1809 = vmatprep.subr.bf16.mxu0 0
  %1810 = vmatpush2.bf16.msra.mxu0 0
  %1811 = vmatprep.subr.bf16.mxu0 0
  %1812 = vmatpush2.bf16.msra.mxu0 0
  %1813 = vmatprep.mubr.bf16.mxu0 0
  %1814 = vmatmul.mubr.bf16.gmra.mxu0 %v1776
  %v1815 = vpop.f32.mrf.mxu0
  %v1816 = vadd.f32 0.0, %v1815
  %v1817 = vpop.f32.mrf.mxu0
  %v1818 = vpop.f32.mrf.mxu0
  %v1819 = vpop.f32.mrf.mxu0
  %1820 = vdwg.mxu0
  %1821 = vrot.lane.b32.xlu0 %v272, 112
  %v1822 = vpop.permute.xlu0 %1821
  %v1824 = vsel %vm275, %v1250, 0
  %v1827 = vsel %vm1263, %v1822, 0
  %1829 = vmatprep.subr.bf16.mxu0 0
  %1830 = vmatpush1.bf16.msra.mxu0 0
  %1831 = vmatprep.subr.bf16.mxu0 0
  %1832 = vmatpush1.bf16.msra.mxu0 0
  %1833 = vmatprep.subr.bf16.mxu0 0
  %1834 = vmatpush1.bf16.msra.mxu0 0
  %1835 = vmatprep.subr.bf16.mxu0 0
  %1836 = vmatpush1.bf16.msra.mxu0 0
  %1837 = vmatprep.subr.bf16.mxu0 0
  %1838 = vmatpush1.bf16.msra.mxu0 0
  %1839 = vmatprep.subr.bf16.mxu0 0
  %1840 = vmatpush1.bf16.msra.mxu0 0
  %1841 = vmatprep.subr.bf16.mxu0 0
  %1842 = vmatpush1.bf16.msra.mxu0 0
  %1843 = vmatprep.subr.bf16.mxu0 0
  %1844 = vmatpush1.bf16.msra.mxu0 %v1827
  %1845 = vmatprep.subr.bf16.mxu0 0
  %1846 = vmatpush2.bf16.msra.mxu0 0
  %1847 = vmatprep.subr.bf16.mxu0 0
  %1848 = vmatpush2.bf16.msra.mxu0 0
  %1849 = vmatprep.subr.bf16.mxu0 0
  %1850 = vmatpush2.bf16.msra.mxu0 0
  %1851 = vmatprep.subr.bf16.mxu0 0
  %1852 = vmatpush2.bf16.msra.mxu0 0
  %1853 = vmatprep.subr.bf16.mxu0 0
  %1854 = vmatpush2.bf16.msra.mxu0 0
  %1855 = vmatprep.subr.bf16.mxu0 0
  %1856 = vmatpush2.bf16.msra.mxu0 0
  %1857 = vmatprep.subr.bf16.mxu0 0
  %1858 = vmatpush2.bf16.msra.mxu0 0
  %1859 = vmatprep.subr.bf16.mxu0 0
  %1860 = vmatpush2.bf16.msra.mxu0 0
  %1861 = vmatprep.mubr.bf16.mxu0 0
  %1862 = vmatmul.mubr.bf16.gmra.mxu0 %v1824
  %v1863 = vpop.f32.mrf.mxu0
  %v1864 = vadd.f32 0.0, %v1863
  %v1865 = vpop.f32.mrf.mxu0
  %v1866 = vpop.f32.mrf.mxu0
  %v1867 = vpop.f32.mrf.mxu0
  %1868 = vdwg.mxu0
  %1869 = vrot.lane.b32.xlu0 %v273, 112
  %v1870 = vpop.permute.xlu0 %1869
  %v1872 = vsel %vm275, %v1254, 0
  %v1875 = vsel %vm1263, %v1870, 0
  %1877 = vmatprep.subr.bf16.mxu0 0
  %1878 = vmatpush1.bf16.msra.mxu0 0
  %1879 = vmatprep.subr.bf16.mxu0 0
  %1880 = vmatpush1.bf16.msra.mxu0 0
  %1881 = vmatprep.subr.bf16.mxu0 0
  %1882 = vmatpush1.bf16.msra.mxu0 0
  %1883 = vmatprep.subr.bf16.mxu0 0
  %1884 = vmatpush1.bf16.msra.mxu0 0
  %1885 = vmatprep.subr.bf16.mxu0 0
  %1886 = vmatpush1.bf16.msra.mxu0 0
  %1887 = vmatprep.subr.bf16.mxu0 0
  %1888 = vmatpush1.bf16.msra.mxu0 0
  %1889 = vmatprep.subr.bf16.mxu0 0
  %1890 = vmatpush1.bf16.msra.mxu0 0
  %1891 = vmatprep.subr.bf16.mxu0 0
  %1892 = vmatpush1.bf16.msra.mxu0 %v1875
  %1893 = vmatprep.subr.bf16.mxu0 0
  %1894 = vmatpush2.bf16.msra.mxu0 0
  %1895 = vmatprep.subr.bf16.mxu0 0
  %1896 = vmatpush2.bf16.msra.mxu0 0
  %1897 = vmatprep.subr.bf16.mxu0 0
  %1898 = vmatpush2.bf16.msra.mxu0 0
  %1899 = vmatprep.subr.bf16.mxu0 0
  %1900 = vmatpush2.bf16.msra.mxu0 0
  %1901 = vmatprep.subr.bf16.mxu0 0
  %1902 = vmatpush2.bf16.msra.mxu0 0
  %1903 = vmatprep.subr.bf16.mxu0 0
  %1904 = vmatpush2.bf16.msra.mxu0 0
  %1905 = vmatprep.subr.bf16.mxu0 0
  %1906 = vmatpush2.bf16.msra.mxu0 0
  %1907 = vmatprep.subr.bf16.mxu0 0
  %1908 = vmatpush2.bf16.msra.mxu0 0
  %1909 = vmatprep.mubr.bf16.mxu0 0
  %1910 = vmatmul.mubr.bf16.gmra.mxu0 %v1872
  %v1911 = vpop.f32.mrf.mxu0
  %v1912 = vadd.f32 0.0, %v1911
  %v1913 = vpop.f32.mrf.mxu0
  %v1914 = vpop.f32.mrf.mxu0
  %v1915 = vpop.f32.mrf.mxu0
  %1916 = vdwg.mxu0
  %1917 = vrot.lane.b32.xlu0 %v274, 112
  %v1918 = vpop.permute.xlu0 %1917
  %v1920 = vsel %vm275, %v1258, 0
  %v1923 = vsel %vm1263, %v1918, 0
  %1925 = vmatprep.subr.bf16.mxu0 0
  %1926 = vmatpush1.bf16.msra.mxu0 0
  %1927 = vmatprep.subr.bf16.mxu0 0
  %1928 = vmatpush1.bf16.msra.mxu0 0
  %1929 = vmatprep.subr.bf16.mxu0 0
  %1930 = vmatpush1.bf16.msra.mxu0 0
  %1931 = vmatprep.subr.bf16.mxu0 0
  %1932 = vmatpush1.bf16.msra.mxu0 0
  %1933 = vmatprep.subr.bf16.mxu0 0
  %1934 = vmatpush1.bf16.msra.mxu0 0
  %1935 = vmatprep.subr.bf16.mxu0 0
  %1936 = vmatpush1.bf16.msra.mxu0 0
  %1937 = vmatprep.subr.bf16.mxu0 0
  %1938 = vmatpush1.bf16.msra.mxu0 0
  %1939 = vmatprep.subr.bf16.mxu0 0
  %1940 = vmatpush1.bf16.msra.mxu0 %v1923
  %1941 = vmatprep.subr.bf16.mxu0 0
  %1942 = vmatpush2.bf16.msra.mxu0 0
  %1943 = vmatprep.subr.bf16.mxu0 0
  %1944 = vmatpush2.bf16.msra.mxu0 0
  %1945 = vmatprep.subr.bf16.mxu0 0
  %1946 = vmatpush2.bf16.msra.mxu0 0
  %1947 = vmatprep.subr.bf16.mxu0 0
  %1948 = vmatpush2.bf16.msra.mxu0 0
  %1949 = vmatprep.subr.bf16.mxu0 0
  %1950 = vmatpush2.bf16.msra.mxu0 0
  %1951 = vmatprep.subr.bf16.mxu0 0
  %1952 = vmatpush2.bf16.msra.mxu0 0
  %1953 = vmatprep.subr.bf16.mxu0 0
  %1954 = vmatpush2.bf16.msra.mxu0 0
  %1955 = vmatprep.subr.bf16.mxu0 0
  %1956 = vmatpush2.bf16.msra.mxu0 0
  %1957 = vmatprep.mubr.bf16.mxu0 0
  %1958 = vmatmul.mubr.bf16.gmra.mxu0 %v1920
  %v1959 = vpop.f32.mrf.mxu0
  %v1960 = vadd.f32 0.0, %v1959
  %v1961 = vpop.f32.mrf.mxu0
  %v1962 = vpop.f32.mrf.mxu0
  %v1963 = vpop.f32.mrf.mxu0
  %1964 = vdwg.mxu0
  %v1965 = vpack.c.bf16 %v1864, %v1816
  %v1966 = vpack.c.bf16 %v1960, %v1912
  %v1968 = vsel %vm275, %v1965, 0
  %v1971 = vsel %vm275, %v1966, 0
  %v1974 = vsel %vm1263, %v53, 0
  %1976 = vmatprep.subr.bf16.mxu0 0
  %1977 = vmatpush1.bf16.msra.mxu0 0
  %1978 = vmatprep.subr.bf16.mxu0 0
  %1979 = vmatpush1.bf16.msra.mxu0 0
  %1980 = vmatprep.subr.bf16.mxu0 0
  %1981 = vmatpush1.bf16.msra.mxu0 0
  %1982 = vmatprep.subr.bf16.mxu0 0
  %1983 = vmatpush1.bf16.msra.mxu0 0
  %1984 = vmatprep.subr.bf16.mxu0 0
  %1985 = vmatpush1.bf16.msra.mxu0 0
  %1986 = vmatprep.subr.bf16.mxu0 0
  %1987 = vmatpush1.bf16.msra.mxu0 0
  %1988 = vmatprep.subr.bf16.mxu0 0
  %1989 = vmatpush1.bf16.msra.mxu0 0
  %1990 = vmatprep.subr.bf16.mxu0 0
  %1991 = vmatpush1.bf16.msra.mxu0 %v1974
  %1992 = vmatprep.subr.bf16.mxu0 0
  %1993 = vmatpush2.bf16.msra.mxu0 0
  %1994 = vmatprep.subr.bf16.mxu0 0
  %1995 = vmatpush2.bf16.msra.mxu0 0
  %1996 = vmatprep.subr.bf16.mxu0 0
  %1997 = vmatpush2.bf16.msra.mxu0 0
  %1998 = vmatprep.subr.bf16.mxu0 0
  %1999 = vmatpush2.bf16.msra.mxu0 0
  %2000 = vmatprep.subr.bf16.mxu0 0
  %2001 = vmatpush2.bf16.msra.mxu0 0
  %2002 = vmatprep.subr.bf16.mxu0 0
  %2003 = vmatpush2.bf16.msra.mxu0 0
  %2004 = vmatprep.subr.bf16.mxu0 0
  %2005 = vmatpush2.bf16.msra.mxu0 0
  %2006 = vmatprep.subr.bf16.mxu0 0
  %2007 = vmatpush2.bf16.msra.mxu0 0
  %2008 = vmatprep.mubr.bf16.mxu0 0
  %2009 = vmatmul.mubr.bf16.gmra.mxu0 %v1968
  %v2010 = vpop.f32.mrf.mxu0
  %v2011 = vadd.f32 0.0, %v2010
  %v2012 = vpop.f32.mrf.mxu0
  %v2013 = vpop.f32.mrf.mxu0
  %v2014 = vadd.f32 0.0, %v2013
  %v2015 = vpop.f32.mrf.mxu0
  %2016 = vmatprep.mubr.bf16.mxu0 0
  %2017 = vmatmul.mubr.bf16.gmra.mxu0 %v1971
  %v2018 = vpop.f32.mrf.mxu0
  %v2019 = vadd.f32 0.0, %v2018
  %v2020 = vpop.f32.mrf.mxu0
  %v2021 = vpop.f32.mrf.mxu0
  %v2022 = vadd.f32 0.0, %v2021
  %v2023 = vpop.f32.mrf.mxu0
  %2024 = vdwg.mxu0
  %v2025 = vadd.f32 %v1769, %v2011
  %v2026 = vadd.f32 %v1770, %v2014
  %v2027 = vadd.f32 %v1771, %v2019
  %v2028 = vadd.f32 %v1772, %v2022
  %2029 = vrot.lane.b32.xlu0 %v271, 104
  %v2030 = vpop.permute.xlu0 %2029
  %v2032 = vsel %vm275, %v1247, 0
  %v2035 = vsel %vm1263, %v2030, 0
  %2037 = vmatprep.subr.bf16.mxu0 0
  %2038 = vmatpush1.bf16.msra.mxu0 0
  %2039 = vmatprep.subr.bf16.mxu0 0
  %2040 = vmatpush1.bf16.msra.mxu0 0
  %2041 = vmatprep.subr.bf16.mxu0 0
  %2042 = vmatpush1.bf16.msra.mxu0 0
  %2043 = vmatprep.subr.bf16.mxu0 0
  %2044 = vmatpush1.bf16.msra.mxu0 0
  %2045 = vmatprep.subr.bf16.mxu0 0
  %2046 = vmatpush1.bf16.msra.mxu0 0
  %2047 = vmatprep.subr.bf16.mxu0 0
  %2048 = vmatpush1.bf16.msra.mxu0 0
  %2049 = vmatprep.subr.bf16.mxu0 0
  %2050 = vmatpush1.bf16.msra.mxu0 0
  %2051 = vmatprep.subr.bf16.mxu0 0
  %2052 = vmatpush1.bf16.msra.mxu0 %v2035
  %2053 = vmatprep.subr.bf16.mxu0 0
  %2054 = vmatpush2.bf16.msra.mxu0 0
  %2055 = vmatprep.subr.bf16.mxu0 0
  %2056 = vmatpush2.bf16.msra.mxu0 0
  %2057 = vmatprep.subr.bf16.mxu0 0
  %2058 = vmatpush2.bf16.msra.mxu0 0
  %2059 = vmatprep.subr.bf16.mxu0 0
  %2060 = vmatpush2.bf16.msra.mxu0 0
  %2061 = vmatprep.subr.bf16.mxu0 0
  %2062 = vmatpush2.bf16.msra.mxu0 0
  %2063 = vmatprep.subr.bf16.mxu0 0
  %2064 = vmatpush2.bf16.msra.mxu0 0
  %2065 = vmatprep.subr.bf16.mxu0 0
  %2066 = vmatpush2.bf16.msra.mxu0 0
  %2067 = vmatprep.subr.bf16.mxu0 0
  %2068 = vmatpush2.bf16.msra.mxu0 0
  %2069 = vmatprep.mubr.bf16.mxu0 0
  %2070 = vmatmul.mubr.bf16.gmra.mxu0 %v2032
  %v2071 = vpop.f32.mrf.mxu0
  %v2072 = vadd.f32 0.0, %v2071
  %v2073 = vpop.f32.mrf.mxu0
  %v2074 = vpop.f32.mrf.mxu0
  %v2075 = vpop.f32.mrf.mxu0
  %2076 = vdwg.mxu0
  %2077 = vrot.lane.b32.xlu0 %v272, 104
  %v2078 = vpop.permute.xlu0 %2077
  %v2080 = vsel %vm275, %v1251, 0
  %v2083 = vsel %vm1263, %v2078, 0
  %2085 = vmatprep.subr.bf16.mxu0 0
  %2086 = vmatpush1.bf16.msra.mxu0 0
  %2087 = vmatprep.subr.bf16.mxu0 0
  %2088 = vmatpush1.bf16.msra.mxu0 0
  %2089 = vmatprep.subr.bf16.mxu0 0
  %2090 = vmatpush1.bf16.msra.mxu0 0
  %2091 = vmatprep.subr.bf16.mxu0 0
  %2092 = vmatpush1.bf16.msra.mxu0 0
  %2093 = vmatprep.subr.bf16.mxu0 0
  %2094 = vmatpush1.bf16.msra.mxu0 0
  %2095 = vmatprep.subr.bf16.mxu0 0
  %2096 = vmatpush1.bf16.msra.mxu0 0
  %2097 = vmatprep.subr.bf16.mxu0 0
  %2098 = vmatpush1.bf16.msra.mxu0 0
  %2099 = vmatprep.subr.bf16.mxu0 0
  %2100 = vmatpush1.bf16.msra.mxu0 %v2083
  %2101 = vmatprep.subr.bf16.mxu0 0
  %2102 = vmatpush2.bf16.msra.mxu0 0
  %2103 = vmatprep.subr.bf16.mxu0 0
  %2104 = vmatpush2.bf16.msra.mxu0 0
  %2105 = vmatprep.subr.bf16.mxu0 0
  %2106 = vmatpush2.bf16.msra.mxu0 0
  %2107 = vmatprep.subr.bf16.mxu0 0
  %2108 = vmatpush2.bf16.msra.mxu0 0
  %2109 = vmatprep.subr.bf16.mxu0 0
  %2110 = vmatpush2.bf16.msra.mxu0 0
  %2111 = vmatprep.subr.bf16.mxu0 0
  %2112 = vmatpush2.bf16.msra.mxu0 0
  %2113 = vmatprep.subr.bf16.mxu0 0
  %2114 = vmatpush2.bf16.msra.mxu0 0
  %2115 = vmatprep.subr.bf16.mxu0 0
  %2116 = vmatpush2.bf16.msra.mxu0 0
  %2117 = vmatprep.mubr.bf16.mxu0 0
  %2118 = vmatmul.mubr.bf16.gmra.mxu0 %v2080
  %v2119 = vpop.f32.mrf.mxu0
  %v2120 = vadd.f32 0.0, %v2119
  %v2121 = vpop.f32.mrf.mxu0
  %v2122 = vpop.f32.mrf.mxu0
  %v2123 = vpop.f32.mrf.mxu0
  %2124 = vdwg.mxu0
  %2125 = vrot.lane.b32.xlu0 %v273, 104
  %v2126 = vpop.permute.xlu0 %2125
  %v2128 = vsel %vm275, %v1255, 0
  %v2131 = vsel %vm1263, %v2126, 0
  %2133 = vmatprep.subr.bf16.mxu0 0
  %2134 = vmatpush1.bf16.msra.mxu0 0
  %2135 = vmatprep.subr.bf16.mxu0 0
  %2136 = vmatpush1.bf16.msra.mxu0 0
  %2137 = vmatprep.subr.bf16.mxu0 0
  %2138 = vmatpush1.bf16.msra.mxu0 0
  %2139 = vmatprep.subr.bf16.mxu0 0
  %2140 = vmatpush1.bf16.msra.mxu0 0
  %2141 = vmatprep.subr.bf16.mxu0 0
  %2142 = vmatpush1.bf16.msra.mxu0 0
  %2143 = vmatprep.subr.bf16.mxu0 0
  %2144 = vmatpush1.bf16.msra.mxu0 0
  %2145 = vmatprep.subr.bf16.mxu0 0
  %2146 = vmatpush1.bf16.msra.mxu0 0
  %2147 = vmatprep.subr.bf16.mxu0 0
  %2148 = vmatpush1.bf16.msra.mxu0 %v2131
  %2149 = vmatprep.subr.bf16.mxu0 0
  %2150 = vmatpush2.bf16.msra.mxu0 0
  %2151 = vmatprep.subr.bf16.mxu0 0
  %2152 = vmatpush2.bf16.msra.mxu0 0
  %2153 = vmatprep.subr.bf16.mxu0 0
  %2154 = vmatpush2.bf16.msra.mxu0 0
  %2155 = vmatprep.subr.bf16.mxu0 0
  %2156 = vmatpush2.bf16.msra.mxu0 0
  %2157 = vmatprep.subr.bf16.mxu0 0
  %2158 = vmatpush2.bf16.msra.mxu0 0
  %2159 = vmatprep.subr.bf16.mxu0 0
  %2160 = vmatpush2.bf16.msra.mxu0 0
  %2161 = vmatprep.subr.bf16.mxu0 0
  %2162 = vmatpush2.bf16.msra.mxu0 0
  %2163 = vmatprep.subr.bf16.mxu0 0
  %2164 = vmatpush2.bf16.msra.mxu0 0
  %2165 = vmatprep.mubr.bf16.mxu0 0
  %2166 = vmatmul.mubr.bf16.gmra.mxu0 %v2128
  %v2167 = vpop.f32.mrf.mxu0
  %v2168 = vadd.f32 0.0, %v2167
  %v2169 = vpop.f32.mrf.mxu0
  %v2170 = vpop.f32.mrf.mxu0
  %v2171 = vpop.f32.mrf.mxu0
  %2172 = vdwg.mxu0
  %2173 = vrot.lane.b32.xlu0 %v274, 104
  %v2174 = vpop.permute.xlu0 %2173
  %v2176 = vsel %vm275, %v1259, 0
  %v2179 = vsel %vm1263, %v2174, 0
  %2181 = vmatprep.subr.bf16.mxu0 0
  %2182 = vmatpush1.bf16.msra.mxu0 0
  %2183 = vmatprep.subr.bf16.mxu0 0
  %2184 = vmatpush1.bf16.msra.mxu0 0
  %2185 = vmatprep.subr.bf16.mxu0 0
  %2186 = vmatpush1.bf16.msra.mxu0 0
  %2187 = vmatprep.subr.bf16.mxu0 0
  %2188 = vmatpush1.bf16.msra.mxu0 0
  %2189 = vmatprep.subr.bf16.mxu0 0
  %2190 = vmatpush1.bf16.msra.mxu0 0
  %2191 = vmatprep.subr.bf16.mxu0 0
  %2192 = vmatpush1.bf16.msra.mxu0 0
  %2193 = vmatprep.subr.bf16.mxu0 0
  %2194 = vmatpush1.bf16.msra.mxu0 0
  %2195 = vmatprep.subr.bf16.mxu0 0
  %2196 = vmatpush1.bf16.msra.mxu0 %v2179
  %2197 = vmatprep.subr.bf16.mxu0 0
  %2198 = vmatpush2.bf16.msra.mxu0 0
  %2199 = vmatprep.subr.bf16.mxu0 0
  %2200 = vmatpush2.bf16.msra.mxu0 0
  %2201 = vmatprep.subr.bf16.mxu0 0
  %2202 = vmatpush2.bf16.msra.mxu0 0
  %2203 = vmatprep.subr.bf16.mxu0 0
  %2204 = vmatpush2.bf16.msra.mxu0 0
  %2205 = vmatprep.subr.bf16.mxu0 0
  %2206 = vmatpush2.bf16.msra.mxu0 0
  %2207 = vmatprep.subr.bf16.mxu0 0
  %2208 = vmatpush2.bf16.msra.mxu0 0
  %2209 = vmatprep.subr.bf16.mxu0 0
  %2210 = vmatpush2.bf16.msra.mxu0 0
  %2211 = vmatprep.subr.bf16.mxu0 0
  %2212 = vmatpush2.bf16.msra.mxu0 0
  %2213 = vmatprep.mubr.bf16.mxu0 0
  %2214 = vmatmul.mubr.bf16.gmra.mxu0 %v2176
  %v2215 = vpop.f32.mrf.mxu0
  %v2216 = vadd.f32 0.0, %v2215
  %v2217 = vpop.f32.mrf.mxu0
  %v2218 = vpop.f32.mrf.mxu0
  %v2219 = vpop.f32.mrf.mxu0
  %2220 = vdwg.mxu0
  %v2221 = vpack.c.bf16 %v2120, %v2072
  %v2222 = vpack.c.bf16 %v2216, %v2168
  %v2224 = vsel %vm275, %v2221, 0
  %v2227 = vsel %vm275, %v2222, 0
  %v2230 = vsel %vm1263, %v54, 0
  %2232 = vmatprep.subr.bf16.mxu0 0
  %2233 = vmatpush1.bf16.msra.mxu0 0
  %2234 = vmatprep.subr.bf16.mxu0 0
  %2235 = vmatpush1.bf16.msra.mxu0 0
  %2236 = vmatprep.subr.bf16.mxu0 0
  %2237 = vmatpush1.bf16.msra.mxu0 0
  %2238 = vmatprep.subr.bf16.mxu0 0
  %2239 = vmatpush1.bf16.msra.mxu0 0
  %2240 = vmatprep.subr.bf16.mxu0 0
  %2241 = vmatpush1.bf16.msra.mxu0 0
  %2242 = vmatprep.subr.bf16.mxu0 0
  %2243 = vmatpush1.bf16.msra.mxu0 0
  %2244 = vmatprep.subr.bf16.mxu0 0
  %2245 = vmatpush1.bf16.msra.mxu0 0
  %2246 = vmatprep.subr.bf16.mxu0 0
  %2247 = vmatpush1.bf16.msra.mxu0 %v2230
  %2248 = vmatprep.subr.bf16.mxu0 0
  %2249 = vmatpush2.bf16.msra.mxu0 0
  %2250 = vmatprep.subr.bf16.mxu0 0
  %2251 = vmatpush2.bf16.msra.mxu0 0
  %2252 = vmatprep.subr.bf16.mxu0 0
  %2253 = vmatpush2.bf16.msra.mxu0 0
  %2254 = vmatprep.subr.bf16.mxu0 0
  %2255 = vmatpush2.bf16.msra.mxu0 0
  %2256 = vmatprep.subr.bf16.mxu0 0
  %2257 = vmatpush2.bf16.msra.mxu0 0
  %2258 = vmatprep.subr.bf16.mxu0 0
  %2259 = vmatpush2.bf16.msra.mxu0 0
  %2260 = vmatprep.subr.bf16.mxu0 0
  %2261 = vmatpush2.bf16.msra.mxu0 0
  %2262 = vmatprep.subr.bf16.mxu0 0
  %2263 = vmatpush2.bf16.msra.mxu0 0
  %2264 = vmatprep.mubr.bf16.mxu0 0
  %2265 = vmatmul.mubr.bf16.gmra.mxu0 %v2224
  %v2266 = vpop.f32.mrf.mxu0
  %v2267 = vadd.f32 0.0, %v2266
  %v2268 = vpop.f32.mrf.mxu0
  %v2269 = vpop.f32.mrf.mxu0
  %v2270 = vadd.f32 0.0, %v2269
  %v2271 = vpop.f32.mrf.mxu0
  %2272 = vmatprep.mubr.bf16.mxu0 0
  %2273 = vmatmul.mubr.bf16.gmra.mxu0 %v2227
  %v2274 = vpop.f32.mrf.mxu0
  %v2275 = vadd.f32 0.0, %v2274
  %v2276 = vpop.f32.mrf.mxu0
  %v2277 = vpop.f32.mrf.mxu0
  %v2278 = vadd.f32 0.0, %v2277
  %v2279 = vpop.f32.mrf.mxu0
  %2280 = vdwg.mxu0
  %v2281 = vadd.f32 %v2025, %v2267
  %v2282 = vadd.f32 %v2026, %v2270
  %v2283 = vadd.f32 %v2027, %v2275
  %v2284 = vadd.f32 %v2028, %v2278
  %v2285 = vadd.f32 %v33, %v2281
  %v2286 = vadd.f32 %v34, %v2282
  %v2287 = vadd.f32 %v35, %v2283
  %v2288 = vadd.f32 %v36, %v2284
  %v2289 = vsel %vm73, %v2285, 0.0
  %2290 = vadd.xlane.f32.xlu0 %v2289
  %v2291 = vpop.xlane.xlu0 %2290
  %v2292 = vsel %vm73, %v2286, 0.0
  %2293 = vadd.xlane.f32.xlu0 %v2292
  %v2294 = vpop.xlane.xlu0 %2293
  %v2295 = vsel %vm73, %v2287, 0.0
  %2296 = vadd.xlane.f32.xlu0 %v2295
  %v2297 = vpop.xlane.xlu0 %2296
  %v2298 = vsel %vm73, %v2288, 0.0
  %2299 = vadd.xlane.f32.xlu0 %v2298
  %v2300 = vpop.xlane.xlu0 %2299
  %v2301 = vrcp.pop 32.0
  %v2302 = vmul.f32 %v2291, %v2301
  %v2303 = vmul.f32 %v2294, %v2301
  %v2304 = vmul.f32 %v2297, %v2301
  %v2305 = vmul.f32 %v2300, %v2301
  %v2306 = vsub.f32 %v2285, %v2302
  %v2307 = vsub.f32 %v2286, %v2303
  %v2308 = vsub.f32 %v2287, %v2304
  %v2309 = vsub.f32 %v2288, %v2305
  %v2310 = vmul.f32 %v2306, %v2306
  %v2311 = vmul.f32 %v2307, %v2307
  %v2312 = vmul.f32 %v2308, %v2308
  %v2313 = vmul.f32 %v2309, %v2309
  %v2314 = vsel %vm73, %v2310, 0.0
  %2315 = vadd.xlane.f32.xlu0 %v2314
  %v2316 = vpop.xlane.xlu0 %2315
  %v2317 = vsel %vm73, %v2311, 0.0
  %2318 = vadd.xlane.f32.xlu0 %v2317
  %v2319 = vpop.xlane.xlu0 %2318
  %v2320 = vsel %vm73, %v2312, 0.0
  %2321 = vadd.xlane.f32.xlu0 %v2320
  %v2322 = vpop.xlane.xlu0 %2321
  %v2323 = vsel %vm73, %v2313, 0.0
  %2324 = vadd.xlane.f32.xlu0 %v2323
  %v2325 = vpop.xlane.xlu0 %2324
  %v2326 = vmul.f32 %v2316, %v2301
  %v2327 = vmul.f32 %v2319, %v2301
  %v2328 = vmul.f32 %v2322, %v2301
  %v2329 = vmul.f32 %v2325, %v2301
  %v2330 = vadd.f32 %v2326, 1e-05
  %v2331 = vadd.f32 %v2327, 1e-05
  %v2332 = vadd.f32 %v2328, 1e-05
  %v2333 = vadd.f32 %v2329, 1e-05
  %v2334 = vrsqrt.pop %v2330
  %v2335 = vrsqrt.pop %v2331
  %v2336 = vrsqrt.pop %v2332
  %v2337 = vrsqrt.pop %v2333
  %v2338 = vmul.f32 %v2306, %v2334
  %v2339 = vmul.f32 %v2307, %v2335
  %v2340 = vmul.f32 %v2308, %v2336
  %v2341 = vmul.f32 %v2309, %v2337
  %v2342 = vlaneseq
  %v2343 = vshrl.u32 %v2342, 7
  %v2344 = vsub.s32 4, %v2343
  %v2345 = vrot.slane %v37, %v2344
  %v2346 = vmul.f32 %v2338, %v2345
  %v2347 = vmul.f32 %v2339, %v2345
  %v2348 = vmul.f32 %v2340, %v2345
  %v2349 = vmul.f32 %v2341, %v2345
  %v2350 = vlaneseq
  %v2351 = vshrl.u32 %v2350, 7
  %v2352 = vsub.s32 5, %v2351
  %v2353 = vrot.slane %v37, %v2352
  %v2354 = vadd.f32 %v2346, %v2353
  %v2355 = vadd.f32 %v2347, %v2353
  %v2356 = vadd.f32 %v2348, %v2353
  %v2357 = vadd.f32 %v2349, %v2353
  %v2358 = vpack.c.bf16 %v2355, %v2354
  %v2359 = vpack.c.bf16 %v2357, %v2356
  %v2360 = vld [vmem:[%s4] sm:$0xf]
  %v2361 = vld [vmem:[%s4 + $0x4] sm:$0xf]
  %v2362 = vld [vmem:[%s4 + $0x8] sm:$0xf]
  %v2363 = vld [vmem:[%s4 + $0xc] sm:$0xf]
  %v2364 = vlaneseq
  %v2365 = vshrl.u32 %v2364, 7
  %v2366 = vsub.s32 6, %v2365
  %v2367 = vrot.slane %v37, %v2366
  %v2372 = vunpack.c.l.b16 %v2360
  %v2373 = vunpack.c.l.b16 %v2361
  %v2374 = vunpack.c.l.b16 %v2362
  %v2375 = vunpack.c.l.b16 %v2363
  %v2376 = vpack.c.b16 %v2373, %v2372
  %v2377 = vpack.c.b16 %v2375, %v2374
  %v2381 = vsel %vm73, %v2358, 0
  %v2384 = vsel %vm73, %v2359, 0
  %2386 = vmatprep.subr.bf16.mxu0 0
  %2387 = vmatpush1.bf16.msra.mxu0 0
  %2388 = vmatprep.subr.bf16.mxu0 0
  %2389 = vmatpush1.bf16.msra.mxu0 0
  %2390 = vmatprep.subr.bf16.mxu0 0
  %2391 = vmatpush1.bf16.msra.mxu0 0
  %2392 = vmatprep.subr.bf16.mxu0 0
  %2393 = vmatpush1.bf16.msra.mxu0 0
  %2394 = vmatprep.subr.bf16.mxu0 0
  %2395 = vmatpush1.bf16.msra.mxu0 0
  %2396 = vmatprep.subr.bf16.mxu0 0
  %2397 = vmatpush1.bf16.msra.mxu0 0
  %2398 = vmatprep.subr.bf16.mxu0 0
  %2399 = vmatpush1.bf16.msra.mxu0 %v2377
  %2400 = vmatprep.subr.bf16.mxu0 0
  %2401 = vmatpush1.bf16.msra.mxu0 %v2376
  %2402 = vmatprep.subr.bf16.mxu0 0
  %2403 = vmatpush2.bf16.msra.mxu0 0
  %2404 = vmatprep.subr.bf16.mxu0 0
  %2405 = vmatpush2.bf16.msra.mxu0 0
  %2406 = vmatprep.subr.bf16.mxu0 0
  %2407 = vmatpush2.bf16.msra.mxu0 0
  %2408 = vmatprep.subr.bf16.mxu0 0
  %2409 = vmatpush2.bf16.msra.mxu0 0
  %2410 = vmatprep.subr.bf16.mxu0 0
  %2411 = vmatpush2.bf16.msra.mxu0 0
  %2412 = vmatprep.subr.bf16.mxu0 0
  %2413 = vmatpush2.bf16.msra.mxu0 0
  %2414 = vmatprep.subr.bf16.mxu0 0
  %2415 = vmatpush2.bf16.msra.mxu0 0
  %2416 = vmatprep.subr.bf16.mxu0 0
  %2417 = vmatpush2.bf16.msra.mxu0 0
  %2418 = vmatprep.mubr.bf16.mxu0 0
  %2419 = vmatmul.mubr.bf16.gmra.mxu0 %v2381
  %v2420 = vpop.f32.mrf.mxu0
  %v2421 = vadd.f32 %v2367, %v2420
  %v2422 = vpop.f32.mrf.mxu0
  %v2423 = vpop.f32.mrf.mxu0
  %v2424 = vadd.f32 %v2367, %v2423
  %v2425 = vpop.f32.mrf.mxu0
  %2426 = vmatprep.mubr.bf16.mxu0 0
  %2427 = vmatmul.mubr.bf16.gmra.mxu0 %v2384
  %v2428 = vpop.f32.mrf.mxu0
  %v2429 = vadd.f32 %v2367, %v2428
  %v2430 = vpop.f32.mrf.mxu0
  %v2431 = vpop.f32.mrf.mxu0
  %v2432 = vadd.f32 %v2367, %v2431
  %v2433 = vpop.f32.mrf.mxu0
  %2434 = vdwg.mxu0
  %v2435 = vmax.f32 %v2421, 0.0
  %v2436 = vmax.f32 %v2424, 0.0
  %v2437 = vmax.f32 %v2429, 0.0
  %v2438 = vmax.f32 %v2432, 0.0
  %v2439 = vpack.c.bf16 %v2436, %v2435
  %v2440 = vpack.c.bf16 %v2438, %v2437
  %v2441 = vld [vmem:[%s5] sm:$0xf]
  %v2442 = vld [vmem:[%s5 + $0x4] sm:$0xf]
  %v2443 = vld [vmem:[%s5 + $0x8] sm:$0xf]
  %v2444 = vld [vmem:[%s5 + $0xc] sm:$0xf]
  %v2445 = vld [vmem:[%s5 + $0x10] sm:$0xf]
  %v2446 = vld [vmem:[%s5 + $0x14] sm:$0xf]
  %v2447 = vld [vmem:[%s5 + $0x18] sm:$0xf]
  %v2448 = vld [vmem:[%s5 + $0x1c] sm:$0xf]
  %v2449 = vlaneseq
  %v2450 = vshrl.u32 %v2449, 7
  %v2451 = vsub.s32 7, %v2450
  %v2452 = vrot.slane %v37, %v2451
  %v2461 = vunpack.c.l.b16 %v2441
  %v2462 = vunpack.c.l.b16 %v2442
  %v2463 = vunpack.c.l.b16 %v2443
  %v2464 = vunpack.c.l.b16 %v2444
  %v2465 = vunpack.c.l.b16 %v2445
  %v2466 = vunpack.c.l.b16 %v2446
  %v2467 = vunpack.c.l.b16 %v2447
  %v2468 = vunpack.c.l.b16 %v2448
  %v2469 = vpack.c.b16 %v2462, %v2461
  %v2470 = vpack.c.b16 %v2464, %v2463
  %v2471 = vpack.c.b16 %v2466, %v2465
  %v2472 = vpack.c.b16 %v2468, %v2467
  %vm2477 = vcmask 523264
  %v2479 = vsel %vm2477, %v2439, 0
  %v2482 = vsel %vm2477, %v2440, 0
  %2484 = vmatprep.subr.bf16.mxu0 0
  %2485 = vmatpush1.bf16.msra.mxu0 0
  %2486 = vmatprep.subr.bf16.mxu0 0
  %2487 = vmatpush1.bf16.msra.mxu0 0
  %2488 = vmatprep.subr.bf16.mxu0 0
  %2489 = vmatpush1.bf16.msra.mxu0 0
  %2490 = vmatprep.subr.bf16.mxu0 0
  %2491 = vmatpush1.bf16.msra.mxu0 0
  %2492 = vmatprep.subr.bf16.mxu0 0
  %2493 = vmatpush1.bf16.msra.mxu0 %v2472
  %2494 = vmatprep.subr.bf16.mxu0 0
  %2495 = vmatpush1.bf16.msra.mxu0 %v2471
  %2496 = vmatprep.subr.bf16.mxu0 0
  %2497 = vmatpush1.bf16.msra.mxu0 %v2470
  %2498 = vmatprep.subr.bf16.mxu0 0
  %2499 = vmatpush1.bf16.msra.mxu0 %v2469
  %2500 = vmatprep.subr.bf16.mxu0 0
  %2501 = vmatpush2.bf16.msra.mxu0 0
  %2502 = vmatprep.subr.bf16.mxu0 0
  %2503 = vmatpush2.bf16.msra.mxu0 0
  %2504 = vmatprep.subr.bf16.mxu0 0
  %2505 = vmatpush2.bf16.msra.mxu0 0
  %2506 = vmatprep.subr.bf16.mxu0 0
  %2507 = vmatpush2.bf16.msra.mxu0 0
  %2508 = vmatprep.subr.bf16.mxu0 0
  %2509 = vmatpush2.bf16.msra.mxu0 0
  %2510 = vmatprep.subr.bf16.mxu0 0
  %2511 = vmatpush2.bf16.msra.mxu0 0
  %2512 = vmatprep.subr.bf16.mxu0 0
  %2513 = vmatpush2.bf16.msra.mxu0 0
  %2514 = vmatprep.subr.bf16.mxu0 0
  %2515 = vmatpush2.bf16.msra.mxu0 0
  %2516 = vmatprep.mubr.bf16.mxu0 0
  %2517 = vmatmul.mubr.bf16.gmra.mxu0 %v2479
  %v2518 = vpop.f32.mrf.mxu0
  %v2519 = vadd.f32 %v2452, %v2518
  %v2520 = vpop.f32.mrf.mxu0
  %v2521 = vpop.f32.mrf.mxu0
  %v2522 = vadd.f32 %v2452, %v2521
  %v2523 = vpop.f32.mrf.mxu0
  %2524 = vmatprep.mubr.bf16.mxu0 0
  %2525 = vmatmul.mubr.bf16.gmra.mxu0 %v2482
  %v2526 = vpop.f32.mrf.mxu0
  %v2527 = vadd.f32 %v2452, %v2526
  %v2528 = vpop.f32.mrf.mxu0
  %v2529 = vpop.f32.mrf.mxu0
  %v2530 = vadd.f32 %v2452, %v2529
  %v2531 = vpop.f32.mrf.mxu0
  %2532 = vdwg.mxu0
  %v2533 = vadd.f32 %v2354, %v2519
  %v2534 = vadd.f32 %v2355, %v2522
  %v2535 = vadd.f32 %v2356, %v2527
  %v2536 = vadd.f32 %v2357, %v2530
  %v2537 = vsel %vm73, %v2533, 0.0
  %2538 = vadd.xlane.f32.xlu0 %v2537
  %v2539 = vpop.xlane.xlu0 %2538
  %v2540 = vsel %vm73, %v2534, 0.0
  %2541 = vadd.xlane.f32.xlu0 %v2540
  %v2542 = vpop.xlane.xlu0 %2541
  %v2543 = vsel %vm73, %v2535, 0.0
  %2544 = vadd.xlane.f32.xlu0 %v2543
  %v2545 = vpop.xlane.xlu0 %2544
  %v2546 = vsel %vm73, %v2536, 0.0
  %2547 = vadd.xlane.f32.xlu0 %v2546
  %v2548 = vpop.xlane.xlu0 %2547
  %v2549 = vmul.f32 %v2539, %v2301
  %v2550 = vmul.f32 %v2542, %v2301
  %v2551 = vmul.f32 %v2545, %v2301
  %v2552 = vmul.f32 %v2548, %v2301
  %v2553 = vsub.f32 %v2533, %v2549
  %v2554 = vsub.f32 %v2534, %v2550
  %v2555 = vsub.f32 %v2535, %v2551
  %v2556 = vsub.f32 %v2536, %v2552
  %v2557 = vmul.f32 %v2553, %v2553
  %v2558 = vmul.f32 %v2554, %v2554
  %v2559 = vmul.f32 %v2555, %v2555
  %v2560 = vmul.f32 %v2556, %v2556
  %v2561 = vsel %vm73, %v2557, 0.0
  %2562 = vadd.xlane.f32.xlu0 %v2561
  %v2563 = vpop.xlane.xlu0 %2562
  %v2564 = vsel %vm73, %v2558, 0.0
  %2565 = vadd.xlane.f32.xlu0 %v2564
  %v2566 = vpop.xlane.xlu0 %2565
  %v2567 = vsel %vm73, %v2559, 0.0
  %2568 = vadd.xlane.f32.xlu0 %v2567
  %v2569 = vpop.xlane.xlu0 %2568
  %v2570 = vsel %vm73, %v2560, 0.0
  %2571 = vadd.xlane.f32.xlu0 %v2570
  %v2572 = vpop.xlane.xlu0 %2571
  %v2573 = vmul.f32 %v2563, %v2301
  %v2574 = vmul.f32 %v2566, %v2301
  %v2575 = vmul.f32 %v2569, %v2301
  %v2576 = vmul.f32 %v2572, %v2301
  %v2577 = vadd.f32 %v2573, 1e-05
  %v2578 = vadd.f32 %v2574, 1e-05
  %v2579 = vadd.f32 %v2575, 1e-05
  %v2580 = vadd.f32 %v2576, 1e-05
  %v2581 = vrsqrt.pop %v2577
  %v2582 = vrsqrt.pop %v2578
  %v2583 = vrsqrt.pop %v2579
  %v2584 = vrsqrt.pop %v2580
  %v2585 = vmul.f32 %v2553, %v2581
  %v2586 = vmul.f32 %v2554, %v2582
  %v2587 = vmul.f32 %v2555, %v2583
  %v2588 = vmul.f32 %v2556, %v2584
  %v2589 = vlaneseq
  %v2590 = vshrl.u32 %v2589, 7
  %v2591 = vsub.s32 0, %v2590
  %v2592 = vrot.slane %v38, %v2591
  %v2593 = vmul.f32 %v2585, %v2592
  %v2594 = vmul.f32 %v2586, %v2592
  %v2595 = vmul.f32 %v2587, %v2592
  %v2596 = vmul.f32 %v2588, %v2592
  %v2597 = vlaneseq
  %v2598 = vshrl.u32 %v2597, 7
  %v2599 = vsub.s32 1, %v2598
  %v2600 = vrot.slane %v38, %v2599
  %v2601 = vadd.f32 %v2593, %v2600
  %v2602 = vadd.f32 %v2594, %v2600
  %v2603 = vadd.f32 %v2595, %v2600
  %v2604 = vadd.f32 %v2596, %v2600
  %s2605 = scalar_lea.vmem %s6, 16
  %v2606 = vld [vmem:[%s2605] sm:$0xff]
  %v2607 = vld [vmem:[%s2605 + $0x8] sm:$0xff]
  %s2608 = scalar_lea.vmem %s2, 48
  %v2609 = vld [vmem:[%s2608] sm:$0xf]
  %v2610 = vld [vmem:[%s2608 + $0x4] sm:$0xf]
  %v2611 = vld [vmem:[%s2608 + $0x8] sm:$0xf]
  %v2612 = vld [vmem:[%s2608 + $0xc] sm:$0xf]
  %v2613 = vld [vmem:[%s2608 + $0x10] sm:$0xf]
  %v2614 = vld [vmem:[%s2608 + $0x14] sm:$0xf]
  %v2615 = vld [vmem:[%s2608 + $0x18] sm:$0xf]
  %v2616 = vld [vmem:[%s2608 + $0x1c] sm:$0xf]
  %v2617 = vld [vmem:[%s2608 + $0x20] sm:$0xf]
  %v2618 = vld [vmem:[%s2608 + $0x24] sm:$0xf]
  %v2619 = vld [vmem:[%s2608 + $0x28] sm:$0xf]
  %v2620 = vld [vmem:[%s2608 + $0x2c] sm:$0xf]
  %s2621 = scalar_lea.vmem %s3, 16
  %v2622 = vld [vmem:[%s2621] sm:$0xf]
  %v2623 = vld [vmem:[%s2621 + $0x4] sm:$0xf]
  %v2624 = vld [vmem:[%s2621 + $0x8] sm:$0xf]
  %v2625 = vld [vmem:[%s2621 + $0xc] sm:$0xf]
  %v2626 = vpack.c.bf16 %v2602, %v2601
  %v2627 = vpack.c.bf16 %v2604, %v2603
  %v2628 = vlaneseq
  %v2629 = vshrl.u32 %v2628, 7
  %v2630 = vsub.s32 0, %v2629
  %v2631 = vrot.slane %v2606, %v2630
  %v2636 = vunpack.c.l.b16 %v2609
  %v2637 = vunpack.c.l.b16 %v2610
  %v2638 = vunpack.c.l.b16 %v2611
  %v2639 = vunpack.c.l.b16 %v2612
  %v2640 = vpack.c.b16 %v2637, %v2636
  %v2641 = vpack.c.b16 %v2639, %v2638
  %v2645 = vsel %vm73, %v2626, 0
  %v2648 = vsel %vm73, %v2627, 0
  %2650 = vmatprep.subr.bf16.mxu0 0
  %2651 = vmatpush1.bf16.msra.mxu0 0
  %2652 = vmatprep.subr.bf16.mxu0 0
  %2653 = vmatpush1.bf16.msra.mxu0 0
  %2654 = vmatprep.subr.bf16.mxu0 0
  %2655 = vmatpush1.bf16.msra.mxu0 0
  %2656 = vmatprep.subr.bf16.mxu0 0
  %2657 = vmatpush1.bf16.msra.mxu0 0
  %2658 = vmatprep.subr.bf16.mxu0 0
  %2659 = vmatpush1.bf16.msra.mxu0 0
  %2660 = vmatprep.subr.bf16.mxu0 0
  %2661 = vmatpush1.bf16.msra.mxu0 0
  %2662 = vmatprep.subr.bf16.mxu0 0
  %2663 = vmatpush1.bf16.msra.mxu0 %v2641
  %2664 = vmatprep.subr.bf16.mxu0 0
  %2665 = vmatpush1.bf16.msra.mxu0 %v2640
  %2666 = vmatprep.subr.bf16.mxu0 0
  %2667 = vmatpush2.bf16.msra.mxu0 0
  %2668 = vmatprep.subr.bf16.mxu0 0
  %2669 = vmatpush2.bf16.msra.mxu0 0
  %2670 = vmatprep.subr.bf16.mxu0 0
  %2671 = vmatpush2.bf16.msra.mxu0 0
  %2672 = vmatprep.subr.bf16.mxu0 0
  %2673 = vmatpush2.bf16.msra.mxu0 0
  %2674 = vmatprep.subr.bf16.mxu0 0
  %2675 = vmatpush2.bf16.msra.mxu0 0
  %2676 = vmatprep.subr.bf16.mxu0 0
  %2677 = vmatpush2.bf16.msra.mxu0 0
  %2678 = vmatprep.subr.bf16.mxu0 0
  %2679 = vmatpush2.bf16.msra.mxu0 0
  %2680 = vmatprep.subr.bf16.mxu0 0
  %2681 = vmatpush2.bf16.msra.mxu0 0
  %2682 = vmatprep.mubr.bf16.mxu0 0
  %2683 = vmatmul.mubr.bf16.gmra.mxu0 %v2645
  %v2684 = vpop.f32.mrf.mxu0
  %v2685 = vadd.f32 %v2631, %v2684
  %v2686 = vpop.f32.mrf.mxu0
  %v2687 = vpop.f32.mrf.mxu0
  %v2688 = vadd.f32 %v2631, %v2687
  %v2689 = vpop.f32.mrf.mxu0
  %2690 = vmatprep.mubr.bf16.mxu0 0
  %2691 = vmatmul.mubr.bf16.gmra.mxu0 %v2648
  %v2692 = vpop.f32.mrf.mxu0
  %v2693 = vadd.f32 %v2631, %v2692
  %v2694 = vpop.f32.mrf.mxu0
  %v2695 = vpop.f32.mrf.mxu0
  %v2696 = vadd.f32 %v2631, %v2695
  %v2697 = vpop.f32.mrf.mxu0
  %2698 = vdwg.mxu0
  %v2699 = vlaneseq
  %v2700 = vshrl.u32 %v2699, 7
  %v2701 = vsub.s32 1, %v2700
  %v2702 = vrot.slane %v2606, %v2701
  %v2707 = vunpack.c.l.b16 %v2613
  %v2708 = vunpack.c.l.b16 %v2614
  %v2709 = vunpack.c.l.b16 %v2615
  %v2710 = vunpack.c.l.b16 %v2616
  %v2711 = vpack.c.b16 %v2708, %v2707
  %v2712 = vpack.c.b16 %v2710, %v2709
  %2715 = vmatprep.subr.bf16.mxu0 0
  %2716 = vmatpush1.bf16.msra.mxu0 0
  %2717 = vmatprep.subr.bf16.mxu0 0
  %2718 = vmatpush1.bf16.msra.mxu0 0
  %2719 = vmatprep.subr.bf16.mxu0 0
  %2720 = vmatpush1.bf16.msra.mxu0 0
  %2721 = vmatprep.subr.bf16.mxu0 0
  %2722 = vmatpush1.bf16.msra.mxu0 0
  %2723 = vmatprep.subr.bf16.mxu0 0
  %2724 = vmatpush1.bf16.msra.mxu0 0
  %2725 = vmatprep.subr.bf16.mxu0 0
  %2726 = vmatpush1.bf16.msra.mxu0 0
  %2727 = vmatprep.subr.bf16.mxu0 0
  %2728 = vmatpush1.bf16.msra.mxu0 %v2712
  %2729 = vmatprep.subr.bf16.mxu0 0
  %2730 = vmatpush1.bf16.msra.mxu0 %v2711
  %2731 = vmatprep.subr.bf16.mxu0 0
  %2732 = vmatpush2.bf16.msra.mxu0 0
  %2733 = vmatprep.subr.bf16.mxu0 0
  %2734 = vmatpush2.bf16.msra.mxu0 0
  %2735 = vmatprep.subr.bf16.mxu0 0
  %2736 = vmatpush2.bf16.msra.mxu0 0
  %2737 = vmatprep.subr.bf16.mxu0 0
  %2738 = vmatpush2.bf16.msra.mxu0 0
  %2739 = vmatprep.subr.bf16.mxu0 0
  %2740 = vmatpush2.bf16.msra.mxu0 0
  %2741 = vmatprep.subr.bf16.mxu0 0
  %2742 = vmatpush2.bf16.msra.mxu0 0
  %2743 = vmatprep.subr.bf16.mxu0 0
  %2744 = vmatpush2.bf16.msra.mxu0 0
  %2745 = vmatprep.subr.bf16.mxu0 0
  %2746 = vmatpush2.bf16.msra.mxu0 0
  %2747 = vmatprep.mubr.bf16.mxu0 0
  %2748 = vmatmul.mubr.bf16.gmra.mxu0 %v2645
  %v2749 = vpop.f32.mrf.mxu0
  %v2750 = vadd.f32 %v2702, %v2749
  %v2751 = vpop.f32.mrf.mxu0
  %v2752 = vpop.f32.mrf.mxu0
  %v2753 = vadd.f32 %v2702, %v2752
  %v2754 = vpop.f32.mrf.mxu0
  %2755 = vmatprep.mubr.bf16.mxu0 0
  %2756 = vmatmul.mubr.bf16.gmra.mxu0 %v2648
  %v2757 = vpop.f32.mrf.mxu0
  %v2758 = vadd.f32 %v2702, %v2757
  %v2759 = vpop.f32.mrf.mxu0
  %v2760 = vpop.f32.mrf.mxu0
  %v2761 = vadd.f32 %v2702, %v2760
  %v2762 = vpop.f32.mrf.mxu0
  %2763 = vdwg.mxu0
  %v2764 = vlaneseq
  %v2765 = vshrl.u32 %v2764, 7
  %v2766 = vsub.s32 2, %v2765
  %v2767 = vrot.slane %v2606, %v2766
  %v2772 = vunpack.c.l.b16 %v2617
  %v2773 = vunpack.c.l.b16 %v2618
  %v2774 = vunpack.c.l.b16 %v2619
  %v2775 = vunpack.c.l.b16 %v2620
  %v2776 = vpack.c.b16 %v2773, %v2772
  %v2777 = vpack.c.b16 %v2775, %v2774
  %2780 = vmatprep.subr.bf16.mxu0 0
  %2781 = vmatpush1.bf16.msra.mxu0 0
  %2782 = vmatprep.subr.bf16.mxu0 0
  %2783 = vmatpush1.bf16.msra.mxu0 0
  %2784 = vmatprep.subr.bf16.mxu0 0
  %2785 = vmatpush1.bf16.msra.mxu0 0
  %2786 = vmatprep.subr.bf16.mxu0 0
  %2787 = vmatpush1.bf16.msra.mxu0 0
  %2788 = vmatprep.subr.bf16.mxu0 0
  %2789 = vmatpush1.bf16.msra.mxu0 0
  %2790 = vmatprep.subr.bf16.mxu0 0
  %2791 = vmatpush1.bf16.msra.mxu0 0
  %2792 = vmatprep.subr.bf16.mxu0 0
  %2793 = vmatpush1.bf16.msra.mxu0 %v2777
  %2794 = vmatprep.subr.bf16.mxu0 0
  %2795 = vmatpush1.bf16.msra.mxu0 %v2776
  %2796 = vmatprep.subr.bf16.mxu0 0
  %2797 = vmatpush2.bf16.msra.mxu0 0
  %2798 = vmatprep.subr.bf16.mxu0 0
  %2799 = vmatpush2.bf16.msra.mxu0 0
  %2800 = vmatprep.subr.bf16.mxu0 0
  %2801 = vmatpush2.bf16.msra.mxu0 0
  %2802 = vmatprep.subr.bf16.mxu0 0
  %2803 = vmatpush2.bf16.msra.mxu0 0
  %2804 = vmatprep.subr.bf16.mxu0 0
  %2805 = vmatpush2.bf16.msra.mxu0 0
  %2806 = vmatprep.subr.bf16.mxu0 0
  %2807 = vmatpush2.bf16.msra.mxu0 0
  %2808 = vmatprep.subr.bf16.mxu0 0
  %2809 = vmatpush2.bf16.msra.mxu0 0
  %2810 = vmatprep.subr.bf16.mxu0 0
  %2811 = vmatpush2.bf16.msra.mxu0 0
  %2812 = vmatprep.mubr.bf16.mxu0 0
  %2813 = vmatmul.mubr.bf16.gmra.mxu0 %v2645
  %v2814 = vpop.f32.mrf.mxu0
  %v2815 = vadd.f32 %v2767, %v2814
  %v2816 = vpop.f32.mrf.mxu0
  %v2817 = vpop.f32.mrf.mxu0
  %v2818 = vadd.f32 %v2767, %v2817
  %v2819 = vpop.f32.mrf.mxu0
  %2820 = vmatprep.mubr.bf16.mxu0 0
  %2821 = vmatmul.mubr.bf16.gmra.mxu0 %v2648
  %v2822 = vpop.f32.mrf.mxu0
  %v2823 = vadd.f32 %v2767, %v2822
  %v2824 = vpop.f32.mrf.mxu0
  %v2825 = vpop.f32.mrf.mxu0
  %v2826 = vadd.f32 %v2767, %v2825
  %v2827 = vpop.f32.mrf.mxu0
  %2828 = vdwg.mxu0
  %v2829 = vmul.f32 %v2685, 0.35355338
  %v2830 = vmul.f32 %v2688, 0.35355338
  %v2831 = vmul.f32 %v2693, 0.35355338
  %v2832 = vmul.f32 %v2696, 0.35355338
  %v2833 = vpack.c.bf16 %v2829, %v2829
  %v2834 = vpack.c.bf16 %v2830, %v2830
  %v2835 = vpack.c.bf16 %v2831, %v2831
  %v2836 = vpack.c.bf16 %v2832, %v2832
  %v2837 = vpack.c.bf16 %v2750, %v2750
  %v2838 = vpack.c.bf16 %v2753, %v2753
  %v2839 = vpack.c.bf16 %v2758, %v2758
  %v2840 = vpack.c.bf16 %v2761, %v2761
  %v2841 = vpack.c.bf16 %v2815, %v2815
  %v2842 = vpack.c.bf16 %v2818, %v2818
  %v2843 = vpack.c.bf16 %v2823, %v2823
  %v2844 = vpack.c.bf16 %v2826, %v2826
  %v2846 = vsel %vm275, %v2833, 0
  %v2849 = vsel %vm275, %v2837, 0
  %2851 = vmatprep.subr.bf16.mxu0 0
  %2852 = vmatpush1.bf16.xpose.msra.mxu0 0
  %2853 = vmatprep.subr.bf16.mxu0 0
  %2854 = vmatpush1.bf16.xpose.msra.mxu0 0
  %2855 = vmatprep.subr.bf16.mxu0 0
  %2856 = vmatpush1.bf16.xpose.msra.mxu0 0
  %2857 = vmatprep.subr.bf16.mxu0 0
  %2858 = vmatpush1.bf16.xpose.msra.mxu0 0
  %2859 = vmatprep.subr.bf16.mxu0 0
  %2860 = vmatpush1.bf16.xpose.msra.mxu0 0
  %2861 = vmatprep.subr.bf16.mxu0 0
  %2862 = vmatpush1.bf16.xpose.msra.mxu0 0
  %2863 = vmatprep.subr.bf16.mxu0 0
  %2864 = vmatpush1.bf16.xpose.msra.mxu0 0
  %2865 = vmatprep.subr.bf16.mxu0 0
  %2866 = vmatpush1.bf16.xpose.msra.mxu0 %v2849
  %2867 = vmatprep.subr.bf16.mxu0 0
  %2868 = vmatpush2.bf16.xpose.msra.mxu0 0
  %2869 = vmatprep.subr.bf16.mxu0 0
  %2870 = vmatpush2.bf16.xpose.msra.mxu0 0
  %2871 = vmatprep.subr.bf16.mxu0 0
  %2872 = vmatpush2.bf16.xpose.msra.mxu0 0
  %2873 = vmatprep.subr.bf16.mxu0 0
  %2874 = vmatpush2.bf16.xpose.msra.mxu0 0
  %2875 = vmatprep.subr.bf16.mxu0 0
  %2876 = vmatpush2.bf16.xpose.msra.mxu0 0
  %2877 = vmatprep.subr.bf16.mxu0 0
  %2878 = vmatpush2.bf16.xpose.msra.mxu0 0
  %2879 = vmatprep.subr.bf16.mxu0 0
  %2880 = vmatpush2.bf16.xpose.msra.mxu0 0
  %2881 = vmatprep.subr.bf16.mxu0 0
  %2882 = vmatpush2.bf16.xpose.msra.mxu0 0
  %2883 = vmatprep.mubr.bf16.mxu0 0
  %2884 = vmatmul.mubr.bf16.gmra.mxu0 %v2846
  %v2885 = vpop.f32.mrf.mxu0
  %v2886 = vadd.f32 0.0, %v2885
  %v2887 = vpop.f32.mrf.mxu0
  %v2888 = vpop.f32.mrf.mxu0
  %v2889 = vpop.f32.mrf.mxu0
  %2890 = vdwg.mxu0
  %v2892 = vsel %vm275, %v2834, 0
  %v2895 = vsel %vm275, %v2838, 0
  %2897 = vmatprep.subr.bf16.mxu0 0
  %2898 = vmatpush1.bf16.xpose.msra.mxu0 0
  %2899 = vmatprep.subr.bf16.mxu0 0
  %2900 = vmatpush1.bf16.xpose.msra.mxu0 0
  %2901 = vmatprep.subr.bf16.mxu0 0
  %2902 = vmatpush1.bf16.xpose.msra.mxu0 0
  %2903 = vmatprep.subr.bf16.mxu0 0
  %2904 = vmatpush1.bf16.xpose.msra.mxu0 0
  %2905 = vmatprep.subr.bf16.mxu0 0
  %2906 = vmatpush1.bf16.xpose.msra.mxu0 0
  %2907 = vmatprep.subr.bf16.mxu0 0
  %2908 = vmatpush1.bf16.xpose.msra.mxu0 0
  %2909 = vmatprep.subr.bf16.mxu0 0
  %2910 = vmatpush1.bf16.xpose.msra.mxu0 0
  %2911 = vmatprep.subr.bf16.mxu0 0
  %2912 = vmatpush1.bf16.xpose.msra.mxu0 %v2895
  %2913 = vmatprep.subr.bf16.mxu0 0
  %2914 = vmatpush2.bf16.xpose.msra.mxu0 0
  %2915 = vmatprep.subr.bf16.mxu0 0
  %2916 = vmatpush2.bf16.xpose.msra.mxu0 0
  %2917 = vmatprep.subr.bf16.mxu0 0
  %2918 = vmatpush2.bf16.xpose.msra.mxu0 0
  %2919 = vmatprep.subr.bf16.mxu0 0
  %2920 = vmatpush2.bf16.xpose.msra.mxu0 0
  %2921 = vmatprep.subr.bf16.mxu0 0
  %2922 = vmatpush2.bf16.xpose.msra.mxu0 0
  %2923 = vmatprep.subr.bf16.mxu0 0
  %2924 = vmatpush2.bf16.xpose.msra.mxu0 0
  %2925 = vmatprep.subr.bf16.mxu0 0
  %2926 = vmatpush2.bf16.xpose.msra.mxu0 0
  %2927 = vmatprep.subr.bf16.mxu0 0
  %2928 = vmatpush2.bf16.xpose.msra.mxu0 0
  %2929 = vmatprep.mubr.bf16.mxu0 0
  %2930 = vmatmul.mubr.bf16.gmra.mxu0 %v2892
  %v2931 = vpop.f32.mrf.mxu0
  %v2932 = vadd.f32 0.0, %v2931
  %v2933 = vpop.f32.mrf.mxu0
  %v2934 = vpop.f32.mrf.mxu0
  %v2935 = vpop.f32.mrf.mxu0
  %2936 = vdwg.mxu0
  %v2938 = vsel %vm275, %v2835, 0
  %v2941 = vsel %vm275, %v2839, 0
  %2943 = vmatprep.subr.bf16.mxu0 0
  %2944 = vmatpush1.bf16.xpose.msra.mxu0 0
  %2945 = vmatprep.subr.bf16.mxu0 0
  %2946 = vmatpush1.bf16.xpose.msra.mxu0 0
  %2947 = vmatprep.subr.bf16.mxu0 0
  %2948 = vmatpush1.bf16.xpose.msra.mxu0 0
  %2949 = vmatprep.subr.bf16.mxu0 0
  %2950 = vmatpush1.bf16.xpose.msra.mxu0 0
  %2951 = vmatprep.subr.bf16.mxu0 0
  %2952 = vmatpush1.bf16.xpose.msra.mxu0 0
  %2953 = vmatprep.subr.bf16.mxu0 0
  %2954 = vmatpush1.bf16.xpose.msra.mxu0 0
  %2955 = vmatprep.subr.bf16.mxu0 0
  %2956 = vmatpush1.bf16.xpose.msra.mxu0 0
  %2957 = vmatprep.subr.bf16.mxu0 0
  %2958 = vmatpush1.bf16.xpose.msra.mxu0 %v2941
  %2959 = vmatprep.subr.bf16.mxu0 0
  %2960 = vmatpush2.bf16.xpose.msra.mxu0 0
  %2961 = vmatprep.subr.bf16.mxu0 0
  %2962 = vmatpush2.bf16.xpose.msra.mxu0 0
  %2963 = vmatprep.subr.bf16.mxu0 0
  %2964 = vmatpush2.bf16.xpose.msra.mxu0 0
  %2965 = vmatprep.subr.bf16.mxu0 0
  %2966 = vmatpush2.bf16.xpose.msra.mxu0 0
  %2967 = vmatprep.subr.bf16.mxu0 0
  %2968 = vmatpush2.bf16.xpose.msra.mxu0 0
  %2969 = vmatprep.subr.bf16.mxu0 0
  %2970 = vmatpush2.bf16.xpose.msra.mxu0 0
  %2971 = vmatprep.subr.bf16.mxu0 0
  %2972 = vmatpush2.bf16.xpose.msra.mxu0 0
  %2973 = vmatprep.subr.bf16.mxu0 0
  %2974 = vmatpush2.bf16.xpose.msra.mxu0 0
  %2975 = vmatprep.mubr.bf16.mxu0 0
  %2976 = vmatmul.mubr.bf16.gmra.mxu0 %v2938
  %v2977 = vpop.f32.mrf.mxu0
  %v2978 = vadd.f32 0.0, %v2977
  %v2979 = vpop.f32.mrf.mxu0
  %v2980 = vpop.f32.mrf.mxu0
  %v2981 = vpop.f32.mrf.mxu0
  %2982 = vdwg.mxu0
  %v2984 = vsel %vm275, %v2836, 0
  %v2987 = vsel %vm275, %v2840, 0
  %2989 = vmatprep.subr.bf16.mxu0 0
  %2990 = vmatpush1.bf16.xpose.msra.mxu0 0
  %2991 = vmatprep.subr.bf16.mxu0 0
  %2992 = vmatpush1.bf16.xpose.msra.mxu0 0
  %2993 = vmatprep.subr.bf16.mxu0 0
  %2994 = vmatpush1.bf16.xpose.msra.mxu0 0
  %2995 = vmatprep.subr.bf16.mxu0 0
  %2996 = vmatpush1.bf16.xpose.msra.mxu0 0
  %2997 = vmatprep.subr.bf16.mxu0 0
  %2998 = vmatpush1.bf16.xpose.msra.mxu0 0
  %2999 = vmatprep.subr.bf16.mxu0 0
  %3000 = vmatpush1.bf16.xpose.msra.mxu0 0
  %3001 = vmatprep.subr.bf16.mxu0 0
  %3002 = vmatpush1.bf16.xpose.msra.mxu0 0
  %3003 = vmatprep.subr.bf16.mxu0 0
  %3004 = vmatpush1.bf16.xpose.msra.mxu0 %v2987
  %3005 = vmatprep.subr.bf16.mxu0 0
  %3006 = vmatpush2.bf16.xpose.msra.mxu0 0
  %3007 = vmatprep.subr.bf16.mxu0 0
  %3008 = vmatpush2.bf16.xpose.msra.mxu0 0
  %3009 = vmatprep.subr.bf16.mxu0 0
  %3010 = vmatpush2.bf16.xpose.msra.mxu0 0
  %3011 = vmatprep.subr.bf16.mxu0 0
  %3012 = vmatpush2.bf16.xpose.msra.mxu0 0
  %3013 = vmatprep.subr.bf16.mxu0 0
  %3014 = vmatpush2.bf16.xpose.msra.mxu0 0
  %3015 = vmatprep.subr.bf16.mxu0 0
  %3016 = vmatpush2.bf16.xpose.msra.mxu0 0
  %3017 = vmatprep.subr.bf16.mxu0 0
  %3018 = vmatpush2.bf16.xpose.msra.mxu0 0
  %3019 = vmatprep.subr.bf16.mxu0 0
  %3020 = vmatpush2.bf16.xpose.msra.mxu0 0
  %3021 = vmatprep.mubr.bf16.mxu0 0
  %3022 = vmatmul.mubr.bf16.gmra.mxu0 %v2984
  %v3023 = vpop.f32.mrf.mxu0
  %v3024 = vadd.f32 0.0, %v3023
  %v3025 = vpop.f32.mrf.mxu0
  %v3026 = vpop.f32.mrf.mxu0
  %v3027 = vpop.f32.mrf.mxu0
  %3028 = vdwg.mxu0
  %3030 = vrot.lane.b32.xlu0 %v2833, 120
  %v3031 = vpop.permute.xlu0 %3030
  %3033 = vrot.lane.b32.xlu0 %v2837, 120
  %v3034 = vpop.permute.xlu0 %3033
  %v3036 = vsel %vm275, %v3031, 0
  %v3039 = vsel %vm275, %v3034, 0
  %3041 = vmatprep.subr.bf16.mxu0 0
  %3042 = vmatpush1.bf16.xpose.msra.mxu0 0
  %3043 = vmatprep.subr.bf16.mxu0 0
  %3044 = vmatpush1.bf16.xpose.msra.mxu0 0
  %3045 = vmatprep.subr.bf16.mxu0 0
  %3046 = vmatpush1.bf16.xpose.msra.mxu0 0
  %3047 = vmatprep.subr.bf16.mxu0 0
  %3048 = vmatpush1.bf16.xpose.msra.mxu0 0
  %3049 = vmatprep.subr.bf16.mxu0 0
  %3050 = vmatpush1.bf16.xpose.msra.mxu0 0
  %3051 = vmatprep.subr.bf16.mxu0 0
  %3052 = vmatpush1.bf16.xpose.msra.mxu0 0
  %3053 = vmatprep.subr.bf16.mxu0 0
  %3054 = vmatpush1.bf16.xpose.msra.mxu0 0
  %3055 = vmatprep.subr.bf16.mxu0 0
  %3056 = vmatpush1.bf16.xpose.msra.mxu0 %v3039
  %3057 = vmatprep.subr.bf16.mxu0 0
  %3058 = vmatpush2.bf16.xpose.msra.mxu0 0
  %3059 = vmatprep.subr.bf16.mxu0 0
  %3060 = vmatpush2.bf16.xpose.msra.mxu0 0
  %3061 = vmatprep.subr.bf16.mxu0 0
  %3062 = vmatpush2.bf16.xpose.msra.mxu0 0
  %3063 = vmatprep.subr.bf16.mxu0 0
  %3064 = vmatpush2.bf16.xpose.msra.mxu0 0
  %3065 = vmatprep.subr.bf16.mxu0 0
  %3066 = vmatpush2.bf16.xpose.msra.mxu0 0
  %3067 = vmatprep.subr.bf16.mxu0 0
  %3068 = vmatpush2.bf16.xpose.msra.mxu0 0
  %3069 = vmatprep.subr.bf16.mxu0 0
  %3070 = vmatpush2.bf16.xpose.msra.mxu0 0
  %3071 = vmatprep.subr.bf16.mxu0 0
  %3072 = vmatpush2.bf16.xpose.msra.mxu0 0
  %3073 = vmatprep.mubr.bf16.mxu0 0
  %3074 = vmatmul.mubr.bf16.gmra.mxu0 %v3036
  %v3075 = vpop.f32.mrf.mxu0
  %v3076 = vadd.f32 0.0, %v3075
  %v3077 = vpop.f32.mrf.mxu0
  %v3078 = vpop.f32.mrf.mxu0
  %v3079 = vpop.f32.mrf.mxu0
  %3080 = vdwg.mxu0
  %3082 = vrot.lane.b32.xlu0 %v2834, 120
  %v3083 = vpop.permute.xlu0 %3082
  %3085 = vrot.lane.b32.xlu0 %v2838, 120
  %v3086 = vpop.permute.xlu0 %3085
  %v3088 = vsel %vm275, %v3083, 0
  %v3091 = vsel %vm275, %v3086, 0
  %3093 = vmatprep.subr.bf16.mxu0 0
  %3094 = vmatpush1.bf16.xpose.msra.mxu0 0
  %3095 = vmatprep.subr.bf16.mxu0 0
  %3096 = vmatpush1.bf16.xpose.msra.mxu0 0
  %3097 = vmatprep.subr.bf16.mxu0 0
  %3098 = vmatpush1.bf16.xpose.msra.mxu0 0
  %3099 = vmatprep.subr.bf16.mxu0 0
  %3100 = vmatpush1.bf16.xpose.msra.mxu0 0
  %3101 = vmatprep.subr.bf16.mxu0 0
  %3102 = vmatpush1.bf16.xpose.msra.mxu0 0
  %3103 = vmatprep.subr.bf16.mxu0 0
  %3104 = vmatpush1.bf16.xpose.msra.mxu0 0
  %3105 = vmatprep.subr.bf16.mxu0 0
  %3106 = vmatpush1.bf16.xpose.msra.mxu0 0
  %3107 = vmatprep.subr.bf16.mxu0 0
  %3108 = vmatpush1.bf16.xpose.msra.mxu0 %v3091
  %3109 = vmatprep.subr.bf16.mxu0 0
  %3110 = vmatpush2.bf16.xpose.msra.mxu0 0
  %3111 = vmatprep.subr.bf16.mxu0 0
  %3112 = vmatpush2.bf16.xpose.msra.mxu0 0
  %3113 = vmatprep.subr.bf16.mxu0 0
  %3114 = vmatpush2.bf16.xpose.msra.mxu0 0
  %3115 = vmatprep.subr.bf16.mxu0 0
  %3116 = vmatpush2.bf16.xpose.msra.mxu0 0
  %3117 = vmatprep.subr.bf16.mxu0 0
  %3118 = vmatpush2.bf16.xpose.msra.mxu0 0
  %3119 = vmatprep.subr.bf16.mxu0 0
  %3120 = vmatpush2.bf16.xpose.msra.mxu0 0
  %3121 = vmatprep.subr.bf16.mxu0 0
  %3122 = vmatpush2.bf16.xpose.msra.mxu0 0
  %3123 = vmatprep.subr.bf16.mxu0 0
  %3124 = vmatpush2.bf16.xpose.msra.mxu0 0
  %3125 = vmatprep.mubr.bf16.mxu0 0
  %3126 = vmatmul.mubr.bf16.gmra.mxu0 %v3088
  %v3127 = vpop.f32.mrf.mxu0
  %v3128 = vadd.f32 0.0, %v3127
  %v3129 = vpop.f32.mrf.mxu0
  %v3130 = vpop.f32.mrf.mxu0
  %v3131 = vpop.f32.mrf.mxu0
  %3132 = vdwg.mxu0
  %3134 = vrot.lane.b32.xlu0 %v2835, 120
  %v3135 = vpop.permute.xlu0 %3134
  %3137 = vrot.lane.b32.xlu0 %v2839, 120
  %v3138 = vpop.permute.xlu0 %3137
  %v3140 = vsel %vm275, %v3135, 0
  %v3143 = vsel %vm275, %v3138, 0
  %3145 = vmatprep.subr.bf16.mxu0 0
  %3146 = vmatpush1.bf16.xpose.msra.mxu0 0
  %3147 = vmatprep.subr.bf16.mxu0 0
  %3148 = vmatpush1.bf16.xpose.msra.mxu0 0
  %3149 = vmatprep.subr.bf16.mxu0 0
  %3150 = vmatpush1.bf16.xpose.msra.mxu0 0
  %3151 = vmatprep.subr.bf16.mxu0 0
  %3152 = vmatpush1.bf16.xpose.msra.mxu0 0
  %3153 = vmatprep.subr.bf16.mxu0 0
  %3154 = vmatpush1.bf16.xpose.msra.mxu0 0
  %3155 = vmatprep.subr.bf16.mxu0 0
  %3156 = vmatpush1.bf16.xpose.msra.mxu0 0
  %3157 = vmatprep.subr.bf16.mxu0 0
  %3158 = vmatpush1.bf16.xpose.msra.mxu0 0
  %3159 = vmatprep.subr.bf16.mxu0 0
  %3160 = vmatpush1.bf16.xpose.msra.mxu0 %v3143
  %3161 = vmatprep.subr.bf16.mxu0 0
  %3162 = vmatpush2.bf16.xpose.msra.mxu0 0
  %3163 = vmatprep.subr.bf16.mxu0 0
  %3164 = vmatpush2.bf16.xpose.msra.mxu0 0
  %3165 = vmatprep.subr.bf16.mxu0 0
  %3166 = vmatpush2.bf16.xpose.msra.mxu0 0
  %3167 = vmatprep.subr.bf16.mxu0 0
  %3168 = vmatpush2.bf16.xpose.msra.mxu0 0
  %3169 = vmatprep.subr.bf16.mxu0 0
  %3170 = vmatpush2.bf16.xpose.msra.mxu0 0
  %3171 = vmatprep.subr.bf16.mxu0 0
  %3172 = vmatpush2.bf16.xpose.msra.mxu0 0
  %3173 = vmatprep.subr.bf16.mxu0 0
  %3174 = vmatpush2.bf16.xpose.msra.mxu0 0
  %3175 = vmatprep.subr.bf16.mxu0 0
  %3176 = vmatpush2.bf16.xpose.msra.mxu0 0
  %3177 = vmatprep.mubr.bf16.mxu0 0
  %3178 = vmatmul.mubr.bf16.gmra.mxu0 %v3140
  %v3179 = vpop.f32.mrf.mxu0
  %v3180 = vadd.f32 0.0, %v3179
  %v3181 = vpop.f32.mrf.mxu0
  %v3182 = vpop.f32.mrf.mxu0
  %v3183 = vpop.f32.mrf.mxu0
  %3184 = vdwg.mxu0
  %3186 = vrot.lane.b32.xlu0 %v2836, 120
  %v3187 = vpop.permute.xlu0 %3186
  %3189 = vrot.lane.b32.xlu0 %v2840, 120
  %v3190 = vpop.permute.xlu0 %3189
  %v3192 = vsel %vm275, %v3187, 0
  %v3195 = vsel %vm275, %v3190, 0
  %3197 = vmatprep.subr.bf16.mxu0 0
  %3198 = vmatpush1.bf16.xpose.msra.mxu0 0
  %3199 = vmatprep.subr.bf16.mxu0 0
  %3200 = vmatpush1.bf16.xpose.msra.mxu0 0
  %3201 = vmatprep.subr.bf16.mxu0 0
  %3202 = vmatpush1.bf16.xpose.msra.mxu0 0
  %3203 = vmatprep.subr.bf16.mxu0 0
  %3204 = vmatpush1.bf16.xpose.msra.mxu0 0
  %3205 = vmatprep.subr.bf16.mxu0 0
  %3206 = vmatpush1.bf16.xpose.msra.mxu0 0
  %3207 = vmatprep.subr.bf16.mxu0 0
  %3208 = vmatpush1.bf16.xpose.msra.mxu0 0
  %3209 = vmatprep.subr.bf16.mxu0 0
  %3210 = vmatpush1.bf16.xpose.msra.mxu0 0
  %3211 = vmatprep.subr.bf16.mxu0 0
  %3212 = vmatpush1.bf16.xpose.msra.mxu0 %v3195
  %3213 = vmatprep.subr.bf16.mxu0 0
  %3214 = vmatpush2.bf16.xpose.msra.mxu0 0
  %3215 = vmatprep.subr.bf16.mxu0 0
  %3216 = vmatpush2.bf16.xpose.msra.mxu0 0
  %3217 = vmatprep.subr.bf16.mxu0 0
  %3218 = vmatpush2.bf16.xpose.msra.mxu0 0
  %3219 = vmatprep.subr.bf16.mxu0 0
  %3220 = vmatpush2.bf16.xpose.msra.mxu0 0
  %3221 = vmatprep.subr.bf16.mxu0 0
  %3222 = vmatpush2.bf16.xpose.msra.mxu0 0
  %3223 = vmatprep.subr.bf16.mxu0 0
  %3224 = vmatpush2.bf16.xpose.msra.mxu0 0
  %3225 = vmatprep.subr.bf16.mxu0 0
  %3226 = vmatpush2.bf16.xpose.msra.mxu0 0
  %3227 = vmatprep.subr.bf16.mxu0 0
  %3228 = vmatpush2.bf16.xpose.msra.mxu0 0
  %3229 = vmatprep.mubr.bf16.mxu0 0
  %3230 = vmatmul.mubr.bf16.gmra.mxu0 %v3192
  %v3231 = vpop.f32.mrf.mxu0
  %v3232 = vadd.f32 0.0, %v3231
  %v3233 = vpop.f32.mrf.mxu0
  %v3234 = vpop.f32.mrf.mxu0
  %v3235 = vpop.f32.mrf.mxu0
  %3236 = vdwg.mxu0
  %3237 = vrot.lane.b32.xlu0 %v2833, 112
  %v3238 = vpop.permute.xlu0 %3237
  %3239 = vrot.lane.b32.xlu0 %v2837, 112
  %v3240 = vpop.permute.xlu0 %3239
  %v3242 = vsel %vm275, %v3238, 0
  %v3245 = vsel %vm275, %v3240, 0
  %3247 = vmatprep.subr.bf16.mxu0 0
  %3248 = vmatpush1.bf16.xpose.msra.mxu0 0
  %3249 = vmatprep.subr.bf16.mxu0 0
  %3250 = vmatpush1.bf16.xpose.msra.mxu0 0
  %3251 = vmatprep.subr.bf16.mxu0 0
  %3252 = vmatpush1.bf16.xpose.msra.mxu0 0
  %3253 = vmatprep.subr.bf16.mxu0 0
  %3254 = vmatpush1.bf16.xpose.msra.mxu0 0
  %3255 = vmatprep.subr.bf16.mxu0 0
  %3256 = vmatpush1.bf16.xpose.msra.mxu0 0
  %3257 = vmatprep.subr.bf16.mxu0 0
  %3258 = vmatpush1.bf16.xpose.msra.mxu0 0
  %3259 = vmatprep.subr.bf16.mxu0 0
  %3260 = vmatpush1.bf16.xpose.msra.mxu0 0
  %3261 = vmatprep.subr.bf16.mxu0 0
  %3262 = vmatpush1.bf16.xpose.msra.mxu0 %v3245
  %3263 = vmatprep.subr.bf16.mxu0 0
  %3264 = vmatpush2.bf16.xpose.msra.mxu0 0
  %3265 = vmatprep.subr.bf16.mxu0 0
  %3266 = vmatpush2.bf16.xpose.msra.mxu0 0
  %3267 = vmatprep.subr.bf16.mxu0 0
  %3268 = vmatpush2.bf16.xpose.msra.mxu0 0
  %3269 = vmatprep.subr.bf16.mxu0 0
  %3270 = vmatpush2.bf16.xpose.msra.mxu0 0
  %3271 = vmatprep.subr.bf16.mxu0 0
  %3272 = vmatpush2.bf16.xpose.msra.mxu0 0
  %3273 = vmatprep.subr.bf16.mxu0 0
  %3274 = vmatpush2.bf16.xpose.msra.mxu0 0
  %3275 = vmatprep.subr.bf16.mxu0 0
  %3276 = vmatpush2.bf16.xpose.msra.mxu0 0
  %3277 = vmatprep.subr.bf16.mxu0 0
  %3278 = vmatpush2.bf16.xpose.msra.mxu0 0
  %3279 = vmatprep.mubr.bf16.mxu0 0
  %3280 = vmatmul.mubr.bf16.gmra.mxu0 %v3242
  %v3281 = vpop.f32.mrf.mxu0
  %v3282 = vadd.f32 0.0, %v3281
  %v3283 = vpop.f32.mrf.mxu0
  %v3284 = vpop.f32.mrf.mxu0
  %v3285 = vpop.f32.mrf.mxu0
  %3286 = vdwg.mxu0
  %3287 = vrot.lane.b32.xlu0 %v2834, 112
  %v3288 = vpop.permute.xlu0 %3287
  %3289 = vrot.lane.b32.xlu0 %v2838, 112
  %v3290 = vpop.permute.xlu0 %3289
  %v3292 = vsel %vm275, %v3288, 0
  %v3295 = vsel %vm275, %v3290, 0
  %3297 = vmatprep.subr.bf16.mxu0 0
  %3298 = vmatpush1.bf16.xpose.msra.mxu0 0
  %3299 = vmatprep.subr.bf16.mxu0 0
  %3300 = vmatpush1.bf16.xpose.msra.mxu0 0
  %3301 = vmatprep.subr.bf16.mxu0 0
  %3302 = vmatpush1.bf16.xpose.msra.mxu0 0
  %3303 = vmatprep.subr.bf16.mxu0 0
  %3304 = vmatpush1.bf16.xpose.msra.mxu0 0
  %3305 = vmatprep.subr.bf16.mxu0 0
  %3306 = vmatpush1.bf16.xpose.msra.mxu0 0
  %3307 = vmatprep.subr.bf16.mxu0 0
  %3308 = vmatpush1.bf16.xpose.msra.mxu0 0
  %3309 = vmatprep.subr.bf16.mxu0 0
  %3310 = vmatpush1.bf16.xpose.msra.mxu0 0
  %3311 = vmatprep.subr.bf16.mxu0 0
  %3312 = vmatpush1.bf16.xpose.msra.mxu0 %v3295
  %3313 = vmatprep.subr.bf16.mxu0 0
  %3314 = vmatpush2.bf16.xpose.msra.mxu0 0
  %3315 = vmatprep.subr.bf16.mxu0 0
  %3316 = vmatpush2.bf16.xpose.msra.mxu0 0
  %3317 = vmatprep.subr.bf16.mxu0 0
  %3318 = vmatpush2.bf16.xpose.msra.mxu0 0
  %3319 = vmatprep.subr.bf16.mxu0 0
  %3320 = vmatpush2.bf16.xpose.msra.mxu0 0
  %3321 = vmatprep.subr.bf16.mxu0 0
  %3322 = vmatpush2.bf16.xpose.msra.mxu0 0
  %3323 = vmatprep.subr.bf16.mxu0 0
  %3324 = vmatpush2.bf16.xpose.msra.mxu0 0
  %3325 = vmatprep.subr.bf16.mxu0 0
  %3326 = vmatpush2.bf16.xpose.msra.mxu0 0
  %3327 = vmatprep.subr.bf16.mxu0 0
  %3328 = vmatpush2.bf16.xpose.msra.mxu0 0
  %3329 = vmatprep.mubr.bf16.mxu0 0
  %3330 = vmatmul.mubr.bf16.gmra.mxu0 %v3292
  %v3331 = vpop.f32.mrf.mxu0
  %v3332 = vadd.f32 0.0, %v3331
  %v3333 = vpop.f32.mrf.mxu0
  %v3334 = vpop.f32.mrf.mxu0
  %v3335 = vpop.f32.mrf.mxu0
  %3336 = vdwg.mxu0
  %3337 = vrot.lane.b32.xlu0 %v2835, 112
  %v3338 = vpop.permute.xlu0 %3337
  %3339 = vrot.lane.b32.xlu0 %v2839, 112
  %v3340 = vpop.permute.xlu0 %3339
  %v3342 = vsel %vm275, %v3338, 0
  %v3345 = vsel %vm275, %v3340, 0
  %3347 = vmatprep.subr.bf16.mxu0 0
  %3348 = vmatpush1.bf16.xpose.msra.mxu0 0
  %3349 = vmatprep.subr.bf16.mxu0 0
  %3350 = vmatpush1.bf16.xpose.msra.mxu0 0
  %3351 = vmatprep.subr.bf16.mxu0 0
  %3352 = vmatpush1.bf16.xpose.msra.mxu0 0
  %3353 = vmatprep.subr.bf16.mxu0 0
  %3354 = vmatpush1.bf16.xpose.msra.mxu0 0
  %3355 = vmatprep.subr.bf16.mxu0 0
  %3356 = vmatpush1.bf16.xpose.msra.mxu0 0
  %3357 = vmatprep.subr.bf16.mxu0 0
  %3358 = vmatpush1.bf16.xpose.msra.mxu0 0
  %3359 = vmatprep.subr.bf16.mxu0 0
  %3360 = vmatpush1.bf16.xpose.msra.mxu0 0
  %3361 = vmatprep.subr.bf16.mxu0 0
  %3362 = vmatpush1.bf16.xpose.msra.mxu0 %v3345
  %3363 = vmatprep.subr.bf16.mxu0 0
  %3364 = vmatpush2.bf16.xpose.msra.mxu0 0
  %3365 = vmatprep.subr.bf16.mxu0 0
  %3366 = vmatpush2.bf16.xpose.msra.mxu0 0
  %3367 = vmatprep.subr.bf16.mxu0 0
  %3368 = vmatpush2.bf16.xpose.msra.mxu0 0
  %3369 = vmatprep.subr.bf16.mxu0 0
  %3370 = vmatpush2.bf16.xpose.msra.mxu0 0
  %3371 = vmatprep.subr.bf16.mxu0 0
  %3372 = vmatpush2.bf16.xpose.msra.mxu0 0
  %3373 = vmatprep.subr.bf16.mxu0 0
  %3374 = vmatpush2.bf16.xpose.msra.mxu0 0
  %3375 = vmatprep.subr.bf16.mxu0 0
  %3376 = vmatpush2.bf16.xpose.msra.mxu0 0
  %3377 = vmatprep.subr.bf16.mxu0 0
  %3378 = vmatpush2.bf16.xpose.msra.mxu0 0
  %3379 = vmatprep.mubr.bf16.mxu0 0
  %3380 = vmatmul.mubr.bf16.gmra.mxu0 %v3342
  %v3381 = vpop.f32.mrf.mxu0
  %v3382 = vadd.f32 0.0, %v3381
  %v3383 = vpop.f32.mrf.mxu0
  %v3384 = vpop.f32.mrf.mxu0
  %v3385 = vpop.f32.mrf.mxu0
  %3386 = vdwg.mxu0
  %3387 = vrot.lane.b32.xlu0 %v2836, 112
  %v3388 = vpop.permute.xlu0 %3387
  %3389 = vrot.lane.b32.xlu0 %v2840, 112
  %v3390 = vpop.permute.xlu0 %3389
  %v3392 = vsel %vm275, %v3388, 0
  %v3395 = vsel %vm275, %v3390, 0
  %3397 = vmatprep.subr.bf16.mxu0 0
  %3398 = vmatpush1.bf16.xpose.msra.mxu0 0
  %3399 = vmatprep.subr.bf16.mxu0 0
  %3400 = vmatpush1.bf16.xpose.msra.mxu0 0
  %3401 = vmatprep.subr.bf16.mxu0 0
  %3402 = vmatpush1.bf16.xpose.msra.mxu0 0
  %3403 = vmatprep.subr.bf16.mxu0 0
  %3404 = vmatpush1.bf16.xpose.msra.mxu0 0
  %3405 = vmatprep.subr.bf16.mxu0 0
  %3406 = vmatpush1.bf16.xpose.msra.mxu0 0
  %3407 = vmatprep.subr.bf16.mxu0 0
  %3408 = vmatpush1.bf16.xpose.msra.mxu0 0
  %3409 = vmatprep.subr.bf16.mxu0 0
  %3410 = vmatpush1.bf16.xpose.msra.mxu0 0
  %3411 = vmatprep.subr.bf16.mxu0 0
  %3412 = vmatpush1.bf16.xpose.msra.mxu0 %v3395
  %3413 = vmatprep.subr.bf16.mxu0 0
  %3414 = vmatpush2.bf16.xpose.msra.mxu0 0
  %3415 = vmatprep.subr.bf16.mxu0 0
  %3416 = vmatpush2.bf16.xpose.msra.mxu0 0
  %3417 = vmatprep.subr.bf16.mxu0 0
  %3418 = vmatpush2.bf16.xpose.msra.mxu0 0
  %3419 = vmatprep.subr.bf16.mxu0 0
  %3420 = vmatpush2.bf16.xpose.msra.mxu0 0
  %3421 = vmatprep.subr.bf16.mxu0 0
  %3422 = vmatpush2.bf16.xpose.msra.mxu0 0
  %3423 = vmatprep.subr.bf16.mxu0 0
  %3424 = vmatpush2.bf16.xpose.msra.mxu0 0
  %3425 = vmatprep.subr.bf16.mxu0 0
  %3426 = vmatpush2.bf16.xpose.msra.mxu0 0
  %3427 = vmatprep.subr.bf16.mxu0 0
  %3428 = vmatpush2.bf16.xpose.msra.mxu0 0
  %3429 = vmatprep.mubr.bf16.mxu0 0
  %3430 = vmatmul.mubr.bf16.gmra.mxu0 %v3392
  %v3431 = vpop.f32.mrf.mxu0
  %v3432 = vadd.f32 0.0, %v3431
  %v3433 = vpop.f32.mrf.mxu0
  %v3434 = vpop.f32.mrf.mxu0
  %v3435 = vpop.f32.mrf.mxu0
  %3436 = vdwg.mxu0
  %3437 = vrot.lane.b32.xlu0 %v2833, 104
  %v3438 = vpop.permute.xlu0 %3437
  %3439 = vrot.lane.b32.xlu0 %v2837, 104
  %v3440 = vpop.permute.xlu0 %3439
  %v3442 = vsel %vm275, %v3438, 0
  %v3445 = vsel %vm275, %v3440, 0
  %3447 = vmatprep.subr.bf16.mxu0 0
  %3448 = vmatpush1.bf16.xpose.msra.mxu0 0
  %3449 = vmatprep.subr.bf16.mxu0 0
  %3450 = vmatpush1.bf16.xpose.msra.mxu0 0
  %3451 = vmatprep.subr.bf16.mxu0 0
  %3452 = vmatpush1.bf16.xpose.msra.mxu0 0
  %3453 = vmatprep.subr.bf16.mxu0 0
  %3454 = vmatpush1.bf16.xpose.msra.mxu0 0
  %3455 = vmatprep.subr.bf16.mxu0 0
  %3456 = vmatpush1.bf16.xpose.msra.mxu0 0
  %3457 = vmatprep.subr.bf16.mxu0 0
  %3458 = vmatpush1.bf16.xpose.msra.mxu0 0
  %3459 = vmatprep.subr.bf16.mxu0 0
  %3460 = vmatpush1.bf16.xpose.msra.mxu0 0
  %3461 = vmatprep.subr.bf16.mxu0 0
  %3462 = vmatpush1.bf16.xpose.msra.mxu0 %v3445
  %3463 = vmatprep.subr.bf16.mxu0 0
  %3464 = vmatpush2.bf16.xpose.msra.mxu0 0
  %3465 = vmatprep.subr.bf16.mxu0 0
  %3466 = vmatpush2.bf16.xpose.msra.mxu0 0
  %3467 = vmatprep.subr.bf16.mxu0 0
  %3468 = vmatpush2.bf16.xpose.msra.mxu0 0
  %3469 = vmatprep.subr.bf16.mxu0 0
  %3470 = vmatpush2.bf16.xpose.msra.mxu0 0
  %3471 = vmatprep.subr.bf16.mxu0 0
  %3472 = vmatpush2.bf16.xpose.msra.mxu0 0
  %3473 = vmatprep.subr.bf16.mxu0 0
  %3474 = vmatpush2.bf16.xpose.msra.mxu0 0
  %3475 = vmatprep.subr.bf16.mxu0 0
  %3476 = vmatpush2.bf16.xpose.msra.mxu0 0
  %3477 = vmatprep.subr.bf16.mxu0 0
  %3478 = vmatpush2.bf16.xpose.msra.mxu0 0
  %3479 = vmatprep.mubr.bf16.mxu0 0
  %3480 = vmatmul.mubr.bf16.gmra.mxu0 %v3442
  %v3481 = vpop.f32.mrf.mxu0
  %v3482 = vadd.f32 0.0, %v3481
  %v3483 = vpop.f32.mrf.mxu0
  %v3484 = vpop.f32.mrf.mxu0
  %v3485 = vpop.f32.mrf.mxu0
  %3486 = vdwg.mxu0
  %3487 = vrot.lane.b32.xlu0 %v2834, 104
  %v3488 = vpop.permute.xlu0 %3487
  %3489 = vrot.lane.b32.xlu0 %v2838, 104
  %v3490 = vpop.permute.xlu0 %3489
  %v3492 = vsel %vm275, %v3488, 0
  %v3495 = vsel %vm275, %v3490, 0
  %3497 = vmatprep.subr.bf16.mxu0 0
  %3498 = vmatpush1.bf16.xpose.msra.mxu0 0
  %3499 = vmatprep.subr.bf16.mxu0 0
  %3500 = vmatpush1.bf16.xpose.msra.mxu0 0
  %3501 = vmatprep.subr.bf16.mxu0 0
  %3502 = vmatpush1.bf16.xpose.msra.mxu0 0
  %3503 = vmatprep.subr.bf16.mxu0 0
  %3504 = vmatpush1.bf16.xpose.msra.mxu0 0
  %3505 = vmatprep.subr.bf16.mxu0 0
  %3506 = vmatpush1.bf16.xpose.msra.mxu0 0
  %3507 = vmatprep.subr.bf16.mxu0 0
  %3508 = vmatpush1.bf16.xpose.msra.mxu0 0
  %3509 = vmatprep.subr.bf16.mxu0 0
  %3510 = vmatpush1.bf16.xpose.msra.mxu0 0
  %3511 = vmatprep.subr.bf16.mxu0 0
  %3512 = vmatpush1.bf16.xpose.msra.mxu0 %v3495
  %3513 = vmatprep.subr.bf16.mxu0 0
  %3514 = vmatpush2.bf16.xpose.msra.mxu0 0
  %3515 = vmatprep.subr.bf16.mxu0 0
  %3516 = vmatpush2.bf16.xpose.msra.mxu0 0
  %3517 = vmatprep.subr.bf16.mxu0 0
  %3518 = vmatpush2.bf16.xpose.msra.mxu0 0
  %3519 = vmatprep.subr.bf16.mxu0 0
  %3520 = vmatpush2.bf16.xpose.msra.mxu0 0
  %3521 = vmatprep.subr.bf16.mxu0 0
  %3522 = vmatpush2.bf16.xpose.msra.mxu0 0
  %3523 = vmatprep.subr.bf16.mxu0 0
  %3524 = vmatpush2.bf16.xpose.msra.mxu0 0
  %3525 = vmatprep.subr.bf16.mxu0 0
  %3526 = vmatpush2.bf16.xpose.msra.mxu0 0
  %3527 = vmatprep.subr.bf16.mxu0 0
  %3528 = vmatpush2.bf16.xpose.msra.mxu0 0
  %3529 = vmatprep.mubr.bf16.mxu0 0
  %3530 = vmatmul.mubr.bf16.gmra.mxu0 %v3492
  %v3531 = vpop.f32.mrf.mxu0
  %v3532 = vadd.f32 0.0, %v3531
  %v3533 = vpop.f32.mrf.mxu0
  %v3534 = vpop.f32.mrf.mxu0
  %v3535 = vpop.f32.mrf.mxu0
  %3536 = vdwg.mxu0
  %3537 = vrot.lane.b32.xlu0 %v2835, 104
  %v3538 = vpop.permute.xlu0 %3537
  %3539 = vrot.lane.b32.xlu0 %v2839, 104
  %v3540 = vpop.permute.xlu0 %3539
  %v3542 = vsel %vm275, %v3538, 0
  %v3545 = vsel %vm275, %v3540, 0
  %3547 = vmatprep.subr.bf16.mxu0 0
  %3548 = vmatpush1.bf16.xpose.msra.mxu0 0
  %3549 = vmatprep.subr.bf16.mxu0 0
  %3550 = vmatpush1.bf16.xpose.msra.mxu0 0
  %3551 = vmatprep.subr.bf16.mxu0 0
  %3552 = vmatpush1.bf16.xpose.msra.mxu0 0
  %3553 = vmatprep.subr.bf16.mxu0 0
  %3554 = vmatpush1.bf16.xpose.msra.mxu0 0
  %3555 = vmatprep.subr.bf16.mxu0 0
  %3556 = vmatpush1.bf16.xpose.msra.mxu0 0
  %3557 = vmatprep.subr.bf16.mxu0 0
  %3558 = vmatpush1.bf16.xpose.msra.mxu0 0
  %3559 = vmatprep.subr.bf16.mxu0 0
  %3560 = vmatpush1.bf16.xpose.msra.mxu0 0
  %3561 = vmatprep.subr.bf16.mxu0 0
  %3562 = vmatpush1.bf16.xpose.msra.mxu0 %v3545
  %3563 = vmatprep.subr.bf16.mxu0 0
  %3564 = vmatpush2.bf16.xpose.msra.mxu0 0
  %3565 = vmatprep.subr.bf16.mxu0 0
  %3566 = vmatpush2.bf16.xpose.msra.mxu0 0
  %3567 = vmatprep.subr.bf16.mxu0 0
  %3568 = vmatpush2.bf16.xpose.msra.mxu0 0
  %3569 = vmatprep.subr.bf16.mxu0 0
  %3570 = vmatpush2.bf16.xpose.msra.mxu0 0
  %3571 = vmatprep.subr.bf16.mxu0 0
  %3572 = vmatpush2.bf16.xpose.msra.mxu0 0
  %3573 = vmatprep.subr.bf16.mxu0 0
  %3574 = vmatpush2.bf16.xpose.msra.mxu0 0
  %3575 = vmatprep.subr.bf16.mxu0 0
  %3576 = vmatpush2.bf16.xpose.msra.mxu0 0
  %3577 = vmatprep.subr.bf16.mxu0 0
  %3578 = vmatpush2.bf16.xpose.msra.mxu0 0
  %3579 = vmatprep.mubr.bf16.mxu0 0
  %3580 = vmatmul.mubr.bf16.gmra.mxu0 %v3542
  %v3581 = vpop.f32.mrf.mxu0
  %v3582 = vadd.f32 0.0, %v3581
  %v3583 = vpop.f32.mrf.mxu0
  %v3584 = vpop.f32.mrf.mxu0
  %v3585 = vpop.f32.mrf.mxu0
  %3586 = vdwg.mxu0
  %3587 = vrot.lane.b32.xlu0 %v2836, 104
  %v3588 = vpop.permute.xlu0 %3587
  %3589 = vrot.lane.b32.xlu0 %v2840, 104
  %v3590 = vpop.permute.xlu0 %3589
  %v3592 = vsel %vm275, %v3588, 0
  %v3595 = vsel %vm275, %v3590, 0
  %3597 = vmatprep.subr.bf16.mxu0 0
  %3598 = vmatpush1.bf16.xpose.msra.mxu0 0
  %3599 = vmatprep.subr.bf16.mxu0 0
  %3600 = vmatpush1.bf16.xpose.msra.mxu0 0
  %3601 = vmatprep.subr.bf16.mxu0 0
  %3602 = vmatpush1.bf16.xpose.msra.mxu0 0
  %3603 = vmatprep.subr.bf16.mxu0 0
  %3604 = vmatpush1.bf16.xpose.msra.mxu0 0
  %3605 = vmatprep.subr.bf16.mxu0 0
  %3606 = vmatpush1.bf16.xpose.msra.mxu0 0
  %3607 = vmatprep.subr.bf16.mxu0 0
  %3608 = vmatpush1.bf16.xpose.msra.mxu0 0
  %3609 = vmatprep.subr.bf16.mxu0 0
  %3610 = vmatpush1.bf16.xpose.msra.mxu0 0
  %3611 = vmatprep.subr.bf16.mxu0 0
  %3612 = vmatpush1.bf16.xpose.msra.mxu0 %v3595
  %3613 = vmatprep.subr.bf16.mxu0 0
  %3614 = vmatpush2.bf16.xpose.msra.mxu0 0
  %3615 = vmatprep.subr.bf16.mxu0 0
  %3616 = vmatpush2.bf16.xpose.msra.mxu0 0
  %3617 = vmatprep.subr.bf16.mxu0 0
  %3618 = vmatpush2.bf16.xpose.msra.mxu0 0
  %3619 = vmatprep.subr.bf16.mxu0 0
  %3620 = vmatpush2.bf16.xpose.msra.mxu0 0
  %3621 = vmatprep.subr.bf16.mxu0 0
  %3622 = vmatpush2.bf16.xpose.msra.mxu0 0
  %3623 = vmatprep.subr.bf16.mxu0 0
  %3624 = vmatpush2.bf16.xpose.msra.mxu0 0
  %3625 = vmatprep.subr.bf16.mxu0 0
  %3626 = vmatpush2.bf16.xpose.msra.mxu0 0
  %3627 = vmatprep.subr.bf16.mxu0 0
  %3628 = vmatpush2.bf16.xpose.msra.mxu0 0
  %3629 = vmatprep.mubr.bf16.mxu0 0
  %3630 = vmatmul.mubr.bf16.gmra.mxu0 %v3592
  %v3631 = vpop.f32.mrf.mxu0
  %v3632 = vadd.f32 0.0, %v3631
  %v3633 = vpop.f32.mrf.mxu0
  %v3634 = vpop.f32.mrf.mxu0
  %v3635 = vpop.f32.mrf.mxu0
  %3636 = vdwg.mxu0
  %v3637 = vsel %vm275, %v2886, -inf
  %3638 = vmax.xlane.f32.xlu0 %v3637
  %v3639 = vpop.xlane.xlu0 %3638
  %v3640 = vsel %vm275, %v3076, -inf
  %3641 = vmax.xlane.f32.xlu0 %v3640
  %v3642 = vpop.xlane.xlu0 %3641
  %v3643 = vsel %vm275, %v3282, -inf
  %3644 = vmax.xlane.f32.xlu0 %v3643
  %v3645 = vpop.xlane.xlu0 %3644
  %v3646 = vsel %vm275, %v3482, -inf
  %3647 = vmax.xlane.f32.xlu0 %v3646
  %v3648 = vpop.xlane.xlu0 %3647
  %v3649 = vsel %vm275, %v2932, -inf
  %3650 = vmax.xlane.f32.xlu0 %v3649
  %v3651 = vpop.xlane.xlu0 %3650
  %v3652 = vsel %vm275, %v3128, -inf
  %3653 = vmax.xlane.f32.xlu0 %v3652
  %v3654 = vpop.xlane.xlu0 %3653
  %v3655 = vsel %vm275, %v3332, -inf
  %3656 = vmax.xlane.f32.xlu0 %v3655
  %v3657 = vpop.xlane.xlu0 %3656
  %v3658 = vsel %vm275, %v3532, -inf
  %3659 = vmax.xlane.f32.xlu0 %v3658
  %v3660 = vpop.xlane.xlu0 %3659
  %v3661 = vsel %vm275, %v2978, -inf
  %3662 = vmax.xlane.f32.xlu0 %v3661
  %v3663 = vpop.xlane.xlu0 %3662
  %v3664 = vsel %vm275, %v3180, -inf
  %3665 = vmax.xlane.f32.xlu0 %v3664
  %v3666 = vpop.xlane.xlu0 %3665
  %v3667 = vsel %vm275, %v3382, -inf
  %3668 = vmax.xlane.f32.xlu0 %v3667
  %v3669 = vpop.xlane.xlu0 %3668
  %v3670 = vsel %vm275, %v3582, -inf
  %3671 = vmax.xlane.f32.xlu0 %v3670
  %v3672 = vpop.xlane.xlu0 %3671
  %v3673 = vsel %vm275, %v3024, -inf
  %3674 = vmax.xlane.f32.xlu0 %v3673
  %v3675 = vpop.xlane.xlu0 %3674
  %v3676 = vsel %vm275, %v3232, -inf
  %3677 = vmax.xlane.f32.xlu0 %v3676
  %v3678 = vpop.xlane.xlu0 %3677
  %v3679 = vsel %vm275, %v3432, -inf
  %3680 = vmax.xlane.f32.xlu0 %v3679
  %v3681 = vpop.xlane.xlu0 %3680
  %v3682 = vsel %vm275, %v3632, -inf
  %3683 = vmax.xlane.f32.xlu0 %v3682
  %v3684 = vpop.xlane.xlu0 %3683
  %v3685 = vsub.f32 %v2886, %v3639
  %v3686 = vsub.f32 %v3076, %v3642
  %v3687 = vsub.f32 %v3282, %v3645
  %v3688 = vsub.f32 %v3482, %v3648
  %v3689 = vsub.f32 %v2932, %v3651
  %v3690 = vsub.f32 %v3128, %v3654
  %v3691 = vsub.f32 %v3332, %v3657
  %v3692 = vsub.f32 %v3532, %v3660
  %v3693 = vsub.f32 %v2978, %v3663
  %v3694 = vsub.f32 %v3180, %v3666
  %v3695 = vsub.f32 %v3382, %v3669
  %v3696 = vsub.f32 %v3582, %v3672
  %v3697 = vsub.f32 %v3024, %v3675
  %v3698 = vsub.f32 %v3232, %v3678
  %v3699 = vsub.f32 %v3432, %v3681
  %v3700 = vsub.f32 %v3632, %v3684
  %v3701 = vmul.f32 %v3685, 1.442695
  %v3702 = vpow.pop %v3701
  %v3703 = vmul.f32 %v3686, 1.442695
  %v3704 = vpow.pop %v3703
  %v3705 = vmul.f32 %v3687, 1.442695
  %v3706 = vpow.pop %v3705
  %v3707 = vmul.f32 %v3688, 1.442695
  %v3708 = vpow.pop %v3707
  %v3709 = vmul.f32 %v3689, 1.442695
  %v3710 = vpow.pop %v3709
  %v3711 = vmul.f32 %v3690, 1.442695
  %v3712 = vpow.pop %v3711
  %v3713 = vmul.f32 %v3691, 1.442695
  %v3714 = vpow.pop %v3713
  %v3715 = vmul.f32 %v3692, 1.442695
  %v3716 = vpow.pop %v3715
  %v3717 = vmul.f32 %v3693, 1.442695
  %v3718 = vpow.pop %v3717
  %v3719 = vmul.f32 %v3694, 1.442695
  %v3720 = vpow.pop %v3719
  %v3721 = vmul.f32 %v3695, 1.442695
  %v3722 = vpow.pop %v3721
  %v3723 = vmul.f32 %v3696, 1.442695
  %v3724 = vpow.pop %v3723
  %v3725 = vmul.f32 %v3697, 1.442695
  %v3726 = vpow.pop %v3725
  %v3727 = vmul.f32 %v3698, 1.442695
  %v3728 = vpow.pop %v3727
  %v3729 = vmul.f32 %v3699, 1.442695
  %v3730 = vpow.pop %v3729
  %v3731 = vmul.f32 %v3700, 1.442695
  %v3732 = vpow.pop %v3731
  %v3733 = vsel %vm275, %v3702, 0.0
  %3734 = vadd.xlane.f32.xlu0 %v3733
  %v3735 = vpop.xlane.xlu0 %3734
  %v3736 = vsel %vm275, %v3704, 0.0
  %3737 = vadd.xlane.f32.xlu0 %v3736
  %v3738 = vpop.xlane.xlu0 %3737
  %v3739 = vsel %vm275, %v3706, 0.0
  %3740 = vadd.xlane.f32.xlu0 %v3739
  %v3741 = vpop.xlane.xlu0 %3740
  %v3742 = vsel %vm275, %v3708, 0.0
  %3743 = vadd.xlane.f32.xlu0 %v3742
  %v3744 = vpop.xlane.xlu0 %3743
  %v3745 = vsel %vm275, %v3710, 0.0
  %3746 = vadd.xlane.f32.xlu0 %v3745
  %v3747 = vpop.xlane.xlu0 %3746
  %v3748 = vsel %vm275, %v3712, 0.0
  %3749 = vadd.xlane.f32.xlu0 %v3748
  %v3750 = vpop.xlane.xlu0 %3749
  %v3751 = vsel %vm275, %v3714, 0.0
  %3752 = vadd.xlane.f32.xlu0 %v3751
  %v3753 = vpop.xlane.xlu0 %3752
  %v3754 = vsel %vm275, %v3716, 0.0
  %3755 = vadd.xlane.f32.xlu0 %v3754
  %v3756 = vpop.xlane.xlu0 %3755
  %v3757 = vsel %vm275, %v3718, 0.0
  %3758 = vadd.xlane.f32.xlu0 %v3757
  %v3759 = vpop.xlane.xlu0 %3758
  %v3760 = vsel %vm275, %v3720, 0.0
  %3761 = vadd.xlane.f32.xlu0 %v3760
  %v3762 = vpop.xlane.xlu0 %3761
  %v3763 = vsel %vm275, %v3722, 0.0
  %3764 = vadd.xlane.f32.xlu0 %v3763
  %v3765 = vpop.xlane.xlu0 %3764
  %v3766 = vsel %vm275, %v3724, 0.0
  %3767 = vadd.xlane.f32.xlu0 %v3766
  %v3768 = vpop.xlane.xlu0 %3767
  %v3769 = vsel %vm275, %v3726, 0.0
  %3770 = vadd.xlane.f32.xlu0 %v3769
  %v3771 = vpop.xlane.xlu0 %3770
  %v3772 = vsel %vm275, %v3728, 0.0
  %3773 = vadd.xlane.f32.xlu0 %v3772
  %v3774 = vpop.xlane.xlu0 %3773
  %v3775 = vsel %vm275, %v3730, 0.0
  %3776 = vadd.xlane.f32.xlu0 %v3775
  %v3777 = vpop.xlane.xlu0 %3776
  %v3778 = vsel %vm275, %v3732, 0.0
  %3779 = vadd.xlane.f32.xlu0 %v3778
  %v3780 = vpop.xlane.xlu0 %3779
  %v3781 = vrcp.pop %v3735
  %v3782 = vrcp.pop %v3738
  %v3783 = vrcp.pop %v3741
  %v3784 = vrcp.pop %v3744
  %v3785 = vrcp.pop %v3747
  %v3786 = vrcp.pop %v3750
  %v3787 = vrcp.pop %v3753
  %v3788 = vrcp.pop %v3756
  %v3789 = vrcp.pop %v3759
  %v3790 = vrcp.pop %v3762
  %v3791 = vrcp.pop %v3765
  %v3792 = vrcp.pop %v3768
  %v3793 = vrcp.pop %v3771
  %v3794 = vrcp.pop %v3774
  %v3795 = vrcp.pop %v3777
  %v3796 = vrcp.pop %v3780
  %v3797 = vmul.f32 %v3702, %v3781
  %v3798 = vmul.f32 %v3704, %v3782
  %v3799 = vmul.f32 %v3706, %v3783
  %v3800 = vmul.f32 %v3708, %v3784
  %v3801 = vmul.f32 %v3710, %v3785
  %v3802 = vmul.f32 %v3712, %v3786
  %v3803 = vmul.f32 %v3714, %v3787
  %v3804 = vmul.f32 %v3716, %v3788
  %v3805 = vmul.f32 %v3718, %v3789
  %v3806 = vmul.f32 %v3720, %v3790
  %v3807 = vmul.f32 %v3722, %v3791
  %v3808 = vmul.f32 %v3724, %v3792
  %v3809 = vmul.f32 %v3726, %v3793
  %v3810 = vmul.f32 %v3728, %v3794
  %v3811 = vmul.f32 %v3730, %v3795
  %v3812 = vmul.f32 %v3732, %v3796
  %v3813 = vpack.c.bf16 %v3797, %v3797
  %v3814 = vpack.c.bf16 %v3798, %v3798
  %v3815 = vpack.c.bf16 %v3799, %v3799
  %v3816 = vpack.c.bf16 %v3800, %v3800
  %v3817 = vpack.c.bf16 %v3801, %v3801
  %v3818 = vpack.c.bf16 %v3802, %v3802
  %v3819 = vpack.c.bf16 %v3803, %v3803
  %v3820 = vpack.c.bf16 %v3804, %v3804
  %v3821 = vpack.c.bf16 %v3805, %v3805
  %v3822 = vpack.c.bf16 %v3806, %v3806
  %v3823 = vpack.c.bf16 %v3807, %v3807
  %v3824 = vpack.c.bf16 %v3808, %v3808
  %v3825 = vpack.c.bf16 %v3809, %v3809
  %v3826 = vpack.c.bf16 %v3810, %v3810
  %v3827 = vpack.c.bf16 %v3811, %v3811
  %v3828 = vpack.c.bf16 %v3812, %v3812
  %v3830 = vsel %vm275, %v3813, 0
  %v3833 = vsel %vm1263, %v2841, 0
  %3835 = vmatprep.subr.bf16.mxu0 0
  %3836 = vmatpush1.bf16.msra.mxu0 0
  %3837 = vmatprep.subr.bf16.mxu0 0
  %3838 = vmatpush1.bf16.msra.mxu0 0
  %3839 = vmatprep.subr.bf16.mxu0 0
  %3840 = vmatpush1.bf16.msra.mxu0 0
  %3841 = vmatprep.subr.bf16.mxu0 0
  %3842 = vmatpush1.bf16.msra.mxu0 0
  %3843 = vmatprep.subr.bf16.mxu0 0
  %3844 = vmatpush1.bf16.msra.mxu0 0
  %3845 = vmatprep.subr.bf16.mxu0 0
  %3846 = vmatpush1.bf16.msra.mxu0 0
  %3847 = vmatprep.subr.bf16.mxu0 0
  %3848 = vmatpush1.bf16.msra.mxu0 0
  %3849 = vmatprep.subr.bf16.mxu0 0
  %3850 = vmatpush1.bf16.msra.mxu0 %v3833
  %3851 = vmatprep.subr.bf16.mxu0 0
  %3852 = vmatpush2.bf16.msra.mxu0 0
  %3853 = vmatprep.subr.bf16.mxu0 0
  %3854 = vmatpush2.bf16.msra.mxu0 0
  %3855 = vmatprep.subr.bf16.mxu0 0
  %3856 = vmatpush2.bf16.msra.mxu0 0
  %3857 = vmatprep.subr.bf16.mxu0 0
  %3858 = vmatpush2.bf16.msra.mxu0 0
  %3859 = vmatprep.subr.bf16.mxu0 0
  %3860 = vmatpush2.bf16.msra.mxu0 0
  %3861 = vmatprep.subr.bf16.mxu0 0
  %3862 = vmatpush2.bf16.msra.mxu0 0
  %3863 = vmatprep.subr.bf16.mxu0 0
  %3864 = vmatpush2.bf16.msra.mxu0 0
  %3865 = vmatprep.subr.bf16.mxu0 0
  %3866 = vmatpush2.bf16.msra.mxu0 0
  %3867 = vmatprep.mubr.bf16.mxu0 0
  %3868 = vmatmul.mubr.bf16.gmra.mxu0 %v3830
  %v3869 = vpop.f32.mrf.mxu0
  %v3870 = vadd.f32 0.0, %v3869
  %v3871 = vpop.f32.mrf.mxu0
  %v3872 = vpop.f32.mrf.mxu0
  %v3873 = vpop.f32.mrf.mxu0
  %3874 = vdwg.mxu0
  %v3876 = vsel %vm275, %v3817, 0
  %v3879 = vsel %vm1263, %v2842, 0
  %3881 = vmatprep.subr.bf16.mxu0 0
  %3882 = vmatpush1.bf16.msra.mxu0 0
  %3883 = vmatprep.subr.bf16.mxu0 0
  %3884 = vmatpush1.bf16.msra.mxu0 0
  %3885 = vmatprep.subr.bf16.mxu0 0
  %3886 = vmatpush1.bf16.msra.mxu0 0
  %3887 = vmatprep.subr.bf16.mxu0 0
  %3888 = vmatpush1.bf16.msra.mxu0 0
  %3889 = vmatprep.subr.bf16.mxu0 0
  %3890 = vmatpush1.bf16.msra.mxu0 0
  %3891 = vmatprep.subr.bf16.mxu0 0
  %3892 = vmatpush1.bf16.msra.mxu0 0
  %3893 = vmatprep.subr.bf16.mxu0 0
  %3894 = vmatpush1.bf16.msra.mxu0 0
  %3895 = vmatprep.subr.bf16.mxu0 0
  %3896 = vmatpush1.bf16.msra.mxu0 %v3879
  %3897 = vmatprep.subr.bf16.mxu0 0
  %3898 = vmatpush2.bf16.msra.mxu0 0
  %3899 = vmatprep.subr.bf16.mxu0 0
  %3900 = vmatpush2.bf16.msra.mxu0 0
  %3901 = vmatprep.subr.bf16.mxu0 0
  %3902 = vmatpush2.bf16.msra.mxu0 0
  %3903 = vmatprep.subr.bf16.mxu0 0
  %3904 = vmatpush2.bf16.msra.mxu0 0
  %3905 = vmatprep.subr.bf16.mxu0 0
  %3906 = vmatpush2.bf16.msra.mxu0 0
  %3907 = vmatprep.subr.bf16.mxu0 0
  %3908 = vmatpush2.bf16.msra.mxu0 0
  %3909 = vmatprep.subr.bf16.mxu0 0
  %3910 = vmatpush2.bf16.msra.mxu0 0
  %3911 = vmatprep.subr.bf16.mxu0 0
  %3912 = vmatpush2.bf16.msra.mxu0 0
  %3913 = vmatprep.mubr.bf16.mxu0 0
  %3914 = vmatmul.mubr.bf16.gmra.mxu0 %v3876
  %v3915 = vpop.f32.mrf.mxu0
  %v3916 = vadd.f32 0.0, %v3915
  %v3917 = vpop.f32.mrf.mxu0
  %v3918 = vpop.f32.mrf.mxu0
  %v3919 = vpop.f32.mrf.mxu0
  %3920 = vdwg.mxu0
  %v3922 = vsel %vm275, %v3821, 0
  %v3925 = vsel %vm1263, %v2843, 0
  %3927 = vmatprep.subr.bf16.mxu0 0
  %3928 = vmatpush1.bf16.msra.mxu0 0
  %3929 = vmatprep.subr.bf16.mxu0 0
  %3930 = vmatpush1.bf16.msra.mxu0 0
  %3931 = vmatprep.subr.bf16.mxu0 0
  %3932 = vmatpush1.bf16.msra.mxu0 0
  %3933 = vmatprep.subr.bf16.mxu0 0
  %3934 = vmatpush1.bf16.msra.mxu0 0
  %3935 = vmatprep.subr.bf16.mxu0 0
  %3936 = vmatpush1.bf16.msra.mxu0 0
  %3937 = vmatprep.subr.bf16.mxu0 0
  %3938 = vmatpush1.bf16.msra.mxu0 0
  %3939 = vmatprep.subr.bf16.mxu0 0
  %3940 = vmatpush1.bf16.msra.mxu0 0
  %3941 = vmatprep.subr.bf16.mxu0 0
  %3942 = vmatpush1.bf16.msra.mxu0 %v3925
  %3943 = vmatprep.subr.bf16.mxu0 0
  %3944 = vmatpush2.bf16.msra.mxu0 0
  %3945 = vmatprep.subr.bf16.mxu0 0
  %3946 = vmatpush2.bf16.msra.mxu0 0
  %3947 = vmatprep.subr.bf16.mxu0 0
  %3948 = vmatpush2.bf16.msra.mxu0 0
  %3949 = vmatprep.subr.bf16.mxu0 0
  %3950 = vmatpush2.bf16.msra.mxu0 0
  %3951 = vmatprep.subr.bf16.mxu0 0
  %3952 = vmatpush2.bf16.msra.mxu0 0
  %3953 = vmatprep.subr.bf16.mxu0 0
  %3954 = vmatpush2.bf16.msra.mxu0 0
  %3955 = vmatprep.subr.bf16.mxu0 0
  %3956 = vmatpush2.bf16.msra.mxu0 0
  %3957 = vmatprep.subr.bf16.mxu0 0
  %3958 = vmatpush2.bf16.msra.mxu0 0
  %3959 = vmatprep.mubr.bf16.mxu0 0
  %3960 = vmatmul.mubr.bf16.gmra.mxu0 %v3922
  %v3961 = vpop.f32.mrf.mxu0
  %v3962 = vadd.f32 0.0, %v3961
  %v3963 = vpop.f32.mrf.mxu0
  %v3964 = vpop.f32.mrf.mxu0
  %v3965 = vpop.f32.mrf.mxu0
  %3966 = vdwg.mxu0
  %v3968 = vsel %vm275, %v3825, 0
  %v3971 = vsel %vm1263, %v2844, 0
  %3973 = vmatprep.subr.bf16.mxu0 0
  %3974 = vmatpush1.bf16.msra.mxu0 0
  %3975 = vmatprep.subr.bf16.mxu0 0
  %3976 = vmatpush1.bf16.msra.mxu0 0
  %3977 = vmatprep.subr.bf16.mxu0 0
  %3978 = vmatpush1.bf16.msra.mxu0 0
  %3979 = vmatprep.subr.bf16.mxu0 0
  %3980 = vmatpush1.bf16.msra.mxu0 0
  %3981 = vmatprep.subr.bf16.mxu0 0
  %3982 = vmatpush1.bf16.msra.mxu0 0
  %3983 = vmatprep.subr.bf16.mxu0 0
  %3984 = vmatpush1.bf16.msra.mxu0 0
  %3985 = vmatprep.subr.bf16.mxu0 0
  %3986 = vmatpush1.bf16.msra.mxu0 0
  %3987 = vmatprep.subr.bf16.mxu0 0
  %3988 = vmatpush1.bf16.msra.mxu0 %v3971
  %3989 = vmatprep.subr.bf16.mxu0 0
  %3990 = vmatpush2.bf16.msra.mxu0 0
  %3991 = vmatprep.subr.bf16.mxu0 0
  %3992 = vmatpush2.bf16.msra.mxu0 0
  %3993 = vmatprep.subr.bf16.mxu0 0
  %3994 = vmatpush2.bf16.msra.mxu0 0
  %3995 = vmatprep.subr.bf16.mxu0 0
  %3996 = vmatpush2.bf16.msra.mxu0 0
  %3997 = vmatprep.subr.bf16.mxu0 0
  %3998 = vmatpush2.bf16.msra.mxu0 0
  %3999 = vmatprep.subr.bf16.mxu0 0
  %4000 = vmatpush2.bf16.msra.mxu0 0
  %4001 = vmatprep.subr.bf16.mxu0 0
  %4002 = vmatpush2.bf16.msra.mxu0 0
  %4003 = vmatprep.subr.bf16.mxu0 0
  %4004 = vmatpush2.bf16.msra.mxu0 0
  %4005 = vmatprep.mubr.bf16.mxu0 0
  %4006 = vmatmul.mubr.bf16.gmra.mxu0 %v3968
  %v4007 = vpop.f32.mrf.mxu0
  %v4008 = vadd.f32 0.0, %v4007
  %v4009 = vpop.f32.mrf.mxu0
  %v4010 = vpop.f32.mrf.mxu0
  %v4011 = vpop.f32.mrf.mxu0
  %4012 = vdwg.mxu0
  %v4013 = vpack.c.bf16 %v3916, %v3870
  %v4014 = vpack.c.bf16 %v4008, %v3962
  %v4016 = vsel %vm275, %v4013, 0
  %v4019 = vsel %vm275, %v4014, 0
  %v4022 = vsel %vm1263, %v2622, 0
  %4024 = vmatprep.subr.bf16.mxu0 0
  %4025 = vmatpush1.bf16.msra.mxu0 0
  %4026 = vmatprep.subr.bf16.mxu0 0
  %4027 = vmatpush1.bf16.msra.mxu0 0
  %4028 = vmatprep.subr.bf16.mxu0 0
  %4029 = vmatpush1.bf16.msra.mxu0 0
  %4030 = vmatprep.subr.bf16.mxu0 0
  %4031 = vmatpush1.bf16.msra.mxu0 0
  %4032 = vmatprep.subr.bf16.mxu0 0
  %4033 = vmatpush1.bf16.msra.mxu0 0
  %4034 = vmatprep.subr.bf16.mxu0 0
  %4035 = vmatpush1.bf16.msra.mxu0 0
  %4036 = vmatprep.subr.bf16.mxu0 0
  %4037 = vmatpush1.bf16.msra.mxu0 0
  %4038 = vmatprep.subr.bf16.mxu0 0
  %4039 = vmatpush1.bf16.msra.mxu0 %v4022
  %4040 = vmatprep.subr.bf16.mxu0 0
  %4041 = vmatpush2.bf16.msra.mxu0 0
  %4042 = vmatprep.subr.bf16.mxu0 0
  %4043 = vmatpush2.bf16.msra.mxu0 0
  %4044 = vmatprep.subr.bf16.mxu0 0
  %4045 = vmatpush2.bf16.msra.mxu0 0
  %4046 = vmatprep.subr.bf16.mxu0 0
  %4047 = vmatpush2.bf16.msra.mxu0 0
  %4048 = vmatprep.subr.bf16.mxu0 0
  %4049 = vmatpush2.bf16.msra.mxu0 0
  %4050 = vmatprep.subr.bf16.mxu0 0
  %4051 = vmatpush2.bf16.msra.mxu0 0
  %4052 = vmatprep.subr.bf16.mxu0 0
  %4053 = vmatpush2.bf16.msra.mxu0 0
  %4054 = vmatprep.subr.bf16.mxu0 0
  %4055 = vmatpush2.bf16.msra.mxu0 0
  %4056 = vmatprep.mubr.bf16.mxu0 0
  %4057 = vmatmul.mubr.bf16.gmra.mxu0 %v4016
  %v4058 = vpop.f32.mrf.mxu0
  %v4059 = vadd.f32 0.0, %v4058
  %v4060 = vpop.f32.mrf.mxu0
  %v4061 = vpop.f32.mrf.mxu0
  %v4062 = vadd.f32 0.0, %v4061
  %v4063 = vpop.f32.mrf.mxu0
  %4064 = vmatprep.mubr.bf16.mxu0 0
  %4065 = vmatmul.mubr.bf16.gmra.mxu0 %v4019
  %v4066 = vpop.f32.mrf.mxu0
  %v4067 = vadd.f32 0.0, %v4066
  %v4068 = vpop.f32.mrf.mxu0
  %v4069 = vpop.f32.mrf.mxu0
  %v4070 = vadd.f32 0.0, %v4069
  %v4071 = vpop.f32.mrf.mxu0
  %4072 = vdwg.mxu0
  %v4073 = vlaneseq
  %v4074 = vshrl.u32 %v4073, 7
  %v4075 = vsub.s32 3, %v4074
  %v4076 = vrot.slane %v2606, %v4075
  %v4077 = vadd.f32 %v4076, %v4059
  %v4078 = vadd.f32 %v4076, %v4062
  %v4079 = vadd.f32 %v4076, %v4067
  %v4080 = vadd.f32 %v4076, %v4070
  %4082 = vrot.lane.b32.xlu0 %v2841, 120
  %v4083 = vpop.permute.xlu0 %4082
  %v4085 = vsel %vm275, %v3814, 0
  %v4088 = vsel %vm1263, %v4083, 0
  %4090 = vmatprep.subr.bf16.mxu0 0
  %4091 = vmatpush1.bf16.msra.mxu0 0
  %4092 = vmatprep.subr.bf16.mxu0 0
  %4093 = vmatpush1.bf16.msra.mxu0 0
  %4094 = vmatprep.subr.bf16.mxu0 0
  %4095 = vmatpush1.bf16.msra.mxu0 0
  %4096 = vmatprep.subr.bf16.mxu0 0
  %4097 = vmatpush1.bf16.msra.mxu0 0
  %4098 = vmatprep.subr.bf16.mxu0 0
  %4099 = vmatpush1.bf16.msra.mxu0 0
  %4100 = vmatprep.subr.bf16.mxu0 0
  %4101 = vmatpush1.bf16.msra.mxu0 0
  %4102 = vmatprep.subr.bf16.mxu0 0
  %4103 = vmatpush1.bf16.msra.mxu0 0
  %4104 = vmatprep.subr.bf16.mxu0 0
  %4105 = vmatpush1.bf16.msra.mxu0 %v4088
  %4106 = vmatprep.subr.bf16.mxu0 0
  %4107 = vmatpush2.bf16.msra.mxu0 0
  %4108 = vmatprep.subr.bf16.mxu0 0
  %4109 = vmatpush2.bf16.msra.mxu0 0
  %4110 = vmatprep.subr.bf16.mxu0 0
  %4111 = vmatpush2.bf16.msra.mxu0 0
  %4112 = vmatprep.subr.bf16.mxu0 0
  %4113 = vmatpush2.bf16.msra.mxu0 0
  %4114 = vmatprep.subr.bf16.mxu0 0
  %4115 = vmatpush2.bf16.msra.mxu0 0
  %4116 = vmatprep.subr.bf16.mxu0 0
  %4117 = vmatpush2.bf16.msra.mxu0 0
  %4118 = vmatprep.subr.bf16.mxu0 0
  %4119 = vmatpush2.bf16.msra.mxu0 0
  %4120 = vmatprep.subr.bf16.mxu0 0
  %4121 = vmatpush2.bf16.msra.mxu0 0
  %4122 = vmatprep.mubr.bf16.mxu0 0
  %4123 = vmatmul.mubr.bf16.gmra.mxu0 %v4085
  %v4124 = vpop.f32.mrf.mxu0
  %v4125 = vadd.f32 0.0, %v4124
  %v4126 = vpop.f32.mrf.mxu0
  %v4127 = vpop.f32.mrf.mxu0
  %v4128 = vpop.f32.mrf.mxu0
  %4129 = vdwg.mxu0
  %4131 = vrot.lane.b32.xlu0 %v2842, 120
  %v4132 = vpop.permute.xlu0 %4131
  %v4134 = vsel %vm275, %v3818, 0
  %v4137 = vsel %vm1263, %v4132, 0
  %4139 = vmatprep.subr.bf16.mxu0 0
  %4140 = vmatpush1.bf16.msra.mxu0 0
  %4141 = vmatprep.subr.bf16.mxu0 0
  %4142 = vmatpush1.bf16.msra.mxu0 0
  %4143 = vmatprep.subr.bf16.mxu0 0
  %4144 = vmatpush1.bf16.msra.mxu0 0
  %4145 = vmatprep.subr.bf16.mxu0 0
  %4146 = vmatpush1.bf16.msra.mxu0 0
  %4147 = vmatprep.subr.bf16.mxu0 0
  %4148 = vmatpush1.bf16.msra.mxu0 0
  %4149 = vmatprep.subr.bf16.mxu0 0
  %4150 = vmatpush1.bf16.msra.mxu0 0
  %4151 = vmatprep.subr.bf16.mxu0 0
  %4152 = vmatpush1.bf16.msra.mxu0 0
  %4153 = vmatprep.subr.bf16.mxu0 0
  %4154 = vmatpush1.bf16.msra.mxu0 %v4137
  %4155 = vmatprep.subr.bf16.mxu0 0
  %4156 = vmatpush2.bf16.msra.mxu0 0
  %4157 = vmatprep.subr.bf16.mxu0 0
  %4158 = vmatpush2.bf16.msra.mxu0 0
  %4159 = vmatprep.subr.bf16.mxu0 0
  %4160 = vmatpush2.bf16.msra.mxu0 0
  %4161 = vmatprep.subr.bf16.mxu0 0
  %4162 = vmatpush2.bf16.msra.mxu0 0
  %4163 = vmatprep.subr.bf16.mxu0 0
  %4164 = vmatpush2.bf16.msra.mxu0 0
  %4165 = vmatprep.subr.bf16.mxu0 0
  %4166 = vmatpush2.bf16.msra.mxu0 0
  %4167 = vmatprep.subr.bf16.mxu0 0
  %4168 = vmatpush2.bf16.msra.mxu0 0
  %4169 = vmatprep.subr.bf16.mxu0 0
  %4170 = vmatpush2.bf16.msra.mxu0 0
  %4171 = vmatprep.mubr.bf16.mxu0 0
  %4172 = vmatmul.mubr.bf16.gmra.mxu0 %v4134
  %v4173 = vpop.f32.mrf.mxu0
  %v4174 = vadd.f32 0.0, %v4173
  %v4175 = vpop.f32.mrf.mxu0
  %v4176 = vpop.f32.mrf.mxu0
  %v4177 = vpop.f32.mrf.mxu0
  %4178 = vdwg.mxu0
  %4180 = vrot.lane.b32.xlu0 %v2843, 120
  %v4181 = vpop.permute.xlu0 %4180
  %v4183 = vsel %vm275, %v3822, 0
  %v4186 = vsel %vm1263, %v4181, 0
  %4188 = vmatprep.subr.bf16.mxu0 0
  %4189 = vmatpush1.bf16.msra.mxu0 0
  %4190 = vmatprep.subr.bf16.mxu0 0
  %4191 = vmatpush1.bf16.msra.mxu0 0
  %4192 = vmatprep.subr.bf16.mxu0 0
  %4193 = vmatpush1.bf16.msra.mxu0 0
  %4194 = vmatprep.subr.bf16.mxu0 0
  %4195 = vmatpush1.bf16.msra.mxu0 0
  %4196 = vmatprep.subr.bf16.mxu0 0
  %4197 = vmatpush1.bf16.msra.mxu0 0
  %4198 = vmatprep.subr.bf16.mxu0 0
  %4199 = vmatpush1.bf16.msra.mxu0 0
  %4200 = vmatprep.subr.bf16.mxu0 0
  %4201 = vmatpush1.bf16.msra.mxu0 0
  %4202 = vmatprep.subr.bf16.mxu0 0
  %4203 = vmatpush1.bf16.msra.mxu0 %v4186
  %4204 = vmatprep.subr.bf16.mxu0 0
  %4205 = vmatpush2.bf16.msra.mxu0 0
  %4206 = vmatprep.subr.bf16.mxu0 0
  %4207 = vmatpush2.bf16.msra.mxu0 0
  %4208 = vmatprep.subr.bf16.mxu0 0
  %4209 = vmatpush2.bf16.msra.mxu0 0
  %4210 = vmatprep.subr.bf16.mxu0 0
  %4211 = vmatpush2.bf16.msra.mxu0 0
  %4212 = vmatprep.subr.bf16.mxu0 0
  %4213 = vmatpush2.bf16.msra.mxu0 0
  %4214 = vmatprep.subr.bf16.mxu0 0
  %4215 = vmatpush2.bf16.msra.mxu0 0
  %4216 = vmatprep.subr.bf16.mxu0 0
  %4217 = vmatpush2.bf16.msra.mxu0 0
  %4218 = vmatprep.subr.bf16.mxu0 0
  %4219 = vmatpush2.bf16.msra.mxu0 0
  %4220 = vmatprep.mubr.bf16.mxu0 0
  %4221 = vmatmul.mubr.bf16.gmra.mxu0 %v4183
  %v4222 = vpop.f32.mrf.mxu0
  %v4223 = vadd.f32 0.0, %v4222
  %v4224 = vpop.f32.mrf.mxu0
  %v4225 = vpop.f32.mrf.mxu0
  %v4226 = vpop.f32.mrf.mxu0
  %4227 = vdwg.mxu0
  %4229 = vrot.lane.b32.xlu0 %v2844, 120
  %v4230 = vpop.permute.xlu0 %4229
  %v4232 = vsel %vm275, %v3826, 0
  %v4235 = vsel %vm1263, %v4230, 0
  %4237 = vmatprep.subr.bf16.mxu0 0
  %4238 = vmatpush1.bf16.msra.mxu0 0
  %4239 = vmatprep.subr.bf16.mxu0 0
  %4240 = vmatpush1.bf16.msra.mxu0 0
  %4241 = vmatprep.subr.bf16.mxu0 0
  %4242 = vmatpush1.bf16.msra.mxu0 0
  %4243 = vmatprep.subr.bf16.mxu0 0
  %4244 = vmatpush1.bf16.msra.mxu0 0
  %4245 = vmatprep.subr.bf16.mxu0 0
  %4246 = vmatpush1.bf16.msra.mxu0 0
  %4247 = vmatprep.subr.bf16.mxu0 0
  %4248 = vmatpush1.bf16.msra.mxu0 0
  %4249 = vmatprep.subr.bf16.mxu0 0
  %4250 = vmatpush1.bf16.msra.mxu0 0
  %4251 = vmatprep.subr.bf16.mxu0 0
  %4252 = vmatpush1.bf16.msra.mxu0 %v4235
  %4253 = vmatprep.subr.bf16.mxu0 0
  %4254 = vmatpush2.bf16.msra.mxu0 0
  %4255 = vmatprep.subr.bf16.mxu0 0
  %4256 = vmatpush2.bf16.msra.mxu0 0
  %4257 = vmatprep.subr.bf16.mxu0 0
  %4258 = vmatpush2.bf16.msra.mxu0 0
  %4259 = vmatprep.subr.bf16.mxu0 0
  %4260 = vmatpush2.bf16.msra.mxu0 0
  %4261 = vmatprep.subr.bf16.mxu0 0
  %4262 = vmatpush2.bf16.msra.mxu0 0
  %4263 = vmatprep.subr.bf16.mxu0 0
  %4264 = vmatpush2.bf16.msra.mxu0 0
  %4265 = vmatprep.subr.bf16.mxu0 0
  %4266 = vmatpush2.bf16.msra.mxu0 0
  %4267 = vmatprep.subr.bf16.mxu0 0
  %4268 = vmatpush2.bf16.msra.mxu0 0
  %4269 = vmatprep.mubr.bf16.mxu0 0
  %4270 = vmatmul.mubr.bf16.gmra.mxu0 %v4232
  %v4271 = vpop.f32.mrf.mxu0
  %v4272 = vadd.f32 0.0, %v4271
  %v4273 = vpop.f32.mrf.mxu0
  %v4274 = vpop.f32.mrf.mxu0
  %v4275 = vpop.f32.mrf.mxu0
  %4276 = vdwg.mxu0
  %v4277 = vpack.c.bf16 %v4174, %v4125
  %v4278 = vpack.c.bf16 %v4272, %v4223
  %v4280 = vsel %vm275, %v4277, 0
  %v4283 = vsel %vm275, %v4278, 0
  %v4286 = vsel %vm1263, %v2623, 0
  %4288 = vmatprep.subr.bf16.mxu0 0
  %4289 = vmatpush1.bf16.msra.mxu0 0
  %4290 = vmatprep.subr.bf16.mxu0 0
  %4291 = vmatpush1.bf16.msra.mxu0 0
  %4292 = vmatprep.subr.bf16.mxu0 0
  %4293 = vmatpush1.bf16.msra.mxu0 0
  %4294 = vmatprep.subr.bf16.mxu0 0
  %4295 = vmatpush1.bf16.msra.mxu0 0
  %4296 = vmatprep.subr.bf16.mxu0 0
  %4297 = vmatpush1.bf16.msra.mxu0 0
  %4298 = vmatprep.subr.bf16.mxu0 0
  %4299 = vmatpush1.bf16.msra.mxu0 0
  %4300 = vmatprep.subr.bf16.mxu0 0
  %4301 = vmatpush1.bf16.msra.mxu0 0
  %4302 = vmatprep.subr.bf16.mxu0 0
  %4303 = vmatpush1.bf16.msra.mxu0 %v4286
  %4304 = vmatprep.subr.bf16.mxu0 0
  %4305 = vmatpush2.bf16.msra.mxu0 0
  %4306 = vmatprep.subr.bf16.mxu0 0
  %4307 = vmatpush2.bf16.msra.mxu0 0
  %4308 = vmatprep.subr.bf16.mxu0 0
  %4309 = vmatpush2.bf16.msra.mxu0 0
  %4310 = vmatprep.subr.bf16.mxu0 0
  %4311 = vmatpush2.bf16.msra.mxu0 0
  %4312 = vmatprep.subr.bf16.mxu0 0
  %4313 = vmatpush2.bf16.msra.mxu0 0
  %4314 = vmatprep.subr.bf16.mxu0 0
  %4315 = vmatpush2.bf16.msra.mxu0 0
  %4316 = vmatprep.subr.bf16.mxu0 0
  %4317 = vmatpush2.bf16.msra.mxu0 0
  %4318 = vmatprep.subr.bf16.mxu0 0
  %4319 = vmatpush2.bf16.msra.mxu0 0
  %4320 = vmatprep.mubr.bf16.mxu0 0
  %4321 = vmatmul.mubr.bf16.gmra.mxu0 %v4280
  %v4322 = vpop.f32.mrf.mxu0
  %v4323 = vadd.f32 0.0, %v4322
  %v4324 = vpop.f32.mrf.mxu0
  %v4325 = vpop.f32.mrf.mxu0
  %v4326 = vadd.f32 0.0, %v4325
  %v4327 = vpop.f32.mrf.mxu0
  %4328 = vmatprep.mubr.bf16.mxu0 0
  %4329 = vmatmul.mubr.bf16.gmra.mxu0 %v4283
  %v4330 = vpop.f32.mrf.mxu0
  %v4331 = vadd.f32 0.0, %v4330
  %v4332 = vpop.f32.mrf.mxu0
  %v4333 = vpop.f32.mrf.mxu0
  %v4334 = vadd.f32 0.0, %v4333
  %v4335 = vpop.f32.mrf.mxu0
  %4336 = vdwg.mxu0
  %v4337 = vadd.f32 %v4077, %v4323
  %v4338 = vadd.f32 %v4078, %v4326
  %v4339 = vadd.f32 %v4079, %v4331
  %v4340 = vadd.f32 %v4080, %v4334
  %4341 = vrot.lane.b32.xlu0 %v2841, 112
  %v4342 = vpop.permute.xlu0 %4341
  %v4344 = vsel %vm275, %v3815, 0
  %v4347 = vsel %vm1263, %v4342, 0
  %4349 = vmatprep.subr.bf16.mxu0 0
  %4350 = vmatpush1.bf16.msra.mxu0 0
  %4351 = vmatprep.subr.bf16.mxu0 0
  %4352 = vmatpush1.bf16.msra.mxu0 0
  %4353 = vmatprep.subr.bf16.mxu0 0
  %4354 = vmatpush1.bf16.msra.mxu0 0
  %4355 = vmatprep.subr.bf16.mxu0 0
  %4356 = vmatpush1.bf16.msra.mxu0 0
  %4357 = vmatprep.subr.bf16.mxu0 0
  %4358 = vmatpush1.bf16.msra.mxu0 0
  %4359 = vmatprep.subr.bf16.mxu0 0
  %4360 = vmatpush1.bf16.msra.mxu0 0
  %4361 = vmatprep.subr.bf16.mxu0 0
  %4362 = vmatpush1.bf16.msra.mxu0 0
  %4363 = vmatprep.subr.bf16.mxu0 0
  %4364 = vmatpush1.bf16.msra.mxu0 %v4347
  %4365 = vmatprep.subr.bf16.mxu0 0
  %4366 = vmatpush2.bf16.msra.mxu0 0
  %4367 = vmatprep.subr.bf16.mxu0 0
  %4368 = vmatpush2.bf16.msra.mxu0 0
  %4369 = vmatprep.subr.bf16.mxu0 0
  %4370 = vmatpush2.bf16.msra.mxu0 0
  %4371 = vmatprep.subr.bf16.mxu0 0
  %4372 = vmatpush2.bf16.msra.mxu0 0
  %4373 = vmatprep.subr.bf16.mxu0 0
  %4374 = vmatpush2.bf16.msra.mxu0 0
  %4375 = vmatprep.subr.bf16.mxu0 0
  %4376 = vmatpush2.bf16.msra.mxu0 0
  %4377 = vmatprep.subr.bf16.mxu0 0
  %4378 = vmatpush2.bf16.msra.mxu0 0
  %4379 = vmatprep.subr.bf16.mxu0 0
  %4380 = vmatpush2.bf16.msra.mxu0 0
  %4381 = vmatprep.mubr.bf16.mxu0 0
  %4382 = vmatmul.mubr.bf16.gmra.mxu0 %v4344
  %v4383 = vpop.f32.mrf.mxu0
  %v4384 = vadd.f32 0.0, %v4383
  %v4385 = vpop.f32.mrf.mxu0
  %v4386 = vpop.f32.mrf.mxu0
  %v4387 = vpop.f32.mrf.mxu0
  %4388 = vdwg.mxu0
  %4389 = vrot.lane.b32.xlu0 %v2842, 112
  %v4390 = vpop.permute.xlu0 %4389
  %v4392 = vsel %vm275, %v3819, 0
  %v4395 = vsel %vm1263, %v4390, 0
  %4397 = vmatprep.subr.bf16.mxu0 0
  %4398 = vmatpush1.bf16.msra.mxu0 0
  %4399 = vmatprep.subr.bf16.mxu0 0
  %4400 = vmatpush1.bf16.msra.mxu0 0
  %4401 = vmatprep.subr.bf16.mxu0 0
  %4402 = vmatpush1.bf16.msra.mxu0 0
  %4403 = vmatprep.subr.bf16.mxu0 0
  %4404 = vmatpush1.bf16.msra.mxu0 0
  %4405 = vmatprep.subr.bf16.mxu0 0
  %4406 = vmatpush1.bf16.msra.mxu0 0
  %4407 = vmatprep.subr.bf16.mxu0 0
  %4408 = vmatpush1.bf16.msra.mxu0 0
  %4409 = vmatprep.subr.bf16.mxu0 0
  %4410 = vmatpush1.bf16.msra.mxu0 0
  %4411 = vmatprep.subr.bf16.mxu0 0
  %4412 = vmatpush1.bf16.msra.mxu0 %v4395
  %4413 = vmatprep.subr.bf16.mxu0 0
  %4414 = vmatpush2.bf16.msra.mxu0 0
  %4415 = vmatprep.subr.bf16.mxu0 0
  %4416 = vmatpush2.bf16.msra.mxu0 0
  %4417 = vmatprep.subr.bf16.mxu0 0
  %4418 = vmatpush2.bf16.msra.mxu0 0
  %4419 = vmatprep.subr.bf16.mxu0 0
  %4420 = vmatpush2.bf16.msra.mxu0 0
  %4421 = vmatprep.subr.bf16.mxu0 0
  %4422 = vmatpush2.bf16.msra.mxu0 0
  %4423 = vmatprep.subr.bf16.mxu0 0
  %4424 = vmatpush2.bf16.msra.mxu0 0
  %4425 = vmatprep.subr.bf16.mxu0 0
  %4426 = vmatpush2.bf16.msra.mxu0 0
  %4427 = vmatprep.subr.bf16.mxu0 0
  %4428 = vmatpush2.bf16.msra.mxu0 0
  %4429 = vmatprep.mubr.bf16.mxu0 0
  %4430 = vmatmul.mubr.bf16.gmra.mxu0 %v4392
  %v4431 = vpop.f32.mrf.mxu0
  %v4432 = vadd.f32 0.0, %v4431
  %v4433 = vpop.f32.mrf.mxu0
  %v4434 = vpop.f32.mrf.mxu0
  %v4435 = vpop.f32.mrf.mxu0
  %4436 = vdwg.mxu0
  %4437 = vrot.lane.b32.xlu0 %v2843, 112
  %v4438 = vpop.permute.xlu0 %4437
  %v4440 = vsel %vm275, %v3823, 0
  %v4443 = vsel %vm1263, %v4438, 0
  %4445 = vmatprep.subr.bf16.mxu0 0
  %4446 = vmatpush1.bf16.msra.mxu0 0
  %4447 = vmatprep.subr.bf16.mxu0 0
  %4448 = vmatpush1.bf16.msra.mxu0 0
  %4449 = vmatprep.subr.bf16.mxu0 0
  %4450 = vmatpush1.bf16.msra.mxu0 0
  %4451 = vmatprep.subr.bf16.mxu0 0
  %4452 = vmatpush1.bf16.msra.mxu0 0
  %4453 = vmatprep.subr.bf16.mxu0 0
  %4454 = vmatpush1.bf16.msra.mxu0 0
  %4455 = vmatprep.subr.bf16.mxu0 0
  %4456 = vmatpush1.bf16.msra.mxu0 0
  %4457 = vmatprep.subr.bf16.mxu0 0
  %4458 = vmatpush1.bf16.msra.mxu0 0
  %4459 = vmatprep.subr.bf16.mxu0 0
  %4460 = vmatpush1.bf16.msra.mxu0 %v4443
  %4461 = vmatprep.subr.bf16.mxu0 0
  %4462 = vmatpush2.bf16.msra.mxu0 0
  %4463 = vmatprep.subr.bf16.mxu0 0
  %4464 = vmatpush2.bf16.msra.mxu0 0
  %4465 = vmatprep.subr.bf16.mxu0 0
  %4466 = vmatpush2.bf16.msra.mxu0 0
  %4467 = vmatprep.subr.bf16.mxu0 0
  %4468 = vmatpush2.bf16.msra.mxu0 0
  %4469 = vmatprep.subr.bf16.mxu0 0
  %4470 = vmatpush2.bf16.msra.mxu0 0
  %4471 = vmatprep.subr.bf16.mxu0 0
  %4472 = vmatpush2.bf16.msra.mxu0 0
  %4473 = vmatprep.subr.bf16.mxu0 0
  %4474 = vmatpush2.bf16.msra.mxu0 0
  %4475 = vmatprep.subr.bf16.mxu0 0
  %4476 = vmatpush2.bf16.msra.mxu0 0
  %4477 = vmatprep.mubr.bf16.mxu0 0
  %4478 = vmatmul.mubr.bf16.gmra.mxu0 %v4440
  %v4479 = vpop.f32.mrf.mxu0
  %v4480 = vadd.f32 0.0, %v4479
  %v4481 = vpop.f32.mrf.mxu0
  %v4482 = vpop.f32.mrf.mxu0
  %v4483 = vpop.f32.mrf.mxu0
  %4484 = vdwg.mxu0
  %4485 = vrot.lane.b32.xlu0 %v2844, 112
  %v4486 = vpop.permute.xlu0 %4485
  %v4488 = vsel %vm275, %v3827, 0
  %v4491 = vsel %vm1263, %v4486, 0
  %4493 = vmatprep.subr.bf16.mxu0 0
  %4494 = vmatpush1.bf16.msra.mxu0 0
  %4495 = vmatprep.subr.bf16.mxu0 0
  %4496 = vmatpush1.bf16.msra.mxu0 0
  %4497 = vmatprep.subr.bf16.mxu0 0
  %4498 = vmatpush1.bf16.msra.mxu0 0
  %4499 = vmatprep.subr.bf16.mxu0 0
  %4500 = vmatpush1.bf16.msra.mxu0 0
  %4501 = vmatprep.subr.bf16.mxu0 0
  %4502 = vmatpush1.bf16.msra.mxu0 0
  %4503 = vmatprep.subr.bf16.mxu0 0
  %4504 = vmatpush1.bf16.msra.mxu0 0
  %4505 = vmatprep.subr.bf16.mxu0 0
  %4506 = vmatpush1.bf16.msra.mxu0 0
  %4507 = vmatprep.subr.bf16.mxu0 0
  %4508 = vmatpush1.bf16.msra.mxu0 %v4491
  %4509 = vmatprep.subr.bf16.mxu0 0
  %4510 = vmatpush2.bf16.msra.mxu0 0
  %4511 = vmatprep.subr.bf16.mxu0 0
  %4512 = vmatpush2.bf16.msra.mxu0 0
  %4513 = vmatprep.subr.bf16.mxu0 0
  %4514 = vmatpush2.bf16.msra.mxu0 0
  %4515 = vmatprep.subr.bf16.mxu0 0
  %4516 = vmatpush2.bf16.msra.mxu0 0
  %4517 = vmatprep.subr.bf16.mxu0 0
  %4518 = vmatpush2.bf16.msra.mxu0 0
  %4519 = vmatprep.subr.bf16.mxu0 0
  %4520 = vmatpush2.bf16.msra.mxu0 0
  %4521 = vmatprep.subr.bf16.mxu0 0
  %4522 = vmatpush2.bf16.msra.mxu0 0
  %4523 = vmatprep.subr.bf16.mxu0 0
  %4524 = vmatpush2.bf16.msra.mxu0 0
  %4525 = vmatprep.mubr.bf16.mxu0 0
  %4526 = vmatmul.mubr.bf16.gmra.mxu0 %v4488
  %v4527 = vpop.f32.mrf.mxu0
  %v4528 = vadd.f32 0.0, %v4527
  %v4529 = vpop.f32.mrf.mxu0
  %v4530 = vpop.f32.mrf.mxu0
  %v4531 = vpop.f32.mrf.mxu0
  %4532 = vdwg.mxu0
  %v4533 = vpack.c.bf16 %v4432, %v4384
  %v4534 = vpack.c.bf16 %v4528, %v4480
  %v4536 = vsel %vm275, %v4533, 0
  %v4539 = vsel %vm275, %v4534, 0
  %v4542 = vsel %vm1263, %v2624, 0
  %4544 = vmatprep.subr.bf16.mxu0 0
  %4545 = vmatpush1.bf16.msra.mxu0 0
  %4546 = vmatprep.subr.bf16.mxu0 0
  %4547 = vmatpush1.bf16.msra.mxu0 0
  %4548 = vmatprep.subr.bf16.mxu0 0
  %4549 = vmatpush1.bf16.msra.mxu0 0
  %4550 = vmatprep.subr.bf16.mxu0 0
  %4551 = vmatpush1.bf16.msra.mxu0 0
  %4552 = vmatprep.subr.bf16.mxu0 0
  %4553 = vmatpush1.bf16.msra.mxu0 0
  %4554 = vmatprep.subr.bf16.mxu0 0
  %4555 = vmatpush1.bf16.msra.mxu0 0
  %4556 = vmatprep.subr.bf16.mxu0 0
  %4557 = vmatpush1.bf16.msra.mxu0 0
  %4558 = vmatprep.subr.bf16.mxu0 0
  %4559 = vmatpush1.bf16.msra.mxu0 %v4542
  %4560 = vmatprep.subr.bf16.mxu0 0
  %4561 = vmatpush2.bf16.msra.mxu0 0
  %4562 = vmatprep.subr.bf16.mxu0 0
  %4563 = vmatpush2.bf16.msra.mxu0 0
  %4564 = vmatprep.subr.bf16.mxu0 0
  %4565 = vmatpush2.bf16.msra.mxu0 0
  %4566 = vmatprep.subr.bf16.mxu0 0
  %4567 = vmatpush2.bf16.msra.mxu0 0
  %4568 = vmatprep.subr.bf16.mxu0 0
  %4569 = vmatpush2.bf16.msra.mxu0 0
  %4570 = vmatprep.subr.bf16.mxu0 0
  %4571 = vmatpush2.bf16.msra.mxu0 0
  %4572 = vmatprep.subr.bf16.mxu0 0
  %4573 = vmatpush2.bf16.msra.mxu0 0
  %4574 = vmatprep.subr.bf16.mxu0 0
  %4575 = vmatpush2.bf16.msra.mxu0 0
  %4576 = vmatprep.mubr.bf16.mxu0 0
  %4577 = vmatmul.mubr.bf16.gmra.mxu0 %v4536
  %v4578 = vpop.f32.mrf.mxu0
  %v4579 = vadd.f32 0.0, %v4578
  %v4580 = vpop.f32.mrf.mxu0
  %v4581 = vpop.f32.mrf.mxu0
  %v4582 = vadd.f32 0.0, %v4581
  %v4583 = vpop.f32.mrf.mxu0
  %4584 = vmatprep.mubr.bf16.mxu0 0
  %4585 = vmatmul.mubr.bf16.gmra.mxu0 %v4539
  %v4586 = vpop.f32.mrf.mxu0
  %v4587 = vadd.f32 0.0, %v4586
  %v4588 = vpop.f32.mrf.mxu0
  %v4589 = vpop.f32.mrf.mxu0
  %v4590 = vadd.f32 0.0, %v4589
  %v4591 = vpop.f32.mrf.mxu0
  %4592 = vdwg.mxu0
  %v4593 = vadd.f32 %v4337, %v4579
  %v4594 = vadd.f32 %v4338, %v4582
  %v4595 = vadd.f32 %v4339, %v4587
  %v4596 = vadd.f32 %v4340, %v4590
  %4597 = vrot.lane.b32.xlu0 %v2841, 104
  %v4598 = vpop.permute.xlu0 %4597
  %v4600 = vsel %vm275, %v3816, 0
  %v4603 = vsel %vm1263, %v4598, 0
  %4605 = vmatprep.subr.bf16.mxu0 0
  %4606 = vmatpush1.bf16.msra.mxu0 0
  %4607 = vmatprep.subr.bf16.mxu0 0
  %4608 = vmatpush1.bf16.msra.mxu0 0
  %4609 = vmatprep.subr.bf16.mxu0 0
  %4610 = vmatpush1.bf16.msra.mxu0 0
  %4611 = vmatprep.subr.bf16.mxu0 0
  %4612 = vmatpush1.bf16.msra.mxu0 0
  %4613 = vmatprep.subr.bf16.mxu0 0
  %4614 = vmatpush1.bf16.msra.mxu0 0
  %4615 = vmatprep.subr.bf16.mxu0 0
  %4616 = vmatpush1.bf16.msra.mxu0 0
  %4617 = vmatprep.subr.bf16.mxu0 0
  %4618 = vmatpush1.bf16.msra.mxu0 0
  %4619 = vmatprep.subr.bf16.mxu0 0
  %4620 = vmatpush1.bf16.msra.mxu0 %v4603
  %4621 = vmatprep.subr.bf16.mxu0 0
  %4622 = vmatpush2.bf16.msra.mxu0 0
  %4623 = vmatprep.subr.bf16.mxu0 0
  %4624 = vmatpush2.bf16.msra.mxu0 0
  %4625 = vmatprep.subr.bf16.mxu0 0
  %4626 = vmatpush2.bf16.msra.mxu0 0
  %4627 = vmatprep.subr.bf16.mxu0 0
  %4628 = vmatpush2.bf16.msra.mxu0 0
  %4629 = vmatprep.subr.bf16.mxu0 0
  %4630 = vmatpush2.bf16.msra.mxu0 0
  %4631 = vmatprep.subr.bf16.mxu0 0
  %4632 = vmatpush2.bf16.msra.mxu0 0
  %4633 = vmatprep.subr.bf16.mxu0 0
  %4634 = vmatpush2.bf16.msra.mxu0 0
  %4635 = vmatprep.subr.bf16.mxu0 0
  %4636 = vmatpush2.bf16.msra.mxu0 0
  %4637 = vmatprep.mubr.bf16.mxu0 0
  %4638 = vmatmul.mubr.bf16.gmra.mxu0 %v4600
  %v4639 = vpop.f32.mrf.mxu0
  %v4640 = vadd.f32 0.0, %v4639
  %v4641 = vpop.f32.mrf.mxu0
  %v4642 = vpop.f32.mrf.mxu0
  %v4643 = vpop.f32.mrf.mxu0
  %4644 = vdwg.mxu0
  %4645 = vrot.lane.b32.xlu0 %v2842, 104
  %v4646 = vpop.permute.xlu0 %4645
  %v4648 = vsel %vm275, %v3820, 0
  %v4651 = vsel %vm1263, %v4646, 0
  %4653 = vmatprep.subr.bf16.mxu0 0
  %4654 = vmatpush1.bf16.msra.mxu0 0
  %4655 = vmatprep.subr.bf16.mxu0 0
  %4656 = vmatpush1.bf16.msra.mxu0 0
  %4657 = vmatprep.subr.bf16.mxu0 0
  %4658 = vmatpush1.bf16.msra.mxu0 0
  %4659 = vmatprep.subr.bf16.mxu0 0
  %4660 = vmatpush1.bf16.msra.mxu0 0
  %4661 = vmatprep.subr.bf16.mxu0 0
  %4662 = vmatpush1.bf16.msra.mxu0 0
  %4663 = vmatprep.subr.bf16.mxu0 0
  %4664 = vmatpush1.bf16.msra.mxu0 0
  %4665 = vmatprep.subr.bf16.mxu0 0
  %4666 = vmatpush1.bf16.msra.mxu0 0
  %4667 = vmatprep.subr.bf16.mxu0 0
  %4668 = vmatpush1.bf16.msra.mxu0 %v4651
  %4669 = vmatprep.subr.bf16.mxu0 0
  %4670 = vmatpush2.bf16.msra.mxu0 0
  %4671 = vmatprep.subr.bf16.mxu0 0
  %4672 = vmatpush2.bf16.msra.mxu0 0
  %4673 = vmatprep.subr.bf16.mxu0 0
  %4674 = vmatpush2.bf16.msra.mxu0 0
  %4675 = vmatprep.subr.bf16.mxu0 0
  %4676 = vmatpush2.bf16.msra.mxu0 0
  %4677 = vmatprep.subr.bf16.mxu0 0
  %4678 = vmatpush2.bf16.msra.mxu0 0
  %4679 = vmatprep.subr.bf16.mxu0 0
  %4680 = vmatpush2.bf16.msra.mxu0 0
  %4681 = vmatprep.subr.bf16.mxu0 0
  %4682 = vmatpush2.bf16.msra.mxu0 0
  %4683 = vmatprep.subr.bf16.mxu0 0
  %4684 = vmatpush2.bf16.msra.mxu0 0
  %4685 = vmatprep.mubr.bf16.mxu0 0
  %4686 = vmatmul.mubr.bf16.gmra.mxu0 %v4648
  %v4687 = vpop.f32.mrf.mxu0
  %v4688 = vadd.f32 0.0, %v4687
  %v4689 = vpop.f32.mrf.mxu0
  %v4690 = vpop.f32.mrf.mxu0
  %v4691 = vpop.f32.mrf.mxu0
  %4692 = vdwg.mxu0
  %4693 = vrot.lane.b32.xlu0 %v2843, 104
  %v4694 = vpop.permute.xlu0 %4693
  %v4696 = vsel %vm275, %v3824, 0
  %v4699 = vsel %vm1263, %v4694, 0
  %4701 = vmatprep.subr.bf16.mxu0 0
  %4702 = vmatpush1.bf16.msra.mxu0 0
  %4703 = vmatprep.subr.bf16.mxu0 0
  %4704 = vmatpush1.bf16.msra.mxu0 0
  %4705 = vmatprep.subr.bf16.mxu0 0
  %4706 = vmatpush1.bf16.msra.mxu0 0
  %4707 = vmatprep.subr.bf16.mxu0 0
  %4708 = vmatpush1.bf16.msra.mxu0 0
  %4709 = vmatprep.subr.bf16.mxu0 0
  %4710 = vmatpush1.bf16.msra.mxu0 0
  %4711 = vmatprep.subr.bf16.mxu0 0
  %4712 = vmatpush1.bf16.msra.mxu0 0
  %4713 = vmatprep.subr.bf16.mxu0 0
  %4714 = vmatpush1.bf16.msra.mxu0 0
  %4715 = vmatprep.subr.bf16.mxu0 0
  %4716 = vmatpush1.bf16.msra.mxu0 %v4699
  %4717 = vmatprep.subr.bf16.mxu0 0
  %4718 = vmatpush2.bf16.msra.mxu0 0
  %4719 = vmatprep.subr.bf16.mxu0 0
  %4720 = vmatpush2.bf16.msra.mxu0 0
  %4721 = vmatprep.subr.bf16.mxu0 0
  %4722 = vmatpush2.bf16.msra.mxu0 0
  %4723 = vmatprep.subr.bf16.mxu0 0
  %4724 = vmatpush2.bf16.msra.mxu0 0
  %4725 = vmatprep.subr.bf16.mxu0 0
  %4726 = vmatpush2.bf16.msra.mxu0 0
  %4727 = vmatprep.subr.bf16.mxu0 0
  %4728 = vmatpush2.bf16.msra.mxu0 0
  %4729 = vmatprep.subr.bf16.mxu0 0
  %4730 = vmatpush2.bf16.msra.mxu0 0
  %4731 = vmatprep.subr.bf16.mxu0 0
  %4732 = vmatpush2.bf16.msra.mxu0 0
  %4733 = vmatprep.mubr.bf16.mxu0 0
  %4734 = vmatmul.mubr.bf16.gmra.mxu0 %v4696
  %v4735 = vpop.f32.mrf.mxu0
  %v4736 = vadd.f32 0.0, %v4735
  %v4737 = vpop.f32.mrf.mxu0
  %v4738 = vpop.f32.mrf.mxu0
  %v4739 = vpop.f32.mrf.mxu0
  %4740 = vdwg.mxu0
  %4741 = vrot.lane.b32.xlu0 %v2844, 104
  %v4742 = vpop.permute.xlu0 %4741
  %v4744 = vsel %vm275, %v3828, 0
  %v4747 = vsel %vm1263, %v4742, 0
  %4749 = vmatprep.subr.bf16.mxu0 0
  %4750 = vmatpush1.bf16.msra.mxu0 0
  %4751 = vmatprep.subr.bf16.mxu0 0
  %4752 = vmatpush1.bf16.msra.mxu0 0
  %4753 = vmatprep.subr.bf16.mxu0 0
  %4754 = vmatpush1.bf16.msra.mxu0 0
  %4755 = vmatprep.subr.bf16.mxu0 0
  %4756 = vmatpush1.bf16.msra.mxu0 0
  %4757 = vmatprep.subr.bf16.mxu0 0
  %4758 = vmatpush1.bf16.msra.mxu0 0
  %4759 = vmatprep.subr.bf16.mxu0 0
  %4760 = vmatpush1.bf16.msra.mxu0 0
  %4761 = vmatprep.subr.bf16.mxu0 0
  %4762 = vmatpush1.bf16.msra.mxu0 0
  %4763 = vmatprep.subr.bf16.mxu0 0
  %4764 = vmatpush1.bf16.msra.mxu0 %v4747
  %4765 = vmatprep.subr.bf16.mxu0 0
  %4766 = vmatpush2.bf16.msra.mxu0 0
  %4767 = vmatprep.subr.bf16.mxu0 0
  %4768 = vmatpush2.bf16.msra.mxu0 0
  %4769 = vmatprep.subr.bf16.mxu0 0
  %4770 = vmatpush2.bf16.msra.mxu0 0
  %4771 = vmatprep.subr.bf16.mxu0 0
  %4772 = vmatpush2.bf16.msra.mxu0 0
  %4773 = vmatprep.subr.bf16.mxu0 0
  %4774 = vmatpush2.bf16.msra.mxu0 0
  %4775 = vmatprep.subr.bf16.mxu0 0
  %4776 = vmatpush2.bf16.msra.mxu0 0
  %4777 = vmatprep.subr.bf16.mxu0 0
  %4778 = vmatpush2.bf16.msra.mxu0 0
  %4779 = vmatprep.subr.bf16.mxu0 0
  %4780 = vmatpush2.bf16.msra.mxu0 0
  %4781 = vmatprep.mubr.bf16.mxu0 0
  %4782 = vmatmul.mubr.bf16.gmra.mxu0 %v4744
  %v4783 = vpop.f32.mrf.mxu0
  %v4784 = vadd.f32 0.0, %v4783
  %v4785 = vpop.f32.mrf.mxu0
  %v4786 = vpop.f32.mrf.mxu0
  %v4787 = vpop.f32.mrf.mxu0
  %4788 = vdwg.mxu0
  %v4789 = vpack.c.bf16 %v4688, %v4640
  %v4790 = vpack.c.bf16 %v4784, %v4736
  %v4792 = vsel %vm275, %v4789, 0
  %v4795 = vsel %vm275, %v4790, 0
  %v4798 = vsel %vm1263, %v2625, 0
  %4800 = vmatprep.subr.bf16.mxu0 0
  %4801 = vmatpush1.bf16.msra.mxu0 0
  %4802 = vmatprep.subr.bf16.mxu0 0
  %4803 = vmatpush1.bf16.msra.mxu0 0
  %4804 = vmatprep.subr.bf16.mxu0 0
  %4805 = vmatpush1.bf16.msra.mxu0 0
  %4806 = vmatprep.subr.bf16.mxu0 0
  %4807 = vmatpush1.bf16.msra.mxu0 0
  %4808 = vmatprep.subr.bf16.mxu0 0
  %4809 = vmatpush1.bf16.msra.mxu0 0
  %4810 = vmatprep.subr.bf16.mxu0 0
  %4811 = vmatpush1.bf16.msra.mxu0 0
  %4812 = vmatprep.subr.bf16.mxu0 0
  %4813 = vmatpush1.bf16.msra.mxu0 0
  %4814 = vmatprep.subr.bf16.mxu0 0
  %4815 = vmatpush1.bf16.msra.mxu0 %v4798
  %4816 = vmatprep.subr.bf16.mxu0 0
  %4817 = vmatpush2.bf16.msra.mxu0 0
  %4818 = vmatprep.subr.bf16.mxu0 0
  %4819 = vmatpush2.bf16.msra.mxu0 0
  %4820 = vmatprep.subr.bf16.mxu0 0
  %4821 = vmatpush2.bf16.msra.mxu0 0
  %4822 = vmatprep.subr.bf16.mxu0 0
  %4823 = vmatpush2.bf16.msra.mxu0 0
  %4824 = vmatprep.subr.bf16.mxu0 0
  %4825 = vmatpush2.bf16.msra.mxu0 0
  %4826 = vmatprep.subr.bf16.mxu0 0
  %4827 = vmatpush2.bf16.msra.mxu0 0
  %4828 = vmatprep.subr.bf16.mxu0 0
  %4829 = vmatpush2.bf16.msra.mxu0 0
  %4830 = vmatprep.subr.bf16.mxu0 0
  %4831 = vmatpush2.bf16.msra.mxu0 0
  %4832 = vmatprep.mubr.bf16.mxu0 0
  %4833 = vmatmul.mubr.bf16.gmra.mxu0 %v4792
  %v4834 = vpop.f32.mrf.mxu0
  %v4835 = vadd.f32 0.0, %v4834
  %v4836 = vpop.f32.mrf.mxu0
  %v4837 = vpop.f32.mrf.mxu0
  %v4838 = vadd.f32 0.0, %v4837
  %v4839 = vpop.f32.mrf.mxu0
  %4840 = vmatprep.mubr.bf16.mxu0 0
  %4841 = vmatmul.mubr.bf16.gmra.mxu0 %v4795
  %v4842 = vpop.f32.mrf.mxu0
  %v4843 = vadd.f32 0.0, %v4842
  %v4844 = vpop.f32.mrf.mxu0
  %v4845 = vpop.f32.mrf.mxu0
  %v4846 = vadd.f32 0.0, %v4845
  %v4847 = vpop.f32.mrf.mxu0
  %4848 = vdwg.mxu0
  %v4849 = vadd.f32 %v4593, %v4835
  %v4850 = vadd.f32 %v4594, %v4838
  %v4851 = vadd.f32 %v4595, %v4843
  %v4852 = vadd.f32 %v4596, %v4846
  %v4853 = vadd.f32 %v2601, %v4849
  %v4854 = vadd.f32 %v2602, %v4850
  %v4855 = vadd.f32 %v2603, %v4851
  %v4856 = vadd.f32 %v2604, %v4852
  %v4857 = vsel %vm73, %v4853, 0.0
  %4858 = vadd.xlane.f32.xlu0 %v4857
  %v4859 = vpop.xlane.xlu0 %4858
  %v4860 = vsel %vm73, %v4854, 0.0
  %4861 = vadd.xlane.f32.xlu0 %v4860
  %v4862 = vpop.xlane.xlu0 %4861
  %v4863 = vsel %vm73, %v4855, 0.0
  %4864 = vadd.xlane.f32.xlu0 %v4863
  %v4865 = vpop.xlane.xlu0 %4864
  %v4866 = vsel %vm73, %v4856, 0.0
  %4867 = vadd.xlane.f32.xlu0 %v4866
  %v4868 = vpop.xlane.xlu0 %4867
  %v4869 = vmul.f32 %v4859, %v2301
  %v4870 = vmul.f32 %v4862, %v2301
  %v4871 = vmul.f32 %v4865, %v2301
  %v4872 = vmul.f32 %v4868, %v2301
  %v4873 = vsub.f32 %v4853, %v4869
  %v4874 = vsub.f32 %v4854, %v4870
  %v4875 = vsub.f32 %v4855, %v4871
  %v4876 = vsub.f32 %v4856, %v4872
  %v4877 = vmul.f32 %v4873, %v4873
  %v4878 = vmul.f32 %v4874, %v4874
  %v4879 = vmul.f32 %v4875, %v4875
  %v4880 = vmul.f32 %v4876, %v4876
  %v4881 = vsel %vm73, %v4877, 0.0
  %4882 = vadd.xlane.f32.xlu0 %v4881
  %v4883 = vpop.xlane.xlu0 %4882
  %v4884 = vsel %vm73, %v4878, 0.0
  %4885 = vadd.xlane.f32.xlu0 %v4884
  %v4886 = vpop.xlane.xlu0 %4885
  %v4887 = vsel %vm73, %v4879, 0.0
  %4888 = vadd.xlane.f32.xlu0 %v4887
  %v4889 = vpop.xlane.xlu0 %4888
  %v4890 = vsel %vm73, %v4880, 0.0
  %4891 = vadd.xlane.f32.xlu0 %v4890
  %v4892 = vpop.xlane.xlu0 %4891
  %v4893 = vmul.f32 %v4883, %v2301
  %v4894 = vmul.f32 %v4886, %v2301
  %v4895 = vmul.f32 %v4889, %v2301
  %v4896 = vmul.f32 %v4892, %v2301
  %v4897 = vadd.f32 %v4893, 1e-05
  %v4898 = vadd.f32 %v4894, 1e-05
  %v4899 = vadd.f32 %v4895, 1e-05
  %v4900 = vadd.f32 %v4896, 1e-05
  %v4901 = vrsqrt.pop %v4897
  %v4902 = vrsqrt.pop %v4898
  %v4903 = vrsqrt.pop %v4899
  %v4904 = vrsqrt.pop %v4900
  %v4905 = vmul.f32 %v4873, %v4901
  %v4906 = vmul.f32 %v4874, %v4902
  %v4907 = vmul.f32 %v4875, %v4903
  %v4908 = vmul.f32 %v4876, %v4904
  %v4909 = vlaneseq
  %v4910 = vshrl.u32 %v4909, 7
  %v4911 = vsub.s32 4, %v4910
  %v4912 = vrot.slane %v2606, %v4911
  %v4913 = vmul.f32 %v4905, %v4912
  %v4914 = vmul.f32 %v4906, %v4912
  %v4915 = vmul.f32 %v4907, %v4912
  %v4916 = vmul.f32 %v4908, %v4912
  %v4917 = vlaneseq
  %v4918 = vshrl.u32 %v4917, 7
  %v4919 = vsub.s32 5, %v4918
  %v4920 = vrot.slane %v2606, %v4919
  %v4921 = vadd.f32 %v4913, %v4920
  %v4922 = vadd.f32 %v4914, %v4920
  %v4923 = vadd.f32 %v4915, %v4920
  %v4924 = vadd.f32 %v4916, %v4920
  %v4925 = vpack.c.bf16 %v4922, %v4921
  %v4926 = vpack.c.bf16 %v4924, %v4923
  %s4927 = scalar_lea.vmem %s4, 16
  %v4928 = vld [vmem:[%s4927] sm:$0xf]
  %v4929 = vld [vmem:[%s4927 + $0x4] sm:$0xf]
  %v4930 = vld [vmem:[%s4927 + $0x8] sm:$0xf]
  %v4931 = vld [vmem:[%s4927 + $0xc] sm:$0xf]
  %v4932 = vlaneseq
  %v4933 = vshrl.u32 %v4932, 7
  %v4934 = vsub.s32 6, %v4933
  %v4935 = vrot.slane %v2606, %v4934
  %v4940 = vunpack.c.l.b16 %v4928
  %v4941 = vunpack.c.l.b16 %v4929
  %v4942 = vunpack.c.l.b16 %v4930
  %v4943 = vunpack.c.l.b16 %v4931
  %v4944 = vpack.c.b16 %v4941, %v4940
  %v4945 = vpack.c.b16 %v4943, %v4942
  %v4949 = vsel %vm73, %v4925, 0
  %v4952 = vsel %vm73, %v4926, 0
  %4954 = vmatprep.subr.bf16.mxu0 0
  %4955 = vmatpush1.bf16.msra.mxu0 0
  %4956 = vmatprep.subr.bf16.mxu0 0
  %4957 = vmatpush1.bf16.msra.mxu0 0
  %4958 = vmatprep.subr.bf16.mxu0 0
  %4959 = vmatpush1.bf16.msra.mxu0 0
  %4960 = vmatprep.subr.bf16.mxu0 0
  %4961 = vmatpush1.bf16.msra.mxu0 0
  %4962 = vmatprep.subr.bf16.mxu0 0
  %4963 = vmatpush1.bf16.msra.mxu0 0
  %4964 = vmatprep.subr.bf16.mxu0 0
  %4965 = vmatpush1.bf16.msra.mxu0 0
  %4966 = vmatprep.subr.bf16.mxu0 0
  %4967 = vmatpush1.bf16.msra.mxu0 %v4945
  %4968 = vmatprep.subr.bf16.mxu0 0
  %4969 = vmatpush1.bf16.msra.mxu0 %v4944
  %4970 = vmatprep.subr.bf16.mxu0 0
  %4971 = vmatpush2.bf16.msra.mxu0 0
  %4972 = vmatprep.subr.bf16.mxu0 0
  %4973 = vmatpush2.bf16.msra.mxu0 0
  %4974 = vmatprep.subr.bf16.mxu0 0
  %4975 = vmatpush2.bf16.msra.mxu0 0
  %4976 = vmatprep.subr.bf16.mxu0 0
  %4977 = vmatpush2.bf16.msra.mxu0 0
  %4978 = vmatprep.subr.bf16.mxu0 0
  %4979 = vmatpush2.bf16.msra.mxu0 0
  %4980 = vmatprep.subr.bf16.mxu0 0
  %4981 = vmatpush2.bf16.msra.mxu0 0
  %4982 = vmatprep.subr.bf16.mxu0 0
  %4983 = vmatpush2.bf16.msra.mxu0 0
  %4984 = vmatprep.subr.bf16.mxu0 0
  %4985 = vmatpush2.bf16.msra.mxu0 0
  %4986 = vmatprep.mubr.bf16.mxu0 0
  %4987 = vmatmul.mubr.bf16.gmra.mxu0 %v4949
  %v4988 = vpop.f32.mrf.mxu0
  %v4989 = vadd.f32 %v4935, %v4988
  %v4990 = vpop.f32.mrf.mxu0
  %v4991 = vpop.f32.mrf.mxu0
  %v4992 = vadd.f32 %v4935, %v4991
  %v4993 = vpop.f32.mrf.mxu0
  %4994 = vmatprep.mubr.bf16.mxu0 0
  %4995 = vmatmul.mubr.bf16.gmra.mxu0 %v4952
  %v4996 = vpop.f32.mrf.mxu0
  %v4997 = vadd.f32 %v4935, %v4996
  %v4998 = vpop.f32.mrf.mxu0
  %v4999 = vpop.f32.mrf.mxu0
  %v5000 = vadd.f32 %v4935, %v4999
  %v5001 = vpop.f32.mrf.mxu0
  %5002 = vdwg.mxu0
  %v5003 = vmax.f32 %v4989, 0.0
  %v5004 = vmax.f32 %v4992, 0.0
  %v5005 = vmax.f32 %v4997, 0.0
  %v5006 = vmax.f32 %v5000, 0.0
  %v5007 = vpack.c.bf16 %v5004, %v5003
  %v5008 = vpack.c.bf16 %v5006, %v5005
  %s5009 = scalar_lea.vmem %s5, 32
  %v5010 = vld [vmem:[%s5009] sm:$0xf]
  %v5011 = vld [vmem:[%s5009 + $0x4] sm:$0xf]
  %v5012 = vld [vmem:[%s5009 + $0x8] sm:$0xf]
  %v5013 = vld [vmem:[%s5009 + $0xc] sm:$0xf]
  %v5014 = vld [vmem:[%s5009 + $0x10] sm:$0xf]
  %v5015 = vld [vmem:[%s5009 + $0x14] sm:$0xf]
  %v5016 = vld [vmem:[%s5009 + $0x18] sm:$0xf]
  %v5017 = vld [vmem:[%s5009 + $0x1c] sm:$0xf]
  %v5018 = vlaneseq
  %v5019 = vshrl.u32 %v5018, 7
  %v5020 = vsub.s32 7, %v5019
  %v5021 = vrot.slane %v2606, %v5020
  %v5030 = vunpack.c.l.b16 %v5010
  %v5031 = vunpack.c.l.b16 %v5011
  %v5032 = vunpack.c.l.b16 %v5012
  %v5033 = vunpack.c.l.b16 %v5013
  %v5034 = vunpack.c.l.b16 %v5014
  %v5035 = vunpack.c.l.b16 %v5015
  %v5036 = vunpack.c.l.b16 %v5016
  %v5037 = vunpack.c.l.b16 %v5017
  %v5038 = vpack.c.b16 %v5031, %v5030
  %v5039 = vpack.c.b16 %v5033, %v5032
  %v5040 = vpack.c.b16 %v5035, %v5034
  %v5041 = vpack.c.b16 %v5037, %v5036
  %v5047 = vsel %vm2477, %v5007, 0
  %v5050 = vsel %vm2477, %v5008, 0
  %5052 = vmatprep.subr.bf16.mxu0 0
  %5053 = vmatpush1.bf16.msra.mxu0 0
  %5054 = vmatprep.subr.bf16.mxu0 0
  %5055 = vmatpush1.bf16.msra.mxu0 0
  %5056 = vmatprep.subr.bf16.mxu0 0
  %5057 = vmatpush1.bf16.msra.mxu0 0
  %5058 = vmatprep.subr.bf16.mxu0 0
  %5059 = vmatpush1.bf16.msra.mxu0 0
  %5060 = vmatprep.subr.bf16.mxu0 0
  %5061 = vmatpush1.bf16.msra.mxu0 %v5041
  %5062 = vmatprep.subr.bf16.mxu0 0
  %5063 = vmatpush1.bf16.msra.mxu0 %v5040
  %5064 = vmatprep.subr.bf16.mxu0 0
  %5065 = vmatpush1.bf16.msra.mxu0 %v5039
  %5066 = vmatprep.subr.bf16.mxu0 0
  %5067 = vmatpush1.bf16.msra.mxu0 %v5038
  %5068 = vmatprep.subr.bf16.mxu0 0
  %5069 = vmatpush2.bf16.msra.mxu0 0
  %5070 = vmatprep.subr.bf16.mxu0 0
  %5071 = vmatpush2.bf16.msra.mxu0 0
  %5072 = vmatprep.subr.bf16.mxu0 0
  %5073 = vmatpush2.bf16.msra.mxu0 0
  %5074 = vmatprep.subr.bf16.mxu0 0
  %5075 = vmatpush2.bf16.msra.mxu0 0
  %5076 = vmatprep.subr.bf16.mxu0 0
  %5077 = vmatpush2.bf16.msra.mxu0 0
  %5078 = vmatprep.subr.bf16.mxu0 0
  %5079 = vmatpush2.bf16.msra.mxu0 0
  %5080 = vmatprep.subr.bf16.mxu0 0
  %5081 = vmatpush2.bf16.msra.mxu0 0
  %5082 = vmatprep.subr.bf16.mxu0 0
  %5083 = vmatpush2.bf16.msra.mxu0 0
  %5084 = vmatprep.mubr.bf16.mxu0 0
  %5085 = vmatmul.mubr.bf16.gmra.mxu0 %v5047
  %v5086 = vpop.f32.mrf.mxu0
  %v5087 = vadd.f32 %v5021, %v5086
  %v5088 = vpop.f32.mrf.mxu0
  %v5089 = vpop.f32.mrf.mxu0
  %v5090 = vadd.f32 %v5021, %v5089
  %v5091 = vpop.f32.mrf.mxu0
  %5092 = vmatprep.mubr.bf16.mxu0 0
  %5093 = vmatmul.mubr.bf16.gmra.mxu0 %v5050
  %v5094 = vpop.f32.mrf.mxu0
  %v5095 = vadd.f32 %v5021, %v5094
  %v5096 = vpop.f32.mrf.mxu0
  %v5097 = vpop.f32.mrf.mxu0
  %v5098 = vadd.f32 %v5021, %v5097
  %v5099 = vpop.f32.mrf.mxu0
  %5100 = vdwg.mxu0
  %v5101 = vadd.f32 %v4921, %v5087
  %v5102 = vadd.f32 %v4922, %v5090
  %v5103 = vadd.f32 %v4923, %v5095
  %v5104 = vadd.f32 %v4924, %v5098
  %v5105 = vsel %vm73, %v5101, 0.0
  %5106 = vadd.xlane.f32.xlu0 %v5105
  %v5107 = vpop.xlane.xlu0 %5106
  %v5108 = vsel %vm73, %v5102, 0.0
  %5109 = vadd.xlane.f32.xlu0 %v5108
  %v5110 = vpop.xlane.xlu0 %5109
  %v5111 = vsel %vm73, %v5103, 0.0
  %5112 = vadd.xlane.f32.xlu0 %v5111
  %v5113 = vpop.xlane.xlu0 %5112
  %v5114 = vsel %vm73, %v5104, 0.0
  %5115 = vadd.xlane.f32.xlu0 %v5114
  %v5116 = vpop.xlane.xlu0 %5115
  %v5117 = vmul.f32 %v5107, %v2301
  %v5118 = vmul.f32 %v5110, %v2301
  %v5119 = vmul.f32 %v5113, %v2301
  %v5120 = vmul.f32 %v5116, %v2301
  %v5121 = vsub.f32 %v5101, %v5117
  %v5122 = vsub.f32 %v5102, %v5118
  %v5123 = vsub.f32 %v5103, %v5119
  %v5124 = vsub.f32 %v5104, %v5120
  %v5125 = vmul.f32 %v5121, %v5121
  %v5126 = vmul.f32 %v5122, %v5122
  %v5127 = vmul.f32 %v5123, %v5123
  %v5128 = vmul.f32 %v5124, %v5124
  %v5129 = vsel %vm73, %v5125, 0.0
  %5130 = vadd.xlane.f32.xlu0 %v5129
  %v5131 = vpop.xlane.xlu0 %5130
  %v5132 = vsel %vm73, %v5126, 0.0
  %5133 = vadd.xlane.f32.xlu0 %v5132
  %v5134 = vpop.xlane.xlu0 %5133
  %v5135 = vsel %vm73, %v5127, 0.0
  %5136 = vadd.xlane.f32.xlu0 %v5135
  %v5137 = vpop.xlane.xlu0 %5136
  %v5138 = vsel %vm73, %v5128, 0.0
  %5139 = vadd.xlane.f32.xlu0 %v5138
  %v5140 = vpop.xlane.xlu0 %5139
  %v5141 = vmul.f32 %v5131, %v2301
  %v5142 = vmul.f32 %v5134, %v2301
  %v5143 = vmul.f32 %v5137, %v2301
  %v5144 = vmul.f32 %v5140, %v2301
  %v5145 = vadd.f32 %v5141, 1e-05
  %v5146 = vadd.f32 %v5142, 1e-05
  %v5147 = vadd.f32 %v5143, 1e-05
  %v5148 = vadd.f32 %v5144, 1e-05
  %v5149 = vrsqrt.pop %v5145
  %v5150 = vrsqrt.pop %v5146
  %v5151 = vrsqrt.pop %v5147
  %v5152 = vrsqrt.pop %v5148
  %v5153 = vmul.f32 %v5121, %v5149
  %v5154 = vmul.f32 %v5122, %v5150
  %v5155 = vmul.f32 %v5123, %v5151
  %v5156 = vmul.f32 %v5124, %v5152
  %v5157 = vlaneseq
  %v5158 = vshrl.u32 %v5157, 7
  %v5159 = vsub.s32 0, %v5158
  %v5160 = vrot.slane %v2607, %v5159
  %v5161 = vmul.f32 %v5153, %v5160
  %v5162 = vmul.f32 %v5154, %v5160
  %v5163 = vmul.f32 %v5155, %v5160
  %v5164 = vmul.f32 %v5156, %v5160
  %v5165 = vlaneseq
  %v5166 = vshrl.u32 %v5165, 7
  %v5167 = vsub.s32 1, %v5166
  %v5168 = vrot.slane %v2607, %v5167
  %v5169 = vadd.f32 %v5161, %v5168
  %v5170 = vadd.f32 %v5162, %v5168
  %v5171 = vadd.f32 %v5163, %v5168
  %v5172 = vadd.f32 %v5164, %v5168
  %s5173 = scalar_lea.vmem %s6, 32
  %v5174 = vld [vmem:[%s5173] sm:$0xff]
  %v5175 = vld [vmem:[%s5173 + $0x8] sm:$0xff]
  %s5176 = scalar_lea.vmem %s2, 96
  %v5177 = vld [vmem:[%s5176] sm:$0xf]
  %v5178 = vld [vmem:[%s5176 + $0x4] sm:$0xf]
  %v5179 = vld [vmem:[%s5176 + $0x8] sm:$0xf]
  %v5180 = vld [vmem:[%s5176 + $0xc] sm:$0xf]
  %v5181 = vld [vmem:[%s5176 + $0x10] sm:$0xf]
  %v5182 = vld [vmem:[%s5176 + $0x14] sm:$0xf]
  %v5183 = vld [vmem:[%s5176 + $0x18] sm:$0xf]
  %v5184 = vld [vmem:[%s5176 + $0x1c] sm:$0xf]
  %v5185 = vld [vmem:[%s5176 + $0x20] sm:$0xf]
  %v5186 = vld [vmem:[%s5176 + $0x24] sm:$0xf]
  %v5187 = vld [vmem:[%s5176 + $0x28] sm:$0xf]
  %v5188 = vld [vmem:[%s5176 + $0x2c] sm:$0xf]
  %s5189 = scalar_lea.vmem %s3, 32
  %v5190 = vld [vmem:[%s5189] sm:$0xf]
  %v5191 = vld [vmem:[%s5189 + $0x4] sm:$0xf]
  %v5192 = vld [vmem:[%s5189 + $0x8] sm:$0xf]
  %v5193 = vld [vmem:[%s5189 + $0xc] sm:$0xf]
  %v5194 = vpack.c.bf16 %v5170, %v5169
  %v5195 = vpack.c.bf16 %v5172, %v5171
  %v5196 = vlaneseq
  %v5197 = vshrl.u32 %v5196, 7
  %v5198 = vsub.s32 0, %v5197
  %v5199 = vrot.slane %v5174, %v5198
  %v5204 = vunpack.c.l.b16 %v5177
  %v5205 = vunpack.c.l.b16 %v5178
  %v5206 = vunpack.c.l.b16 %v5179
  %v5207 = vunpack.c.l.b16 %v5180
  %v5208 = vpack.c.b16 %v5205, %v5204
  %v5209 = vpack.c.b16 %v5207, %v5206
  %v5213 = vsel %vm73, %v5194, 0
  %v5216 = vsel %vm73, %v5195, 0
  %5218 = vmatprep.subr.bf16.mxu0 0
  %5219 = vmatpush1.bf16.msra.mxu0 0
  %5220 = vmatprep.subr.bf16.mxu0 0
  %5221 = vmatpush1.bf16.msra.mxu0 0
  %5222 = vmatprep.subr.bf16.mxu0 0
  %5223 = vmatpush1.bf16.msra.mxu0 0
  %5224 = vmatprep.subr.bf16.mxu0 0
  %5225 = vmatpush1.bf16.msra.mxu0 0
  %5226 = vmatprep.subr.bf16.mxu0 0
  %5227 = vmatpush1.bf16.msra.mxu0 0
  %5228 = vmatprep.subr.bf16.mxu0 0
  %5229 = vmatpush1.bf16.msra.mxu0 0
  %5230 = vmatprep.subr.bf16.mxu0 0
  %5231 = vmatpush1.bf16.msra.mxu0 %v5209
  %5232 = vmatprep.subr.bf16.mxu0 0
  %5233 = vmatpush1.bf16.msra.mxu0 %v5208
  %5234 = vmatprep.subr.bf16.mxu0 0
  %5235 = vmatpush2.bf16.msra.mxu0 0
  %5236 = vmatprep.subr.bf16.mxu0 0
  %5237 = vmatpush2.bf16.msra.mxu0 0
  %5238 = vmatprep.subr.bf16.mxu0 0
  %5239 = vmatpush2.bf16.msra.mxu0 0
  %5240 = vmatprep.subr.bf16.mxu0 0
  %5241 = vmatpush2.bf16.msra.mxu0 0
  %5242 = vmatprep.subr.bf16.mxu0 0
  %5243 = vmatpush2.bf16.msra.mxu0 0
  %5244 = vmatprep.subr.bf16.mxu0 0
  %5245 = vmatpush2.bf16.msra.mxu0 0
  %5246 = vmatprep.subr.bf16.mxu0 0
  %5247 = vmatpush2.bf16.msra.mxu0 0
  %5248 = vmatprep.subr.bf16.mxu0 0
  %5249 = vmatpush2.bf16.msra.mxu0 0
  %5250 = vmatprep.mubr.bf16.mxu0 0
  %5251 = vmatmul.mubr.bf16.gmra.mxu0 %v5213
  %v5252 = vpop.f32.mrf.mxu0
  %v5253 = vadd.f32 %v5199, %v5252
  %v5254 = vpop.f32.mrf.mxu0
  %v5255 = vpop.f32.mrf.mxu0
  %v5256 = vadd.f32 %v5199, %v5255
  %v5257 = vpop.f32.mrf.mxu0
  %5258 = vmatprep.mubr.bf16.mxu0 0
  %5259 = vmatmul.mubr.bf16.gmra.mxu0 %v5216
  %v5260 = vpop.f32.mrf.mxu0
  %v5261 = vadd.f32 %v5199, %v5260
  %v5262 = vpop.f32.mrf.mxu0
  %v5263 = vpop.f32.mrf.mxu0
  %v5264 = vadd.f32 %v5199, %v5263
  %v5265 = vpop.f32.mrf.mxu0
  %5266 = vdwg.mxu0
  %v5267 = vlaneseq
  %v5268 = vshrl.u32 %v5267, 7
  %v5269 = vsub.s32 1, %v5268
  %v5270 = vrot.slane %v5174, %v5269
  %v5275 = vunpack.c.l.b16 %v5181
  %v5276 = vunpack.c.l.b16 %v5182
  %v5277 = vunpack.c.l.b16 %v5183
  %v5278 = vunpack.c.l.b16 %v5184
  %v5279 = vpack.c.b16 %v5276, %v5275
  %v5280 = vpack.c.b16 %v5278, %v5277
  %5283 = vmatprep.subr.bf16.mxu0 0
  %5284 = vmatpush1.bf16.msra.mxu0 0
  %5285 = vmatprep.subr.bf16.mxu0 0
  %5286 = vmatpush1.bf16.msra.mxu0 0
  %5287 = vmatprep.subr.bf16.mxu0 0
  %5288 = vmatpush1.bf16.msra.mxu0 0
  %5289 = vmatprep.subr.bf16.mxu0 0
  %5290 = vmatpush1.bf16.msra.mxu0 0
  %5291 = vmatprep.subr.bf16.mxu0 0
  %5292 = vmatpush1.bf16.msra.mxu0 0
  %5293 = vmatprep.subr.bf16.mxu0 0
  %5294 = vmatpush1.bf16.msra.mxu0 0
  %5295 = vmatprep.subr.bf16.mxu0 0
  %5296 = vmatpush1.bf16.msra.mxu0 %v5280
  %5297 = vmatprep.subr.bf16.mxu0 0
  %5298 = vmatpush1.bf16.msra.mxu0 %v5279
  %5299 = vmatprep.subr.bf16.mxu0 0
  %5300 = vmatpush2.bf16.msra.mxu0 0
  %5301 = vmatprep.subr.bf16.mxu0 0
  %5302 = vmatpush2.bf16.msra.mxu0 0
  %5303 = vmatprep.subr.bf16.mxu0 0
  %5304 = vmatpush2.bf16.msra.mxu0 0
  %5305 = vmatprep.subr.bf16.mxu0 0
  %5306 = vmatpush2.bf16.msra.mxu0 0
  %5307 = vmatprep.subr.bf16.mxu0 0
  %5308 = vmatpush2.bf16.msra.mxu0 0
  %5309 = vmatprep.subr.bf16.mxu0 0
  %5310 = vmatpush2.bf16.msra.mxu0 0
  %5311 = vmatprep.subr.bf16.mxu0 0
  %5312 = vmatpush2.bf16.msra.mxu0 0
  %5313 = vmatprep.subr.bf16.mxu0 0
  %5314 = vmatpush2.bf16.msra.mxu0 0
  %5315 = vmatprep.mubr.bf16.mxu0 0
  %5316 = vmatmul.mubr.bf16.gmra.mxu0 %v5213
  %v5317 = vpop.f32.mrf.mxu0
  %v5318 = vadd.f32 %v5270, %v5317
  %v5319 = vpop.f32.mrf.mxu0
  %v5320 = vpop.f32.mrf.mxu0
  %v5321 = vadd.f32 %v5270, %v5320
  %v5322 = vpop.f32.mrf.mxu0
  %5323 = vmatprep.mubr.bf16.mxu0 0
  %5324 = vmatmul.mubr.bf16.gmra.mxu0 %v5216
  %v5325 = vpop.f32.mrf.mxu0
  %v5326 = vadd.f32 %v5270, %v5325
  %v5327 = vpop.f32.mrf.mxu0
  %v5328 = vpop.f32.mrf.mxu0
  %v5329 = vadd.f32 %v5270, %v5328
  %v5330 = vpop.f32.mrf.mxu0
  %5331 = vdwg.mxu0
  %v5332 = vlaneseq
  %v5333 = vshrl.u32 %v5332, 7
  %v5334 = vsub.s32 2, %v5333
  %v5335 = vrot.slane %v5174, %v5334
  %v5340 = vunpack.c.l.b16 %v5185
  %v5341 = vunpack.c.l.b16 %v5186
  %v5342 = vunpack.c.l.b16 %v5187
  %v5343 = vunpack.c.l.b16 %v5188
  %v5344 = vpack.c.b16 %v5341, %v5340
  %v5345 = vpack.c.b16 %v5343, %v5342
  %5348 = vmatprep.subr.bf16.mxu0 0
  %5349 = vmatpush1.bf16.msra.mxu0 0
  %5350 = vmatprep.subr.bf16.mxu0 0
  %5351 = vmatpush1.bf16.msra.mxu0 0
  %5352 = vmatprep.subr.bf16.mxu0 0
  %5353 = vmatpush1.bf16.msra.mxu0 0
  %5354 = vmatprep.subr.bf16.mxu0 0
  %5355 = vmatpush1.bf16.msra.mxu0 0
  %5356 = vmatprep.subr.bf16.mxu0 0
  %5357 = vmatpush1.bf16.msra.mxu0 0
  %5358 = vmatprep.subr.bf16.mxu0 0
  %5359 = vmatpush1.bf16.msra.mxu0 0
  %5360 = vmatprep.subr.bf16.mxu0 0
  %5361 = vmatpush1.bf16.msra.mxu0 %v5345
  %5362 = vmatprep.subr.bf16.mxu0 0
  %5363 = vmatpush1.bf16.msra.mxu0 %v5344
  %5364 = vmatprep.subr.bf16.mxu0 0
  %5365 = vmatpush2.bf16.msra.mxu0 0
  %5366 = vmatprep.subr.bf16.mxu0 0
  %5367 = vmatpush2.bf16.msra.mxu0 0
  %5368 = vmatprep.subr.bf16.mxu0 0
  %5369 = vmatpush2.bf16.msra.mxu0 0
  %5370 = vmatprep.subr.bf16.mxu0 0
  %5371 = vmatpush2.bf16.msra.mxu0 0
  %5372 = vmatprep.subr.bf16.mxu0 0
  %5373 = vmatpush2.bf16.msra.mxu0 0
  %5374 = vmatprep.subr.bf16.mxu0 0
  %5375 = vmatpush2.bf16.msra.mxu0 0
  %5376 = vmatprep.subr.bf16.mxu0 0
  %5377 = vmatpush2.bf16.msra.mxu0 0
  %5378 = vmatprep.subr.bf16.mxu0 0
  %5379 = vmatpush2.bf16.msra.mxu0 0
  %5380 = vmatprep.mubr.bf16.mxu0 0
  %5381 = vmatmul.mubr.bf16.gmra.mxu0 %v5213
  %v5382 = vpop.f32.mrf.mxu0
  %v5383 = vadd.f32 %v5335, %v5382
  %v5384 = vpop.f32.mrf.mxu0
  %v5385 = vpop.f32.mrf.mxu0
  %v5386 = vadd.f32 %v5335, %v5385
  %v5387 = vpop.f32.mrf.mxu0
  %5388 = vmatprep.mubr.bf16.mxu0 0
  %5389 = vmatmul.mubr.bf16.gmra.mxu0 %v5216
  %v5390 = vpop.f32.mrf.mxu0
  %v5391 = vadd.f32 %v5335, %v5390
  %v5392 = vpop.f32.mrf.mxu0
  %v5393 = vpop.f32.mrf.mxu0
  %v5394 = vadd.f32 %v5335, %v5393
  %v5395 = vpop.f32.mrf.mxu0
  %5396 = vdwg.mxu0
  %v5397 = vmul.f32 %v5253, 0.35355338
  %v5398 = vmul.f32 %v5256, 0.35355338
  %v5399 = vmul.f32 %v5261, 0.35355338
  %v5400 = vmul.f32 %v5264, 0.35355338
  %v5401 = vpack.c.bf16 %v5397, %v5397
  %v5402 = vpack.c.bf16 %v5398, %v5398
  %v5403 = vpack.c.bf16 %v5399, %v5399
  %v5404 = vpack.c.bf16 %v5400, %v5400
  %v5405 = vpack.c.bf16 %v5318, %v5318
  %v5406 = vpack.c.bf16 %v5321, %v5321
  %v5407 = vpack.c.bf16 %v5326, %v5326
  %v5408 = vpack.c.bf16 %v5329, %v5329
  %v5409 = vpack.c.bf16 %v5383, %v5383
  %v5410 = vpack.c.bf16 %v5386, %v5386
  %v5411 = vpack.c.bf16 %v5391, %v5391
  %v5412 = vpack.c.bf16 %v5394, %v5394
  %v5414 = vsel %vm275, %v5401, 0
  %v5417 = vsel %vm275, %v5405, 0
  %5419 = vmatprep.subr.bf16.mxu0 0
  %5420 = vmatpush1.bf16.xpose.msra.mxu0 0
  %5421 = vmatprep.subr.bf16.mxu0 0
  %5422 = vmatpush1.bf16.xpose.msra.mxu0 0
  %5423 = vmatprep.subr.bf16.mxu0 0
  %5424 = vmatpush1.bf16.xpose.msra.mxu0 0
  %5425 = vmatprep.subr.bf16.mxu0 0
  %5426 = vmatpush1.bf16.xpose.msra.mxu0 0
  %5427 = vmatprep.subr.bf16.mxu0 0
  %5428 = vmatpush1.bf16.xpose.msra.mxu0 0
  %5429 = vmatprep.subr.bf16.mxu0 0
  %5430 = vmatpush1.bf16.xpose.msra.mxu0 0
  %5431 = vmatprep.subr.bf16.mxu0 0
  %5432 = vmatpush1.bf16.xpose.msra.mxu0 0
  %5433 = vmatprep.subr.bf16.mxu0 0
  %5434 = vmatpush1.bf16.xpose.msra.mxu0 %v5417
  %5435 = vmatprep.subr.bf16.mxu0 0
  %5436 = vmatpush2.bf16.xpose.msra.mxu0 0
  %5437 = vmatprep.subr.bf16.mxu0 0
  %5438 = vmatpush2.bf16.xpose.msra.mxu0 0
  %5439 = vmatprep.subr.bf16.mxu0 0
  %5440 = vmatpush2.bf16.xpose.msra.mxu0 0
  %5441 = vmatprep.subr.bf16.mxu0 0
  %5442 = vmatpush2.bf16.xpose.msra.mxu0 0
  %5443 = vmatprep.subr.bf16.mxu0 0
  %5444 = vmatpush2.bf16.xpose.msra.mxu0 0
  %5445 = vmatprep.subr.bf16.mxu0 0
  %5446 = vmatpush2.bf16.xpose.msra.mxu0 0
  %5447 = vmatprep.subr.bf16.mxu0 0
  %5448 = vmatpush2.bf16.xpose.msra.mxu0 0
  %5449 = vmatprep.subr.bf16.mxu0 0
  %5450 = vmatpush2.bf16.xpose.msra.mxu0 0
  %5451 = vmatprep.mubr.bf16.mxu0 0
  %5452 = vmatmul.mubr.bf16.gmra.mxu0 %v5414
  %v5453 = vpop.f32.mrf.mxu0
  %v5454 = vadd.f32 0.0, %v5453
  %v5455 = vpop.f32.mrf.mxu0
  %v5456 = vpop.f32.mrf.mxu0
  %v5457 = vpop.f32.mrf.mxu0
  %5458 = vdwg.mxu0
  %v5460 = vsel %vm275, %v5402, 0
  %v5463 = vsel %vm275, %v5406, 0
  %5465 = vmatprep.subr.bf16.mxu0 0
  %5466 = vmatpush1.bf16.xpose.msra.mxu0 0
  %5467 = vmatprep.subr.bf16.mxu0 0
  %5468 = vmatpush1.bf16.xpose.msra.mxu0 0
  %5469 = vmatprep.subr.bf16.mxu0 0
  %5470 = vmatpush1.bf16.xpose.msra.mxu0 0
  %5471 = vmatprep.subr.bf16.mxu0 0
  %5472 = vmatpush1.bf16.xpose.msra.mxu0 0
  %5473 = vmatprep.subr.bf16.mxu0 0
  %5474 = vmatpush1.bf16.xpose.msra.mxu0 0
  %5475 = vmatprep.subr.bf16.mxu0 0
  %5476 = vmatpush1.bf16.xpose.msra.mxu0 0
  %5477 = vmatprep.subr.bf16.mxu0 0
  %5478 = vmatpush1.bf16.xpose.msra.mxu0 0
  %5479 = vmatprep.subr.bf16.mxu0 0
  %5480 = vmatpush1.bf16.xpose.msra.mxu0 %v5463
  %5481 = vmatprep.subr.bf16.mxu0 0
  %5482 = vmatpush2.bf16.xpose.msra.mxu0 0
  %5483 = vmatprep.subr.bf16.mxu0 0
  %5484 = vmatpush2.bf16.xpose.msra.mxu0 0
  %5485 = vmatprep.subr.bf16.mxu0 0
  %5486 = vmatpush2.bf16.xpose.msra.mxu0 0
  %5487 = vmatprep.subr.bf16.mxu0 0
  %5488 = vmatpush2.bf16.xpose.msra.mxu0 0
  %5489 = vmatprep.subr.bf16.mxu0 0
  %5490 = vmatpush2.bf16.xpose.msra.mxu0 0
  %5491 = vmatprep.subr.bf16.mxu0 0
  %5492 = vmatpush2.bf16.xpose.msra.mxu0 0
  %5493 = vmatprep.subr.bf16.mxu0 0
  %5494 = vmatpush2.bf16.xpose.msra.mxu0 0
  %5495 = vmatprep.subr.bf16.mxu0 0
  %5496 = vmatpush2.bf16.xpose.msra.mxu0 0
  %5497 = vmatprep.mubr.bf16.mxu0 0
  %5498 = vmatmul.mubr.bf16.gmra.mxu0 %v5460
  %v5499 = vpop.f32.mrf.mxu0
  %v5500 = vadd.f32 0.0, %v5499
  %v5501 = vpop.f32.mrf.mxu0
  %v5502 = vpop.f32.mrf.mxu0
  %v5503 = vpop.f32.mrf.mxu0
  %5504 = vdwg.mxu0
  %v5506 = vsel %vm275, %v5403, 0
  %v5509 = vsel %vm275, %v5407, 0
  %5511 = vmatprep.subr.bf16.mxu0 0
  %5512 = vmatpush1.bf16.xpose.msra.mxu0 0
  %5513 = vmatprep.subr.bf16.mxu0 0
  %5514 = vmatpush1.bf16.xpose.msra.mxu0 0
  %5515 = vmatprep.subr.bf16.mxu0 0
  %5516 = vmatpush1.bf16.xpose.msra.mxu0 0
  %5517 = vmatprep.subr.bf16.mxu0 0
  %5518 = vmatpush1.bf16.xpose.msra.mxu0 0
  %5519 = vmatprep.subr.bf16.mxu0 0
  %5520 = vmatpush1.bf16.xpose.msra.mxu0 0
  %5521 = vmatprep.subr.bf16.mxu0 0
  %5522 = vmatpush1.bf16.xpose.msra.mxu0 0
  %5523 = vmatprep.subr.bf16.mxu0 0
  %5524 = vmatpush1.bf16.xpose.msra.mxu0 0
  %5525 = vmatprep.subr.bf16.mxu0 0
  %5526 = vmatpush1.bf16.xpose.msra.mxu0 %v5509
  %5527 = vmatprep.subr.bf16.mxu0 0
  %5528 = vmatpush2.bf16.xpose.msra.mxu0 0
  %5529 = vmatprep.subr.bf16.mxu0 0
  %5530 = vmatpush2.bf16.xpose.msra.mxu0 0
  %5531 = vmatprep.subr.bf16.mxu0 0
  %5532 = vmatpush2.bf16.xpose.msra.mxu0 0
  %5533 = vmatprep.subr.bf16.mxu0 0
  %5534 = vmatpush2.bf16.xpose.msra.mxu0 0
  %5535 = vmatprep.subr.bf16.mxu0 0
  %5536 = vmatpush2.bf16.xpose.msra.mxu0 0
  %5537 = vmatprep.subr.bf16.mxu0 0
  %5538 = vmatpush2.bf16.xpose.msra.mxu0 0
  %5539 = vmatprep.subr.bf16.mxu0 0
  %5540 = vmatpush2.bf16.xpose.msra.mxu0 0
  %5541 = vmatprep.subr.bf16.mxu0 0
  %5542 = vmatpush2.bf16.xpose.msra.mxu0 0
  %5543 = vmatprep.mubr.bf16.mxu0 0
  %5544 = vmatmul.mubr.bf16.gmra.mxu0 %v5506
  %v5545 = vpop.f32.mrf.mxu0
  %v5546 = vadd.f32 0.0, %v5545
  %v5547 = vpop.f32.mrf.mxu0
  %v5548 = vpop.f32.mrf.mxu0
  %v5549 = vpop.f32.mrf.mxu0
  %5550 = vdwg.mxu0
  %v5552 = vsel %vm275, %v5404, 0
  %v5555 = vsel %vm275, %v5408, 0
  %5557 = vmatprep.subr.bf16.mxu0 0
  %5558 = vmatpush1.bf16.xpose.msra.mxu0 0
  %5559 = vmatprep.subr.bf16.mxu0 0
  %5560 = vmatpush1.bf16.xpose.msra.mxu0 0
  %5561 = vmatprep.subr.bf16.mxu0 0
  %5562 = vmatpush1.bf16.xpose.msra.mxu0 0
  %5563 = vmatprep.subr.bf16.mxu0 0
  %5564 = vmatpush1.bf16.xpose.msra.mxu0 0
  %5565 = vmatprep.subr.bf16.mxu0 0
  %5566 = vmatpush1.bf16.xpose.msra.mxu0 0
  %5567 = vmatprep.subr.bf16.mxu0 0
  %5568 = vmatpush1.bf16.xpose.msra.mxu0 0
  %5569 = vmatprep.subr.bf16.mxu0 0
  %5570 = vmatpush1.bf16.xpose.msra.mxu0 0
  %5571 = vmatprep.subr.bf16.mxu0 0
  %5572 = vmatpush1.bf16.xpose.msra.mxu0 %v5555
  %5573 = vmatprep.subr.bf16.mxu0 0
  %5574 = vmatpush2.bf16.xpose.msra.mxu0 0
  %5575 = vmatprep.subr.bf16.mxu0 0
  %5576 = vmatpush2.bf16.xpose.msra.mxu0 0
  %5577 = vmatprep.subr.bf16.mxu0 0
  %5578 = vmatpush2.bf16.xpose.msra.mxu0 0
  %5579 = vmatprep.subr.bf16.mxu0 0
  %5580 = vmatpush2.bf16.xpose.msra.mxu0 0
  %5581 = vmatprep.subr.bf16.mxu0 0
  %5582 = vmatpush2.bf16.xpose.msra.mxu0 0
  %5583 = vmatprep.subr.bf16.mxu0 0
  %5584 = vmatpush2.bf16.xpose.msra.mxu0 0
  %5585 = vmatprep.subr.bf16.mxu0 0
  %5586 = vmatpush2.bf16.xpose.msra.mxu0 0
  %5587 = vmatprep.subr.bf16.mxu0 0
  %5588 = vmatpush2.bf16.xpose.msra.mxu0 0
  %5589 = vmatprep.mubr.bf16.mxu0 0
  %5590 = vmatmul.mubr.bf16.gmra.mxu0 %v5552
  %v5591 = vpop.f32.mrf.mxu0
  %v5592 = vadd.f32 0.0, %v5591
  %v5593 = vpop.f32.mrf.mxu0
  %v5594 = vpop.f32.mrf.mxu0
  %v5595 = vpop.f32.mrf.mxu0
  %5596 = vdwg.mxu0
  %5598 = vrot.lane.b32.xlu0 %v5401, 120
  %v5599 = vpop.permute.xlu0 %5598
  %5601 = vrot.lane.b32.xlu0 %v5405, 120
  %v5602 = vpop.permute.xlu0 %5601
  %v5604 = vsel %vm275, %v5599, 0
  %v5607 = vsel %vm275, %v5602, 0
  %5609 = vmatprep.subr.bf16.mxu0 0
  %5610 = vmatpush1.bf16.xpose.msra.mxu0 0
  %5611 = vmatprep.subr.bf16.mxu0 0
  %5612 = vmatpush1.bf16.xpose.msra.mxu0 0
  %5613 = vmatprep.subr.bf16.mxu0 0
  %5614 = vmatpush1.bf16.xpose.msra.mxu0 0
  %5615 = vmatprep.subr.bf16.mxu0 0
  %5616 = vmatpush1.bf16.xpose.msra.mxu0 0
  %5617 = vmatprep.subr.bf16.mxu0 0
  %5618 = vmatpush1.bf16.xpose.msra.mxu0 0
  %5619 = vmatprep.subr.bf16.mxu0 0
  %5620 = vmatpush1.bf16.xpose.msra.mxu0 0
  %5621 = vmatprep.subr.bf16.mxu0 0
  %5622 = vmatpush1.bf16.xpose.msra.mxu0 0
  %5623 = vmatprep.subr.bf16.mxu0 0
  %5624 = vmatpush1.bf16.xpose.msra.mxu0 %v5607
  %5625 = vmatprep.subr.bf16.mxu0 0
  %5626 = vmatpush2.bf16.xpose.msra.mxu0 0
  %5627 = vmatprep.subr.bf16.mxu0 0
  %5628 = vmatpush2.bf16.xpose.msra.mxu0 0
  %5629 = vmatprep.subr.bf16.mxu0 0
  %5630 = vmatpush2.bf16.xpose.msra.mxu0 0
  %5631 = vmatprep.subr.bf16.mxu0 0
  %5632 = vmatpush2.bf16.xpose.msra.mxu0 0
  %5633 = vmatprep.subr.bf16.mxu0 0
  %5634 = vmatpush2.bf16.xpose.msra.mxu0 0
  %5635 = vmatprep.subr.bf16.mxu0 0
  %5636 = vmatpush2.bf16.xpose.msra.mxu0 0
  %5637 = vmatprep.subr.bf16.mxu0 0
  %5638 = vmatpush2.bf16.xpose.msra.mxu0 0
  %5639 = vmatprep.subr.bf16.mxu0 0
  %5640 = vmatpush2.bf16.xpose.msra.mxu0 0
  %5641 = vmatprep.mubr.bf16.mxu0 0
  %5642 = vmatmul.mubr.bf16.gmra.mxu0 %v5604
  %v5643 = vpop.f32.mrf.mxu0
  %v5644 = vadd.f32 0.0, %v5643
  %v5645 = vpop.f32.mrf.mxu0
  %v5646 = vpop.f32.mrf.mxu0
  %v5647 = vpop.f32.mrf.mxu0
  %5648 = vdwg.mxu0
  %5650 = vrot.lane.b32.xlu0 %v5402, 120
  %v5651 = vpop.permute.xlu0 %5650
  %5653 = vrot.lane.b32.xlu0 %v5406, 120
  %v5654 = vpop.permute.xlu0 %5653
  %v5656 = vsel %vm275, %v5651, 0
  %v5659 = vsel %vm275, %v5654, 0
  %5661 = vmatprep.subr.bf16.mxu0 0
  %5662 = vmatpush1.bf16.xpose.msra.mxu0 0
  %5663 = vmatprep.subr.bf16.mxu0 0
  %5664 = vmatpush1.bf16.xpose.msra.mxu0 0
  %5665 = vmatprep.subr.bf16.mxu0 0
  %5666 = vmatpush1.bf16.xpose.msra.mxu0 0
  %5667 = vmatprep.subr.bf16.mxu0 0
  %5668 = vmatpush1.bf16.xpose.msra.mxu0 0
  %5669 = vmatprep.subr.bf16.mxu0 0
  %5670 = vmatpush1.bf16.xpose.msra.mxu0 0
  %5671 = vmatprep.subr.bf16.mxu0 0
  %5672 = vmatpush1.bf16.xpose.msra.mxu0 0
  %5673 = vmatprep.subr.bf16.mxu0 0
  %5674 = vmatpush1.bf16.xpose.msra.mxu0 0
  %5675 = vmatprep.subr.bf16.mxu0 0
  %5676 = vmatpush1.bf16.xpose.msra.mxu0 %v5659
  %5677 = vmatprep.subr.bf16.mxu0 0
  %5678 = vmatpush2.bf16.xpose.msra.mxu0 0
  %5679 = vmatprep.subr.bf16.mxu0 0
  %5680 = vmatpush2.bf16.xpose.msra.mxu0 0
  %5681 = vmatprep.subr.bf16.mxu0 0
  %5682 = vmatpush2.bf16.xpose.msra.mxu0 0
  %5683 = vmatprep.subr.bf16.mxu0 0
  %5684 = vmatpush2.bf16.xpose.msra.mxu0 0
  %5685 = vmatprep.subr.bf16.mxu0 0
  %5686 = vmatpush2.bf16.xpose.msra.mxu0 0
  %5687 = vmatprep.subr.bf16.mxu0 0
  %5688 = vmatpush2.bf16.xpose.msra.mxu0 0
  %5689 = vmatprep.subr.bf16.mxu0 0
  %5690 = vmatpush2.bf16.xpose.msra.mxu0 0
  %5691 = vmatprep.subr.bf16.mxu0 0
  %5692 = vmatpush2.bf16.xpose.msra.mxu0 0
  %5693 = vmatprep.mubr.bf16.mxu0 0
  %5694 = vmatmul.mubr.bf16.gmra.mxu0 %v5656
  %v5695 = vpop.f32.mrf.mxu0
  %v5696 = vadd.f32 0.0, %v5695
  %v5697 = vpop.f32.mrf.mxu0
  %v5698 = vpop.f32.mrf.mxu0
  %v5699 = vpop.f32.mrf.mxu0
  %5700 = vdwg.mxu0
  %5702 = vrot.lane.b32.xlu0 %v5403, 120
  %v5703 = vpop.permute.xlu0 %5702
  %5705 = vrot.lane.b32.xlu0 %v5407, 120
  %v5706 = vpop.permute.xlu0 %5705
  %v5708 = vsel %vm275, %v5703, 0
  %v5711 = vsel %vm275, %v5706, 0
  %5713 = vmatprep.subr.bf16.mxu0 0
  %5714 = vmatpush1.bf16.xpose.msra.mxu0 0
  %5715 = vmatprep.subr.bf16.mxu0 0
  %5716 = vmatpush1.bf16.xpose.msra.mxu0 0
  %5717 = vmatprep.subr.bf16.mxu0 0
  %5718 = vmatpush1.bf16.xpose.msra.mxu0 0
  %5719 = vmatprep.subr.bf16.mxu0 0
  %5720 = vmatpush1.bf16.xpose.msra.mxu0 0
  %5721 = vmatprep.subr.bf16.mxu0 0
  %5722 = vmatpush1.bf16.xpose.msra.mxu0 0
  %5723 = vmatprep.subr.bf16.mxu0 0
  %5724 = vmatpush1.bf16.xpose.msra.mxu0 0
  %5725 = vmatprep.subr.bf16.mxu0 0
  %5726 = vmatpush1.bf16.xpose.msra.mxu0 0
  %5727 = vmatprep.subr.bf16.mxu0 0
  %5728 = vmatpush1.bf16.xpose.msra.mxu0 %v5711
  %5729 = vmatprep.subr.bf16.mxu0 0
  %5730 = vmatpush2.bf16.xpose.msra.mxu0 0
  %5731 = vmatprep.subr.bf16.mxu0 0
  %5732 = vmatpush2.bf16.xpose.msra.mxu0 0
  %5733 = vmatprep.subr.bf16.mxu0 0
  %5734 = vmatpush2.bf16.xpose.msra.mxu0 0
  %5735 = vmatprep.subr.bf16.mxu0 0
  %5736 = vmatpush2.bf16.xpose.msra.mxu0 0
  %5737 = vmatprep.subr.bf16.mxu0 0
  %5738 = vmatpush2.bf16.xpose.msra.mxu0 0
  %5739 = vmatprep.subr.bf16.mxu0 0
  %5740 = vmatpush2.bf16.xpose.msra.mxu0 0
  %5741 = vmatprep.subr.bf16.mxu0 0
  %5742 = vmatpush2.bf16.xpose.msra.mxu0 0
  %5743 = vmatprep.subr.bf16.mxu0 0
  %5744 = vmatpush2.bf16.xpose.msra.mxu0 0
  %5745 = vmatprep.mubr.bf16.mxu0 0
  %5746 = vmatmul.mubr.bf16.gmra.mxu0 %v5708
  %v5747 = vpop.f32.mrf.mxu0
  %v5748 = vadd.f32 0.0, %v5747
  %v5749 = vpop.f32.mrf.mxu0
  %v5750 = vpop.f32.mrf.mxu0
  %v5751 = vpop.f32.mrf.mxu0
  %5752 = vdwg.mxu0
  %5754 = vrot.lane.b32.xlu0 %v5404, 120
  %v5755 = vpop.permute.xlu0 %5754
  %5757 = vrot.lane.b32.xlu0 %v5408, 120
  %v5758 = vpop.permute.xlu0 %5757
  %v5760 = vsel %vm275, %v5755, 0
  %v5763 = vsel %vm275, %v5758, 0
  %5765 = vmatprep.subr.bf16.mxu0 0
  %5766 = vmatpush1.bf16.xpose.msra.mxu0 0
  %5767 = vmatprep.subr.bf16.mxu0 0
  %5768 = vmatpush1.bf16.xpose.msra.mxu0 0
  %5769 = vmatprep.subr.bf16.mxu0 0
  %5770 = vmatpush1.bf16.xpose.msra.mxu0 0
  %5771 = vmatprep.subr.bf16.mxu0 0
  %5772 = vmatpush1.bf16.xpose.msra.mxu0 0
  %5773 = vmatprep.subr.bf16.mxu0 0
  %5774 = vmatpush1.bf16.xpose.msra.mxu0 0
  %5775 = vmatprep.subr.bf16.mxu0 0
  %5776 = vmatpush1.bf16.xpose.msra.mxu0 0
  %5777 = vmatprep.subr.bf16.mxu0 0
  %5778 = vmatpush1.bf16.xpose.msra.mxu0 0
  %5779 = vmatprep.subr.bf16.mxu0 0
  %5780 = vmatpush1.bf16.xpose.msra.mxu0 %v5763
  %5781 = vmatprep.subr.bf16.mxu0 0
  %5782 = vmatpush2.bf16.xpose.msra.mxu0 0
  %5783 = vmatprep.subr.bf16.mxu0 0
  %5784 = vmatpush2.bf16.xpose.msra.mxu0 0
  %5785 = vmatprep.subr.bf16.mxu0 0
  %5786 = vmatpush2.bf16.xpose.msra.mxu0 0
  %5787 = vmatprep.subr.bf16.mxu0 0
  %5788 = vmatpush2.bf16.xpose.msra.mxu0 0
  %5789 = vmatprep.subr.bf16.mxu0 0
  %5790 = vmatpush2.bf16.xpose.msra.mxu0 0
  %5791 = vmatprep.subr.bf16.mxu0 0
  %5792 = vmatpush2.bf16.xpose.msra.mxu0 0
  %5793 = vmatprep.subr.bf16.mxu0 0
  %5794 = vmatpush2.bf16.xpose.msra.mxu0 0
  %5795 = vmatprep.subr.bf16.mxu0 0
  %5796 = vmatpush2.bf16.xpose.msra.mxu0 0
  %5797 = vmatprep.mubr.bf16.mxu0 0
  %5798 = vmatmul.mubr.bf16.gmra.mxu0 %v5760
  %v5799 = vpop.f32.mrf.mxu0
  %v5800 = vadd.f32 0.0, %v5799
  %v5801 = vpop.f32.mrf.mxu0
  %v5802 = vpop.f32.mrf.mxu0
  %v5803 = vpop.f32.mrf.mxu0
  %5804 = vdwg.mxu0
  %5805 = vrot.lane.b32.xlu0 %v5401, 112
  %v5806 = vpop.permute.xlu0 %5805
  %5807 = vrot.lane.b32.xlu0 %v5405, 112
  %v5808 = vpop.permute.xlu0 %5807
  %v5810 = vsel %vm275, %v5806, 0
  %v5813 = vsel %vm275, %v5808, 0
  %5815 = vmatprep.subr.bf16.mxu0 0
  %5816 = vmatpush1.bf16.xpose.msra.mxu0 0
  %5817 = vmatprep.subr.bf16.mxu0 0
  %5818 = vmatpush1.bf16.xpose.msra.mxu0 0
  %5819 = vmatprep.subr.bf16.mxu0 0
  %5820 = vmatpush1.bf16.xpose.msra.mxu0 0
  %5821 = vmatprep.subr.bf16.mxu0 0
  %5822 = vmatpush1.bf16.xpose.msra.mxu0 0
  %5823 = vmatprep.subr.bf16.mxu0 0
  %5824 = vmatpush1.bf16.xpose.msra.mxu0 0
  %5825 = vmatprep.subr.bf16.mxu0 0
  %5826 = vmatpush1.bf16.xpose.msra.mxu0 0
  %5827 = vmatprep.subr.bf16.mxu0 0
  %5828 = vmatpush1.bf16.xpose.msra.mxu0 0
  %5829 = vmatprep.subr.bf16.mxu0 0
  %5830 = vmatpush1.bf16.xpose.msra.mxu0 %v5813
  %5831 = vmatprep.subr.bf16.mxu0 0
  %5832 = vmatpush2.bf16.xpose.msra.mxu0 0
  %5833 = vmatprep.subr.bf16.mxu0 0
  %5834 = vmatpush2.bf16.xpose.msra.mxu0 0
  %5835 = vmatprep.subr.bf16.mxu0 0
  %5836 = vmatpush2.bf16.xpose.msra.mxu0 0
  %5837 = vmatprep.subr.bf16.mxu0 0
  %5838 = vmatpush2.bf16.xpose.msra.mxu0 0
  %5839 = vmatprep.subr.bf16.mxu0 0
  %5840 = vmatpush2.bf16.xpose.msra.mxu0 0
  %5841 = vmatprep.subr.bf16.mxu0 0
  %5842 = vmatpush2.bf16.xpose.msra.mxu0 0
  %5843 = vmatprep.subr.bf16.mxu0 0
  %5844 = vmatpush2.bf16.xpose.msra.mxu0 0
  %5845 = vmatprep.subr.bf16.mxu0 0
  %5846 = vmatpush2.bf16.xpose.msra.mxu0 0
  %5847 = vmatprep.mubr.bf16.mxu0 0
  %5848 = vmatmul.mubr.bf16.gmra.mxu0 %v5810
  %v5849 = vpop.f32.mrf.mxu0
  %v5850 = vadd.f32 0.0, %v5849
  %v5851 = vpop.f32.mrf.mxu0
  %v5852 = vpop.f32.mrf.mxu0
  %v5853 = vpop.f32.mrf.mxu0
  %5854 = vdwg.mxu0
  %5855 = vrot.lane.b32.xlu0 %v5402, 112
  %v5856 = vpop.permute.xlu0 %5855
  %5857 = vrot.lane.b32.xlu0 %v5406, 112
  %v5858 = vpop.permute.xlu0 %5857
  %v5860 = vsel %vm275, %v5856, 0
  %v5863 = vsel %vm275, %v5858, 0
  %5865 = vmatprep.subr.bf16.mxu0 0
  %5866 = vmatpush1.bf16.xpose.msra.mxu0 0
  %5867 = vmatprep.subr.bf16.mxu0 0
  %5868 = vmatpush1.bf16.xpose.msra.mxu0 0
  %5869 = vmatprep.subr.bf16.mxu0 0
  %5870 = vmatpush1.bf16.xpose.msra.mxu0 0
  %5871 = vmatprep.subr.bf16.mxu0 0
  %5872 = vmatpush1.bf16.xpose.msra.mxu0 0
  %5873 = vmatprep.subr.bf16.mxu0 0
  %5874 = vmatpush1.bf16.xpose.msra.mxu0 0
  %5875 = vmatprep.subr.bf16.mxu0 0
  %5876 = vmatpush1.bf16.xpose.msra.mxu0 0
  %5877 = vmatprep.subr.bf16.mxu0 0
  %5878 = vmatpush1.bf16.xpose.msra.mxu0 0
  %5879 = vmatprep.subr.bf16.mxu0 0
  %5880 = vmatpush1.bf16.xpose.msra.mxu0 %v5863
  %5881 = vmatprep.subr.bf16.mxu0 0
  %5882 = vmatpush2.bf16.xpose.msra.mxu0 0
  %5883 = vmatprep.subr.bf16.mxu0 0
  %5884 = vmatpush2.bf16.xpose.msra.mxu0 0
  %5885 = vmatprep.subr.bf16.mxu0 0
  %5886 = vmatpush2.bf16.xpose.msra.mxu0 0
  %5887 = vmatprep.subr.bf16.mxu0 0
  %5888 = vmatpush2.bf16.xpose.msra.mxu0 0
  %5889 = vmatprep.subr.bf16.mxu0 0
  %5890 = vmatpush2.bf16.xpose.msra.mxu0 0
  %5891 = vmatprep.subr.bf16.mxu0 0
  %5892 = vmatpush2.bf16.xpose.msra.mxu0 0
  %5893 = vmatprep.subr.bf16.mxu0 0
  %5894 = vmatpush2.bf16.xpose.msra.mxu0 0
  %5895 = vmatprep.subr.bf16.mxu0 0
  %5896 = vmatpush2.bf16.xpose.msra.mxu0 0
  %5897 = vmatprep.mubr.bf16.mxu0 0
  %5898 = vmatmul.mubr.bf16.gmra.mxu0 %v5860
  %v5899 = vpop.f32.mrf.mxu0
  %v5900 = vadd.f32 0.0, %v5899
  %v5901 = vpop.f32.mrf.mxu0
  %v5902 = vpop.f32.mrf.mxu0
  %v5903 = vpop.f32.mrf.mxu0
  %5904 = vdwg.mxu0
  %5905 = vrot.lane.b32.xlu0 %v5403, 112
  %v5906 = vpop.permute.xlu0 %5905
  %5907 = vrot.lane.b32.xlu0 %v5407, 112
  %v5908 = vpop.permute.xlu0 %5907
  %v5910 = vsel %vm275, %v5906, 0
  %v5913 = vsel %vm275, %v5908, 0
  %5915 = vmatprep.subr.bf16.mxu0 0
  %5916 = vmatpush1.bf16.xpose.msra.mxu0 0
  %5917 = vmatprep.subr.bf16.mxu0 0
  %5918 = vmatpush1.bf16.xpose.msra.mxu0 0
  %5919 = vmatprep.subr.bf16.mxu0 0
  %5920 = vmatpush1.bf16.xpose.msra.mxu0 0
  %5921 = vmatprep.subr.bf16.mxu0 0
  %5922 = vmatpush1.bf16.xpose.msra.mxu0 0
  %5923 = vmatprep.subr.bf16.mxu0 0
  %5924 = vmatpush1.bf16.xpose.msra.mxu0 0
  %5925 = vmatprep.subr.bf16.mxu0 0
  %5926 = vmatpush1.bf16.xpose.msra.mxu0 0
  %5927 = vmatprep.subr.bf16.mxu0 0
  %5928 = vmatpush1.bf16.xpose.msra.mxu0 0
  %5929 = vmatprep.subr.bf16.mxu0 0
  %5930 = vmatpush1.bf16.xpose.msra.mxu0 %v5913
  %5931 = vmatprep.subr.bf16.mxu0 0
  %5932 = vmatpush2.bf16.xpose.msra.mxu0 0
  %5933 = vmatprep.subr.bf16.mxu0 0
  %5934 = vmatpush2.bf16.xpose.msra.mxu0 0
  %5935 = vmatprep.subr.bf16.mxu0 0
  %5936 = vmatpush2.bf16.xpose.msra.mxu0 0
  %5937 = vmatprep.subr.bf16.mxu0 0
  %5938 = vmatpush2.bf16.xpose.msra.mxu0 0
  %5939 = vmatprep.subr.bf16.mxu0 0
  %5940 = vmatpush2.bf16.xpose.msra.mxu0 0
  %5941 = vmatprep.subr.bf16.mxu0 0
  %5942 = vmatpush2.bf16.xpose.msra.mxu0 0
  %5943 = vmatprep.subr.bf16.mxu0 0
  %5944 = vmatpush2.bf16.xpose.msra.mxu0 0
  %5945 = vmatprep.subr.bf16.mxu0 0
  %5946 = vmatpush2.bf16.xpose.msra.mxu0 0
  %5947 = vmatprep.mubr.bf16.mxu0 0
  %5948 = vmatmul.mubr.bf16.gmra.mxu0 %v5910
  %v5949 = vpop.f32.mrf.mxu0
  %v5950 = vadd.f32 0.0, %v5949
  %v5951 = vpop.f32.mrf.mxu0
  %v5952 = vpop.f32.mrf.mxu0
  %v5953 = vpop.f32.mrf.mxu0
  %5954 = vdwg.mxu0
  %5955 = vrot.lane.b32.xlu0 %v5404, 112
  %v5956 = vpop.permute.xlu0 %5955
  %5957 = vrot.lane.b32.xlu0 %v5408, 112
  %v5958 = vpop.permute.xlu0 %5957
  %v5960 = vsel %vm275, %v5956, 0
  %v5963 = vsel %vm275, %v5958, 0
  %5965 = vmatprep.subr.bf16.mxu0 0
  %5966 = vmatpush1.bf16.xpose.msra.mxu0 0
  %5967 = vmatprep.subr.bf16.mxu0 0
  %5968 = vmatpush1.bf16.xpose.msra.mxu0 0
  %5969 = vmatprep.subr.bf16.mxu0 0
  %5970 = vmatpush1.bf16.xpose.msra.mxu0 0
  %5971 = vmatprep.subr.bf16.mxu0 0
  %5972 = vmatpush1.bf16.xpose.msra.mxu0 0
  %5973 = vmatprep.subr.bf16.mxu0 0
  %5974 = vmatpush1.bf16.xpose.msra.mxu0 0
  %5975 = vmatprep.subr.bf16.mxu0 0
  %5976 = vmatpush1.bf16.xpose.msra.mxu0 0
  %5977 = vmatprep.subr.bf16.mxu0 0
  %5978 = vmatpush1.bf16.xpose.msra.mxu0 0
  %5979 = vmatprep.subr.bf16.mxu0 0
  %5980 = vmatpush1.bf16.xpose.msra.mxu0 %v5963
  %5981 = vmatprep.subr.bf16.mxu0 0
  %5982 = vmatpush2.bf16.xpose.msra.mxu0 0
  %5983 = vmatprep.subr.bf16.mxu0 0
  %5984 = vmatpush2.bf16.xpose.msra.mxu0 0
  %5985 = vmatprep.subr.bf16.mxu0 0
  %5986 = vmatpush2.bf16.xpose.msra.mxu0 0
  %5987 = vmatprep.subr.bf16.mxu0 0
  %5988 = vmatpush2.bf16.xpose.msra.mxu0 0
  %5989 = vmatprep.subr.bf16.mxu0 0
  %5990 = vmatpush2.bf16.xpose.msra.mxu0 0
  %5991 = vmatprep.subr.bf16.mxu0 0
  %5992 = vmatpush2.bf16.xpose.msra.mxu0 0
  %5993 = vmatprep.subr.bf16.mxu0 0
  %5994 = vmatpush2.bf16.xpose.msra.mxu0 0
  %5995 = vmatprep.subr.bf16.mxu0 0
  %5996 = vmatpush2.bf16.xpose.msra.mxu0 0
  %5997 = vmatprep.mubr.bf16.mxu0 0
  %5998 = vmatmul.mubr.bf16.gmra.mxu0 %v5960
  %v5999 = vpop.f32.mrf.mxu0
  %v6000 = vadd.f32 0.0, %v5999
  %v6001 = vpop.f32.mrf.mxu0
  %v6002 = vpop.f32.mrf.mxu0
  %v6003 = vpop.f32.mrf.mxu0
  %6004 = vdwg.mxu0
  %6005 = vrot.lane.b32.xlu0 %v5401, 104
  %v6006 = vpop.permute.xlu0 %6005
  %6007 = vrot.lane.b32.xlu0 %v5405, 104
  %v6008 = vpop.permute.xlu0 %6007
  %v6010 = vsel %vm275, %v6006, 0
  %v6013 = vsel %vm275, %v6008, 0
  %6015 = vmatprep.subr.bf16.mxu0 0
  %6016 = vmatpush1.bf16.xpose.msra.mxu0 0
  %6017 = vmatprep.subr.bf16.mxu0 0
  %6018 = vmatpush1.bf16.xpose.msra.mxu0 0
  %6019 = vmatprep.subr.bf16.mxu0 0
  %6020 = vmatpush1.bf16.xpose.msra.mxu0 0
  %6021 = vmatprep.subr.bf16.mxu0 0
  %6022 = vmatpush1.bf16.xpose.msra.mxu0 0
  %6023 = vmatprep.subr.bf16.mxu0 0
  %6024 = vmatpush1.bf16.xpose.msra.mxu0 0
  %6025 = vmatprep.subr.bf16.mxu0 0
  %6026 = vmatpush1.bf16.xpose.msra.mxu0 0
  %6027 = vmatprep.subr.bf16.mxu0 0
  %6028 = vmatpush1.bf16.xpose.msra.mxu0 0
  %6029 = vmatprep.subr.bf16.mxu0 0
  %6030 = vmatpush1.bf16.xpose.msra.mxu0 %v6013
  %6031 = vmatprep.subr.bf16.mxu0 0
  %6032 = vmatpush2.bf16.xpose.msra.mxu0 0
  %6033 = vmatprep.subr.bf16.mxu0 0
  %6034 = vmatpush2.bf16.xpose.msra.mxu0 0
  %6035 = vmatprep.subr.bf16.mxu0 0
  %6036 = vmatpush2.bf16.xpose.msra.mxu0 0
  %6037 = vmatprep.subr.bf16.mxu0 0
  %6038 = vmatpush2.bf16.xpose.msra.mxu0 0
  %6039 = vmatprep.subr.bf16.mxu0 0
  %6040 = vmatpush2.bf16.xpose.msra.mxu0 0
  %6041 = vmatprep.subr.bf16.mxu0 0
  %6042 = vmatpush2.bf16.xpose.msra.mxu0 0
  %6043 = vmatprep.subr.bf16.mxu0 0
  %6044 = vmatpush2.bf16.xpose.msra.mxu0 0
  %6045 = vmatprep.subr.bf16.mxu0 0
  %6046 = vmatpush2.bf16.xpose.msra.mxu0 0
  %6047 = vmatprep.mubr.bf16.mxu0 0
  %6048 = vmatmul.mubr.bf16.gmra.mxu0 %v6010
  %v6049 = vpop.f32.mrf.mxu0
  %v6050 = vadd.f32 0.0, %v6049
  %v6051 = vpop.f32.mrf.mxu0
  %v6052 = vpop.f32.mrf.mxu0
  %v6053 = vpop.f32.mrf.mxu0
  %6054 = vdwg.mxu0
  %6055 = vrot.lane.b32.xlu0 %v5402, 104
  %v6056 = vpop.permute.xlu0 %6055
  %6057 = vrot.lane.b32.xlu0 %v5406, 104
  %v6058 = vpop.permute.xlu0 %6057
  %v6060 = vsel %vm275, %v6056, 0
  %v6063 = vsel %vm275, %v6058, 0
  %6065 = vmatprep.subr.bf16.mxu0 0
  %6066 = vmatpush1.bf16.xpose.msra.mxu0 0
  %6067 = vmatprep.subr.bf16.mxu0 0
  %6068 = vmatpush1.bf16.xpose.msra.mxu0 0
  %6069 = vmatprep.subr.bf16.mxu0 0
  %6070 = vmatpush1.bf16.xpose.msra.mxu0 0
  %6071 = vmatprep.subr.bf16.mxu0 0
  %6072 = vmatpush1.bf16.xpose.msra.mxu0 0
  %6073 = vmatprep.subr.bf16.mxu0 0
  %6074 = vmatpush1.bf16.xpose.msra.mxu0 0
  %6075 = vmatprep.subr.bf16.mxu0 0
  %6076 = vmatpush1.bf16.xpose.msra.mxu0 0
  %6077 = vmatprep.subr.bf16.mxu0 0
  %6078 = vmatpush1.bf16.xpose.msra.mxu0 0
  %6079 = vmatprep.subr.bf16.mxu0 0
  %6080 = vmatpush1.bf16.xpose.msra.mxu0 %v6063
  %6081 = vmatprep.subr.bf16.mxu0 0
  %6082 = vmatpush2.bf16.xpose.msra.mxu0 0
  %6083 = vmatprep.subr.bf16.mxu0 0
  %6084 = vmatpush2.bf16.xpose.msra.mxu0 0
  %6085 = vmatprep.subr.bf16.mxu0 0
  %6086 = vmatpush2.bf16.xpose.msra.mxu0 0
  %6087 = vmatprep.subr.bf16.mxu0 0
  %6088 = vmatpush2.bf16.xpose.msra.mxu0 0
  %6089 = vmatprep.subr.bf16.mxu0 0
  %6090 = vmatpush2.bf16.xpose.msra.mxu0 0
  %6091 = vmatprep.subr.bf16.mxu0 0
  %6092 = vmatpush2.bf16.xpose.msra.mxu0 0
  %6093 = vmatprep.subr.bf16.mxu0 0
  %6094 = vmatpush2.bf16.xpose.msra.mxu0 0
  %6095 = vmatprep.subr.bf16.mxu0 0
  %6096 = vmatpush2.bf16.xpose.msra.mxu0 0
  %6097 = vmatprep.mubr.bf16.mxu0 0
  %6098 = vmatmul.mubr.bf16.gmra.mxu0 %v6060
  %v6099 = vpop.f32.mrf.mxu0
  %v6100 = vadd.f32 0.0, %v6099
  %v6101 = vpop.f32.mrf.mxu0
  %v6102 = vpop.f32.mrf.mxu0
  %v6103 = vpop.f32.mrf.mxu0
  %6104 = vdwg.mxu0
  %6105 = vrot.lane.b32.xlu0 %v5403, 104
  %v6106 = vpop.permute.xlu0 %6105
  %6107 = vrot.lane.b32.xlu0 %v5407, 104
  %v6108 = vpop.permute.xlu0 %6107
  %v6110 = vsel %vm275, %v6106, 0
  %v6113 = vsel %vm275, %v6108, 0
  %6115 = vmatprep.subr.bf16.mxu0 0
  %6116 = vmatpush1.bf16.xpose.msra.mxu0 0
  %6117 = vmatprep.subr.bf16.mxu0 0
  %6118 = vmatpush1.bf16.xpose.msra.mxu0 0
  %6119 = vmatprep.subr.bf16.mxu0 0
  %6120 = vmatpush1.bf16.xpose.msra.mxu0 0
  %6121 = vmatprep.subr.bf16.mxu0 0
  %6122 = vmatpush1.bf16.xpose.msra.mxu0 0
  %6123 = vmatprep.subr.bf16.mxu0 0
  %6124 = vmatpush1.bf16.xpose.msra.mxu0 0
  %6125 = vmatprep.subr.bf16.mxu0 0
  %6126 = vmatpush1.bf16.xpose.msra.mxu0 0
  %6127 = vmatprep.subr.bf16.mxu0 0
  %6128 = vmatpush1.bf16.xpose.msra.mxu0 0
  %6129 = vmatprep.subr.bf16.mxu0 0
  %6130 = vmatpush1.bf16.xpose.msra.mxu0 %v6113
  %6131 = vmatprep.subr.bf16.mxu0 0
  %6132 = vmatpush2.bf16.xpose.msra.mxu0 0
  %6133 = vmatprep.subr.bf16.mxu0 0
  %6134 = vmatpush2.bf16.xpose.msra.mxu0 0
  %6135 = vmatprep.subr.bf16.mxu0 0
  %6136 = vmatpush2.bf16.xpose.msra.mxu0 0
  %6137 = vmatprep.subr.bf16.mxu0 0
  %6138 = vmatpush2.bf16.xpose.msra.mxu0 0
  %6139 = vmatprep.subr.bf16.mxu0 0
  %6140 = vmatpush2.bf16.xpose.msra.mxu0 0
  %6141 = vmatprep.subr.bf16.mxu0 0
  %6142 = vmatpush2.bf16.xpose.msra.mxu0 0
  %6143 = vmatprep.subr.bf16.mxu0 0
  %6144 = vmatpush2.bf16.xpose.msra.mxu0 0
  %6145 = vmatprep.subr.bf16.mxu0 0
  %6146 = vmatpush2.bf16.xpose.msra.mxu0 0
  %6147 = vmatprep.mubr.bf16.mxu0 0
  %6148 = vmatmul.mubr.bf16.gmra.mxu0 %v6110
  %v6149 = vpop.f32.mrf.mxu0
  %v6150 = vadd.f32 0.0, %v6149
  %v6151 = vpop.f32.mrf.mxu0
  %v6152 = vpop.f32.mrf.mxu0
  %v6153 = vpop.f32.mrf.mxu0
  %6154 = vdwg.mxu0
  %6155 = vrot.lane.b32.xlu0 %v5404, 104
  %v6156 = vpop.permute.xlu0 %6155
  %6157 = vrot.lane.b32.xlu0 %v5408, 104
  %v6158 = vpop.permute.xlu0 %6157
  %v6160 = vsel %vm275, %v6156, 0
  %v6163 = vsel %vm275, %v6158, 0
  %6165 = vmatprep.subr.bf16.mxu0 0
  %6166 = vmatpush1.bf16.xpose.msra.mxu0 0
  %6167 = vmatprep.subr.bf16.mxu0 0
  %6168 = vmatpush1.bf16.xpose.msra.mxu0 0
  %6169 = vmatprep.subr.bf16.mxu0 0
  %6170 = vmatpush1.bf16.xpose.msra.mxu0 0
  %6171 = vmatprep.subr.bf16.mxu0 0
  %6172 = vmatpush1.bf16.xpose.msra.mxu0 0
  %6173 = vmatprep.subr.bf16.mxu0 0
  %6174 = vmatpush1.bf16.xpose.msra.mxu0 0
  %6175 = vmatprep.subr.bf16.mxu0 0
  %6176 = vmatpush1.bf16.xpose.msra.mxu0 0
  %6177 = vmatprep.subr.bf16.mxu0 0
  %6178 = vmatpush1.bf16.xpose.msra.mxu0 0
  %6179 = vmatprep.subr.bf16.mxu0 0
  %6180 = vmatpush1.bf16.xpose.msra.mxu0 %v6163
  %6181 = vmatprep.subr.bf16.mxu0 0
  %6182 = vmatpush2.bf16.xpose.msra.mxu0 0
  %6183 = vmatprep.subr.bf16.mxu0 0
  %6184 = vmatpush2.bf16.xpose.msra.mxu0 0
  %6185 = vmatprep.subr.bf16.mxu0 0
  %6186 = vmatpush2.bf16.xpose.msra.mxu0 0
  %6187 = vmatprep.subr.bf16.mxu0 0
  %6188 = vmatpush2.bf16.xpose.msra.mxu0 0
  %6189 = vmatprep.subr.bf16.mxu0 0
  %6190 = vmatpush2.bf16.xpose.msra.mxu0 0
  %6191 = vmatprep.subr.bf16.mxu0 0
  %6192 = vmatpush2.bf16.xpose.msra.mxu0 0
  %6193 = vmatprep.subr.bf16.mxu0 0
  %6194 = vmatpush2.bf16.xpose.msra.mxu0 0
  %6195 = vmatprep.subr.bf16.mxu0 0
  %6196 = vmatpush2.bf16.xpose.msra.mxu0 0
  %6197 = vmatprep.mubr.bf16.mxu0 0
  %6198 = vmatmul.mubr.bf16.gmra.mxu0 %v6160
  %v6199 = vpop.f32.mrf.mxu0
  %v6200 = vadd.f32 0.0, %v6199
  %v6201 = vpop.f32.mrf.mxu0
  %v6202 = vpop.f32.mrf.mxu0
  %v6203 = vpop.f32.mrf.mxu0
  %6204 = vdwg.mxu0
  %v6205 = vsel %vm275, %v5454, -inf
  %6206 = vmax.xlane.f32.xlu0 %v6205
  %v6207 = vpop.xlane.xlu0 %6206
  %v6208 = vsel %vm275, %v5644, -inf
  %6209 = vmax.xlane.f32.xlu0 %v6208
  %v6210 = vpop.xlane.xlu0 %6209
  %v6211 = vsel %vm275, %v5850, -inf
  %6212 = vmax.xlane.f32.xlu0 %v6211
  %v6213 = vpop.xlane.xlu0 %6212
  %v6214 = vsel %vm275, %v6050, -inf
  %6215 = vmax.xlane.f32.xlu0 %v6214
  %v6216 = vpop.xlane.xlu0 %6215
  %v6217 = vsel %vm275, %v5500, -inf
  %6218 = vmax.xlane.f32.xlu0 %v6217
  %v6219 = vpop.xlane.xlu0 %6218
  %v6220 = vsel %vm275, %v5696, -inf
  %6221 = vmax.xlane.f32.xlu0 %v6220
  %v6222 = vpop.xlane.xlu0 %6221
  %v6223 = vsel %vm275, %v5900, -inf
  %6224 = vmax.xlane.f32.xlu0 %v6223
  %v6225 = vpop.xlane.xlu0 %6224
  %v6226 = vsel %vm275, %v6100, -inf
  %6227 = vmax.xlane.f32.xlu0 %v6226
  %v6228 = vpop.xlane.xlu0 %6227
  %v6229 = vsel %vm275, %v5546, -inf
  %6230 = vmax.xlane.f32.xlu0 %v6229
  %v6231 = vpop.xlane.xlu0 %6230
  %v6232 = vsel %vm275, %v5748, -inf
  %6233 = vmax.xlane.f32.xlu0 %v6232
  %v6234 = vpop.xlane.xlu0 %6233
  %v6235 = vsel %vm275, %v5950, -inf
  %6236 = vmax.xlane.f32.xlu0 %v6235
  %v6237 = vpop.xlane.xlu0 %6236
  %v6238 = vsel %vm275, %v6150, -inf
  %6239 = vmax.xlane.f32.xlu0 %v6238
  %v6240 = vpop.xlane.xlu0 %6239
  %v6241 = vsel %vm275, %v5592, -inf
  %6242 = vmax.xlane.f32.xlu0 %v6241
  %v6243 = vpop.xlane.xlu0 %6242
  %v6244 = vsel %vm275, %v5800, -inf
  %6245 = vmax.xlane.f32.xlu0 %v6244
  %v6246 = vpop.xlane.xlu0 %6245
  %v6247 = vsel %vm275, %v6000, -inf
  %6248 = vmax.xlane.f32.xlu0 %v6247
  %v6249 = vpop.xlane.xlu0 %6248
  %v6250 = vsel %vm275, %v6200, -inf
  %6251 = vmax.xlane.f32.xlu0 %v6250
  %v6252 = vpop.xlane.xlu0 %6251
  %v6253 = vsub.f32 %v5454, %v6207
  %v6254 = vsub.f32 %v5644, %v6210
  %v6255 = vsub.f32 %v5850, %v6213
  %v6256 = vsub.f32 %v6050, %v6216
  %v6257 = vsub.f32 %v5500, %v6219
  %v6258 = vsub.f32 %v5696, %v6222
  %v6259 = vsub.f32 %v5900, %v6225
  %v6260 = vsub.f32 %v6100, %v6228
  %v6261 = vsub.f32 %v5546, %v6231
  %v6262 = vsub.f32 %v5748, %v6234
  %v6263 = vsub.f32 %v5950, %v6237
  %v6264 = vsub.f32 %v6150, %v6240
  %v6265 = vsub.f32 %v5592, %v6243
  %v6266 = vsub.f32 %v5800, %v6246
  %v6267 = vsub.f32 %v6000, %v6249
  %v6268 = vsub.f32 %v6200, %v6252
  %v6269 = vmul.f32 %v6253, 1.442695
  %v6270 = vpow.pop %v6269
  %v6271 = vmul.f32 %v6254, 1.442695
  %v6272 = vpow.pop %v6271
  %v6273 = vmul.f32 %v6255, 1.442695
  %v6274 = vpow.pop %v6273
  %v6275 = vmul.f32 %v6256, 1.442695
  %v6276 = vpow.pop %v6275
  %v6277 = vmul.f32 %v6257, 1.442695
  %v6278 = vpow.pop %v6277
  %v6279 = vmul.f32 %v6258, 1.442695
  %v6280 = vpow.pop %v6279
  %v6281 = vmul.f32 %v6259, 1.442695
  %v6282 = vpow.pop %v6281
  %v6283 = vmul.f32 %v6260, 1.442695
  %v6284 = vpow.pop %v6283
  %v6285 = vmul.f32 %v6261, 1.442695
  %v6286 = vpow.pop %v6285
  %v6287 = vmul.f32 %v6262, 1.442695
  %v6288 = vpow.pop %v6287
  %v6289 = vmul.f32 %v6263, 1.442695
  %v6290 = vpow.pop %v6289
  %v6291 = vmul.f32 %v6264, 1.442695
  %v6292 = vpow.pop %v6291
  %v6293 = vmul.f32 %v6265, 1.442695
  %v6294 = vpow.pop %v6293
  %v6295 = vmul.f32 %v6266, 1.442695
  %v6296 = vpow.pop %v6295
  %v6297 = vmul.f32 %v6267, 1.442695
  %v6298 = vpow.pop %v6297
  %v6299 = vmul.f32 %v6268, 1.442695
  %v6300 = vpow.pop %v6299
  %v6301 = vsel %vm275, %v6270, 0.0
  %6302 = vadd.xlane.f32.xlu0 %v6301
  %v6303 = vpop.xlane.xlu0 %6302
  %v6304 = vsel %vm275, %v6272, 0.0
  %6305 = vadd.xlane.f32.xlu0 %v6304
  %v6306 = vpop.xlane.xlu0 %6305
  %v6307 = vsel %vm275, %v6274, 0.0
  %6308 = vadd.xlane.f32.xlu0 %v6307
  %v6309 = vpop.xlane.xlu0 %6308
  %v6310 = vsel %vm275, %v6276, 0.0
  %6311 = vadd.xlane.f32.xlu0 %v6310
  %v6312 = vpop.xlane.xlu0 %6311
  %v6313 = vsel %vm275, %v6278, 0.0
  %6314 = vadd.xlane.f32.xlu0 %v6313
  %v6315 = vpop.xlane.xlu0 %6314
  %v6316 = vsel %vm275, %v6280, 0.0
  %6317 = vadd.xlane.f32.xlu0 %v6316
  %v6318 = vpop.xlane.xlu0 %6317
  %v6319 = vsel %vm275, %v6282, 0.0
  %6320 = vadd.xlane.f32.xlu0 %v6319
  %v6321 = vpop.xlane.xlu0 %6320
  %v6322 = vsel %vm275, %v6284, 0.0
  %6323 = vadd.xlane.f32.xlu0 %v6322
  %v6324 = vpop.xlane.xlu0 %6323
  %v6325 = vsel %vm275, %v6286, 0.0
  %6326 = vadd.xlane.f32.xlu0 %v6325
  %v6327 = vpop.xlane.xlu0 %6326
  %v6328 = vsel %vm275, %v6288, 0.0
  %6329 = vadd.xlane.f32.xlu0 %v6328
  %v6330 = vpop.xlane.xlu0 %6329
  %v6331 = vsel %vm275, %v6290, 0.0
  %6332 = vadd.xlane.f32.xlu0 %v6331
  %v6333 = vpop.xlane.xlu0 %6332
  %v6334 = vsel %vm275, %v6292, 0.0
  %6335 = vadd.xlane.f32.xlu0 %v6334
  %v6336 = vpop.xlane.xlu0 %6335
  %v6337 = vsel %vm275, %v6294, 0.0
  %6338 = vadd.xlane.f32.xlu0 %v6337
  %v6339 = vpop.xlane.xlu0 %6338
  %v6340 = vsel %vm275, %v6296, 0.0
  %6341 = vadd.xlane.f32.xlu0 %v6340
  %v6342 = vpop.xlane.xlu0 %6341
  %v6343 = vsel %vm275, %v6298, 0.0
  %6344 = vadd.xlane.f32.xlu0 %v6343
  %v6345 = vpop.xlane.xlu0 %6344
  %v6346 = vsel %vm275, %v6300, 0.0
  %6347 = vadd.xlane.f32.xlu0 %v6346
  %v6348 = vpop.xlane.xlu0 %6347
  %v6349 = vrcp.pop %v6303
  %v6350 = vrcp.pop %v6306
  %v6351 = vrcp.pop %v6309
  %v6352 = vrcp.pop %v6312
  %v6353 = vrcp.pop %v6315
  %v6354 = vrcp.pop %v6318
  %v6355 = vrcp.pop %v6321
  %v6356 = vrcp.pop %v6324
  %v6357 = vrcp.pop %v6327
  %v6358 = vrcp.pop %v6330
  %v6359 = vrcp.pop %v6333
  %v6360 = vrcp.pop %v6336
  %v6361 = vrcp.pop %v6339
  %v6362 = vrcp.pop %v6342
  %v6363 = vrcp.pop %v6345
  %v6364 = vrcp.pop %v6348
  %v6365 = vmul.f32 %v6270, %v6349
  %v6366 = vmul.f32 %v6272, %v6350
  %v6367 = vmul.f32 %v6274, %v6351
  %v6368 = vmul.f32 %v6276, %v6352
  %v6369 = vmul.f32 %v6278, %v6353
  %v6370 = vmul.f32 %v6280, %v6354
  %v6371 = vmul.f32 %v6282, %v6355
  %v6372 = vmul.f32 %v6284, %v6356
  %v6373 = vmul.f32 %v6286, %v6357
  %v6374 = vmul.f32 %v6288, %v6358
  %v6375 = vmul.f32 %v6290, %v6359
  %v6376 = vmul.f32 %v6292, %v6360
  %v6377 = vmul.f32 %v6294, %v6361
  %v6378 = vmul.f32 %v6296, %v6362
  %v6379 = vmul.f32 %v6298, %v6363
  %v6380 = vmul.f32 %v6300, %v6364
  %v6381 = vpack.c.bf16 %v6365, %v6365
  %v6382 = vpack.c.bf16 %v6366, %v6366
  %v6383 = vpack.c.bf16 %v6367, %v6367
  %v6384 = vpack.c.bf16 %v6368, %v6368
  %v6385 = vpack.c.bf16 %v6369, %v6369
  %v6386 = vpack.c.bf16 %v6370, %v6370
  %v6387 = vpack.c.bf16 %v6371, %v6371
  %v6388 = vpack.c.bf16 %v6372, %v6372
  %v6389 = vpack.c.bf16 %v6373, %v6373
  %v6390 = vpack.c.bf16 %v6374, %v6374
  %v6391 = vpack.c.bf16 %v6375, %v6375
  %v6392 = vpack.c.bf16 %v6376, %v6376
  %v6393 = vpack.c.bf16 %v6377, %v6377
  %v6394 = vpack.c.bf16 %v6378, %v6378
  %v6395 = vpack.c.bf16 %v6379, %v6379
  %v6396 = vpack.c.bf16 %v6380, %v6380
  %v6398 = vsel %vm275, %v6381, 0
  %v6401 = vsel %vm1263, %v5409, 0
  %6403 = vmatprep.subr.bf16.mxu0 0
  %6404 = vmatpush1.bf16.msra.mxu0 0
  %6405 = vmatprep.subr.bf16.mxu0 0
  %6406 = vmatpush1.bf16.msra.mxu0 0
  %6407 = vmatprep.subr.bf16.mxu0 0
  %6408 = vmatpush1.bf16.msra.mxu0 0
  %6409 = vmatprep.subr.bf16.mxu0 0
  %6410 = vmatpush1.bf16.msra.mxu0 0
  %6411 = vmatprep.subr.bf16.mxu0 0
  %6412 = vmatpush1.bf16.msra.mxu0 0
  %6413 = vmatprep.subr.bf16.mxu0 0
  %6414 = vmatpush1.bf16.msra.mxu0 0
  %6415 = vmatprep.subr.bf16.mxu0 0
  %6416 = vmatpush1.bf16.msra.mxu0 0
  %6417 = vmatprep.subr.bf16.mxu0 0
  %6418 = vmatpush1.bf16.msra.mxu0 %v6401
  %6419 = vmatprep.subr.bf16.mxu0 0
  %6420 = vmatpush2.bf16.msra.mxu0 0
  %6421 = vmatprep.subr.bf16.mxu0 0
  %6422 = vmatpush2.bf16.msra.mxu0 0
  %6423 = vmatprep.subr.bf16.mxu0 0
  %6424 = vmatpush2.bf16.msra.mxu0 0
  %6425 = vmatprep.subr.bf16.mxu0 0
  %6426 = vmatpush2.bf16.msra.mxu0 0
  %6427 = vmatprep.subr.bf16.mxu0 0
  %6428 = vmatpush2.bf16.msra.mxu0 0
  %6429 = vmatprep.subr.bf16.mxu0 0
  %6430 = vmatpush2.bf16.msra.mxu0 0
  %6431 = vmatprep.subr.bf16.mxu0 0
  %6432 = vmatpush2.bf16.msra.mxu0 0
  %6433 = vmatprep.subr.bf16.mxu0 0
  %6434 = vmatpush2.bf16.msra.mxu0 0
  %6435 = vmatprep.mubr.bf16.mxu0 0
  %6436 = vmatmul.mubr.bf16.gmra.mxu0 %v6398
  %v6437 = vpop.f32.mrf.mxu0
  %v6438 = vadd.f32 0.0, %v6437
  %v6439 = vpop.f32.mrf.mxu0
  %v6440 = vpop.f32.mrf.mxu0
  %v6441 = vpop.f32.mrf.mxu0
  %6442 = vdwg.mxu0
  %v6444 = vsel %vm275, %v6385, 0
  %v6447 = vsel %vm1263, %v5410, 0
  %6449 = vmatprep.subr.bf16.mxu0 0
  %6450 = vmatpush1.bf16.msra.mxu0 0
  %6451 = vmatprep.subr.bf16.mxu0 0
  %6452 = vmatpush1.bf16.msra.mxu0 0
  %6453 = vmatprep.subr.bf16.mxu0 0
  %6454 = vmatpush1.bf16.msra.mxu0 0
  %6455 = vmatprep.subr.bf16.mxu0 0
  %6456 = vmatpush1.bf16.msra.mxu0 0
  %6457 = vmatprep.subr.bf16.mxu0 0
  %6458 = vmatpush1.bf16.msra.mxu0 0
  %6459 = vmatprep.subr.bf16.mxu0 0
  %6460 = vmatpush1.bf16.msra.mxu0 0
  %6461 = vmatprep.subr.bf16.mxu0 0
  %6462 = vmatpush1.bf16.msra.mxu0 0
  %6463 = vmatprep.subr.bf16.mxu0 0
  %6464 = vmatpush1.bf16.msra.mxu0 %v6447
  %6465 = vmatprep.subr.bf16.mxu0 0
  %6466 = vmatpush2.bf16.msra.mxu0 0
  %6467 = vmatprep.subr.bf16.mxu0 0
  %6468 = vmatpush2.bf16.msra.mxu0 0
  %6469 = vmatprep.subr.bf16.mxu0 0
  %6470 = vmatpush2.bf16.msra.mxu0 0
  %6471 = vmatprep.subr.bf16.mxu0 0
  %6472 = vmatpush2.bf16.msra.mxu0 0
  %6473 = vmatprep.subr.bf16.mxu0 0
  %6474 = vmatpush2.bf16.msra.mxu0 0
  %6475 = vmatprep.subr.bf16.mxu0 0
  %6476 = vmatpush2.bf16.msra.mxu0 0
  %6477 = vmatprep.subr.bf16.mxu0 0
  %6478 = vmatpush2.bf16.msra.mxu0 0
  %6479 = vmatprep.subr.bf16.mxu0 0
  %6480 = vmatpush2.bf16.msra.mxu0 0
  %6481 = vmatprep.mubr.bf16.mxu0 0
  %6482 = vmatmul.mubr.bf16.gmra.mxu0 %v6444
  %v6483 = vpop.f32.mrf.mxu0
  %v6484 = vadd.f32 0.0, %v6483
  %v6485 = vpop.f32.mrf.mxu0
  %v6486 = vpop.f32.mrf.mxu0
  %v6487 = vpop.f32.mrf.mxu0
  %6488 = vdwg.mxu0
  %v6490 = vsel %vm275, %v6389, 0
  %v6493 = vsel %vm1263, %v5411, 0
  %6495 = vmatprep.subr.bf16.mxu0 0
  %6496 = vmatpush1.bf16.msra.mxu0 0
  %6497 = vmatprep.subr.bf16.mxu0 0
  %6498 = vmatpush1.bf16.msra.mxu0 0
  %6499 = vmatprep.subr.bf16.mxu0 0
  %6500 = vmatpush1.bf16.msra.mxu0 0
  %6501 = vmatprep.subr.bf16.mxu0 0
  %6502 = vmatpush1.bf16.msra.mxu0 0
  %6503 = vmatprep.subr.bf16.mxu0 0
  %6504 = vmatpush1.bf16.msra.mxu0 0
  %6505 = vmatprep.subr.bf16.mxu0 0
  %6506 = vmatpush1.bf16.msra.mxu0 0
  %6507 = vmatprep.subr.bf16.mxu0 0
  %6508 = vmatpush1.bf16.msra.mxu0 0
  %6509 = vmatprep.subr.bf16.mxu0 0
  %6510 = vmatpush1.bf16.msra.mxu0 %v6493
  %6511 = vmatprep.subr.bf16.mxu0 0
  %6512 = vmatpush2.bf16.msra.mxu0 0
  %6513 = vmatprep.subr.bf16.mxu0 0
  %6514 = vmatpush2.bf16.msra.mxu0 0
  %6515 = vmatprep.subr.bf16.mxu0 0
  %6516 = vmatpush2.bf16.msra.mxu0 0
  %6517 = vmatprep.subr.bf16.mxu0 0
  %6518 = vmatpush2.bf16.msra.mxu0 0
  %6519 = vmatprep.subr.bf16.mxu0 0
  %6520 = vmatpush2.bf16.msra.mxu0 0
  %6521 = vmatprep.subr.bf16.mxu0 0
  %6522 = vmatpush2.bf16.msra.mxu0 0
  %6523 = vmatprep.subr.bf16.mxu0 0
  %6524 = vmatpush2.bf16.msra.mxu0 0
  %6525 = vmatprep.subr.bf16.mxu0 0
  %6526 = vmatpush2.bf16.msra.mxu0 0
  %6527 = vmatprep.mubr.bf16.mxu0 0
  %6528 = vmatmul.mubr.bf16.gmra.mxu0 %v6490
  %v6529 = vpop.f32.mrf.mxu0
  %v6530 = vadd.f32 0.0, %v6529
  %v6531 = vpop.f32.mrf.mxu0
  %v6532 = vpop.f32.mrf.mxu0
  %v6533 = vpop.f32.mrf.mxu0
  %6534 = vdwg.mxu0
  %v6536 = vsel %vm275, %v6393, 0
  %v6539 = vsel %vm1263, %v5412, 0
  %6541 = vmatprep.subr.bf16.mxu0 0
  %6542 = vmatpush1.bf16.msra.mxu0 0
  %6543 = vmatprep.subr.bf16.mxu0 0
  %6544 = vmatpush1.bf16.msra.mxu0 0
  %6545 = vmatprep.subr.bf16.mxu0 0
  %6546 = vmatpush1.bf16.msra.mxu0 0
  %6547 = vmatprep.subr.bf16.mxu0 0
  %6548 = vmatpush1.bf16.msra.mxu0 0
  %6549 = vmatprep.subr.bf16.mxu0 0
  %6550 = vmatpush1.bf16.msra.mxu0 0
  %6551 = vmatprep.subr.bf16.mxu0 0
  %6552 = vmatpush1.bf16.msra.mxu0 0
  %6553 = vmatprep.subr.bf16.mxu0 0
  %6554 = vmatpush1.bf16.msra.mxu0 0
  %6555 = vmatprep.subr.bf16.mxu0 0
  %6556 = vmatpush1.bf16.msra.mxu0 %v6539
  %6557 = vmatprep.subr.bf16.mxu0 0
  %6558 = vmatpush2.bf16.msra.mxu0 0
  %6559 = vmatprep.subr.bf16.mxu0 0
  %6560 = vmatpush2.bf16.msra.mxu0 0
  %6561 = vmatprep.subr.bf16.mxu0 0
  %6562 = vmatpush2.bf16.msra.mxu0 0
  %6563 = vmatprep.subr.bf16.mxu0 0
  %6564 = vmatpush2.bf16.msra.mxu0 0
  %6565 = vmatprep.subr.bf16.mxu0 0
  %6566 = vmatpush2.bf16.msra.mxu0 0
  %6567 = vmatprep.subr.bf16.mxu0 0
  %6568 = vmatpush2.bf16.msra.mxu0 0
  %6569 = vmatprep.subr.bf16.mxu0 0
  %6570 = vmatpush2.bf16.msra.mxu0 0
  %6571 = vmatprep.subr.bf16.mxu0 0
  %6572 = vmatpush2.bf16.msra.mxu0 0
  %6573 = vmatprep.mubr.bf16.mxu0 0
  %6574 = vmatmul.mubr.bf16.gmra.mxu0 %v6536
  %v6575 = vpop.f32.mrf.mxu0
  %v6576 = vadd.f32 0.0, %v6575
  %v6577 = vpop.f32.mrf.mxu0
  %v6578 = vpop.f32.mrf.mxu0
  %v6579 = vpop.f32.mrf.mxu0
  %6580 = vdwg.mxu0
  %v6581 = vpack.c.bf16 %v6484, %v6438
  %v6582 = vpack.c.bf16 %v6576, %v6530
  %v6584 = vsel %vm275, %v6581, 0
  %v6587 = vsel %vm275, %v6582, 0
  %v6590 = vsel %vm1263, %v5190, 0
  %6592 = vmatprep.subr.bf16.mxu0 0
  %6593 = vmatpush1.bf16.msra.mxu0 0
  %6594 = vmatprep.subr.bf16.mxu0 0
  %6595 = vmatpush1.bf16.msra.mxu0 0
  %6596 = vmatprep.subr.bf16.mxu0 0
  %6597 = vmatpush1.bf16.msra.mxu0 0
  %6598 = vmatprep.subr.bf16.mxu0 0
  %6599 = vmatpush1.bf16.msra.mxu0 0
  %6600 = vmatprep.subr.bf16.mxu0 0
  %6601 = vmatpush1.bf16.msra.mxu0 0
  %6602 = vmatprep.subr.bf16.mxu0 0
  %6603 = vmatpush1.bf16.msra.mxu0 0
  %6604 = vmatprep.subr.bf16.mxu0 0
  %6605 = vmatpush1.bf16.msra.mxu0 0
  %6606 = vmatprep.subr.bf16.mxu0 0
  %6607 = vmatpush1.bf16.msra.mxu0 %v6590
  %6608 = vmatprep.subr.bf16.mxu0 0
  %6609 = vmatpush2.bf16.msra.mxu0 0
  %6610 = vmatprep.subr.bf16.mxu0 0
  %6611 = vmatpush2.bf16.msra.mxu0 0
  %6612 = vmatprep.subr.bf16.mxu0 0
  %6613 = vmatpush2.bf16.msra.mxu0 0
  %6614 = vmatprep.subr.bf16.mxu0 0
  %6615 = vmatpush2.bf16.msra.mxu0 0
  %6616 = vmatprep.subr.bf16.mxu0 0
  %6617 = vmatpush2.bf16.msra.mxu0 0
  %6618 = vmatprep.subr.bf16.mxu0 0
  %6619 = vmatpush2.bf16.msra.mxu0 0
  %6620 = vmatprep.subr.bf16.mxu0 0
  %6621 = vmatpush2.bf16.msra.mxu0 0
  %6622 = vmatprep.subr.bf16.mxu0 0
  %6623 = vmatpush2.bf16.msra.mxu0 0
  %6624 = vmatprep.mubr.bf16.mxu0 0
  %6625 = vmatmul.mubr.bf16.gmra.mxu0 %v6584
  %v6626 = vpop.f32.mrf.mxu0
  %v6627 = vadd.f32 0.0, %v6626
  %v6628 = vpop.f32.mrf.mxu0
  %v6629 = vpop.f32.mrf.mxu0
  %v6630 = vadd.f32 0.0, %v6629
  %v6631 = vpop.f32.mrf.mxu0
  %6632 = vmatprep.mubr.bf16.mxu0 0
  %6633 = vmatmul.mubr.bf16.gmra.mxu0 %v6587
  %v6634 = vpop.f32.mrf.mxu0
  %v6635 = vadd.f32 0.0, %v6634
  %v6636 = vpop.f32.mrf.mxu0
  %v6637 = vpop.f32.mrf.mxu0
  %v6638 = vadd.f32 0.0, %v6637
  %v6639 = vpop.f32.mrf.mxu0
  %6640 = vdwg.mxu0
  %v6641 = vlaneseq
  %v6642 = vshrl.u32 %v6641, 7
  %v6643 = vsub.s32 3, %v6642
  %v6644 = vrot.slane %v5174, %v6643
  %v6645 = vadd.f32 %v6644, %v6627
  %v6646 = vadd.f32 %v6644, %v6630
  %v6647 = vadd.f32 %v6644, %v6635
  %v6648 = vadd.f32 %v6644, %v6638
  %6650 = vrot.lane.b32.xlu0 %v5409, 120
  %v6651 = vpop.permute.xlu0 %6650
  %v6653 = vsel %vm275, %v6382, 0
  %v6656 = vsel %vm1263, %v6651, 0
  %6658 = vmatprep.subr.bf16.mxu0 0
  %6659 = vmatpush1.bf16.msra.mxu0 0
  %6660 = vmatprep.subr.bf16.mxu0 0
  %6661 = vmatpush1.bf16.msra.mxu0 0
  %6662 = vmatprep.subr.bf16.mxu0 0
  %6663 = vmatpush1.bf16.msra.mxu0 0
  %6664 = vmatprep.subr.bf16.mxu0 0
  %6665 = vmatpush1.bf16.msra.mxu0 0
  %6666 = vmatprep.subr.bf16.mxu0 0
  %6667 = vmatpush1.bf16.msra.mxu0 0
  %6668 = vmatprep.subr.bf16.mxu0 0
  %6669 = vmatpush1.bf16.msra.mxu0 0
  %6670 = vmatprep.subr.bf16.mxu0 0
  %6671 = vmatpush1.bf16.msra.mxu0 0
  %6672 = vmatprep.subr.bf16.mxu0 0
  %6673 = vmatpush1.bf16.msra.mxu0 %v6656
  %6674 = vmatprep.subr.bf16.mxu0 0
  %6675 = vmatpush2.bf16.msra.mxu0 0
  %6676 = vmatprep.subr.bf16.mxu0 0
  %6677 = vmatpush2.bf16.msra.mxu0 0
  %6678 = vmatprep.subr.bf16.mxu0 0
  %6679 = vmatpush2.bf16.msra.mxu0 0
  %6680 = vmatprep.subr.bf16.mxu0 0
  %6681 = vmatpush2.bf16.msra.mxu0 0
  %6682 = vmatprep.subr.bf16.mxu0 0
  %6683 = vmatpush2.bf16.msra.mxu0 0
  %6684 = vmatprep.subr.bf16.mxu0 0
  %6685 = vmatpush2.bf16.msra.mxu0 0
  %6686 = vmatprep.subr.bf16.mxu0 0
  %6687 = vmatpush2.bf16.msra.mxu0 0
  %6688 = vmatprep.subr.bf16.mxu0 0
  %6689 = vmatpush2.bf16.msra.mxu0 0
  %6690 = vmatprep.mubr.bf16.mxu0 0
  %6691 = vmatmul.mubr.bf16.gmra.mxu0 %v6653
  %v6692 = vpop.f32.mrf.mxu0
  %v6693 = vadd.f32 0.0, %v6692
  %v6694 = vpop.f32.mrf.mxu0
  %v6695 = vpop.f32.mrf.mxu0
  %v6696 = vpop.f32.mrf.mxu0
  %6697 = vdwg.mxu0
  %6699 = vrot.lane.b32.xlu0 %v5410, 120
  %v6700 = vpop.permute.xlu0 %6699
  %v6702 = vsel %vm275, %v6386, 0
  %v6705 = vsel %vm1263, %v6700, 0
  %6707 = vmatprep.subr.bf16.mxu0 0
  %6708 = vmatpush1.bf16.msra.mxu0 0
  %6709 = vmatprep.subr.bf16.mxu0 0
  %6710 = vmatpush1.bf16.msra.mxu0 0
  %6711 = vmatprep.subr.bf16.mxu0 0
  %6712 = vmatpush1.bf16.msra.mxu0 0
  %6713 = vmatprep.subr.bf16.mxu0 0
  %6714 = vmatpush1.bf16.msra.mxu0 0
  %6715 = vmatprep.subr.bf16.mxu0 0
  %6716 = vmatpush1.bf16.msra.mxu0 0
  %6717 = vmatprep.subr.bf16.mxu0 0
  %6718 = vmatpush1.bf16.msra.mxu0 0
  %6719 = vmatprep.subr.bf16.mxu0 0
  %6720 = vmatpush1.bf16.msra.mxu0 0
  %6721 = vmatprep.subr.bf16.mxu0 0
  %6722 = vmatpush1.bf16.msra.mxu0 %v6705
  %6723 = vmatprep.subr.bf16.mxu0 0
  %6724 = vmatpush2.bf16.msra.mxu0 0
  %6725 = vmatprep.subr.bf16.mxu0 0
  %6726 = vmatpush2.bf16.msra.mxu0 0
  %6727 = vmatprep.subr.bf16.mxu0 0
  %6728 = vmatpush2.bf16.msra.mxu0 0
  %6729 = vmatprep.subr.bf16.mxu0 0
  %6730 = vmatpush2.bf16.msra.mxu0 0
  %6731 = vmatprep.subr.bf16.mxu0 0
  %6732 = vmatpush2.bf16.msra.mxu0 0
  %6733 = vmatprep.subr.bf16.mxu0 0
  %6734 = vmatpush2.bf16.msra.mxu0 0
  %6735 = vmatprep.subr.bf16.mxu0 0
  %6736 = vmatpush2.bf16.msra.mxu0 0
  %6737 = vmatprep.subr.bf16.mxu0 0
  %6738 = vmatpush2.bf16.msra.mxu0 0
  %6739 = vmatprep.mubr.bf16.mxu0 0
  %6740 = vmatmul.mubr.bf16.gmra.mxu0 %v6702
  %v6741 = vpop.f32.mrf.mxu0
  %v6742 = vadd.f32 0.0, %v6741
  %v6743 = vpop.f32.mrf.mxu0
  %v6744 = vpop.f32.mrf.mxu0
  %v6745 = vpop.f32.mrf.mxu0
  %6746 = vdwg.mxu0
  %6748 = vrot.lane.b32.xlu0 %v5411, 120
  %v6749 = vpop.permute.xlu0 %6748
  %v6751 = vsel %vm275, %v6390, 0
  %v6754 = vsel %vm1263, %v6749, 0
  %6756 = vmatprep.subr.bf16.mxu0 0
  %6757 = vmatpush1.bf16.msra.mxu0 0
  %6758 = vmatprep.subr.bf16.mxu0 0
  %6759 = vmatpush1.bf16.msra.mxu0 0
  %6760 = vmatprep.subr.bf16.mxu0 0
  %6761 = vmatpush1.bf16.msra.mxu0 0
  %6762 = vmatprep.subr.bf16.mxu0 0
  %6763 = vmatpush1.bf16.msra.mxu0 0
  %6764 = vmatprep.subr.bf16.mxu0 0
  %6765 = vmatpush1.bf16.msra.mxu0 0
  %6766 = vmatprep.subr.bf16.mxu0 0
  %6767 = vmatpush1.bf16.msra.mxu0 0
  %6768 = vmatprep.subr.bf16.mxu0 0
  %6769 = vmatpush1.bf16.msra.mxu0 0
  %6770 = vmatprep.subr.bf16.mxu0 0
  %6771 = vmatpush1.bf16.msra.mxu0 %v6754
  %6772 = vmatprep.subr.bf16.mxu0 0
  %6773 = vmatpush2.bf16.msra.mxu0 0
  %6774 = vmatprep.subr.bf16.mxu0 0
  %6775 = vmatpush2.bf16.msra.mxu0 0
  %6776 = vmatprep.subr.bf16.mxu0 0
  %6777 = vmatpush2.bf16.msra.mxu0 0
  %6778 = vmatprep.subr.bf16.mxu0 0
  %6779 = vmatpush2.bf16.msra.mxu0 0
  %6780 = vmatprep.subr.bf16.mxu0 0
  %6781 = vmatpush2.bf16.msra.mxu0 0
  %6782 = vmatprep.subr.bf16.mxu0 0
  %6783 = vmatpush2.bf16.msra.mxu0 0
  %6784 = vmatprep.subr.bf16.mxu0 0
  %6785 = vmatpush2.bf16.msra.mxu0 0
  %6786 = vmatprep.subr.bf16.mxu0 0
  %6787 = vmatpush2.bf16.msra.mxu0 0
  %6788 = vmatprep.mubr.bf16.mxu0 0
  %6789 = vmatmul.mubr.bf16.gmra.mxu0 %v6751
  %v6790 = vpop.f32.mrf.mxu0
  %v6791 = vadd.f32 0.0, %v6790
  %v6792 = vpop.f32.mrf.mxu0
  %v6793 = vpop.f32.mrf.mxu0
  %v6794 = vpop.f32.mrf.mxu0
  %6795 = vdwg.mxu0
  %6797 = vrot.lane.b32.xlu0 %v5412, 120
  %v6798 = vpop.permute.xlu0 %6797
  %v6800 = vsel %vm275, %v6394, 0
  %v6803 = vsel %vm1263, %v6798, 0
  %6805 = vmatprep.subr.bf16.mxu0 0
  %6806 = vmatpush1.bf16.msra.mxu0 0
  %6807 = vmatprep.subr.bf16.mxu0 0
  %6808 = vmatpush1.bf16.msra.mxu0 0
  %6809 = vmatprep.subr.bf16.mxu0 0
  %6810 = vmatpush1.bf16.msra.mxu0 0
  %6811 = vmatprep.subr.bf16.mxu0 0
  %6812 = vmatpush1.bf16.msra.mxu0 0
  %6813 = vmatprep.subr.bf16.mxu0 0
  %6814 = vmatpush1.bf16.msra.mxu0 0
  %6815 = vmatprep.subr.bf16.mxu0 0
  %6816 = vmatpush1.bf16.msra.mxu0 0
  %6817 = vmatprep.subr.bf16.mxu0 0
  %6818 = vmatpush1.bf16.msra.mxu0 0
  %6819 = vmatprep.subr.bf16.mxu0 0
  %6820 = vmatpush1.bf16.msra.mxu0 %v6803
  %6821 = vmatprep.subr.bf16.mxu0 0
  %6822 = vmatpush2.bf16.msra.mxu0 0
  %6823 = vmatprep.subr.bf16.mxu0 0
  %6824 = vmatpush2.bf16.msra.mxu0 0
  %6825 = vmatprep.subr.bf16.mxu0 0
  %6826 = vmatpush2.bf16.msra.mxu0 0
  %6827 = vmatprep.subr.bf16.mxu0 0
  %6828 = vmatpush2.bf16.msra.mxu0 0
  %6829 = vmatprep.subr.bf16.mxu0 0
  %6830 = vmatpush2.bf16.msra.mxu0 0
  %6831 = vmatprep.subr.bf16.mxu0 0
  %6832 = vmatpush2.bf16.msra.mxu0 0
  %6833 = vmatprep.subr.bf16.mxu0 0
  %6834 = vmatpush2.bf16.msra.mxu0 0
  %6835 = vmatprep.subr.bf16.mxu0 0
  %6836 = vmatpush2.bf16.msra.mxu0 0
  %6837 = vmatprep.mubr.bf16.mxu0 0
  %6838 = vmatmul.mubr.bf16.gmra.mxu0 %v6800
  %v6839 = vpop.f32.mrf.mxu0
  %v6840 = vadd.f32 0.0, %v6839
  %v6841 = vpop.f32.mrf.mxu0
  %v6842 = vpop.f32.mrf.mxu0
  %v6843 = vpop.f32.mrf.mxu0
  %6844 = vdwg.mxu0
  %v6845 = vpack.c.bf16 %v6742, %v6693
  %v6846 = vpack.c.bf16 %v6840, %v6791
  %v6848 = vsel %vm275, %v6845, 0
  %v6851 = vsel %vm275, %v6846, 0
  %v6854 = vsel %vm1263, %v5191, 0
  %6856 = vmatprep.subr.bf16.mxu0 0
  %6857 = vmatpush1.bf16.msra.mxu0 0
  %6858 = vmatprep.subr.bf16.mxu0 0
  %6859 = vmatpush1.bf16.msra.mxu0 0
  %6860 = vmatprep.subr.bf16.mxu0 0
  %6861 = vmatpush1.bf16.msra.mxu0 0
  %6862 = vmatprep.subr.bf16.mxu0 0
  %6863 = vmatpush1.bf16.msra.mxu0 0
  %6864 = vmatprep.subr.bf16.mxu0 0
  %6865 = vmatpush1.bf16.msra.mxu0 0
  %6866 = vmatprep.subr.bf16.mxu0 0
  %6867 = vmatpush1.bf16.msra.mxu0 0
  %6868 = vmatprep.subr.bf16.mxu0 0
  %6869 = vmatpush1.bf16.msra.mxu0 0
  %6870 = vmatprep.subr.bf16.mxu0 0
  %6871 = vmatpush1.bf16.msra.mxu0 %v6854
  %6872 = vmatprep.subr.bf16.mxu0 0
  %6873 = vmatpush2.bf16.msra.mxu0 0
  %6874 = vmatprep.subr.bf16.mxu0 0
  %6875 = vmatpush2.bf16.msra.mxu0 0
  %6876 = vmatprep.subr.bf16.mxu0 0
  %6877 = vmatpush2.bf16.msra.mxu0 0
  %6878 = vmatprep.subr.bf16.mxu0 0
  %6879 = vmatpush2.bf16.msra.mxu0 0
  %6880 = vmatprep.subr.bf16.mxu0 0
  %6881 = vmatpush2.bf16.msra.mxu0 0
  %6882 = vmatprep.subr.bf16.mxu0 0
  %6883 = vmatpush2.bf16.msra.mxu0 0
  %6884 = vmatprep.subr.bf16.mxu0 0
  %6885 = vmatpush2.bf16.msra.mxu0 0
  %6886 = vmatprep.subr.bf16.mxu0 0
  %6887 = vmatpush2.bf16.msra.mxu0 0
  %6888 = vmatprep.mubr.bf16.mxu0 0
  %6889 = vmatmul.mubr.bf16.gmra.mxu0 %v6848
  %v6890 = vpop.f32.mrf.mxu0
  %v6891 = vadd.f32 0.0, %v6890
  %v6892 = vpop.f32.mrf.mxu0
  %v6893 = vpop.f32.mrf.mxu0
  %v6894 = vadd.f32 0.0, %v6893
  %v6895 = vpop.f32.mrf.mxu0
  %6896 = vmatprep.mubr.bf16.mxu0 0
  %6897 = vmatmul.mubr.bf16.gmra.mxu0 %v6851
  %v6898 = vpop.f32.mrf.mxu0
  %v6899 = vadd.f32 0.0, %v6898
  %v6900 = vpop.f32.mrf.mxu0
  %v6901 = vpop.f32.mrf.mxu0
  %v6902 = vadd.f32 0.0, %v6901
  %v6903 = vpop.f32.mrf.mxu0
  %6904 = vdwg.mxu0
  %v6905 = vadd.f32 %v6645, %v6891
  %v6906 = vadd.f32 %v6646, %v6894
  %v6907 = vadd.f32 %v6647, %v6899
  %v6908 = vadd.f32 %v6648, %v6902
  %6909 = vrot.lane.b32.xlu0 %v5409, 112
  %v6910 = vpop.permute.xlu0 %6909
  %v6912 = vsel %vm275, %v6383, 0
  %v6915 = vsel %vm1263, %v6910, 0
  %6917 = vmatprep.subr.bf16.mxu0 0
  %6918 = vmatpush1.bf16.msra.mxu0 0
  %6919 = vmatprep.subr.bf16.mxu0 0
  %6920 = vmatpush1.bf16.msra.mxu0 0
  %6921 = vmatprep.subr.bf16.mxu0 0
  %6922 = vmatpush1.bf16.msra.mxu0 0
  %6923 = vmatprep.subr.bf16.mxu0 0
  %6924 = vmatpush1.bf16.msra.mxu0 0
  %6925 = vmatprep.subr.bf16.mxu0 0
  %6926 = vmatpush1.bf16.msra.mxu0 0
  %6927 = vmatprep.subr.bf16.mxu0 0
  %6928 = vmatpush1.bf16.msra.mxu0 0
  %6929 = vmatprep.subr.bf16.mxu0 0
  %6930 = vmatpush1.bf16.msra.mxu0 0
  %6931 = vmatprep.subr.bf16.mxu0 0
  %6932 = vmatpush1.bf16.msra.mxu0 %v6915
  %6933 = vmatprep.subr.bf16.mxu0 0
  %6934 = vmatpush2.bf16.msra.mxu0 0
  %6935 = vmatprep.subr.bf16.mxu0 0
  %6936 = vmatpush2.bf16.msra.mxu0 0
  %6937 = vmatprep.subr.bf16.mxu0 0
  %6938 = vmatpush2.bf16.msra.mxu0 0
  %6939 = vmatprep.subr.bf16.mxu0 0
  %6940 = vmatpush2.bf16.msra.mxu0 0
  %6941 = vmatprep.subr.bf16.mxu0 0
  %6942 = vmatpush2.bf16.msra.mxu0 0
  %6943 = vmatprep.subr.bf16.mxu0 0
  %6944 = vmatpush2.bf16.msra.mxu0 0
  %6945 = vmatprep.subr.bf16.mxu0 0
  %6946 = vmatpush2.bf16.msra.mxu0 0
  %6947 = vmatprep.subr.bf16.mxu0 0
  %6948 = vmatpush2.bf16.msra.mxu0 0
  %6949 = vmatprep.mubr.bf16.mxu0 0
  %6950 = vmatmul.mubr.bf16.gmra.mxu0 %v6912
  %v6951 = vpop.f32.mrf.mxu0
  %v6952 = vadd.f32 0.0, %v6951
  %v6953 = vpop.f32.mrf.mxu0
  %v6954 = vpop.f32.mrf.mxu0
  %v6955 = vpop.f32.mrf.mxu0
  %6956 = vdwg.mxu0
  %6957 = vrot.lane.b32.xlu0 %v5410, 112
  %v6958 = vpop.permute.xlu0 %6957
  %v6960 = vsel %vm275, %v6387, 0
  %v6963 = vsel %vm1263, %v6958, 0
  %6965 = vmatprep.subr.bf16.mxu0 0
  %6966 = vmatpush1.bf16.msra.mxu0 0
  %6967 = vmatprep.subr.bf16.mxu0 0
  %6968 = vmatpush1.bf16.msra.mxu0 0
  %6969 = vmatprep.subr.bf16.mxu0 0
  %6970 = vmatpush1.bf16.msra.mxu0 0
  %6971 = vmatprep.subr.bf16.mxu0 0
  %6972 = vmatpush1.bf16.msra.mxu0 0
  %6973 = vmatprep.subr.bf16.mxu0 0
  %6974 = vmatpush1.bf16.msra.mxu0 0
  %6975 = vmatprep.subr.bf16.mxu0 0
  %6976 = vmatpush1.bf16.msra.mxu0 0
  %6977 = vmatprep.subr.bf16.mxu0 0
  %6978 = vmatpush1.bf16.msra.mxu0 0
  %6979 = vmatprep.subr.bf16.mxu0 0
  %6980 = vmatpush1.bf16.msra.mxu0 %v6963
  %6981 = vmatprep.subr.bf16.mxu0 0
  %6982 = vmatpush2.bf16.msra.mxu0 0
  %6983 = vmatprep.subr.bf16.mxu0 0
  %6984 = vmatpush2.bf16.msra.mxu0 0
  %6985 = vmatprep.subr.bf16.mxu0 0
  %6986 = vmatpush2.bf16.msra.mxu0 0
  %6987 = vmatprep.subr.bf16.mxu0 0
  %6988 = vmatpush2.bf16.msra.mxu0 0
  %6989 = vmatprep.subr.bf16.mxu0 0
  %6990 = vmatpush2.bf16.msra.mxu0 0
  %6991 = vmatprep.subr.bf16.mxu0 0
  %6992 = vmatpush2.bf16.msra.mxu0 0
  %6993 = vmatprep.subr.bf16.mxu0 0
  %6994 = vmatpush2.bf16.msra.mxu0 0
  %6995 = vmatprep.subr.bf16.mxu0 0
  %6996 = vmatpush2.bf16.msra.mxu0 0
  %6997 = vmatprep.mubr.bf16.mxu0 0
  %6998 = vmatmul.mubr.bf16.gmra.mxu0 %v6960
  %v6999 = vpop.f32.mrf.mxu0
  %v7000 = vadd.f32 0.0, %v6999
  %v7001 = vpop.f32.mrf.mxu0
  %v7002 = vpop.f32.mrf.mxu0
  %v7003 = vpop.f32.mrf.mxu0
  %7004 = vdwg.mxu0
  %7005 = vrot.lane.b32.xlu0 %v5411, 112
  %v7006 = vpop.permute.xlu0 %7005
  %v7008 = vsel %vm275, %v6391, 0
  %v7011 = vsel %vm1263, %v7006, 0
  %7013 = vmatprep.subr.bf16.mxu0 0
  %7014 = vmatpush1.bf16.msra.mxu0 0
  %7015 = vmatprep.subr.bf16.mxu0 0
  %7016 = vmatpush1.bf16.msra.mxu0 0
  %7017 = vmatprep.subr.bf16.mxu0 0
  %7018 = vmatpush1.bf16.msra.mxu0 0
  %7019 = vmatprep.subr.bf16.mxu0 0
  %7020 = vmatpush1.bf16.msra.mxu0 0
  %7021 = vmatprep.subr.bf16.mxu0 0
  %7022 = vmatpush1.bf16.msra.mxu0 0
  %7023 = vmatprep.subr.bf16.mxu0 0
  %7024 = vmatpush1.bf16.msra.mxu0 0
  %7025 = vmatprep.subr.bf16.mxu0 0
  %7026 = vmatpush1.bf16.msra.mxu0 0
  %7027 = vmatprep.subr.bf16.mxu0 0
  %7028 = vmatpush1.bf16.msra.mxu0 %v7011
  %7029 = vmatprep.subr.bf16.mxu0 0
  %7030 = vmatpush2.bf16.msra.mxu0 0
  %7031 = vmatprep.subr.bf16.mxu0 0
  %7032 = vmatpush2.bf16.msra.mxu0 0
  %7033 = vmatprep.subr.bf16.mxu0 0
  %7034 = vmatpush2.bf16.msra.mxu0 0
  %7035 = vmatprep.subr.bf16.mxu0 0
  %7036 = vmatpush2.bf16.msra.mxu0 0
  %7037 = vmatprep.subr.bf16.mxu0 0
  %7038 = vmatpush2.bf16.msra.mxu0 0
  %7039 = vmatprep.subr.bf16.mxu0 0
  %7040 = vmatpush2.bf16.msra.mxu0 0
  %7041 = vmatprep.subr.bf16.mxu0 0
  %7042 = vmatpush2.bf16.msra.mxu0 0
  %7043 = vmatprep.subr.bf16.mxu0 0
  %7044 = vmatpush2.bf16.msra.mxu0 0
  %7045 = vmatprep.mubr.bf16.mxu0 0
  %7046 = vmatmul.mubr.bf16.gmra.mxu0 %v7008
  %v7047 = vpop.f32.mrf.mxu0
  %v7048 = vadd.f32 0.0, %v7047
  %v7049 = vpop.f32.mrf.mxu0
  %v7050 = vpop.f32.mrf.mxu0
  %v7051 = vpop.f32.mrf.mxu0
  %7052 = vdwg.mxu0
  %7053 = vrot.lane.b32.xlu0 %v5412, 112
  %v7054 = vpop.permute.xlu0 %7053
  %v7056 = vsel %vm275, %v6395, 0
  %v7059 = vsel %vm1263, %v7054, 0
  %7061 = vmatprep.subr.bf16.mxu0 0
  %7062 = vmatpush1.bf16.msra.mxu0 0
  %7063 = vmatprep.subr.bf16.mxu0 0
  %7064 = vmatpush1.bf16.msra.mxu0 0
  %7065 = vmatprep.subr.bf16.mxu0 0
  %7066 = vmatpush1.bf16.msra.mxu0 0
  %7067 = vmatprep.subr.bf16.mxu0 0
  %7068 = vmatpush1.bf16.msra.mxu0 0
  %7069 = vmatprep.subr.bf16.mxu0 0
  %7070 = vmatpush1.bf16.msra.mxu0 0
  %7071 = vmatprep.subr.bf16.mxu0 0
  %7072 = vmatpush1.bf16.msra.mxu0 0
  %7073 = vmatprep.subr.bf16.mxu0 0
  %7074 = vmatpush1.bf16.msra.mxu0 0
  %7075 = vmatprep.subr.bf16.mxu0 0
  %7076 = vmatpush1.bf16.msra.mxu0 %v7059
  %7077 = vmatprep.subr.bf16.mxu0 0
  %7078 = vmatpush2.bf16.msra.mxu0 0
  %7079 = vmatprep.subr.bf16.mxu0 0
  %7080 = vmatpush2.bf16.msra.mxu0 0
  %7081 = vmatprep.subr.bf16.mxu0 0
  %7082 = vmatpush2.bf16.msra.mxu0 0
  %7083 = vmatprep.subr.bf16.mxu0 0
  %7084 = vmatpush2.bf16.msra.mxu0 0
  %7085 = vmatprep.subr.bf16.mxu0 0
  %7086 = vmatpush2.bf16.msra.mxu0 0
  %7087 = vmatprep.subr.bf16.mxu0 0
  %7088 = vmatpush2.bf16.msra.mxu0 0
  %7089 = vmatprep.subr.bf16.mxu0 0
  %7090 = vmatpush2.bf16.msra.mxu0 0
  %7091 = vmatprep.subr.bf16.mxu0 0
  %7092 = vmatpush2.bf16.msra.mxu0 0
  %7093 = vmatprep.mubr.bf16.mxu0 0
  %7094 = vmatmul.mubr.bf16.gmra.mxu0 %v7056
  %v7095 = vpop.f32.mrf.mxu0
  %v7096 = vadd.f32 0.0, %v7095
  %v7097 = vpop.f32.mrf.mxu0
  %v7098 = vpop.f32.mrf.mxu0
  %v7099 = vpop.f32.mrf.mxu0
  %7100 = vdwg.mxu0
  %v7101 = vpack.c.bf16 %v7000, %v6952
  %v7102 = vpack.c.bf16 %v7096, %v7048
  %v7104 = vsel %vm275, %v7101, 0
  %v7107 = vsel %vm275, %v7102, 0
  %v7110 = vsel %vm1263, %v5192, 0
  %7112 = vmatprep.subr.bf16.mxu0 0
  %7113 = vmatpush1.bf16.msra.mxu0 0
  %7114 = vmatprep.subr.bf16.mxu0 0
  %7115 = vmatpush1.bf16.msra.mxu0 0
  %7116 = vmatprep.subr.bf16.mxu0 0
  %7117 = vmatpush1.bf16.msra.mxu0 0
  %7118 = vmatprep.subr.bf16.mxu0 0
  %7119 = vmatpush1.bf16.msra.mxu0 0
  %7120 = vmatprep.subr.bf16.mxu0 0
  %7121 = vmatpush1.bf16.msra.mxu0 0
  %7122 = vmatprep.subr.bf16.mxu0 0
  %7123 = vmatpush1.bf16.msra.mxu0 0
  %7124 = vmatprep.subr.bf16.mxu0 0
  %7125 = vmatpush1.bf16.msra.mxu0 0
  %7126 = vmatprep.subr.bf16.mxu0 0
  %7127 = vmatpush1.bf16.msra.mxu0 %v7110
  %7128 = vmatprep.subr.bf16.mxu0 0
  %7129 = vmatpush2.bf16.msra.mxu0 0
  %7130 = vmatprep.subr.bf16.mxu0 0
  %7131 = vmatpush2.bf16.msra.mxu0 0
  %7132 = vmatprep.subr.bf16.mxu0 0
  %7133 = vmatpush2.bf16.msra.mxu0 0
  %7134 = vmatprep.subr.bf16.mxu0 0
  %7135 = vmatpush2.bf16.msra.mxu0 0
  %7136 = vmatprep.subr.bf16.mxu0 0
  %7137 = vmatpush2.bf16.msra.mxu0 0
  %7138 = vmatprep.subr.bf16.mxu0 0
  %7139 = vmatpush2.bf16.msra.mxu0 0
  %7140 = vmatprep.subr.bf16.mxu0 0
  %7141 = vmatpush2.bf16.msra.mxu0 0
  %7142 = vmatprep.subr.bf16.mxu0 0
  %7143 = vmatpush2.bf16.msra.mxu0 0
  %7144 = vmatprep.mubr.bf16.mxu0 0
  %7145 = vmatmul.mubr.bf16.gmra.mxu0 %v7104
  %v7146 = vpop.f32.mrf.mxu0
  %v7147 = vadd.f32 0.0, %v7146
  %v7148 = vpop.f32.mrf.mxu0
  %v7149 = vpop.f32.mrf.mxu0
  %v7150 = vadd.f32 0.0, %v7149
  %v7151 = vpop.f32.mrf.mxu0
  %7152 = vmatprep.mubr.bf16.mxu0 0
  %7153 = vmatmul.mubr.bf16.gmra.mxu0 %v7107
  %v7154 = vpop.f32.mrf.mxu0
  %v7155 = vadd.f32 0.0, %v7154
  %v7156 = vpop.f32.mrf.mxu0
  %v7157 = vpop.f32.mrf.mxu0
  %v7158 = vadd.f32 0.0, %v7157
  %v7159 = vpop.f32.mrf.mxu0
  %7160 = vdwg.mxu0
  %v7161 = vadd.f32 %v6905, %v7147
  %v7162 = vadd.f32 %v6906, %v7150
  %v7163 = vadd.f32 %v6907, %v7155
  %v7164 = vadd.f32 %v6908, %v7158
  %7165 = vrot.lane.b32.xlu0 %v5409, 104
  %v7166 = vpop.permute.xlu0 %7165
  %v7168 = vsel %vm275, %v6384, 0
  %v7171 = vsel %vm1263, %v7166, 0
  %7173 = vmatprep.subr.bf16.mxu0 0
  %7174 = vmatpush1.bf16.msra.mxu0 0
  %7175 = vmatprep.subr.bf16.mxu0 0
  %7176 = vmatpush1.bf16.msra.mxu0 0
  %7177 = vmatprep.subr.bf16.mxu0 0
  %7178 = vmatpush1.bf16.msra.mxu0 0
  %7179 = vmatprep.subr.bf16.mxu0 0
  %7180 = vmatpush1.bf16.msra.mxu0 0
  %7181 = vmatprep.subr.bf16.mxu0 0
  %7182 = vmatpush1.bf16.msra.mxu0 0
  %7183 = vmatprep.subr.bf16.mxu0 0
  %7184 = vmatpush1.bf16.msra.mxu0 0
  %7185 = vmatprep.subr.bf16.mxu0 0
  %7186 = vmatpush1.bf16.msra.mxu0 0
  %7187 = vmatprep.subr.bf16.mxu0 0
  %7188 = vmatpush1.bf16.msra.mxu0 %v7171
  %7189 = vmatprep.subr.bf16.mxu0 0
  %7190 = vmatpush2.bf16.msra.mxu0 0
  %7191 = vmatprep.subr.bf16.mxu0 0
  %7192 = vmatpush2.bf16.msra.mxu0 0
  %7193 = vmatprep.subr.bf16.mxu0 0
  %7194 = vmatpush2.bf16.msra.mxu0 0
  %7195 = vmatprep.subr.bf16.mxu0 0
  %7196 = vmatpush2.bf16.msra.mxu0 0
  %7197 = vmatprep.subr.bf16.mxu0 0
  %7198 = vmatpush2.bf16.msra.mxu0 0
  %7199 = vmatprep.subr.bf16.mxu0 0
  %7200 = vmatpush2.bf16.msra.mxu0 0
  %7201 = vmatprep.subr.bf16.mxu0 0
  %7202 = vmatpush2.bf16.msra.mxu0 0
  %7203 = vmatprep.subr.bf16.mxu0 0
  %7204 = vmatpush2.bf16.msra.mxu0 0
  %7205 = vmatprep.mubr.bf16.mxu0 0
  %7206 = vmatmul.mubr.bf16.gmra.mxu0 %v7168
  %v7207 = vpop.f32.mrf.mxu0
  %v7208 = vadd.f32 0.0, %v7207
  %v7209 = vpop.f32.mrf.mxu0
  %v7210 = vpop.f32.mrf.mxu0
  %v7211 = vpop.f32.mrf.mxu0
  %7212 = vdwg.mxu0
  %7213 = vrot.lane.b32.xlu0 %v5410, 104
  %v7214 = vpop.permute.xlu0 %7213
  %v7216 = vsel %vm275, %v6388, 0
  %v7219 = vsel %vm1263, %v7214, 0
  %7221 = vmatprep.subr.bf16.mxu0 0
  %7222 = vmatpush1.bf16.msra.mxu0 0
  %7223 = vmatprep.subr.bf16.mxu0 0
  %7224 = vmatpush1.bf16.msra.mxu0 0
  %7225 = vmatprep.subr.bf16.mxu0 0
  %7226 = vmatpush1.bf16.msra.mxu0 0
  %7227 = vmatprep.subr.bf16.mxu0 0
  %7228 = vmatpush1.bf16.msra.mxu0 0
  %7229 = vmatprep.subr.bf16.mxu0 0
  %7230 = vmatpush1.bf16.msra.mxu0 0
  %7231 = vmatprep.subr.bf16.mxu0 0
  %7232 = vmatpush1.bf16.msra.mxu0 0
  %7233 = vmatprep.subr.bf16.mxu0 0
  %7234 = vmatpush1.bf16.msra.mxu0 0
  %7235 = vmatprep.subr.bf16.mxu0 0
  %7236 = vmatpush1.bf16.msra.mxu0 %v7219
  %7237 = vmatprep.subr.bf16.mxu0 0
  %7238 = vmatpush2.bf16.msra.mxu0 0
  %7239 = vmatprep.subr.bf16.mxu0 0
  %7240 = vmatpush2.bf16.msra.mxu0 0
  %7241 = vmatprep.subr.bf16.mxu0 0
  %7242 = vmatpush2.bf16.msra.mxu0 0
  %7243 = vmatprep.subr.bf16.mxu0 0
  %7244 = vmatpush2.bf16.msra.mxu0 0
  %7245 = vmatprep.subr.bf16.mxu0 0
  %7246 = vmatpush2.bf16.msra.mxu0 0
  %7247 = vmatprep.subr.bf16.mxu0 0
  %7248 = vmatpush2.bf16.msra.mxu0 0
  %7249 = vmatprep.subr.bf16.mxu0 0
  %7250 = vmatpush2.bf16.msra.mxu0 0
  %7251 = vmatprep.subr.bf16.mxu0 0
  %7252 = vmatpush2.bf16.msra.mxu0 0
  %7253 = vmatprep.mubr.bf16.mxu0 0
  %7254 = vmatmul.mubr.bf16.gmra.mxu0 %v7216
  %v7255 = vpop.f32.mrf.mxu0
  %v7256 = vadd.f32 0.0, %v7255
  %v7257 = vpop.f32.mrf.mxu0
  %v7258 = vpop.f32.mrf.mxu0
  %v7259 = vpop.f32.mrf.mxu0
  %7260 = vdwg.mxu0
  %7261 = vrot.lane.b32.xlu0 %v5411, 104
  %v7262 = vpop.permute.xlu0 %7261
  %v7264 = vsel %vm275, %v6392, 0
  %v7267 = vsel %vm1263, %v7262, 0
  %7269 = vmatprep.subr.bf16.mxu0 0
  %7270 = vmatpush1.bf16.msra.mxu0 0
  %7271 = vmatprep.subr.bf16.mxu0 0
  %7272 = vmatpush1.bf16.msra.mxu0 0
  %7273 = vmatprep.subr.bf16.mxu0 0
  %7274 = vmatpush1.bf16.msra.mxu0 0
  %7275 = vmatprep.subr.bf16.mxu0 0
  %7276 = vmatpush1.bf16.msra.mxu0 0
  %7277 = vmatprep.subr.bf16.mxu0 0
  %7278 = vmatpush1.bf16.msra.mxu0 0
  %7279 = vmatprep.subr.bf16.mxu0 0
  %7280 = vmatpush1.bf16.msra.mxu0 0
  %7281 = vmatprep.subr.bf16.mxu0 0
  %7282 = vmatpush1.bf16.msra.mxu0 0
  %7283 = vmatprep.subr.bf16.mxu0 0
  %7284 = vmatpush1.bf16.msra.mxu0 %v7267
  %7285 = vmatprep.subr.bf16.mxu0 0
  %7286 = vmatpush2.bf16.msra.mxu0 0
  %7287 = vmatprep.subr.bf16.mxu0 0
  %7288 = vmatpush2.bf16.msra.mxu0 0
  %7289 = vmatprep.subr.bf16.mxu0 0
  %7290 = vmatpush2.bf16.msra.mxu0 0
  %7291 = vmatprep.subr.bf16.mxu0 0
  %7292 = vmatpush2.bf16.msra.mxu0 0
  %7293 = vmatprep.subr.bf16.mxu0 0
  %7294 = vmatpush2.bf16.msra.mxu0 0
  %7295 = vmatprep.subr.bf16.mxu0 0
  %7296 = vmatpush2.bf16.msra.mxu0 0
  %7297 = vmatprep.subr.bf16.mxu0 0
  %7298 = vmatpush2.bf16.msra.mxu0 0
  %7299 = vmatprep.subr.bf16.mxu0 0
  %7300 = vmatpush2.bf16.msra.mxu0 0
  %7301 = vmatprep.mubr.bf16.mxu0 0
  %7302 = vmatmul.mubr.bf16.gmra.mxu0 %v7264
  %v7303 = vpop.f32.mrf.mxu0
  %v7304 = vadd.f32 0.0, %v7303
  %v7305 = vpop.f32.mrf.mxu0
  %v7306 = vpop.f32.mrf.mxu0
  %v7307 = vpop.f32.mrf.mxu0
  %7308 = vdwg.mxu0
  %7309 = vrot.lane.b32.xlu0 %v5412, 104
  %v7310 = vpop.permute.xlu0 %7309
  %v7312 = vsel %vm275, %v6396, 0
  %v7315 = vsel %vm1263, %v7310, 0
  %7317 = vmatprep.subr.bf16.mxu0 0
  %7318 = vmatpush1.bf16.msra.mxu0 0
  %7319 = vmatprep.subr.bf16.mxu0 0
  %7320 = vmatpush1.bf16.msra.mxu0 0
  %7321 = vmatprep.subr.bf16.mxu0 0
  %7322 = vmatpush1.bf16.msra.mxu0 0
  %7323 = vmatprep.subr.bf16.mxu0 0
  %7324 = vmatpush1.bf16.msra.mxu0 0
  %7325 = vmatprep.subr.bf16.mxu0 0
  %7326 = vmatpush1.bf16.msra.mxu0 0
  %7327 = vmatprep.subr.bf16.mxu0 0
  %7328 = vmatpush1.bf16.msra.mxu0 0
  %7329 = vmatprep.subr.bf16.mxu0 0
  %7330 = vmatpush1.bf16.msra.mxu0 0
  %7331 = vmatprep.subr.bf16.mxu0 0
  %7332 = vmatpush1.bf16.msra.mxu0 %v7315
  %7333 = vmatprep.subr.bf16.mxu0 0
  %7334 = vmatpush2.bf16.msra.mxu0 0
  %7335 = vmatprep.subr.bf16.mxu0 0
  %7336 = vmatpush2.bf16.msra.mxu0 0
  %7337 = vmatprep.subr.bf16.mxu0 0
  %7338 = vmatpush2.bf16.msra.mxu0 0
  %7339 = vmatprep.subr.bf16.mxu0 0
  %7340 = vmatpush2.bf16.msra.mxu0 0
  %7341 = vmatprep.subr.bf16.mxu0 0
  %7342 = vmatpush2.bf16.msra.mxu0 0
  %7343 = vmatprep.subr.bf16.mxu0 0
  %7344 = vmatpush2.bf16.msra.mxu0 0
  %7345 = vmatprep.subr.bf16.mxu0 0
  %7346 = vmatpush2.bf16.msra.mxu0 0
  %7347 = vmatprep.subr.bf16.mxu0 0
  %7348 = vmatpush2.bf16.msra.mxu0 0
  %7349 = vmatprep.mubr.bf16.mxu0 0
  %7350 = vmatmul.mubr.bf16.gmra.mxu0 %v7312
  %v7351 = vpop.f32.mrf.mxu0
  %v7352 = vadd.f32 0.0, %v7351
  %v7353 = vpop.f32.mrf.mxu0
  %v7354 = vpop.f32.mrf.mxu0
  %v7355 = vpop.f32.mrf.mxu0
  %7356 = vdwg.mxu0
  %v7357 = vpack.c.bf16 %v7256, %v7208
  %v7358 = vpack.c.bf16 %v7352, %v7304
  %v7360 = vsel %vm275, %v7357, 0
  %v7363 = vsel %vm275, %v7358, 0
  %v7366 = vsel %vm1263, %v5193, 0
  %7368 = vmatprep.subr.bf16.mxu0 0
  %7369 = vmatpush1.bf16.msra.mxu0 0
  %7370 = vmatprep.subr.bf16.mxu0 0
  %7371 = vmatpush1.bf16.msra.mxu0 0
  %7372 = vmatprep.subr.bf16.mxu0 0
  %7373 = vmatpush1.bf16.msra.mxu0 0
  %7374 = vmatprep.subr.bf16.mxu0 0
  %7375 = vmatpush1.bf16.msra.mxu0 0
  %7376 = vmatprep.subr.bf16.mxu0 0
  %7377 = vmatpush1.bf16.msra.mxu0 0
  %7378 = vmatprep.subr.bf16.mxu0 0
  %7379 = vmatpush1.bf16.msra.mxu0 0
  %7380 = vmatprep.subr.bf16.mxu0 0
  %7381 = vmatpush1.bf16.msra.mxu0 0
  %7382 = vmatprep.subr.bf16.mxu0 0
  %7383 = vmatpush1.bf16.msra.mxu0 %v7366
  %7384 = vmatprep.subr.bf16.mxu0 0
  %7385 = vmatpush2.bf16.msra.mxu0 0
  %7386 = vmatprep.subr.bf16.mxu0 0
  %7387 = vmatpush2.bf16.msra.mxu0 0
  %7388 = vmatprep.subr.bf16.mxu0 0
  %7389 = vmatpush2.bf16.msra.mxu0 0
  %7390 = vmatprep.subr.bf16.mxu0 0
  %7391 = vmatpush2.bf16.msra.mxu0 0
  %7392 = vmatprep.subr.bf16.mxu0 0
  %7393 = vmatpush2.bf16.msra.mxu0 0
  %7394 = vmatprep.subr.bf16.mxu0 0
  %7395 = vmatpush2.bf16.msra.mxu0 0
  %7396 = vmatprep.subr.bf16.mxu0 0
  %7397 = vmatpush2.bf16.msra.mxu0 0
  %7398 = vmatprep.subr.bf16.mxu0 0
  %7399 = vmatpush2.bf16.msra.mxu0 0
  %7400 = vmatprep.mubr.bf16.mxu0 0
  %7401 = vmatmul.mubr.bf16.gmra.mxu0 %v7360
  %v7402 = vpop.f32.mrf.mxu0
  %v7403 = vadd.f32 0.0, %v7402
  %v7404 = vpop.f32.mrf.mxu0
  %v7405 = vpop.f32.mrf.mxu0
  %v7406 = vadd.f32 0.0, %v7405
  %v7407 = vpop.f32.mrf.mxu0
  %7408 = vmatprep.mubr.bf16.mxu0 0
  %7409 = vmatmul.mubr.bf16.gmra.mxu0 %v7363
  %v7410 = vpop.f32.mrf.mxu0
  %v7411 = vadd.f32 0.0, %v7410
  %v7412 = vpop.f32.mrf.mxu0
  %v7413 = vpop.f32.mrf.mxu0
  %v7414 = vadd.f32 0.0, %v7413
  %v7415 = vpop.f32.mrf.mxu0
  %7416 = vdwg.mxu0
  %v7417 = vadd.f32 %v7161, %v7403
  %v7418 = vadd.f32 %v7162, %v7406
  %v7419 = vadd.f32 %v7163, %v7411
  %v7420 = vadd.f32 %v7164, %v7414
  %v7421 = vadd.f32 %v5169, %v7417
  %v7422 = vadd.f32 %v5170, %v7418
  %v7423 = vadd.f32 %v5171, %v7419
  %v7424 = vadd.f32 %v5172, %v7420
  %v7425 = vsel %vm73, %v7421, 0.0
  %7426 = vadd.xlane.f32.xlu0 %v7425
  %v7427 = vpop.xlane.xlu0 %7426
  %v7428 = vsel %vm73, %v7422, 0.0
  %7429 = vadd.xlane.f32.xlu0 %v7428
  %v7430 = vpop.xlane.xlu0 %7429
  %v7431 = vsel %vm73, %v7423, 0.0
  %7432 = vadd.xlane.f32.xlu0 %v7431
  %v7433 = vpop.xlane.xlu0 %7432
  %v7434 = vsel %vm73, %v7424, 0.0
  %7435 = vadd.xlane.f32.xlu0 %v7434
  %v7436 = vpop.xlane.xlu0 %7435
  %v7437 = vmul.f32 %v7427, %v2301
  %v7438 = vmul.f32 %v7430, %v2301
  %v7439 = vmul.f32 %v7433, %v2301
  %v7440 = vmul.f32 %v7436, %v2301
  %v7441 = vsub.f32 %v7421, %v7437
  %v7442 = vsub.f32 %v7422, %v7438
  %v7443 = vsub.f32 %v7423, %v7439
  %v7444 = vsub.f32 %v7424, %v7440
  %v7445 = vmul.f32 %v7441, %v7441
  %v7446 = vmul.f32 %v7442, %v7442
  %v7447 = vmul.f32 %v7443, %v7443
  %v7448 = vmul.f32 %v7444, %v7444
  %v7449 = vsel %vm73, %v7445, 0.0
  %7450 = vadd.xlane.f32.xlu0 %v7449
  %v7451 = vpop.xlane.xlu0 %7450
  %v7452 = vsel %vm73, %v7446, 0.0
  %7453 = vadd.xlane.f32.xlu0 %v7452
  %v7454 = vpop.xlane.xlu0 %7453
  %v7455 = vsel %vm73, %v7447, 0.0
  %7456 = vadd.xlane.f32.xlu0 %v7455
  %v7457 = vpop.xlane.xlu0 %7456
  %v7458 = vsel %vm73, %v7448, 0.0
  %7459 = vadd.xlane.f32.xlu0 %v7458
  %v7460 = vpop.xlane.xlu0 %7459
  %v7461 = vmul.f32 %v7451, %v2301
  %v7462 = vmul.f32 %v7454, %v2301
  %v7463 = vmul.f32 %v7457, %v2301
  %v7464 = vmul.f32 %v7460, %v2301
  %v7465 = vadd.f32 %v7461, 1e-05
  %v7466 = vadd.f32 %v7462, 1e-05
  %v7467 = vadd.f32 %v7463, 1e-05
  %v7468 = vadd.f32 %v7464, 1e-05
  %v7469 = vrsqrt.pop %v7465
  %v7470 = vrsqrt.pop %v7466
  %v7471 = vrsqrt.pop %v7467
  %v7472 = vrsqrt.pop %v7468
  %v7473 = vmul.f32 %v7441, %v7469
  %v7474 = vmul.f32 %v7442, %v7470
  %v7475 = vmul.f32 %v7443, %v7471
  %v7476 = vmul.f32 %v7444, %v7472
  %v7477 = vlaneseq
  %v7478 = vshrl.u32 %v7477, 7
  %v7479 = vsub.s32 4, %v7478
  %v7480 = vrot.slane %v5174, %v7479
  %v7481 = vmul.f32 %v7473, %v7480
  %v7482 = vmul.f32 %v7474, %v7480
  %v7483 = vmul.f32 %v7475, %v7480
  %v7484 = vmul.f32 %v7476, %v7480
  %v7485 = vlaneseq
  %v7486 = vshrl.u32 %v7485, 7
  %v7487 = vsub.s32 5, %v7486
  %v7488 = vrot.slane %v5174, %v7487
  %v7489 = vadd.f32 %v7481, %v7488
  %v7490 = vadd.f32 %v7482, %v7488
  %v7491 = vadd.f32 %v7483, %v7488
  %v7492 = vadd.f32 %v7484, %v7488
  %v7493 = vpack.c.bf16 %v7490, %v7489
  %v7494 = vpack.c.bf16 %v7492, %v7491
  %s7495 = scalar_lea.vmem %s4, 32
  %v7496 = vld [vmem:[%s7495] sm:$0xf]
  %v7497 = vld [vmem:[%s7495 + $0x4] sm:$0xf]
  %v7498 = vld [vmem:[%s7495 + $0x8] sm:$0xf]
  %v7499 = vld [vmem:[%s7495 + $0xc] sm:$0xf]
  %v7500 = vlaneseq
  %v7501 = vshrl.u32 %v7500, 7
  %v7502 = vsub.s32 6, %v7501
  %v7503 = vrot.slane %v5174, %v7502
  %v7508 = vunpack.c.l.b16 %v7496
  %v7509 = vunpack.c.l.b16 %v7497
  %v7510 = vunpack.c.l.b16 %v7498
  %v7511 = vunpack.c.l.b16 %v7499
  %v7512 = vpack.c.b16 %v7509, %v7508
  %v7513 = vpack.c.b16 %v7511, %v7510
  %v7517 = vsel %vm73, %v7493, 0
  %v7520 = vsel %vm73, %v7494, 0
  %7522 = vmatprep.subr.bf16.mxu0 0
  %7523 = vmatpush1.bf16.msra.mxu0 0
  %7524 = vmatprep.subr.bf16.mxu0 0
  %7525 = vmatpush1.bf16.msra.mxu0 0
  %7526 = vmatprep.subr.bf16.mxu0 0
  %7527 = vmatpush1.bf16.msra.mxu0 0
  %7528 = vmatprep.subr.bf16.mxu0 0
  %7529 = vmatpush1.bf16.msra.mxu0 0
  %7530 = vmatprep.subr.bf16.mxu0 0
  %7531 = vmatpush1.bf16.msra.mxu0 0
  %7532 = vmatprep.subr.bf16.mxu0 0
  %7533 = vmatpush1.bf16.msra.mxu0 0
  %7534 = vmatprep.subr.bf16.mxu0 0
  %7535 = vmatpush1.bf16.msra.mxu0 %v7513
  %7536 = vmatprep.subr.bf16.mxu0 0
  %7537 = vmatpush1.bf16.msra.mxu0 %v7512
  %7538 = vmatprep.subr.bf16.mxu0 0
  %7539 = vmatpush2.bf16.msra.mxu0 0
  %7540 = vmatprep.subr.bf16.mxu0 0
  %7541 = vmatpush2.bf16.msra.mxu0 0
  %7542 = vmatprep.subr.bf16.mxu0 0
  %7543 = vmatpush2.bf16.msra.mxu0 0
  %7544 = vmatprep.subr.bf16.mxu0 0
  %7545 = vmatpush2.bf16.msra.mxu0 0
  %7546 = vmatprep.subr.bf16.mxu0 0
  %7547 = vmatpush2.bf16.msra.mxu0 0
  %7548 = vmatprep.subr.bf16.mxu0 0
  %7549 = vmatpush2.bf16.msra.mxu0 0
  %7550 = vmatprep.subr.bf16.mxu0 0
  %7551 = vmatpush2.bf16.msra.mxu0 0
  %7552 = vmatprep.subr.bf16.mxu0 0
  %7553 = vmatpush2.bf16.msra.mxu0 0
  %7554 = vmatprep.mubr.bf16.mxu0 0
  %7555 = vmatmul.mubr.bf16.gmra.mxu0 %v7517
  %v7556 = vpop.f32.mrf.mxu0
  %v7557 = vadd.f32 %v7503, %v7556
  %v7558 = vpop.f32.mrf.mxu0
  %v7559 = vpop.f32.mrf.mxu0
  %v7560 = vadd.f32 %v7503, %v7559
  %v7561 = vpop.f32.mrf.mxu0
  %7562 = vmatprep.mubr.bf16.mxu0 0
  %7563 = vmatmul.mubr.bf16.gmra.mxu0 %v7520
  %v7564 = vpop.f32.mrf.mxu0
  %v7565 = vadd.f32 %v7503, %v7564
  %v7566 = vpop.f32.mrf.mxu0
  %v7567 = vpop.f32.mrf.mxu0
  %v7568 = vadd.f32 %v7503, %v7567
  %v7569 = vpop.f32.mrf.mxu0
  %7570 = vdwg.mxu0
  %v7571 = vmax.f32 %v7557, 0.0
  %v7572 = vmax.f32 %v7560, 0.0
  %v7573 = vmax.f32 %v7565, 0.0
  %v7574 = vmax.f32 %v7568, 0.0
  %v7575 = vpack.c.bf16 %v7572, %v7571
  %v7576 = vpack.c.bf16 %v7574, %v7573
  %s7577 = scalar_lea.vmem %s5, 64
  %v7578 = vld [vmem:[%s7577] sm:$0xf]
  %v7579 = vld [vmem:[%s7577 + $0x4] sm:$0xf]
  %v7580 = vld [vmem:[%s7577 + $0x8] sm:$0xf]
  %v7581 = vld [vmem:[%s7577 + $0xc] sm:$0xf]
  %v7582 = vld [vmem:[%s7577 + $0x10] sm:$0xf]
  %v7583 = vld [vmem:[%s7577 + $0x14] sm:$0xf]
  %v7584 = vld [vmem:[%s7577 + $0x18] sm:$0xf]
  %v7585 = vld [vmem:[%s7577 + $0x1c] sm:$0xf]
  %v7586 = vlaneseq
  %v7587 = vshrl.u32 %v7586, 7
  %v7588 = vsub.s32 7, %v7587
  %v7589 = vrot.slane %v5174, %v7588
  %v7598 = vunpack.c.l.b16 %v7578
  %v7599 = vunpack.c.l.b16 %v7579
  %v7600 = vunpack.c.l.b16 %v7580
  %v7601 = vunpack.c.l.b16 %v7581
  %v7602 = vunpack.c.l.b16 %v7582
  %v7603 = vunpack.c.l.b16 %v7583
  %v7604 = vunpack.c.l.b16 %v7584
  %v7605 = vunpack.c.l.b16 %v7585
  %v7606 = vpack.c.b16 %v7599, %v7598
  %v7607 = vpack.c.b16 %v7601, %v7600
  %v7608 = vpack.c.b16 %v7603, %v7602
  %v7609 = vpack.c.b16 %v7605, %v7604
  %v7615 = vsel %vm2477, %v7575, 0
  %v7618 = vsel %vm2477, %v7576, 0
  %7620 = vmatprep.subr.bf16.mxu0 0
  %7621 = vmatpush1.bf16.msra.mxu0 0
  %7622 = vmatprep.subr.bf16.mxu0 0
  %7623 = vmatpush1.bf16.msra.mxu0 0
  %7624 = vmatprep.subr.bf16.mxu0 0
  %7625 = vmatpush1.bf16.msra.mxu0 0
  %7626 = vmatprep.subr.bf16.mxu0 0
  %7627 = vmatpush1.bf16.msra.mxu0 0
  %7628 = vmatprep.subr.bf16.mxu0 0
  %7629 = vmatpush1.bf16.msra.mxu0 %v7609
  %7630 = vmatprep.subr.bf16.mxu0 0
  %7631 = vmatpush1.bf16.msra.mxu0 %v7608
  %7632 = vmatprep.subr.bf16.mxu0 0
  %7633 = vmatpush1.bf16.msra.mxu0 %v7607
  %7634 = vmatprep.subr.bf16.mxu0 0
  %7635 = vmatpush1.bf16.msra.mxu0 %v7606
  %7636 = vmatprep.subr.bf16.mxu0 0
  %7637 = vmatpush2.bf16.msra.mxu0 0
  %7638 = vmatprep.subr.bf16.mxu0 0
  %7639 = vmatpush2.bf16.msra.mxu0 0
  %7640 = vmatprep.subr.bf16.mxu0 0
  %7641 = vmatpush2.bf16.msra.mxu0 0
  %7642 = vmatprep.subr.bf16.mxu0 0
  %7643 = vmatpush2.bf16.msra.mxu0 0
  %7644 = vmatprep.subr.bf16.mxu0 0
  %7645 = vmatpush2.bf16.msra.mxu0 0
  %7646 = vmatprep.subr.bf16.mxu0 0
  %7647 = vmatpush2.bf16.msra.mxu0 0
  %7648 = vmatprep.subr.bf16.mxu0 0
  %7649 = vmatpush2.bf16.msra.mxu0 0
  %7650 = vmatprep.subr.bf16.mxu0 0
  %7651 = vmatpush2.bf16.msra.mxu0 0
  %7652 = vmatprep.mubr.bf16.mxu0 0
  %7653 = vmatmul.mubr.bf16.gmra.mxu0 %v7615
  %v7654 = vpop.f32.mrf.mxu0
  %v7655 = vadd.f32 %v7589, %v7654
  %v7656 = vpop.f32.mrf.mxu0
  %v7657 = vpop.f32.mrf.mxu0
  %v7658 = vadd.f32 %v7589, %v7657
  %v7659 = vpop.f32.mrf.mxu0
  %7660 = vmatprep.mubr.bf16.mxu0 0
  %7661 = vmatmul.mubr.bf16.gmra.mxu0 %v7618
  %v7662 = vpop.f32.mrf.mxu0
  %v7663 = vadd.f32 %v7589, %v7662
  %v7664 = vpop.f32.mrf.mxu0
  %v7665 = vpop.f32.mrf.mxu0
  %v7666 = vadd.f32 %v7589, %v7665
  %v7667 = vpop.f32.mrf.mxu0
  %7668 = vdwg.mxu0
  %v7669 = vadd.f32 %v7489, %v7655
  %v7670 = vadd.f32 %v7490, %v7658
  %v7671 = vadd.f32 %v7491, %v7663
  %v7672 = vadd.f32 %v7492, %v7666
  %v7673 = vsel %vm73, %v7669, 0.0
  %7674 = vadd.xlane.f32.xlu0 %v7673
  %v7675 = vpop.xlane.xlu0 %7674
  %v7676 = vsel %vm73, %v7670, 0.0
  %7677 = vadd.xlane.f32.xlu0 %v7676
  %v7678 = vpop.xlane.xlu0 %7677
  %v7679 = vsel %vm73, %v7671, 0.0
  %7680 = vadd.xlane.f32.xlu0 %v7679
  %v7681 = vpop.xlane.xlu0 %7680
  %v7682 = vsel %vm73, %v7672, 0.0
  %7683 = vadd.xlane.f32.xlu0 %v7682
  %v7684 = vpop.xlane.xlu0 %7683
  %v7685 = vmul.f32 %v7675, %v2301
  %v7686 = vmul.f32 %v7678, %v2301
  %v7687 = vmul.f32 %v7681, %v2301
  %v7688 = vmul.f32 %v7684, %v2301
  %v7689 = vsub.f32 %v7669, %v7685
  %v7690 = vsub.f32 %v7670, %v7686
  %v7691 = vsub.f32 %v7671, %v7687
  %v7692 = vsub.f32 %v7672, %v7688
  %v7693 = vmul.f32 %v7689, %v7689
  %v7694 = vmul.f32 %v7690, %v7690
  %v7695 = vmul.f32 %v7691, %v7691
  %v7696 = vmul.f32 %v7692, %v7692
  %v7697 = vsel %vm73, %v7693, 0.0
  %7698 = vadd.xlane.f32.xlu0 %v7697
  %v7699 = vpop.xlane.xlu0 %7698
  %v7700 = vsel %vm73, %v7694, 0.0
  %7701 = vadd.xlane.f32.xlu0 %v7700
  %v7702 = vpop.xlane.xlu0 %7701
  %v7703 = vsel %vm73, %v7695, 0.0
  %7704 = vadd.xlane.f32.xlu0 %v7703
  %v7705 = vpop.xlane.xlu0 %7704
  %v7706 = vsel %vm73, %v7696, 0.0
  %7707 = vadd.xlane.f32.xlu0 %v7706
  %v7708 = vpop.xlane.xlu0 %7707
  %v7709 = vmul.f32 %v7699, %v2301
  %v7710 = vmul.f32 %v7702, %v2301
  %v7711 = vmul.f32 %v7705, %v2301
  %v7712 = vmul.f32 %v7708, %v2301
  %v7713 = vadd.f32 %v7709, 1e-05
  %v7714 = vadd.f32 %v7710, 1e-05
  %v7715 = vadd.f32 %v7711, 1e-05
  %v7716 = vadd.f32 %v7712, 1e-05
  %v7717 = vrsqrt.pop %v7713
  %v7718 = vrsqrt.pop %v7714
  %v7719 = vrsqrt.pop %v7715
  %v7720 = vrsqrt.pop %v7716
  %v7721 = vmul.f32 %v7689, %v7717
  %v7722 = vmul.f32 %v7690, %v7718
  %v7723 = vmul.f32 %v7691, %v7719
  %v7724 = vmul.f32 %v7692, %v7720
  %v7725 = vlaneseq
  %v7726 = vshrl.u32 %v7725, 7
  %v7727 = vsub.s32 0, %v7726
  %v7728 = vrot.slane %v5175, %v7727
  %v7729 = vmul.f32 %v7721, %v7728
  %v7730 = vmul.f32 %v7722, %v7728
  %v7731 = vmul.f32 %v7723, %v7728
  %v7732 = vmul.f32 %v7724, %v7728
  %v7733 = vlaneseq
  %v7734 = vshrl.u32 %v7733, 7
  %v7735 = vsub.s32 1, %v7734
  %v7736 = vrot.slane %v5175, %v7735
  %v7737 = vadd.f32 %v7729, %v7736
  %v7738 = vadd.f32 %v7730, %v7736
  %v7739 = vadd.f32 %v7731, %v7736
  %v7740 = vadd.f32 %v7732, %v7736
  %v7741 = vpack.c.bf16 %v7738, %v7737
  %v7742 = vpack.c.bf16 %v7740, %v7739
  %v7743 = vld [vmem:[%s7] sm:$0xf]
  %v7744 = vld [vmem:[%s7 + $0x4] sm:$0xf]
  %v7745 = vld [vmem:[%s7 + $0x8] sm:$0xf]
  %v7746 = vld [vmem:[%s7 + $0xc] sm:$0xf]
  %v7751 = vunpack.c.l.b16 %v7743
  %v7752 = vunpack.c.l.b16 %v7744
  %v7753 = vunpack.c.l.b16 %v7745
  %v7754 = vunpack.c.l.b16 %v7746
  %v7755 = vpack.c.b16 %v7752, %v7751
  %v7756 = vpack.c.b16 %v7754, %v7753
  %v7760 = vsel %vm73, %v7741, 0
  %v7763 = vsel %vm73, %v7742, 0
  %7765 = vmatprep.subr.bf16.mxu0 0
  %7766 = vmatpush1.bf16.msra.mxu0 0
  %7767 = vmatprep.subr.bf16.mxu0 0
  %7768 = vmatpush1.bf16.msra.mxu0 0
  %7769 = vmatprep.subr.bf16.mxu0 0
  %7770 = vmatpush1.bf16.msra.mxu0 0
  %7771 = vmatprep.subr.bf16.mxu0 0
  %7772 = vmatpush1.bf16.msra.mxu0 0
  %7773 = vmatprep.subr.bf16.mxu0 0
  %7774 = vmatpush1.bf16.msra.mxu0 0
  %7775 = vmatprep.subr.bf16.mxu0 0
  %7776 = vmatpush1.bf16.msra.mxu0 0
  %7777 = vmatprep.subr.bf16.mxu0 0
  %7778 = vmatpush1.bf16.msra.mxu0 %v7756
  %7779 = vmatprep.subr.bf16.mxu0 0
  %7780 = vmatpush1.bf16.msra.mxu0 %v7755
  %7781 = vmatprep.subr.bf16.mxu0 0
  %7782 = vmatpush2.bf16.msra.mxu0 0
  %7783 = vmatprep.subr.bf16.mxu0 0
  %7784 = vmatpush2.bf16.msra.mxu0 0
  %7785 = vmatprep.subr.bf16.mxu0 0
  %7786 = vmatpush2.bf16.msra.mxu0 0
  %7787 = vmatprep.subr.bf16.mxu0 0
  %7788 = vmatpush2.bf16.msra.mxu0 0
  %7789 = vmatprep.subr.bf16.mxu0 0
  %7790 = vmatpush2.bf16.msra.mxu0 0
  %7791 = vmatprep.subr.bf16.mxu0 0
  %7792 = vmatpush2.bf16.msra.mxu0 0
  %7793 = vmatprep.subr.bf16.mxu0 0
  %7794 = vmatpush2.bf16.msra.mxu0 0
  %7795 = vmatprep.subr.bf16.mxu0 0
  %7796 = vmatpush2.bf16.msra.mxu0 0
  %7797 = vmatprep.mubr.bf16.mxu0 0
  %7798 = vmatmul.mubr.bf16.gmra.mxu0 %v7760
  %v7799 = vpop.f32.mrf.mxu0
  %v7800 = vadd.f32 0.0, %v7799
  %v7801 = vpop.f32.mrf.mxu0
  %v7802 = vpop.f32.mrf.mxu0
  %v7803 = vadd.f32 0.0, %v7802
  %v7804 = vpop.f32.mrf.mxu0
  %7805 = vmatprep.mubr.bf16.mxu0 0
  %7806 = vmatmul.mubr.bf16.gmra.mxu0 %v7763
  %v7807 = vpop.f32.mrf.mxu0
  %v7808 = vadd.f32 0.0, %v7807
  %v7809 = vpop.f32.mrf.mxu0
  %v7810 = vpop.f32.mrf.mxu0
  %v7811 = vadd.f32 0.0, %v7810
  %v7812 = vpop.f32.mrf.mxu0
  %7813 = vdwg.mxu0
  %v7814 = vld [vmem:[%s1] sm:$0xf]
  %v7815 = vpack.c.bf16 %v7814, %v7814
  %s7816 = scalar_lea.vmem %s7, 16
  %v7817 = vld [vmem:[%s7816] sm:$0xf]
  %v7818 = vld [vmem:[%s7816 + $0x4] sm:$0xf]
  %v7819 = vld [vmem:[%s7816 + $0x8] sm:$0xf]
  %v7820 = vld [vmem:[%s7816 + $0xc] sm:$0xf]
  %v7821 = vld [vmem:[%s8] sm:$0x1]
  %v7823 = vlaneseq
  %v7824 = vshrl.u32 %v7823, 7
  %v7825 = vsub.s32 0, %v7824
  %v7826 = vrot.slane %v7821, %v7825
  %v7832 = vunpack.c.l.b16 %v7817
  %v7833 = vunpack.c.l.b16 %v7818
  %v7834 = vunpack.c.l.b16 %v7819
  %v7835 = vunpack.c.l.b16 %v7820
  %v7836 = vpack.c.b16 %v7833, %v7832
  %v7837 = vpack.c.b16 %v7835, %v7834
  %v7841 = vsel %vm73, %v7815, 0
  %7843 = vmatprep.subr.bf16.mxu0 0
  %7844 = vmatpush1.bf16.msra.mxu0 0
  %7845 = vmatprep.subr.bf16.mxu0 0
  %7846 = vmatpush1.bf16.msra.mxu0 0
  %7847 = vmatprep.subr.bf16.mxu0 0
  %7848 = vmatpush1.bf16.msra.mxu0 0
  %7849 = vmatprep.subr.bf16.mxu0 0
  %7850 = vmatpush1.bf16.msra.mxu0 0
  %7851 = vmatprep.subr.bf16.mxu0 0
  %7852 = vmatpush1.bf16.msra.mxu0 0
  %7853 = vmatprep.subr.bf16.mxu0 0
  %7854 = vmatpush1.bf16.msra.mxu0 0
  %7855 = vmatprep.subr.bf16.mxu0 0
  %7856 = vmatpush1.bf16.msra.mxu0 %v7837
  %7857 = vmatprep.subr.bf16.mxu0 0
  %7858 = vmatpush1.bf16.msra.mxu0 %v7836
  %7859 = vmatprep.subr.bf16.mxu0 0
  %7860 = vmatpush2.bf16.msra.mxu0 0
  %7861 = vmatprep.subr.bf16.mxu0 0
  %7862 = vmatpush2.bf16.msra.mxu0 0
  %7863 = vmatprep.subr.bf16.mxu0 0
  %7864 = vmatpush2.bf16.msra.mxu0 0
  %7865 = vmatprep.subr.bf16.mxu0 0
  %7866 = vmatpush2.bf16.msra.mxu0 0
  %7867 = vmatprep.subr.bf16.mxu0 0
  %7868 = vmatpush2.bf16.msra.mxu0 0
  %7869 = vmatprep.subr.bf16.mxu0 0
  %7870 = vmatpush2.bf16.msra.mxu0 0
  %7871 = vmatprep.subr.bf16.mxu0 0
  %7872 = vmatpush2.bf16.msra.mxu0 0
  %7873 = vmatprep.subr.bf16.mxu0 0
  %7874 = vmatpush2.bf16.msra.mxu0 0
  %7875 = vmatprep.mubr.bf16.mxu0 0
  %7876 = vmatmul.mubr.bf16.gmra.mxu0 %v7841
  %v7877 = vpop.f32.mrf.mxu0
  %v7878 = vadd.f32 %v7826, %v7877
  %v7879 = vpop.f32.mrf.mxu0
  %v7880 = vpop.f32.mrf.mxu0
  %v7881 = vpop.f32.mrf.mxu0
  %7882 = vdwg.mxu0
  %v7885 = vunpack.c.l.s4 1966171168
  %v7886 = vunpack.c.0.s8 %v7885
  %v7887 = vlaneseq
  %v7888 = vshrl.u32 %v7887, 7
  %v7889 = vsub.s32 %v7886, %v7888
  %v7890 = vrot.slane %v7878, %v7889
  %v7891 = vcombine.high %v7890, %v7890
  %v7893 = vunpack.c.l.s4 1966171168
  %v7894 = vunpack.c.0.s8 %v7893
  %v7895 = vlaneseq
  %v7896 = vshrl.u32 %v7895, 7
  %v7897 = vsub.s32 %v7894, %v7896
  %v7898 = vrot.slane %v7890, %v7897
  %v7900 = vunpack.c.l.s4 1966171168
  %v7901 = vunpack.c.0.s8 %v7900
  %v7902 = vlaneseq
  %v7903 = vshrl.u32 %v7902, 7
  %v7904 = vsub.s32 %v7901, %v7903
  %v7905 = vrot.slane %v7891, %v7904
  %v7906 = vcombine.high %v7898, %v7898
  %v7907 = vcombine.high %v7905, %v7905
  %v7908 = vlaneseq
  %v7909 = vshrl.u32 %v7908, 7
  %v7910 = vsub.s32 0, %v7909
  %v7911 = vrot.slane %v7898, %v7910
  %v7912 = vlaneseq
  %v7913 = vshrl.u32 %v7912, 7
  %v7914 = vsub.s32 0, %v7913
  %v7915 = vrot.slane %v7905, %v7914
  %v7916 = vlaneseq
  %v7917 = vshrl.u32 %v7916, 7
  %v7918 = vsub.s32 0, %v7917
  %v7919 = vrot.slane %v7906, %v7918
  %v7920 = vlaneseq
  %v7921 = vshrl.u32 %v7920, 7
  %v7922 = vsub.s32 0, %v7921
  %v7923 = vrot.slane %v7907, %v7922
  %v7928 = vadd.f32 %v7800, %v7911
  %v7929 = vadd.f32 %v7803, %v7915
  %v7930 = vadd.f32 %v7808, %v7919
  %v7931 = vadd.f32 %v7811, %v7923
  %7932 = vst [vmem:[%s9] sm:$0xff] %v7928
  %7933 = vst [vmem:[%s9 + $0x8] sm:$0xff] %v7929
  %7934 = vst [vmem:[%s9 + $0x10] sm:$0xff] %v7930
  %7935 = vst [vmem:[%s9 + $0x18] sm:$0xff] %v7931
  // Predicated region
  $region38: #{forward.1} parent=0 // pred_check
    _
  $region39: #{forward.1} parent=0 // pred_check_branch
    %7937 = sbr.rel (0) target = $region41
  $region40: #{forward.1} parent=0 // pred_region
    _
  $region41: #{forward.1} parent=0 // pred_fallthru
    _
  // Predicated region
  $region42: #{forward.1} parent=0 // pred_check
    _
  $region43: #{forward.1} parent=0 // pred_check_branch
    %7939 = sbr.rel (0) target = $region45
  $region44: #{forward.1} parent=0 // pred_region
    _
  $region45: #{forward.1} parent=0 // pred_fallthru
    _

</llo_original>
